<compile_context>
chip_gen: v7x
topology: tpu7x:2x2x1
jax: 0.10.0
libtpu: 0.0.40
codegen_flags: <defaults>
</compile_context>

<pallas_src>
import numpy as np
import jax
import jax.numpy as jnp
from jax import lax
from jax.experimental import pallas as pl
from jax.experimental.pallas import tpu as pltpu

C_IN = 6            # node feature channels
C_HID = 16          # GNN / conv hidden channels
C_OUT = 6           # final near-field channels
EDGE_HID = 32       # edge-MLP hidden width
SIDE = 9            # 9x9 structural patch
NODES = SIDE * SIDE # 81 nodes per graph
CROP = 5            # center 5x5 crop
PIX = CROP * CROP
LANE = 128          # lanes reserved per graph (81 real + zero pad)
GROUP_MAX = 8       # max graphs fused per grid step

DIRS = ((0, 1), (1, 0), (0, -1), (-1, 0))                 # edge (i+d) -> i
DIR_OFF = tuple(SIDE * dr + dc for dr, dc in DIRS)        # +1, +9, -1, -9
TAP_OFF = tuple(SIDE * dy + dx for dy in (-1, 0, 1) for dx in (-1, 0, 1))

HP = jax.lax.Precision.HIGHEST


# --------------------------------------------------------------------------
# Fused kernel: NNConv(6->16, edge nn 1->32->96, aggr='add') + ReLU + crop
# (as a mask) + 6x Conv2d(3x3, pad=1).  One grid step = G graphs.
# Layout: rows = channels, lanes = g*128 + node (node = 9*r + c).
# --------------------------------------------------------------------------
def fused_kernel(x_ref, ea_ref, mask_ref, w1_ref, b1_ref, w2t_ref, b2_ref,
                 roott_ref, gb_ref, wh_ref, bh_ref, wl_ref, bl_ref, out_ref):
    nl = x_ref.shape[1]
    x = x_ref[...]          # (8, nl)  rows 0..5 = input channels, 6..7 zero
    ea = ea_ref[...]        # (8, nl)  rows 0..3 = edge attr by direction
    masks = mask_ref[...]   # (8, nl)  rows 0..3 = direction validity, row 4 = crop

    def lane_shift(v, s):
        # out[:, i] = v[:, i + s] (cyclic; invalid lanes are masked by callers)
        return v if s == 0 else pltpu.roll(v, (-s) % nl, axis=1)

    # ---- NNConv: edge MLP + per-edge message + scatter-add, per direction ----
    agg = jnp.zeros((C_HID, nl), jnp.float32)
    for d in range(4):
        ea_d = ea[d:d + 1, :]                                              # (1, nl)
        h = jnp.maximum(jnp.broadcast_to(ea_d, (EDGE_HID, nl)) * w1_ref[...]
                        + b1_ref[...], 0.0)                                # (32, nl)
        we = jnp.dot(w2t_ref[...], h, precision=HP,
                     preferred_element_type=jnp.float32) + b2_ref[...]     # (96, nl)
        xs = lane_shift(x, DIR_OFF[d]) * masks[d:d + 1, :]                 # (8, nl)
        for c in range(C_IN):
            agg = agg + (jnp.broadcast_to(xs[c:c + 1, :], (C_HID, nl))
                         * we[c * C_HID:(c + 1) * C_HID, :])
    node = jnp.maximum(
        agg
        + jnp.dot(roott_ref[...], x, precision=HP,
                  preferred_element_type=jnp.float32)
        + gb_ref[...], 0.0)                                                # (16, nl)

    # ---- crop folded in as a mask; 6x 3x3 "same" conv via rolls + K=144 dot ----
    crop = masks[4:5, :]                                                   # (1, nl)
    cur = node
    for layer in range(6):
        curm = cur * crop                                                  # zero-pad semantics
        patches = jnp.concatenate(
            [lane_shift(curm, s) for s in TAP_OFF], axis=0)                # (144, nl)
        if layer < 5:
            w = wh_ref[layer * C_HID:(layer + 1) * C_HID, :]               # (16, 144)
            b = bh_ref[layer * C_HID:(layer + 1) * C_HID, :]               # (16, 1)
            cur = jnp.maximum(
                jnp.dot(w, patches, precision=HP,
                        preferred_element_type=jnp.float32) + b, 0.0)
        else:
            out_ref[...] = jnp.dot(                                        # (8, nl), lane-dense
                wl_ref[...], patches, precision=HP,
                preferred_element_type=jnp.float32) + bl_ref[...]


# --------------------------------------------------------------------------
# Wrapper (plain JAX glue: layout packing, pallas_call, output reorder)
# --------------------------------------------------------------------------
def pick_group(batch, max_g=GROUP_MAX):
    # Prefer >=2 grid steps (v7x dual TensorCore) while still putting a
    # reasonable number of lanes (g*128) on the MXU for larger batches.
    g = min(max_g, max(1, batch // 2)) if batch >= 2 else 1
    steps = -(-batch // g)           # batch is zero-padded to g*steps graphs
    return g, steps


def build_masks_np(g):
    nl = g * LANE
    m = np.zeros((8, nl), np.float32)
    for gi in range(g):
        base = gi * LANE
        for n in range(NODES):
            r, c = divmod(n, SIDE)
            for d, (dr, dc) in enumerate(DIRS):
                if 0 <= r + dr < SIDE and 0 <= c + dc < SIDE:
                    m[d, base + n] = 1.0
            if 2 <= r < 2 + CROP and 2 <= c < 2 + CROP:
                m[4, base + n] = 1.0
    return m


def pack_grid(vals, real_rows, b, g, steps):
    """(b, real_rows, 81) -> (steps*8, g*128) channel-major lane-dense blocks."""
    bp = g * steps
    buf = jnp.zeros((bp, 8, LANE), jnp.float32)
    buf = buf.at[:b, :real_rows, :NODES].set(vals)
    return (buf.reshape(steps, g, 8, LANE)
               .transpose(0, 2, 1, 3)
               .reshape(steps * 8, g * LANE))


def forward(x, edge_attr, edge_slot, kp):
    b = x.shape[0] // NODES
    g, steps = pick_group(b)
    nl = g * LANE

    x_in = pack_grid(x.reshape(b, NODES, C_IN).transpose(0, 2, 1), C_IN, b, g, steps)
    ea = jnp.zeros((b * 4 * NODES,), jnp.float32).at[edge_slot].set(edge_attr[:, 0])
    ea_in = pack_grid(ea.reshape(b, 4, NODES), 4, b, g, steps)
    masks = jnp.asarray(build_masks_np(g))

    const = lambda shape: pl.BlockSpec(shape, lambda i: (0, 0))
    grid_spec = pltpu.PrefetchScalarGridSpec(
        num_scalar_prefetch=0,
        grid=(steps,),
        in_specs=[
            pl.BlockSpec((8, nl), lambda i: (i, 0)),      # x (channel-major)
            pl.BlockSpec((8, nl), lambda i: (i, 0)),      # edge attrs by direction
            const((8, nl)),                               # masks
            const(kp["w1"].shape), const(kp["b1"].shape),
            const(kp["w2t"].shape), const(kp["b2"].shape),
            const(kp["roott"].shape), const(kp["gbias"].shape),
            const(kp["wh"].shape), const(kp["bh"].shape),
            const(kp["wl"].shape), const(kp["bl"].shape),
        ],
        out_specs=pl.BlockSpec((8, nl), lambda i: (i, 0)),
    )
    out = pl.pallas_call(
        fused_kernel,
        out_shape=jax.ShapeDtypeStruct((steps * 8, nl), jnp.float32),
        grid_spec=grid_spec,
        compiler_params=pltpu.CompilerParams(
            dimension_semantics=("parallel",)),
    )(x_in, ea_in, masks,
      kp["w1"], kp["b1"], kp["w2t"], kp["b2"],
      kp["roott"], kp["gbias"], kp["wh"], kp["bh"], kp["wl"], kp["bl"])

    # lane-dense kernel output -> torch NCHW flatten (B, 6*5*5) in the wrapper
    o = out.reshape(steps, 8, g, LANE)[:, :C_OUT, :, :NODES]
    o = o.reshape(steps, C_OUT, g, SIDE, SIDE)[:, :, :, 2:2 + CROP, 2:2 + CROP]
    o = o.transpose(0, 2, 1, 3, 4).reshape(steps * g, C_OUT * PIX)
    return o[:b]


# --------------------------------------------------------------------------
# Deterministic parameters, kernel-layout packing, graph structure
# --------------------------------------------------------------------------
def init_params(key):
    ks = jax.random.split(key, 12)
    s = 0.1
    params = {
        "w1": s * jax.random.normal(ks[0], (1, EDGE_HID), jnp.float32),
        "b1": s * jax.random.normal(ks[1], (1, EDGE_HID), jnp.float32),
        "w2": s * jax.random.normal(ks[2], (EDGE_HID, C_IN * C_HID), jnp.float32),
        "b2": s * jax.random.normal(ks[3], (1, C_IN * C_HID), jnp.float32),
        "root": s * jax.random.normal(ks[4], (C_IN, C_HID), jnp.float32),
        "bias": s * jax.random.normal(ks[5], (1, C_HID), jnp.float32),
    }
    conv_ws, conv_bs = [], []
    for i in range(6):
        cout = C_HID if i < 5 else C_OUT
        kw, kb = jax.random.split(ks[6 + i])
        conv_ws.append(s * jax.random.normal(kw, (cout, C_HID, 3, 3), jnp.float32))
        conv_bs.append(s * jax.random.normal(kb, (cout,), jnp.float32))
    return params, conv_ws, conv_bs


def pack_kernel_params(params, conv_ws, conv_bs):
    def taps(w):  # (Cout, Cin, 3, 3) -> (Cout, 9*Cin), col = (ky*3+kx)*Cin + cin
        return jnp.transpose(w, (0, 2, 3, 1)).reshape(w.shape[0], 9 * w.shape[1])
    roott = jnp.zeros((C_HID, 8), jnp.float32).at[:, :C_IN].set(params["root"].T)
    wl = jnp.zeros((8, 9 * C_HID), jnp.float32).at[:C_OUT, :].set(taps(conv_ws[5]))
    bl = jnp.zeros((8, 1), jnp.float32).at[:C_OUT, 0].set(conv_bs[5])
    return {
        "w1": params["w1"].T,                                   # (32, 1)
        "b1": params["b1"].T,                                   # (32, 1)
        "w2t": params["w2"].T,                                  # (96, 32)
        "b2": params["b2"].T,                                   # (96, 1)
        "roott": roott,                                         # (16, 8)
        "gbias": params["bias"].T,                              # (16, 1)
        "wh": jnp.concatenate([taps(conv_ws[i]) for i in range(5)], axis=0),          # (80, 144)
        "bh": jnp.concatenate([conv_bs[i].reshape(C_HID, 1) for i in range(5)], axis=0),  # (80, 1)
        "wl": wl,                                               # (8, 144), rows 6,7 zero
        "bl": bl,                                               # (8, 1)
    }


def build_local_edges():
    # 4-neighbourhood directed edges within one 9x9 graph (local indices)
    src, dst = [], []
    for r in range(SIDE):
        for c in range(SIDE):
            i = r * SIDE + c
            for dr, dc in DIRS:
                rr, cc = r + dr, c + dc
                if 0 <= rr < SIDE and 0 <= cc < SIDE:
                    src.append(rr * SIDE + cc)   # message source j
                    dst.append(i)                # aggregation target i
    return np.asarray(src, np.int32), np.asarray(dst, np.int32)


def build_edge_slots(src_g, dst_g):
    # flat slot ((graph*4 + direction)*81 + dst_local) for every edge
    src_g = np.asarray(src_g); dst_g = np.asarray(dst_g)
    gidx = dst_g // NODES
    nd = dst_g % NODES
    diff = (src_g % NODES) - nd
    dmap = {off: d for d, off in enumerate(DIR_OFF)}
    d = np.array([dmap[int(v)] for v in diff], np.int32)
    return jnp.asarray((gidx * 4 + d) * NODES + nd, jnp.int32)


# --------------------------------------------------------------------------
# Pure-JAX reference (mirrors the PyTorch forward) for a correctness check
# --------------------------------------------------------------------------
def reference(x, edge_attr, src, dst, params, conv_ws, conv_bs):
    hp = jax.lax.Precision.HIGHEST
    h = jnp.maximum(jnp.dot(edge_attr, params["w1"], precision=hp) + params["b1"], 0.0)
    w_e = (jnp.dot(h, params["w2"], precision=hp) + params["b2"]).reshape(-1, C_IN, C_HID)
    msg = jnp.einsum("ec,eco->eo", x[src], w_e, precision=hp)
    agg = jnp.zeros((x.shape[0], C_HID), jnp.float32).at[dst].add(msg)
    node = jnp.maximum(agg + jnp.dot(x, params["root"], precision=hp) + params["bias"], 0.0)

    b = x.shape[0] // NODES
    dense = node.reshape(b, NODES, C_HID)                       # to_dense_batch
    nchw = jnp.transpose(dense, (0, 2, 1)).reshape(b, C_HID, SIDE, SIDE)
    cur = nchw[:, :, 2:7, 2:7]
    for i in range(6):
        cur = lax.conv_general_dilated(
            cur, conv_ws[i], (1, 1), ((1, 1), (1, 1)),
            dimension_numbers=("NCHW", "OIHW", "NCHW"), precision=hp)
        cur = cur + conv_bs[i][None, :, None, None]
        if i < 5:
            cur = jnp.maximum(cur, 0.0)
    return cur.reshape(b, -1)


if __name__ == "__main__":
    B = 2
    key = jax.random.PRNGKey(0)
    k_param, k_x, k_ea = jax.random.split(key, 3)
    params, conv_ws, conv_bs = init_params(k_param)
    kp = pack_kernel_params(params, conv_ws, conv_bs)

    src_l, dst_l = build_local_edges()
    e_loc = src_l.shape[0]                 # 288 directed edges per graph
    N = B * NODES                          # 162 nodes
    E = B * e_loc                          # 576 edges

    x = jax.random.normal(k_x, (N, C_IN), jnp.float32)
    edge_attr = jax.random.uniform(k_ea, (E, 1), jnp.float32)
    src_g = np.concatenate([src_l + i * NODES for i in range(B)])
    dst_g = np.concatenate([dst_l + i * NODES for i in range(B)])
    edge_slot = build_edge_slots(src_g, dst_g)

    fwd = jax.jit(forward)
    out = jax.block_until_ready(fwd(x, edge_attr, edge_slot, kp))

    ref = reference(x, edge_attr, jnp.asarray(src_g), jnp.asarray(dst_g),
                    params, conv_ws, conv_bs)

    assert out.shape == (B, C_OUT * PIX), out.shape
    np.testing.assert_allclose(np.asarray(out), np.asarray(ref),
                               rtol=5e-3, atol=5e-3)
    print("KERNEL_OK")
</pallas_src>

<mosaic_0001>
module attributes {stable_mosaic.version = 11 : i64} {
  func.func @fused_kernel(%arg0: i32, %arg1: memref<8x128xf32, #tpu.memory_space<vmem>>, %arg2: memref<8x128xf32, #tpu.memory_space<vmem>>, %arg3: memref<8x128xf32, #tpu.memory_space<vmem>>, %arg4: memref<32x1xf32, #tpu.memory_space<vmem>>, %arg5: memref<32x1xf32, #tpu.memory_space<vmem>>, %arg6: memref<96x32xf32, #tpu.memory_space<vmem>>, %arg7: memref<96x1xf32, #tpu.memory_space<vmem>>, %arg8: memref<16x8xf32, #tpu.memory_space<vmem>>, %arg9: memref<16x1xf32, #tpu.memory_space<vmem>>, %arg10: memref<80x144xf32, #tpu.memory_space<vmem>>, %arg11: memref<80x1xf32, #tpu.memory_space<vmem>>, %arg12: memref<8x144xf32, #tpu.memory_space<vmem>>, %arg13: memref<8x1xf32, #tpu.memory_space<vmem>>, %arg14: memref<8x128xf32, #tpu.memory_space<vmem>>) attributes {dimension_semantics = [#tpu.dimension_semantics<parallel>], iteration_bounds = array<i64: 2>, scalar_prefetch = 0 : i64, scratch_operands = 0 : i64, tpu.core_type = #tpu.core_type<tc>, window_params = [{transform_indices = @transform_0, window_bounds = array<i64: 8, 128>}, {transform_indices = @transform_1, window_bounds = array<i64: 8, 128>}, {pipeline_mode = #tpu.pipeline_mode<synchronous>, transform_indices = @transform_2, window_bounds = array<i64: 8, 128>}, {pipeline_mode = #tpu.pipeline_mode<synchronous>, transform_indices = @transform_3, window_bounds = array<i64: 32, 1>}, {pipeline_mode = #tpu.pipeline_mode<synchronous>, transform_indices = @transform_4, window_bounds = array<i64: 32, 1>}, {pipeline_mode = #tpu.pipeline_mode<synchronous>, transform_indices = @transform_5, window_bounds = array<i64: 96, 32>}, {pipeline_mode = #tpu.pipeline_mode<synchronous>, transform_indices = @transform_6, window_bounds = array<i64: 96, 1>}, {pipeline_mode = #tpu.pipeline_mode<synchronous>, transform_indices = @transform_7, window_bounds = array<i64: 16, 8>}, {pipeline_mode = #tpu.pipeline_mode<synchronous>, transform_indices = @transform_8, window_bounds = array<i64: 16, 1>}, {pipeline_mode = #tpu.pipeline_mode<synchronous>, transform_indices = @transform_9, window_bounds = array<i64: 80, 144>}, {pipeline_mode = #tpu.pipeline_mode<synchronous>, transform_indices = @transform_10, window_bounds = array<i64: 80, 1>}, {pipeline_mode = #tpu.pipeline_mode<synchronous>, transform_indices = @transform_11, window_bounds = array<i64: 8, 144>}, {pipeline_mode = #tpu.pipeline_mode<synchronous>, transform_indices = @transform_12, window_bounds = array<i64: 8, 1>}, {transform_indices = @transform_13, window_bounds = array<i64: 8, 128>}]} {
    %c0 = arith.constant 0 : index
    %c0_0 = arith.constant 0 : index
    %0 = vector.load %arg1[%c0, %c0_0] : memref<8x128xf32, #tpu.memory_space<vmem>>, vector<8x128xf32>
    %c0_1 = arith.constant 0 : index
    %c0_2 = arith.constant 0 : index
    %1 = vector.load %arg2[%c0_1, %c0_2] : memref<8x128xf32, #tpu.memory_space<vmem>>, vector<8x128xf32>
    %c0_3 = arith.constant 0 : index
    %c0_4 = arith.constant 0 : index
    %2 = vector.load %arg3[%c0_3, %c0_4] : memref<8x128xf32, #tpu.memory_space<vmem>>, vector<8x128xf32>
    %cst = arith.constant 0.000000e+00 : f32
    %3 = vector.broadcast %cst : f32 to vector<16x128xf32>
    %4 = vector.extract_strided_slice %1 {offsets = [0, 0], sizes = [1, 128], strides = [1, 1]} : vector<8x128xf32> to vector<1x128xf32>
    %5 = vector.shape_cast %4 : vector<1x128xf32> to vector<1x128xf32>
    %6 = vector.broadcast %5 : vector<1x128xf32> to vector<32x128xf32>
    %c0_5 = arith.constant 0 : index
    %c0_6 = arith.constant 0 : index
    %7 = vector.load %arg4[%c0_5, %c0_6] : memref<32x1xf32, #tpu.memory_space<vmem>>, vector<32x1xf32>
    %8 = vector.broadcast %7 : vector<32x1xf32> to vector<32x128xf32>
    %9 = arith.mulf %6, %8 : vector<32x128xf32>
    %c0_7 = arith.constant 0 : index
    %c0_8 = arith.constant 0 : index
    %10 = vector.load %arg5[%c0_7, %c0_8] : memref<32x1xf32, #tpu.memory_space<vmem>>, vector<32x1xf32>
    %11 = vector.broadcast %10 : vector<32x1xf32> to vector<32x128xf32>
    %12 = arith.addf %9, %11 : vector<32x128xf32>
    %cst_9 = arith.constant 0.000000e+00 : f32
    %13 = vector.broadcast %cst_9 : f32 to vector<32x128xf32>
    %14 = arith.maximumf %12, %13 : vector<32x128xf32>
    %c0_10 = arith.constant 0 : index
    %c0_11 = arith.constant 0 : index
    %15 = vector.load %arg6[%c0_10, %c0_11] : memref<96x32xf32, #tpu.memory_space<vmem>>, vector<96x32xf32>
    %cst_12 = arith.constant dense<0.000000e+00> : vector<96x128xf32>
    %16 = tpu.matmul %15, %14, %cst_12 {dimension_numbers = #tpu.dot_dimension_numbers<[1], [0], [0], [1], [0, 0, 1, 1], [], []>, precision = #tpu.contract_precision<fp32>} : vector<96x32xf32>, vector<32x128xf32>, vector<96x128xf32> -> vector<96x128xf32>
    %c0_13 = arith.constant 0 : index
    %c0_14 = arith.constant 0 : index
    %17 = vector.load %arg7[%c0_13, %c0_14] : memref<96x1xf32, #tpu.memory_space<vmem>>, vector<96x1xf32>
    %18 = vector.broadcast %17 : vector<96x1xf32> to vector<96x128xf32>
    %19 = arith.addf %16, %18 : vector<96x128xf32>
    %c127_i32 = arith.constant 127 : i32
    %20 = tpu.dynamic_rotate %0 by %c127_i32 dim 1 : vector<8x128xf32>, i32 -> vector<8x128xf32>
    %21 = vector.extract_strided_slice %2 {offsets = [0, 0], sizes = [1, 128], strides = [1, 1]} : vector<8x128xf32> to vector<1x128xf32>
    %22 = vector.broadcast %21 : vector<1x128xf32> to vector<8x128xf32>
    %23 = arith.mulf %20, %22 : vector<8x128xf32>
    %24 = vector.extract_strided_slice %23 {offsets = [0, 0], sizes = [1, 128], strides = [1, 1]} : vector<8x128xf32> to vector<1x128xf32>
    %25 = vector.shape_cast %24 : vector<1x128xf32> to vector<1x128xf32>
    %26 = vector.broadcast %25 : vector<1x128xf32> to vector<16x128xf32>
    %27 = vector.extract_strided_slice %19 {offsets = [0, 0], sizes = [16, 128], strides = [1, 1]} : vector<96x128xf32> to vector<16x128xf32>
    %28 = arith.mulf %26, %27 : vector<16x128xf32>
    %29 = arith.addf %3, %28 : vector<16x128xf32>
    %30 = vector.extract_strided_slice %23 {offsets = [1, 0], sizes = [1, 128], strides = [1, 1]} : vector<8x128xf32> to vector<1x128xf32>
    %31 = vector.shape_cast %30 : vector<1x128xf32> to vector<1x128xf32>
    %32 = vector.broadcast %31 : vector<1x128xf32> to vector<16x128xf32>
    %33 = vector.extract_strided_slice %19 {offsets = [16, 0], sizes = [16, 128], strides = [1, 1]} : vector<96x128xf32> to vector<16x128xf32>
    %34 = arith.mulf %32, %33 : vector<16x128xf32>
    %35 = arith.addf %29, %34 : vector<16x128xf32>
    %36 = vector.extract_strided_slice %23 {offsets = [2, 0], sizes = [1, 128], strides = [1, 1]} : vector<8x128xf32> to vector<1x128xf32>
    %37 = vector.shape_cast %36 : vector<1x128xf32> to vector<1x128xf32>
    %38 = vector.broadcast %37 : vector<1x128xf32> to vector<16x128xf32>
    %39 = vector.extract_strided_slice %19 {offsets = [32, 0], sizes = [16, 128], strides = [1, 1]} : vector<96x128xf32> to vector<16x128xf32>
    %40 = arith.mulf %38, %39 : vector<16x128xf32>
    %41 = arith.addf %35, %40 : vector<16x128xf32>
    %42 = vector.extract_strided_slice %23 {offsets = [3, 0], sizes = [1, 128], strides = [1, 1]} : vector<8x128xf32> to vector<1x128xf32>
    %43 = vector.shape_cast %42 : vector<1x128xf32> to vector<1x128xf32>
    %44 = vector.broadcast %43 : vector<1x128xf32> to vector<16x128xf32>
    %45 = vector.extract_strided_slice %19 {offsets = [48, 0], sizes = [16, 128], strides = [1, 1]} : vector<96x128xf32> to vector<16x128xf32>
    %46 = arith.mulf %44, %45 : vector<16x128xf32>
    %47 = arith.addf %41, %46 : vector<16x128xf32>
    %48 = vector.extract_strided_slice %23 {offsets = [4, 0], sizes = [1, 128], strides = [1, 1]} : vector<8x128xf32> to vector<1x128xf32>
    %49 = vector.shape_cast %48 : vector<1x128xf32> to vector<1x128xf32>
    %50 = vector.broadcast %49 : vector<1x128xf32> to vector<16x128xf32>
    %51 = vector.extract_strided_slice %19 {offsets = [64, 0], sizes = [16, 128], strides = [1, 1]} : vector<96x128xf32> to vector<16x128xf32>
    %52 = arith.mulf %50, %51 : vector<16x128xf32>
    %53 = arith.addf %47, %52 : vector<16x128xf32>
    %54 = vector.extract_strided_slice %23 {offsets = [5, 0], sizes = [1, 128], strides = [1, 1]} : vector<8x128xf32> to vector<1x128xf32>
    %55 = vector.shape_cast %54 : vector<1x128xf32> to vector<1x128xf32>
    %56 = vector.broadcast %55 : vector<1x128xf32> to vector<16x128xf32>
    %57 = vector.extract_strided_slice %19 {offsets = [80, 0], sizes = [16, 128], strides = [1, 1]} : vector<96x128xf32> to vector<16x128xf32>
    %58 = arith.mulf %56, %57 : vector<16x128xf32>
    %59 = arith.addf %53, %58 : vector<16x128xf32>
    %60 = vector.extract_strided_slice %1 {offsets = [1, 0], sizes = [1, 128], strides = [1, 1]} : vector<8x128xf32> to vector<1x128xf32>
    %61 = vector.shape_cast %60 : vector<1x128xf32> to vector<1x128xf32>
    %62 = vector.broadcast %61 : vector<1x128xf32> to vector<32x128xf32>
    %c0_15 = arith.constant 0 : index
    %c0_16 = arith.constant 0 : index
    %63 = vector.load %arg4[%c0_15, %c0_16] : memref<32x1xf32, #tpu.memory_space<vmem>>, vector<32x1xf32>
    %64 = vector.broadcast %63 : vector<32x1xf32> to vector<32x128xf32>
    %65 = arith.mulf %62, %64 : vector<32x128xf32>
    %c0_17 = arith.constant 0 : index
    %c0_18 = arith.constant 0 : index
    %66 = vector.load %arg5[%c0_17, %c0_18] : memref<32x1xf32, #tpu.memory_space<vmem>>, vector<32x1xf32>
    %67 = vector.broadcast %66 : vector<32x1xf32> to vector<32x128xf32>
    %68 = arith.addf %65, %67 : vector<32x128xf32>
    %cst_19 = arith.constant 0.000000e+00 : f32
    %69 = vector.broadcast %cst_19 : f32 to vector<32x128xf32>
    %70 = arith.maximumf %68, %69 : vector<32x128xf32>
    %c0_20 = arith.constant 0 : index
    %c0_21 = arith.constant 0 : index
    %71 = vector.load %arg6[%c0_20, %c0_21] : memref<96x32xf32, #tpu.memory_space<vmem>>, vector<96x32xf32>
    %cst_22 = arith.constant dense<0.000000e+00> : vector<96x128xf32>
    %72 = tpu.matmul %71, %70, %cst_22 {dimension_numbers = #tpu.dot_dimension_numbers<[1], [0], [0], [1], [0, 0, 1, 1], [], []>, precision = #tpu.contract_precision<fp32>} : vector<96x32xf32>, vector<32x128xf32>, vector<96x128xf32> -> vector<96x128xf32>
    %c0_23 = arith.constant 0 : index
    %c0_24 = arith.constant 0 : index
    %73 = vector.load %arg7[%c0_23, %c0_24] : memref<96x1xf32, #tpu.memory_space<vmem>>, vector<96x1xf32>
    %74 = vector.broadcast %73 : vector<96x1xf32> to vector<96x128xf32>
    %75 = arith.addf %72, %74 : vector<96x128xf32>
    %c119_i32 = arith.constant 119 : i32
    %76 = tpu.dynamic_rotate %0 by %c119_i32 dim 1 : vector<8x128xf32>, i32 -> vector<8x128xf32>
    %77 = vector.extract_strided_slice %2 {offsets = [1, 0], sizes = [1, 128], strides = [1, 1]} : vector<8x128xf32> to vector<1x128xf32>
    %78 = vector.broadcast %77 : vector<1x128xf32> to vector<8x128xf32>
    %79 = arith.mulf %76, %78 : vector<8x128xf32>
    %80 = vector.extract_strided_slice %79 {offsets = [0, 0], sizes = [1, 128], strides = [1, 1]} : vector<8x128xf32> to vector<1x128xf32>
    %81 = vector.shape_cast %80 : vector<1x128xf32> to vector<1x128xf32>
    %82 = vector.broadcast %81 : vector<1x128xf32> to vector<16x128xf32>
    %83 = vector.extract_strided_slice %75 {offsets = [0, 0], sizes = [16, 128], strides = [1, 1]} : vector<96x128xf32> to vector<16x128xf32>
    %84 = arith.mulf %82, %83 : vector<16x128xf32>
    %85 = arith.addf %59, %84 : vector<16x128xf32>
    %86 = vector.extract_strided_slice %79 {offsets = [1, 0], sizes = [1, 128], strides = [1, 1]} : vector<8x128xf32> to vector<1x128xf32>
    %87 = vector.shape_cast %86 : vector<1x128xf32> to vector<1x128xf32>
    %88 = vector.broadcast %87 : vector<1x128xf32> to vector<16x128xf32>
    %89 = vector.extract_strided_slice %75 {offsets = [16, 0], sizes = [16, 128], strides = [1, 1]} : vector<96x128xf32> to vector<16x128xf32>
    %90 = arith.mulf %88, %89 : vector<16x128xf32>
    %91 = arith.addf %85, %90 : vector<16x128xf32>
    %92 = vector.extract_strided_slice %79 {offsets = [2, 0], sizes = [1, 128], strides = [1, 1]} : vector<8x128xf32> to vector<1x128xf32>
    %93 = vector.shape_cast %92 : vector<1x128xf32> to vector<1x128xf32>
    %94 = vector.broadcast %93 : vector<1x128xf32> to vector<16x128xf32>
    %95 = vector.extract_strided_slice %75 {offsets = [32, 0], sizes = [16, 128], strides = [1, 1]} : vector<96x128xf32> to vector<16x128xf32>
    %96 = arith.mulf %94, %95 : vector<16x128xf32>
    %97 = arith.addf %91, %96 : vector<16x128xf32>
    %98 = vector.extract_strided_slice %79 {offsets = [3, 0], sizes = [1, 128], strides = [1, 1]} : vector<8x128xf32> to vector<1x128xf32>
    %99 = vector.shape_cast %98 : vector<1x128xf32> to vector<1x128xf32>
    %100 = vector.broadcast %99 : vector<1x128xf32> to vector<16x128xf32>
    %101 = vector.extract_strided_slice %75 {offsets = [48, 0], sizes = [16, 128], strides = [1, 1]} : vector<96x128xf32> to vector<16x128xf32>
    %102 = arith.mulf %100, %101 : vector<16x128xf32>
    %103 = arith.addf %97, %102 : vector<16x128xf32>
    %104 = vector.extract_strided_slice %79 {offsets = [4, 0], sizes = [1, 128], strides = [1, 1]} : vector<8x128xf32> to vector<1x128xf32>
    %105 = vector.shape_cast %104 : vector<1x128xf32> to vector<1x128xf32>
    %106 = vector.broadcast %105 : vector<1x128xf32> to vector<16x128xf32>
    %107 = vector.extract_strided_slice %75 {offsets = [64, 0], sizes = [16, 128], strides = [1, 1]} : vector<96x128xf32> to vector<16x128xf32>
    %108 = arith.mulf %106, %107 : vector<16x128xf32>
    %109 = arith.addf %103, %108 : vector<16x128xf32>
    %110 = vector.extract_strided_slice %79 {offsets = [5, 0], sizes = [1, 128], strides = [1, 1]} : vector<8x128xf32> to vector<1x128xf32>
    %111 = vector.shape_cast %110 : vector<1x128xf32> to vector<1x128xf32>
    %112 = vector.broadcast %111 : vector<1x128xf32> to vector<16x128xf32>
    %113 = vector.extract_strided_slice %75 {offsets = [80, 0], sizes = [16, 128], strides = [1, 1]} : vector<96x128xf32> to vector<16x128xf32>
    %114 = arith.mulf %112, %113 : vector<16x128xf32>
    %115 = arith.addf %109, %114 : vector<16x128xf32>
    %116 = vector.extract_strided_slice %1 {offsets = [2, 0], sizes = [1, 128], strides = [1, 1]} : vector<8x128xf32> to vector<1x128xf32>
    %117 = vector.shape_cast %116 : vector<1x128xf32> to vector<1x128xf32>
    %118 = vector.broadcast %117 : vector<1x128xf32> to vector<32x128xf32>
    %c0_25 = arith.constant 0 : index
    %c0_26 = arith.constant 0 : index
    %119 = vector.load %arg4[%c0_25, %c0_26] : memref<32x1xf32, #tpu.memory_space<vmem>>, vector<32x1xf32>
    %120 = vector.broadcast %119 : vector<32x1xf32> to vector<32x128xf32>
    %121 = arith.mulf %118, %120 : vector<32x128xf32>
    %c0_27 = arith.constant 0 : index
    %c0_28 = arith.constant 0 : index
    %122 = vector.load %arg5[%c0_27, %c0_28] : memref<32x1xf32, #tpu.memory_space<vmem>>, vector<32x1xf32>
    %123 = vector.broadcast %122 : vector<32x1xf32> to vector<32x128xf32>
    %124 = arith.addf %121, %123 : vector<32x128xf32>
    %cst_29 = arith.constant 0.000000e+00 : f32
    %125 = vector.broadcast %cst_29 : f32 to vector<32x128xf32>
    %126 = arith.maximumf %124, %125 : vector<32x128xf32>
    %c0_30 = arith.constant 0 : index
    %c0_31 = arith.constant 0 : index
    %127 = vector.load %arg6[%c0_30, %c0_31] : memref<96x32xf32, #tpu.memory_space<vmem>>, vector<96x32xf32>
    %cst_32 = arith.constant dense<0.000000e+00> : vector<96x128xf32>
    %128 = tpu.matmul %127, %126, %cst_32 {dimension_numbers = #tpu.dot_dimension_numbers<[1], [0], [0], [1], [0, 0, 1, 1], [], []>, precision = #tpu.contract_precision<fp32>} : vector<96x32xf32>, vector<32x128xf32>, vector<96x128xf32> -> vector<96x128xf32>
    %c0_33 = arith.constant 0 : index
    %c0_34 = arith.constant 0 : index
    %129 = vector.load %arg7[%c0_33, %c0_34] : memref<96x1xf32, #tpu.memory_space<vmem>>, vector<96x1xf32>
    %130 = vector.broadcast %129 : vector<96x1xf32> to vector<96x128xf32>
    %131 = arith.addf %128, %130 : vector<96x128xf32>
    %c1_i32 = arith.constant 1 : i32
    %132 = tpu.dynamic_rotate %0 by %c1_i32 dim 1 : vector<8x128xf32>, i32 -> vector<8x128xf32>
    %133 = vector.extract_strided_slice %2 {offsets = [2, 0], sizes = [1, 128], strides = [1, 1]} : vector<8x128xf32> to vector<1x128xf32>
    %134 = vector.broadcast %133 : vector<1x128xf32> to vector<8x128xf32>
    %135 = arith.mulf %132, %134 : vector<8x128xf32>
    %136 = vector.extract_strided_slice %135 {offsets = [0, 0], sizes = [1, 128], strides = [1, 1]} : vector<8x128xf32> to vector<1x128xf32>
    %137 = vector.shape_cast %136 : vector<1x128xf32> to vector<1x128xf32>
    %138 = vector.broadcast %137 : vector<1x128xf32> to vector<16x128xf32>
    %139 = vector.extract_strided_slice %131 {offsets = [0, 0], sizes = [16, 128], strides = [1, 1]} : vector<96x128xf32> to vector<16x128xf32>
    %140 = arith.mulf %138, %139 : vector<16x128xf32>
    %141 = arith.addf %115, %140 : vector<16x128xf32>
    %142 = vector.extract_strided_slice %135 {offsets = [1, 0], sizes = [1, 128], strides = [1, 1]} : vector<8x128xf32> to vector<1x128xf32>
    %143 = vector.shape_cast %142 : vector<1x128xf32> to vector<1x128xf32>
    %144 = vector.broadcast %143 : vector<1x128xf32> to vector<16x128xf32>
    %145 = vector.extract_strided_slice %131 {offsets = [16, 0], sizes = [16, 128], strides = [1, 1]} : vector<96x128xf32> to vector<16x128xf32>
    %146 = arith.mulf %144, %145 : vector<16x128xf32>
    %147 = arith.addf %141, %146 : vector<16x128xf32>
    %148 = vector.extract_strided_slice %135 {offsets = [2, 0], sizes = [1, 128], strides = [1, 1]} : vector<8x128xf32> to vector<1x128xf32>
    %149 = vector.shape_cast %148 : vector<1x128xf32> to vector<1x128xf32>
    %150 = vector.broadcast %149 : vector<1x128xf32> to vector<16x128xf32>
    %151 = vector.extract_strided_slice %131 {offsets = [32, 0], sizes = [16, 128], strides = [1, 1]} : vector<96x128xf32> to vector<16x128xf32>
    %152 = arith.mulf %150, %151 : vector<16x128xf32>
    %153 = arith.addf %147, %152 : vector<16x128xf32>
    %154 = vector.extract_strided_slice %135 {offsets = [3, 0], sizes = [1, 128], strides = [1, 1]} : vector<8x128xf32> to vector<1x128xf32>
    %155 = vector.shape_cast %154 : vector<1x128xf32> to vector<1x128xf32>
    %156 = vector.broadcast %155 : vector<1x128xf32> to vector<16x128xf32>
    %157 = vector.extract_strided_slice %131 {offsets = [48, 0], sizes = [16, 128], strides = [1, 1]} : vector<96x128xf32> to vector<16x128xf32>
    %158 = arith.mulf %156, %157 : vector<16x128xf32>
    %159 = arith.addf %153, %158 : vector<16x128xf32>
    %160 = vector.extract_strided_slice %135 {offsets = [4, 0], sizes = [1, 128], strides = [1, 1]} : vector<8x128xf32> to vector<1x128xf32>
    %161 = vector.shape_cast %160 : vector<1x128xf32> to vector<1x128xf32>
    %162 = vector.broadcast %161 : vector<1x128xf32> to vector<16x128xf32>
    %163 = vector.extract_strided_slice %131 {offsets = [64, 0], sizes = [16, 128], strides = [1, 1]} : vector<96x128xf32> to vector<16x128xf32>
    %164 = arith.mulf %162, %163 : vector<16x128xf32>
    %165 = arith.addf %159, %164 : vector<16x128xf32>
    %166 = vector.extract_strided_slice %135 {offsets = [5, 0], sizes = [1, 128], strides = [1, 1]} : vector<8x128xf32> to vector<1x128xf32>
    %167 = vector.shape_cast %166 : vector<1x128xf32> to vector<1x128xf32>
    %168 = vector.broadcast %167 : vector<1x128xf32> to vector<16x128xf32>
    %169 = vector.extract_strided_slice %131 {offsets = [80, 0], sizes = [16, 128], strides = [1, 1]} : vector<96x128xf32> to vector<16x128xf32>
    %170 = arith.mulf %168, %169 : vector<16x128xf32>
    %171 = arith.addf %165, %170 : vector<16x128xf32>
    %172 = vector.extract_strided_slice %1 {offsets = [3, 0], sizes = [1, 128], strides = [1, 1]} : vector<8x128xf32> to vector<1x128xf32>
    %173 = vector.shape_cast %172 : vector<1x128xf32> to vector<1x128xf32>
    %174 = vector.broadcast %173 : vector<1x128xf32> to vector<32x128xf32>
    %c0_35 = arith.constant 0 : index
    %c0_36 = arith.constant 0 : index
    %175 = vector.load %arg4[%c0_35, %c0_36] : memref<32x1xf32, #tpu.memory_space<vmem>>, vector<32x1xf32>
    %176 = vector.broadcast %175 : vector<32x1xf32> to vector<32x128xf32>
    %177 = arith.mulf %174, %176 : vector<32x128xf32>
    %c0_37 = arith.constant 0 : index
    %c0_38 = arith.constant 0 : index
    %178 = vector.load %arg5[%c0_37, %c0_38] : memref<32x1xf32, #tpu.memory_space<vmem>>, vector<32x1xf32>
    %179 = vector.broadcast %178 : vector<32x1xf32> to vector<32x128xf32>
    %180 = arith.addf %177, %179 : vector<32x128xf32>
    %cst_39 = arith.constant 0.000000e+00 : f32
    %181 = vector.broadcast %cst_39 : f32 to vector<32x128xf32>
    %182 = arith.maximumf %180, %181 : vector<32x128xf32>
    %c0_40 = arith.constant 0 : index
    %c0_41 = arith.constant 0 : index
    %183 = vector.load %arg6[%c0_40, %c0_41] : memref<96x32xf32, #tpu.memory_space<vmem>>, vector<96x32xf32>
    %cst_42 = arith.constant dense<0.000000e+00> : vector<96x128xf32>
    %184 = tpu.matmul %183, %182, %cst_42 {dimension_numbers = #tpu.dot_dimension_numbers<[1], [0], [0], [1], [0, 0, 1, 1], [], []>, precision = #tpu.contract_precision<fp32>} : vector<96x32xf32>, vector<32x128xf32>, vector<96x128xf32> -> vector<96x128xf32>
    %c0_43 = arith.constant 0 : index
    %c0_44 = arith.constant 0 : index
    %185 = vector.load %arg7[%c0_43, %c0_44] : memref<96x1xf32, #tpu.memory_space<vmem>>, vector<96x1xf32>
    %186 = vector.broadcast %185 : vector<96x1xf32> to vector<96x128xf32>
    %187 = arith.addf %184, %186 : vector<96x128xf32>
    %c9_i32 = arith.constant 9 : i32
    %188 = tpu.dynamic_rotate %0 by %c9_i32 dim 1 : vector<8x128xf32>, i32 -> vector<8x128xf32>
    %189 = vector.extract_strided_slice %2 {offsets = [3, 0], sizes = [1, 128], strides = [1, 1]} : vector<8x128xf32> to vector<1x128xf32>
    %190 = vector.broadcast %189 : vector<1x128xf32> to vector<8x128xf32>
    %191 = arith.mulf %188, %190 : vector<8x128xf32>
    %192 = vector.extract_strided_slice %191 {offsets = [0, 0], sizes = [1, 128], strides = [1, 1]} : vector<8x128xf32> to vector<1x128xf32>
    %193 = vector.shape_cast %192 : vector<1x128xf32> to vector<1x128xf32>
    %194 = vector.broadcast %193 : vector<1x128xf32> to vector<16x128xf32>
    %195 = vector.extract_strided_slice %187 {offsets = [0, 0], sizes = [16, 128], strides = [1, 1]} : vector<96x128xf32> to vector<16x128xf32>
    %196 = arith.mulf %194, %195 : vector<16x128xf32>
    %197 = arith.addf %171, %196 : vector<16x128xf32>
    %198 = vector.extract_strided_slice %191 {offsets = [1, 0], sizes = [1, 128], strides = [1, 1]} : vector<8x128xf32> to vector<1x128xf32>
    %199 = vector.shape_cast %198 : vector<1x128xf32> to vector<1x128xf32>
    %200 = vector.broadcast %199 : vector<1x128xf32> to vector<16x128xf32>
    %201 = vector.extract_strided_slice %187 {offsets = [16, 0], sizes = [16, 128], strides = [1, 1]} : vector<96x128xf32> to vector<16x128xf32>
    %202 = arith.mulf %200, %201 : vector<16x128xf32>
    %203 = arith.addf %197, %202 : vector<16x128xf32>
    %204 = vector.extract_strided_slice %191 {offsets = [2, 0], sizes = [1, 128], strides = [1, 1]} : vector<8x128xf32> to vector<1x128xf32>
    %205 = vector.shape_cast %204 : vector<1x128xf32> to vector<1x128xf32>
    %206 = vector.broadcast %205 : vector<1x128xf32> to vector<16x128xf32>
    %207 = vector.extract_strided_slice %187 {offsets = [32, 0], sizes = [16, 128], strides = [1, 1]} : vector<96x128xf32> to vector<16x128xf32>
    %208 = arith.mulf %206, %207 : vector<16x128xf32>
    %209 = arith.addf %203, %208 : vector<16x128xf32>
    %210 = vector.extract_strided_slice %191 {offsets = [3, 0], sizes = [1, 128], strides = [1, 1]} : vector<8x128xf32> to vector<1x128xf32>
    %211 = vector.shape_cast %210 : vector<1x128xf32> to vector<1x128xf32>
    %212 = vector.broadcast %211 : vector<1x128xf32> to vector<16x128xf32>
    %213 = vector.extract_strided_slice %187 {offsets = [48, 0], sizes = [16, 128], strides = [1, 1]} : vector<96x128xf32> to vector<16x128xf32>
    %214 = arith.mulf %212, %213 : vector<16x128xf32>
    %215 = arith.addf %209, %214 : vector<16x128xf32>
    %216 = vector.extract_strided_slice %191 {offsets = [4, 0], sizes = [1, 128], strides = [1, 1]} : vector<8x128xf32> to vector<1x128xf32>
    %217 = vector.shape_cast %216 : vector<1x128xf32> to vector<1x128xf32>
    %218 = vector.broadcast %217 : vector<1x128xf32> to vector<16x128xf32>
    %219 = vector.extract_strided_slice %187 {offsets = [64, 0], sizes = [16, 128], strides = [1, 1]} : vector<96x128xf32> to vector<16x128xf32>
    %220 = arith.mulf %218, %219 : vector<16x128xf32>
    %221 = arith.addf %215, %220 : vector<16x128xf32>
    %222 = vector.extract_strided_slice %191 {offsets = [5, 0], sizes = [1, 128], strides = [1, 1]} : vector<8x128xf32> to vector<1x128xf32>
    %223 = vector.shape_cast %222 : vector<1x128xf32> to vector<1x128xf32>
    %224 = vector.broadcast %223 : vector<1x128xf32> to vector<16x128xf32>
    %225 = vector.extract_strided_slice %187 {offsets = [80, 0], sizes = [16, 128], strides = [1, 1]} : vector<96x128xf32> to vector<16x128xf32>
    %226 = arith.mulf %224, %225 : vector<16x128xf32>
    %227 = arith.addf %221, %226 : vector<16x128xf32>
    %c0_45 = arith.constant 0 : index
    %c0_46 = arith.constant 0 : index
    %228 = vector.load %arg8[%c0_45, %c0_46] : memref<16x8xf32, #tpu.memory_space<vmem>>, vector<16x8xf32>
    %cst_47 = arith.constant dense<0.000000e+00> : vector<16x128xf32>
    %229 = tpu.matmul %228, %0, %cst_47 {dimension_numbers = #tpu.dot_dimension_numbers<[1], [0], [0], [1], [0, 0, 1, 1], [], []>, precision = #tpu.contract_precision<fp32>} : vector<16x8xf32>, vector<8x128xf32>, vector<16x128xf32> -> vector<16x128xf32>
    %230 = arith.addf %227, %229 : vector<16x128xf32>
    %c0_48 = arith.constant 0 : index
    %c0_49 = arith.constant 0 : index
    %231 = vector.load %arg9[%c0_48, %c0_49] : memref<16x1xf32, #tpu.memory_space<vmem>>, vector<16x1xf32>
    %232 = vector.broadcast %231 : vector<16x1xf32> to vector<16x128xf32>
    %233 = arith.addf %230, %232 : vector<16x128xf32>
    %cst_50 = arith.constant 0.000000e+00 : f32
    %234 = vector.broadcast %cst_50 : f32 to vector<16x128xf32>
    %235 = arith.maximumf %233, %234 : vector<16x128xf32>
    %236 = vector.extract_strided_slice %2 {offsets = [4, 0], sizes = [1, 128], strides = [1, 1]} : vector<8x128xf32> to vector<1x128xf32>
    %237 = vector.broadcast %236 : vector<1x128xf32> to vector<16x128xf32>
    %238 = arith.mulf %235, %237 : vector<16x128xf32>
    %c10_i32 = arith.constant 10 : i32
    %239 = tpu.dynamic_rotate %238 by %c10_i32 dim 1 : vector<16x128xf32>, i32 -> vector<16x128xf32>
    %c9_i32_51 = arith.constant 9 : i32
    %240 = tpu.dynamic_rotate %238 by %c9_i32_51 dim 1 : vector<16x128xf32>, i32 -> vector<16x128xf32>
    %c8_i32 = arith.constant 8 : i32
    %241 = tpu.dynamic_rotate %238 by %c8_i32 dim 1 : vector<16x128xf32>, i32 -> vector<16x128xf32>
    %c1_i32_52 = arith.constant 1 : i32
    %242 = tpu.dynamic_rotate %238 by %c1_i32_52 dim 1 : vector<16x128xf32>, i32 -> vector<16x128xf32>
    %c127_i32_53 = arith.constant 127 : i32
    %243 = tpu.dynamic_rotate %238 by %c127_i32_53 dim 1 : vector<16x128xf32>, i32 -> vector<16x128xf32>
    %c120_i32 = arith.constant 120 : i32
    %244 = tpu.dynamic_rotate %238 by %c120_i32 dim 1 : vector<16x128xf32>, i32 -> vector<16x128xf32>
    %c119_i32_54 = arith.constant 119 : i32
    %245 = tpu.dynamic_rotate %238 by %c119_i32_54 dim 1 : vector<16x128xf32>, i32 -> vector<16x128xf32>
    %c118_i32 = arith.constant 118 : i32
    %246 = tpu.dynamic_rotate %238 by %c118_i32 dim 1 : vector<16x128xf32>, i32 -> vector<16x128xf32>
    %247 = tpu.concatenate %239, %240, %241, %242, %238, %243, %244, %245, %246 in 0 : vector<16x128xf32>, vector<16x128xf32>, vector<16x128xf32>, vector<16x128xf32>, vector<16x128xf32>, vector<16x128xf32>, vector<16x128xf32>, vector<16x128xf32>, vector<16x128xf32> -> vector<144x128xf32>
    %c0_55 = arith.constant 0 : index
    %c0_56 = arith.constant 0 : index
    %248 = vector.load %arg10[%c0_55, %c0_56] : memref<80x144xf32, #tpu.memory_space<vmem>>, vector<16x144xf32>
    %c0_57 = arith.constant 0 : index
    %c0_58 = arith.constant 0 : index
    %249 = vector.load %arg11[%c0_57, %c0_58] : memref<80x1xf32, #tpu.memory_space<vmem>>, vector<16x1xf32>
    %cst_59 = arith.constant dense<0.000000e+00> : vector<16x128xf32>
    %250 = tpu.matmul %248, %247, %cst_59 {dimension_numbers = #tpu.dot_dimension_numbers<[1], [0], [0], [1], [0, 0, 1, 1], [], []>, precision = #tpu.contract_precision<fp32>} : vector<16x144xf32>, vector<144x128xf32>, vector<16x128xf32> -> vector<16x128xf32>
    %251 = vector.broadcast %249 : vector<16x1xf32> to vector<16x128xf32>
    %252 = arith.addf %250, %251 : vector<16x128xf32>
    %cst_60 = arith.constant 0.000000e+00 : f32
    %253 = vector.broadcast %cst_60 : f32 to vector<16x128xf32>
    %254 = arith.maximumf %252, %253 : vector<16x128xf32>
    %255 = vector.broadcast %236 : vector<1x128xf32> to vector<16x128xf32>
    %256 = arith.mulf %254, %255 : vector<16x128xf32>
    %c10_i32_61 = arith.constant 10 : i32
    %257 = tpu.dynamic_rotate %256 by %c10_i32_61 dim 1 : vector<16x128xf32>, i32 -> vector<16x128xf32>
    %c9_i32_62 = arith.constant 9 : i32
    %258 = tpu.dynamic_rotate %256 by %c9_i32_62 dim 1 : vector<16x128xf32>, i32 -> vector<16x128xf32>
    %c8_i32_63 = arith.constant 8 : i32
    %259 = tpu.dynamic_rotate %256 by %c8_i32_63 dim 1 : vector<16x128xf32>, i32 -> vector<16x128xf32>
    %c1_i32_64 = arith.constant 1 : i32
    %260 = tpu.dynamic_rotate %256 by %c1_i32_64 dim 1 : vector<16x128xf32>, i32 -> vector<16x128xf32>
    %c127_i32_65 = arith.constant 127 : i32
    %261 = tpu.dynamic_rotate %256 by %c127_i32_65 dim 1 : vector<16x128xf32>, i32 -> vector<16x128xf32>
    %c120_i32_66 = arith.constant 120 : i32
    %262 = tpu.dynamic_rotate %256 by %c120_i32_66 dim 1 : vector<16x128xf32>, i32 -> vector<16x128xf32>
    %c119_i32_67 = arith.constant 119 : i32
    %263 = tpu.dynamic_rotate %256 by %c119_i32_67 dim 1 : vector<16x128xf32>, i32 -> vector<16x128xf32>
    %c118_i32_68 = arith.constant 118 : i32
    %264 = tpu.dynamic_rotate %256 by %c118_i32_68 dim 1 : vector<16x128xf32>, i32 -> vector<16x128xf32>
    %265 = tpu.concatenate %257, %258, %259, %260, %256, %261, %262, %263, %264 in 0 : vector<16x128xf32>, vector<16x128xf32>, vector<16x128xf32>, vector<16x128xf32>, vector<16x128xf32>, vector<16x128xf32>, vector<16x128xf32>, vector<16x128xf32>, vector<16x128xf32> -> vector<144x128xf32>
    %c16 = arith.constant 16 : index
    %c0_69 = arith.constant 0 : index
    %266 = vector.load %arg10[%c16, %c0_69] : memref<80x144xf32, #tpu.memory_space<vmem>>, vector<16x144xf32>
    %c16_70 = arith.constant 16 : index
    %c0_71 = arith.constant 0 : index
    %267 = vector.load %arg11[%c16_70, %c0_71] : memref<80x1xf32, #tpu.memory_space<vmem>>, vector<16x1xf32>
    %cst_72 = arith.constant dense<0.000000e+00> : vector<16x128xf32>
    %268 = tpu.matmul %266, %265, %cst_72 {dimension_numbers = #tpu.dot_dimension_numbers<[1], [0], [0], [1], [0, 0, 1, 1], [], []>, precision = #tpu.contract_precision<fp32>} : vector<16x144xf32>, vector<144x128xf32>, vector<16x128xf32> -> vector<16x128xf32>
    %269 = vector.broadcast %267 : vector<16x1xf32> to vector<16x128xf32>
    %270 = arith.addf %268, %269 : vector<16x128xf32>
    %cst_73 = arith.constant 0.000000e+00 : f32
    %271 = vector.broadcast %cst_73 : f32 to vector<16x128xf32>
    %272 = arith.maximumf %270, %271 : vector<16x128xf32>
    %273 = vector.broadcast %236 : vector<1x128xf32> to vector<16x128xf32>
    %274 = arith.mulf %272, %273 : vector<16x128xf32>
    %c10_i32_74 = arith.constant 10 : i32
    %275 = tpu.dynamic_rotate %274 by %c10_i32_74 dim 1 : vector<16x128xf32>, i32 -> vector<16x128xf32>
    %c9_i32_75 = arith.constant 9 : i32
    %276 = tpu.dynamic_rotate %274 by %c9_i32_75 dim 1 : vector<16x128xf32>, i32 -> vector<16x128xf32>
    %c8_i32_76 = arith.constant 8 : i32
    %277 = tpu.dynamic_rotate %274 by %c8_i32_76 dim 1 : vector<16x128xf32>, i32 -> vector<16x128xf32>
    %c1_i32_77 = arith.constant 1 : i32
    %278 = tpu.dynamic_rotate %274 by %c1_i32_77 dim 1 : vector<16x128xf32>, i32 -> vector<16x128xf32>
    %c127_i32_78 = arith.constant 127 : i32
    %279 = tpu.dynamic_rotate %274 by %c127_i32_78 dim 1 : vector<16x128xf32>, i32 -> vector<16x128xf32>
    %c120_i32_79 = arith.constant 120 : i32
    %280 = tpu.dynamic_rotate %274 by %c120_i32_79 dim 1 : vector<16x128xf32>, i32 -> vector<16x128xf32>
    %c119_i32_80 = arith.constant 119 : i32
    %281 = tpu.dynamic_rotate %274 by %c119_i32_80 dim 1 : vector<16x128xf32>, i32 -> vector<16x128xf32>
    %c118_i32_81 = arith.constant 118 : i32
    %282 = tpu.dynamic_rotate %274 by %c118_i32_81 dim 1 : vector<16x128xf32>, i32 -> vector<16x128xf32>
    %283 = tpu.concatenate %275, %276, %277, %278, %274, %279, %280, %281, %282 in 0 : vector<16x128xf32>, vector<16x128xf32>, vector<16x128xf32>, vector<16x128xf32>, vector<16x128xf32>, vector<16x128xf32>, vector<16x128xf32>, vector<16x128xf32>, vector<16x128xf32> -> vector<144x128xf32>
    %c32 = arith.constant 32 : index
    %c0_82 = arith.constant 0 : index
    %284 = vector.load %arg10[%c32, %c0_82] : memref<80x144xf32, #tpu.memory_space<vmem>>, vector<16x144xf32>
    %c32_83 = arith.constant 32 : index
    %c0_84 = arith.constant 0 : index
    %285 = vector.load %arg11[%c32_83, %c0_84] : memref<80x1xf32, #tpu.memory_space<vmem>>, vector<16x1xf32>
    %cst_85 = arith.constant dense<0.000000e+00> : vector<16x128xf32>
    %286 = tpu.matmul %284, %283, %cst_85 {dimension_numbers = #tpu.dot_dimension_numbers<[1], [0], [0], [1], [0, 0, 1, 1], [], []>, precision = #tpu.contract_precision<fp32>} : vector<16x144xf32>, vector<144x128xf32>, vector<16x128xf32> -> vector<16x128xf32>
    %287 = vector.broadcast %285 : vector<16x1xf32> to vector<16x128xf32>
    %288 = arith.addf %286, %287 : vector<16x128xf32>
    %cst_86 = arith.constant 0.000000e+00 : f32
    %289 = vector.broadcast %cst_86 : f32 to vector<16x128xf32>
    %290 = arith.maximumf %288, %289 : vector<16x128xf32>
    %291 = vector.broadcast %236 : vector<1x128xf32> to vector<16x128xf32>
    %292 = arith.mulf %290, %291 : vector<16x128xf32>
    %c10_i32_87 = arith.constant 10 : i32
    %293 = tpu.dynamic_rotate %292 by %c10_i32_87 dim 1 : vector<16x128xf32>, i32 -> vector<16x128xf32>
    %c9_i32_88 = arith.constant 9 : i32
    %294 = tpu.dynamic_rotate %292 by %c9_i32_88 dim 1 : vector<16x128xf32>, i32 -> vector<16x128xf32>
    %c8_i32_89 = arith.constant 8 : i32
    %295 = tpu.dynamic_rotate %292 by %c8_i32_89 dim 1 : vector<16x128xf32>, i32 -> vector<16x128xf32>
    %c1_i32_90 = arith.constant 1 : i32
    %296 = tpu.dynamic_rotate %292 by %c1_i32_90 dim 1 : vector<16x128xf32>, i32 -> vector<16x128xf32>
    %c127_i32_91 = arith.constant 127 : i32
    %297 = tpu.dynamic_rotate %292 by %c127_i32_91 dim 1 : vector<16x128xf32>, i32 -> vector<16x128xf32>
    %c120_i32_92 = arith.constant 120 : i32
    %298 = tpu.dynamic_rotate %292 by %c120_i32_92 dim 1 : vector<16x128xf32>, i32 -> vector<16x128xf32>
    %c119_i32_93 = arith.constant 119 : i32
    %299 = tpu.dynamic_rotate %292 by %c119_i32_93 dim 1 : vector<16x128xf32>, i32 -> vector<16x128xf32>
    %c118_i32_94 = arith.constant 118 : i32
    %300 = tpu.dynamic_rotate %292 by %c118_i32_94 dim 1 : vector<16x128xf32>, i32 -> vector<16x128xf32>
    %301 = tpu.concatenate %293, %294, %295, %296, %292, %297, %298, %299, %300 in 0 : vector<16x128xf32>, vector<16x128xf32>, vector<16x128xf32>, vector<16x128xf32>, vector<16x128xf32>, vector<16x128xf32>, vector<16x128xf32>, vector<16x128xf32>, vector<16x128xf32> -> vector<144x128xf32>
    %c48 = arith.constant 48 : index
    %c0_95 = arith.constant 0 : index
    %302 = vector.load %arg10[%c48, %c0_95] : memref<80x144xf32, #tpu.memory_space<vmem>>, vector<16x144xf32>
    %c48_96 = arith.constant 48 : index
    %c0_97 = arith.constant 0 : index
    %303 = vector.load %arg11[%c48_96, %c0_97] : memref<80x1xf32, #tpu.memory_space<vmem>>, vector<16x1xf32>
    %cst_98 = arith.constant dense<0.000000e+00> : vector<16x128xf32>
    %304 = tpu.matmul %302, %301, %cst_98 {dimension_numbers = #tpu.dot_dimension_numbers<[1], [0], [0], [1], [0, 0, 1, 1], [], []>, precision = #tpu.contract_precision<fp32>} : vector<16x144xf32>, vector<144x128xf32>, vector<16x128xf32> -> vector<16x128xf32>
    %305 = vector.broadcast %303 : vector<16x1xf32> to vector<16x128xf32>
    %306 = arith.addf %304, %305 : vector<16x128xf32>
    %cst_99 = arith.constant 0.000000e+00 : f32
    %307 = vector.broadcast %cst_99 : f32 to vector<16x128xf32>
    %308 = arith.maximumf %306, %307 : vector<16x128xf32>
    %309 = vector.broadcast %236 : vector<1x128xf32> to vector<16x128xf32>
    %310 = arith.mulf %308, %309 : vector<16x128xf32>
    %c10_i32_100 = arith.constant 10 : i32
    %311 = tpu.dynamic_rotate %310 by %c10_i32_100 dim 1 : vector<16x128xf32>, i32 -> vector<16x128xf32>
    %c9_i32_101 = arith.constant 9 : i32
    %312 = tpu.dynamic_rotate %310 by %c9_i32_101 dim 1 : vector<16x128xf32>, i32 -> vector<16x128xf32>
    %c8_i32_102 = arith.constant 8 : i32
    %313 = tpu.dynamic_rotate %310 by %c8_i32_102 dim 1 : vector<16x128xf32>, i32 -> vector<16x128xf32>
    %c1_i32_103 = arith.constant 1 : i32
    %314 = tpu.dynamic_rotate %310 by %c1_i32_103 dim 1 : vector<16x128xf32>, i32 -> vector<16x128xf32>
    %c127_i32_104 = arith.constant 127 : i32
    %315 = tpu.dynamic_rotate %310 by %c127_i32_104 dim 1 : vector<16x128xf32>, i32 -> vector<16x128xf32>
    %c120_i32_105 = arith.constant 120 : i32
    %316 = tpu.dynamic_rotate %310 by %c120_i32_105 dim 1 : vector<16x128xf32>, i32 -> vector<16x128xf32>
    %c119_i32_106 = arith.constant 119 : i32
    %317 = tpu.dynamic_rotate %310 by %c119_i32_106 dim 1 : vector<16x128xf32>, i32 -> vector<16x128xf32>
    %c118_i32_107 = arith.constant 118 : i32
    %318 = tpu.dynamic_rotate %310 by %c118_i32_107 dim 1 : vector<16x128xf32>, i32 -> vector<16x128xf32>
    %319 = tpu.concatenate %311, %312, %313, %314, %310, %315, %316, %317, %318 in 0 : vector<16x128xf32>, vector<16x128xf32>, vector<16x128xf32>, vector<16x128xf32>, vector<16x128xf32>, vector<16x128xf32>, vector<16x128xf32>, vector<16x128xf32>, vector<16x128xf32> -> vector<144x128xf32>
    %c64 = arith.constant 64 : index
    %c0_108 = arith.constant 0 : index
    %320 = vector.load %arg10[%c64, %c0_108] : memref<80x144xf32, #tpu.memory_space<vmem>>, vector<16x144xf32>
    %c64_109 = arith.constant 64 : index
    %c0_110 = arith.constant 0 : index
    %321 = vector.load %arg11[%c64_109, %c0_110] : memref<80x1xf32, #tpu.memory_space<vmem>>, vector<16x1xf32>
    %cst_111 = arith.constant dense<0.000000e+00> : vector<16x128xf32>
    %322 = tpu.matmul %320, %319, %cst_111 {dimension_numbers = #tpu.dot_dimension_numbers<[1], [0], [0], [1], [0, 0, 1, 1], [], []>, precision = #tpu.contract_precision<fp32>} : vector<16x144xf32>, vector<144x128xf32>, vector<16x128xf32> -> vector<16x128xf32>
    %323 = vector.broadcast %321 : vector<16x1xf32> to vector<16x128xf32>
    %324 = arith.addf %322, %323 : vector<16x128xf32>
    %cst_112 = arith.constant 0.000000e+00 : f32
    %325 = vector.broadcast %cst_112 : f32 to vector<16x128xf32>
    %326 = arith.maximumf %324, %325 : vector<16x128xf32>
    %327 = vector.broadcast %236 : vector<1x128xf32> to vector<16x128xf32>
    %328 = arith.mulf %326, %327 : vector<16x128xf32>
    %c10_i32_113 = arith.constant 10 : i32
    %329 = tpu.dynamic_rotate %328 by %c10_i32_113 dim 1 : vector<16x128xf32>, i32 -> vector<16x128xf32>
    %c9_i32_114 = arith.constant 9 : i32
    %330 = tpu.dynamic_rotate %328 by %c9_i32_114 dim 1 : vector<16x128xf32>, i32 -> vector<16x128xf32>
    %c8_i32_115 = arith.constant 8 : i32
    %331 = tpu.dynamic_rotate %328 by %c8_i32_115 dim 1 : vector<16x128xf32>, i32 -> vector<16x128xf32>
    %c1_i32_116 = arith.constant 1 : i32
    %332 = tpu.dynamic_rotate %328 by %c1_i32_116 dim 1 : vector<16x128xf32>, i32 -> vector<16x128xf32>
    %c127_i32_117 = arith.constant 127 : i32
    %333 = tpu.dynamic_rotate %328 by %c127_i32_117 dim 1 : vector<16x128xf32>, i32 -> vector<16x128xf32>
    %c120_i32_118 = arith.constant 120 : i32
    %334 = tpu.dynamic_rotate %328 by %c120_i32_118 dim 1 : vector<16x128xf32>, i32 -> vector<16x128xf32>
    %c119_i32_119 = arith.constant 119 : i32
    %335 = tpu.dynamic_rotate %328 by %c119_i32_119 dim 1 : vector<16x128xf32>, i32 -> vector<16x128xf32>
    %c118_i32_120 = arith.constant 118 : i32
    %336 = tpu.dynamic_rotate %328 by %c118_i32_120 dim 1 : vector<16x128xf32>, i32 -> vector<16x128xf32>
    %337 = tpu.concatenate %329, %330, %331, %332, %328, %333, %334, %335, %336 in 0 : vector<16x128xf32>, vector<16x128xf32>, vector<16x128xf32>, vector<16x128xf32>, vector<16x128xf32>, vector<16x128xf32>, vector<16x128xf32>, vector<16x128xf32>, vector<16x128xf32> -> vector<144x128xf32>
    %c0_121 = arith.constant 0 : index
    %c0_122 = arith.constant 0 : index
    %338 = vector.load %arg12[%c0_121, %c0_122] : memref<8x144xf32, #tpu.memory_space<vmem>>, vector<8x144xf32>
    %cst_123 = arith.constant dense<0.000000e+00> : vector<8x128xf32>
    %339 = tpu.matmul %338, %337, %cst_123 {dimension_numbers = #tpu.dot_dimension_numbers<[1], [0], [0], [1], [0, 0, 1, 1], [], []>, precision = #tpu.contract_precision<fp32>} : vector<8x144xf32>, vector<144x128xf32>, vector<8x128xf32> -> vector<8x128xf32>
    %c0_124 = arith.constant 0 : index
    %c0_125 = arith.constant 0 : index
    %340 = vector.load %arg13[%c0_124, %c0_125] : memref<8x1xf32, #tpu.memory_space<vmem>>, vector<8x1xf32>
    %341 = vector.broadcast %340 : vector<8x1xf32> to vector<8x128xf32>
    %342 = arith.addf %339, %341 : vector<8x128xf32>
    %c0_126 = arith.constant 0 : index
    %c0_127 = arith.constant 0 : index
    %343 = vector.load %arg14[%c0_126, %c0_127] : memref<8x128xf32, #tpu.memory_space<vmem>>, vector<8x128xf32>
    tpu.vector_store %arg14[%c0_126, %c0_127], %342 {strides = array<i32>} : memref<8x128xf32, #tpu.memory_space<vmem>>, vector<8x128xf32>,
    return
  }
  func.func @transform_0(%arg0: i32) -> (i32, i32) {
    %c0_i32 = arith.constant 0 : i32
    %c0_i32_0 = arith.constant 0 : i32
    return %arg0, %c0_i32 : i32, i32
  }
  func.func @transform_1(%arg0: i32) -> (i32, i32) {
    %c0_i32 = arith.constant 0 : i32
    %c0_i32_0 = arith.constant 0 : i32
    return %arg0, %c0_i32 : i32, i32
  }
  func.func @transform_2(%arg0: i32) -> (i32, i32) {
    %c0_i32 = arith.constant 0 : i32
    %c0_i32_0 = arith.constant 0 : i32
    %c0_i32_1 = arith.constant 0 : i32
    return %c0_i32, %c0_i32_0 : i32, i32
  }
  func.func @transform_3(%arg0: i32) -> (i32, i32) {
    %c0_i32 = arith.constant 0 : i32
    %c0_i32_0 = arith.constant 0 : i32
    %c0_i32_1 = arith.constant 0 : i32
    return %c0_i32, %c0_i32_0 : i32, i32
  }
  func.func @transform_4(%arg0: i32) -> (i32, i32) {
    %c0_i32 = arith.constant 0 : i32
    %c0_i32_0 = arith.constant 0 : i32
    %c0_i32_1 = arith.constant 0 : i32
    return %c0_i32, %c0_i32_0 : i32, i32
  }
  func.func @transform_5(%arg0: i32) -> (i32, i32) {
    %c0_i32 = arith.constant 0 : i32
    %c0_i32_0 = arith.constant 0 : i32
    %c0_i32_1 = arith.constant 0 : i32
    return %c0_i32, %c0_i32_0 : i32, i32
  }
  func.func @transform_6(%arg0: i32) -> (i32, i32) {
    %c0_i32 = arith.constant 0 : i32
    %c0_i32_0 = arith.constant 0 : i32
    %c0_i32_1 = arith.constant 0 : i32
    return %c0_i32, %c0_i32_0 : i32, i32
  }
  func.func @transform_7(%arg0: i32) -> (i32, i32) {
    %c0_i32 = arith.constant 0 : i32
    %c0_i32_0 = arith.constant 0 : i32
    %c0_i32_1 = arith.constant 0 : i32
    return %c0_i32, %c0_i32_0 : i32, i32
  }
  func.func @transform_8(%arg0: i32) -> (i32, i32) {
    %c0_i32 = arith.constant 0 : i32
    %c0_i32_0 = arith.constant 0 : i32
    %c0_i32_1 = arith.constant 0 : i32
    return %c0_i32, %c0_i32_0 : i32, i32
  }
  func.func @transform_9(%arg0: i32) -> (i32, i32) {
    %c0_i32 = arith.constant 0 : i32
    %c0_i32_0 = arith.constant 0 : i32
    %c0_i32_1 = arith.constant 0 : i32
    return %c0_i32, %c0_i32_0 : i32, i32
  }
  func.func @transform_10(%arg0: i32) -> (i32, i32) {
    %c0_i32 = arith.constant 0 : i32
    %c0_i32_0 = arith.constant 0 : i32
    %c0_i32_1 = arith.constant 0 : i32
    return %c0_i32, %c0_i32_0 : i32, i32
  }
  func.func @transform_11(%arg0: i32) -> (i32, i32) {
    %c0_i32 = arith.constant 0 : i32
    %c0_i32_0 = arith.constant 0 : i32
    %c0_i32_1 = arith.constant 0 : i32
    return %c0_i32, %c0_i32_0 : i32, i32
  }
  func.func @transform_12(%arg0: i32) -> (i32, i32) {
    %c0_i32 = arith.constant 0 : i32
    %c0_i32_0 = arith.constant 0 : i32
    %c0_i32_1 = arith.constant 0 : i32
    return %c0_i32, %c0_i32_0 : i32, i32
  }
  func.func @transform_13(%arg0: i32) -> (i32, i32) {
    %c0_i32 = arith.constant 0 : i32
    %c0_i32_0 = arith.constant 0 : i32
    return %arg0, %c0_i32 : i32, i32
  }
}

</mosaic_0001>

<llo_original>
// kernel: forward.1
$region0: #{forward.1}
  #allocation0 [shape = 'u32[]', space=smem, size = 0x4, offset = 0x4, fixed_abs, tag = 'smem constant byte address 0x4 - core index']
  #allocation1 [shape = 'u32[144,128]{1,0:T(1,128)}', space=vmem, size = 0x12000, scoped, tag = 'internal scratch']
  %s0 = inlined_call_operand.vmem [shape: f32[16,128], index: 0, kind: input, shape index: {}]
  %s1 = inlined_call_operand.vmem [shape: f32[16,128], index: 1, kind: input, shape index: {}]
  %s2 = inlined_call_operand.vmem [shape: f32[8,128], index: 2, kind: input, shape index: {}]
  %s3 = inlined_call_operand.vmem [shape: f32[32,1], index: 3, kind: input, shape index: {}]
  %s4 = inlined_call_operand.vmem [shape: f32[32,1], index: 4, kind: input, shape index: {}]
  %s5 = inlined_call_operand.vmem [shape: f32[96,32], index: 5, kind: input, shape index: {}]
  %s6 = inlined_call_operand.vmem [shape: f32[96,1], index: 6, kind: input, shape index: {}]
  %s7 = inlined_call_operand.vmem [shape: f32[16,8], index: 7, kind: input, shape index: {}]
  %s8 = inlined_call_operand.vmem [shape: f32[16,1], index: 8, kind: input, shape index: {}]
  %s9 = inlined_call_operand.vmem [shape: f32[80,144], index: 9, kind: input, shape index: {}]
  %s10 = inlined_call_operand.vmem [shape: f32[80,1], index: 10, kind: input, shape index: {}]
  %s11 = inlined_call_operand.vmem [shape: f32[8,144], index: 11, kind: input, shape index: {}]
  %s12 = inlined_call_operand.vmem [shape: f32[8,1], index: 12, kind: input, shape index: {}]
  %s13 = inlined_call_operand.vmem [shape: f32[16,128], index: 13, kind: output, shape index: {}]
  %s14 = sld [smem:[#allocation0]]
  $region85: #{forward.1} parent=0
    _
  %s16 = ssub.s32 1, %s14
  %s17 = scalar_select 0, %s16, %s14
  loop: start=0, step=1, limit=4
  $region2: #{forward.1} parent=0 // loop_pre_header
    _
  $region3: #{forward.1} parent=0 // loop_header
    %s19 = sphi 0, %s23
    %p20 = scmp.ge.s32.totalorder %s19, 4
    %s29 = sphi 0, %s31
    %s32 = sphi 0, %s29
    %s33 = sphi 0, %s32
    %s49 = sphi 0, %s33
    %s55 = sphi 0, %s57
    %s58 = sphi 0, %s55
    %s59 = sphi 0, %s58
    %s75 = sphi 0, %s59
    %s79 = sphi 0, %s79
    %s81 = sphi 0, %s79
    %s82 = sphi 0, %s81
    %s96 = sphi 0, %s82
    %s100 = sphi 0, %s100
    %s102 = sphi 0, %s100
    %s103 = sphi 0, %s102
    %s117 = sphi 0, %s103
    %s121 = sphi 0, %s121
    %s123 = sphi 0, %s121
    %s124 = sphi 0, %s123
    %s138 = sphi 0, %s124
    %s142 = sphi 0, %s142
    %s144 = sphi 0, %s142
    %s145 = sphi 0, %s144
    %s159 = sphi 0, %s145
    %s163 = sphi 0, %s163
    %s165 = sphi 0, %s163
    %s166 = sphi 0, %s165
    %s180 = sphi 0, %s166
    %s184 = sphi 0, %s184
    %s186 = sphi 0, %s184
    %s187 = sphi 0, %s186
    %s201 = sphi 0, %s187
    %s205 = sphi 0, %s205
    %s207 = sphi 0, %s205
    %s208 = sphi 0, %s207
    %s222 = sphi 0, %s208
    %s226 = sphi 0, %s226
    %s228 = sphi 0, %s226
    %s229 = sphi 0, %s228
    %s243 = sphi 0, %s229
    %s247 = sphi 0, %s247
    %s249 = sphi 0, %s247
    %s250 = sphi 0, %s249
    %s264 = sphi 0, %s250
    %s268 = sphi 0, %s268
    %s270 = sphi 0, %s268
    %s271 = sphi 0, %s270
    %s285 = sphi 0, %s271
    %s289 = sphi 0, %s289
    %s291 = sphi 0, %s289
    %s292 = sphi 0, %s291
    %s306 = sphi 0, %s292
    %s312 = sphi 0, %s314
    %s315 = sphi 0, %s312
    %s316 = sphi 0, %s315
    %s332 = sphi 0, %s316
  $region4: #{forward.1} parent=0 // loop_header_branch
    %22 = sbr.rel (%p20) target = $region8
  $region5: #{forward.1} parent=0 // loop_body
    %s24 = ssub.s32 %s19, 1
    %s25 = ssub.s32 %s19, 2
    %s26 = sadd.s32 %s19, 1
    %s27 = ssub.s32 %s19, %s26
    %p28 = scmp.eq.s32.totalorder %s27, 0
    %s30 = sadd.s32 %s29, 1
    %s31 = scalar_select %p28, %s29, %s30
    %p34 = pneg %p28
    %p35 = scmp.eq.s32.totalorder %s19, 1
    %p36 = por %p34, %p35
    %p37 = scmp.ne.s32.totalorder %s29, %s32
    %p38 = scmp.eq.s32.totalorder %s19, 0
    %p39 = por %p37, %p38
    %p40 = scmp.ne.s32.totalorder %s29, %s32
    %p41 = scmp.eq.s32.totalorder %s24, 1
    %p42 = por %p40, %p41
    %p43 = scmp.ne.s32.totalorder %s32, %s33
    %p44 = scmp.eq.s32.totalorder %s24, 0
    %p45 = por %p43, %p44
    %p46 = scmp.ne.s32.totalorder %s32, %s33
    %p47 = scmp.eq.s32.totalorder %s25, 1
    %p48 = por %p46, %p47
    %p50 = scmp.ne.s32.totalorder %s33, %s49
    %p51 = scmp.eq.s32.totalorder %s25, 0
    %p52 = por %p50, %p51
    %s53 = ssub.s32 %s19, %s26
    %p54 = scmp.eq.s32.totalorder %s53, 0
    %s56 = sadd.s32 %s55, 1
    %s57 = scalar_select %p54, %s55, %s56
    %p60 = pneg %p54
    %p61 = scmp.eq.s32.totalorder %s19, 1
    %p62 = por %p60, %p61
    %p63 = scmp.ne.s32.totalorder %s55, %s58
    %p64 = scmp.eq.s32.totalorder %s19, 0
    %p65 = por %p63, %p64
    %p66 = scmp.ne.s32.totalorder %s55, %s58
    %p67 = scmp.eq.s32.totalorder %s24, 1
    %p68 = por %p66, %p67
    %p69 = scmp.ne.s32.totalorder %s58, %s59
    %p70 = scmp.eq.s32.totalorder %s24, 0
    %p71 = por %p69, %p70
    %p72 = scmp.ne.s32.totalorder %s58, %s59
    %p73 = scmp.eq.s32.totalorder %s25, 1
    %p74 = por %p72, %p73
    %p76 = scmp.ne.s32.totalorder %s59, %s75
    %p77 = scmp.eq.s32.totalorder %s25, 0
    %p78 = por %p76, %p77
    %s80 = sadd.s32 %s79, 1
    %p83 = scmp.eq.s32.totalorder %s19, 1
    %p84 = scmp.ne.s32.totalorder %s79, %s81
    %p85 = scmp.eq.s32.totalorder %s19, 0
    %p86 = por %p84, %p85
    %p87 = scmp.ne.s32.totalorder %s79, %s81
    %p88 = scmp.eq.s32.totalorder %s24, 1
    %p89 = por %p87, %p88
    %p90 = scmp.ne.s32.totalorder %s81, %s82
    %p91 = scmp.eq.s32.totalorder %s24, 0
    %p92 = por %p90, %p91
    %p93 = scmp.ne.s32.totalorder %s81, %s82
    %p94 = scmp.eq.s32.totalorder %s25, 1
    %p95 = por %p93, %p94
    %p97 = scmp.ne.s32.totalorder %s82, %s96
    %p98 = scmp.eq.s32.totalorder %s25, 0
    %p99 = por %p97, %p98
    %s101 = sadd.s32 %s100, 1
    %p104 = scmp.eq.s32.totalorder %s19, 1
    %p105 = scmp.ne.s32.totalorder %s100, %s102
    %p106 = scmp.eq.s32.totalorder %s19, 0
    %p107 = por %p105, %p106
    %p108 = scmp.ne.s32.totalorder %s100, %s102
    %p109 = scmp.eq.s32.totalorder %s24, 1
    %p110 = por %p108, %p109
    %p111 = scmp.ne.s32.totalorder %s102, %s103
    %p112 = scmp.eq.s32.totalorder %s24, 0
    %p113 = por %p111, %p112
    %p114 = scmp.ne.s32.totalorder %s102, %s103
    %p115 = scmp.eq.s32.totalorder %s25, 1
    %p116 = por %p114, %p115
    %p118 = scmp.ne.s32.totalorder %s103, %s117
    %p119 = scmp.eq.s32.totalorder %s25, 0
    %p120 = por %p118, %p119
    %s122 = sadd.s32 %s121, 1
    %p125 = scmp.eq.s32.totalorder %s19, 1
    %p126 = scmp.ne.s32.totalorder %s121, %s123
    %p127 = scmp.eq.s32.totalorder %s19, 0
    %p128 = por %p126, %p127
    %p129 = scmp.ne.s32.totalorder %s121, %s123
    %p130 = scmp.eq.s32.totalorder %s24, 1
    %p131 = por %p129, %p130
    %p132 = scmp.ne.s32.totalorder %s123, %s124
    %p133 = scmp.eq.s32.totalorder %s24, 0
    %p134 = por %p132, %p133
    %p135 = scmp.ne.s32.totalorder %s123, %s124
    %p136 = scmp.eq.s32.totalorder %s25, 1
    %p137 = por %p135, %p136
    %p139 = scmp.ne.s32.totalorder %s124, %s138
    %p140 = scmp.eq.s32.totalorder %s25, 0
    %p141 = por %p139, %p140
    %s143 = sadd.s32 %s142, 1
    %p146 = scmp.eq.s32.totalorder %s19, 1
    %p147 = scmp.ne.s32.totalorder %s142, %s144
    %p148 = scmp.eq.s32.totalorder %s19, 0
    %p149 = por %p147, %p148
    %p150 = scmp.ne.s32.totalorder %s142, %s144
    %p151 = scmp.eq.s32.totalorder %s24, 1
    %p152 = por %p150, %p151
    %p153 = scmp.ne.s32.totalorder %s144, %s145
    %p154 = scmp.eq.s32.totalorder %s24, 0
    %p155 = por %p153, %p154
    %p156 = scmp.ne.s32.totalorder %s144, %s145
    %p157 = scmp.eq.s32.totalorder %s25, 1
    %p158 = por %p156, %p157
    %p160 = scmp.ne.s32.totalorder %s145, %s159
    %p161 = scmp.eq.s32.totalorder %s25, 0
    %p162 = por %p160, %p161
    %s164 = sadd.s32 %s163, 1
    %p167 = scmp.eq.s32.totalorder %s19, 1
    %p168 = scmp.ne.s32.totalorder %s163, %s165
    %p169 = scmp.eq.s32.totalorder %s19, 0
    %p170 = por %p168, %p169
    %p171 = scmp.ne.s32.totalorder %s163, %s165
    %p172 = scmp.eq.s32.totalorder %s24, 1
    %p173 = por %p171, %p172
    %p174 = scmp.ne.s32.totalorder %s165, %s166
    %p175 = scmp.eq.s32.totalorder %s24, 0
    %p176 = por %p174, %p175
    %p177 = scmp.ne.s32.totalorder %s165, %s166
    %p178 = scmp.eq.s32.totalorder %s25, 1
    %p179 = por %p177, %p178
    %p181 = scmp.ne.s32.totalorder %s166, %s180
    %p182 = scmp.eq.s32.totalorder %s25, 0
    %p183 = por %p181, %p182
    %s185 = sadd.s32 %s184, 1
    %p188 = scmp.eq.s32.totalorder %s19, 1
    %p189 = scmp.ne.s32.totalorder %s184, %s186
    %p190 = scmp.eq.s32.totalorder %s19, 0
    %p191 = por %p189, %p190
    %p192 = scmp.ne.s32.totalorder %s184, %s186
    %p193 = scmp.eq.s32.totalorder %s24, 1
    %p194 = por %p192, %p193
    %p195 = scmp.ne.s32.totalorder %s186, %s187
    %p196 = scmp.eq.s32.totalorder %s24, 0
    %p197 = por %p195, %p196
    %p198 = scmp.ne.s32.totalorder %s186, %s187
    %p199 = scmp.eq.s32.totalorder %s25, 1
    %p200 = por %p198, %p199
    %p202 = scmp.ne.s32.totalorder %s187, %s201
    %p203 = scmp.eq.s32.totalorder %s25, 0
    %p204 = por %p202, %p203
    %s206 = sadd.s32 %s205, 1
    %p209 = scmp.eq.s32.totalorder %s19, 1
    %p210 = scmp.ne.s32.totalorder %s205, %s207
    %p211 = scmp.eq.s32.totalorder %s19, 0
    %p212 = por %p210, %p211
    %p213 = scmp.ne.s32.totalorder %s205, %s207
    %p214 = scmp.eq.s32.totalorder %s24, 1
    %p215 = por %p213, %p214
    %p216 = scmp.ne.s32.totalorder %s207, %s208
    %p217 = scmp.eq.s32.totalorder %s24, 0
    %p218 = por %p216, %p217
    %p219 = scmp.ne.s32.totalorder %s207, %s208
    %p220 = scmp.eq.s32.totalorder %s25, 1
    %p221 = por %p219, %p220
    %p223 = scmp.ne.s32.totalorder %s208, %s222
    %p224 = scmp.eq.s32.totalorder %s25, 0
    %p225 = por %p223, %p224
    %s227 = sadd.s32 %s226, 1
    %p230 = scmp.eq.s32.totalorder %s19, 1
    %p231 = scmp.ne.s32.totalorder %s226, %s228
    %p232 = scmp.eq.s32.totalorder %s19, 0
    %p233 = por %p231, %p232
    %p234 = scmp.ne.s32.totalorder %s226, %s228
    %p235 = scmp.eq.s32.totalorder %s24, 1
    %p236 = por %p234, %p235
    %p237 = scmp.ne.s32.totalorder %s228, %s229
    %p238 = scmp.eq.s32.totalorder %s24, 0
    %p239 = por %p237, %p238
    %p240 = scmp.ne.s32.totalorder %s228, %s229
    %p241 = scmp.eq.s32.totalorder %s25, 1
    %p242 = por %p240, %p241
    %p244 = scmp.ne.s32.totalorder %s229, %s243
    %p245 = scmp.eq.s32.totalorder %s25, 0
    %p246 = por %p244, %p245
    %s248 = sadd.s32 %s247, 1
    %p251 = scmp.eq.s32.totalorder %s19, 1
    %p252 = scmp.ne.s32.totalorder %s247, %s249
    %p253 = scmp.eq.s32.totalorder %s19, 0
    %p254 = por %p252, %p253
    %p255 = scmp.ne.s32.totalorder %s247, %s249
    %p256 = scmp.eq.s32.totalorder %s24, 1
    %p257 = por %p255, %p256
    %p258 = scmp.ne.s32.totalorder %s249, %s250
    %p259 = scmp.eq.s32.totalorder %s24, 0
    %p260 = por %p258, %p259
    %p261 = scmp.ne.s32.totalorder %s249, %s250
    %p262 = scmp.eq.s32.totalorder %s25, 1
    %p263 = por %p261, %p262
    %p265 = scmp.ne.s32.totalorder %s250, %s264
    %p266 = scmp.eq.s32.totalorder %s25, 0
    %p267 = por %p265, %p266
    %s269 = sadd.s32 %s268, 1
    %p272 = scmp.eq.s32.totalorder %s19, 1
    %p273 = scmp.ne.s32.totalorder %s268, %s270
    %p274 = scmp.eq.s32.totalorder %s19, 0
    %p275 = por %p273, %p274
    %p276 = scmp.ne.s32.totalorder %s268, %s270
    %p277 = scmp.eq.s32.totalorder %s24, 1
    %p278 = por %p276, %p277
    %p279 = scmp.ne.s32.totalorder %s270, %s271
    %p280 = scmp.eq.s32.totalorder %s24, 0
    %p281 = por %p279, %p280
    %p282 = scmp.ne.s32.totalorder %s270, %s271
    %p283 = scmp.eq.s32.totalorder %s25, 1
    %p284 = por %p282, %p283
    %p286 = scmp.ne.s32.totalorder %s271, %s285
    %p287 = scmp.eq.s32.totalorder %s25, 0
    %p288 = por %p286, %p287
    %s290 = sadd.s32 %s289, 1
    %p293 = scmp.eq.s32.totalorder %s19, 1
    %p294 = scmp.ne.s32.totalorder %s289, %s291
    %p295 = scmp.eq.s32.totalorder %s19, 0
    %p296 = por %p294, %p295
    %p297 = scmp.ne.s32.totalorder %s289, %s291
    %p298 = scmp.eq.s32.totalorder %s24, 1
    %p299 = por %p297, %p298
    %p300 = scmp.ne.s32.totalorder %s291, %s292
    %p301 = scmp.eq.s32.totalorder %s24, 0
    %p302 = por %p300, %p301
    %p303 = scmp.ne.s32.totalorder %s291, %s292
    %p304 = scmp.eq.s32.totalorder %s25, 1
    %p305 = por %p303, %p304
    %p307 = scmp.ne.s32.totalorder %s292, %s306
    %p308 = scmp.eq.s32.totalorder %s25, 0
    %p309 = por %p307, %p308
    %s310 = ssub.s32 %s19, %s26
    %p311 = scmp.eq.s32.totalorder %s310, 0
    %s313 = sadd.s32 %s312, 1
    %s314 = scalar_select %p311, %s312, %s313
    %p317 = pneg %p311
    %p318 = scmp.eq.s32.totalorder %s19, 1
    %p319 = por %p317, %p318
    %p320 = scmp.ne.s32.totalorder %s312, %s315
    %p321 = scmp.eq.s32.totalorder %s19, 0
    %p322 = por %p320, %p321
    %p323 = scmp.ne.s32.totalorder %s312, %s315
    %p324 = scmp.eq.s32.totalorder %s24, 1
    %p325 = por %p323, %p324
    %p326 = scmp.ne.s32.totalorder %s315, %s316
    %p327 = scmp.eq.s32.totalorder %s24, 0
    %p328 = por %p326, %p327
    %p329 = scmp.ne.s32.totalorder %s315, %s316
    %p330 = scmp.eq.s32.totalorder %s25, 1
    %p331 = por %p329, %p330
    %p333 = scmp.ne.s32.totalorder %s316, %s332
    %p334 = scmp.eq.s32.totalorder %s25, 0
    %p335 = por %p333, %p334
    %p336 = scmp.le.s32.totalorder 1, %s19
    %p337 = scmp.lt.s32.totalorder %s19, 3
    %p338 = pnand %p336, %p337
    %p339 = pneg %p338
    // Predicated region
    $region9: #{forward.1} parent=5 // pred_check
      _
    $region10: #{forward.1} parent=5 // pred_check_branch
      %341 = sbr.rel (%p338) target = $region12
    $region11: #{forward.1} parent=5 // pred_region
      %s342 = ssub.s32 %s19, 1
      // Predicated region
      $region13: #{forward.1} parent=11 // pred_check
        %p343 = pneg %p92
      $region14: #{forward.1} parent=11 // pred_check_branch
        %345 = sbr.rel (%p343) target = $region16
      $region15: #{forward.1} parent=11 // pred_region
        _
      $region16: #{forward.1} parent=11 // pred_fallthru
        _
      // Predicated region
      $region17: #{forward.1} parent=11 // pred_check
        %p346 = pneg %p113
      $region18: #{forward.1} parent=11 // pred_check_branch
        %348 = sbr.rel (%p346) target = $region20
      $region19: #{forward.1} parent=11 // pred_region
        _
      $region20: #{forward.1} parent=11 // pred_fallthru
        _
      // Predicated region
      $region21: #{forward.1} parent=11 // pred_check
        %p349 = pneg %p134
      $region22: #{forward.1} parent=11 // pred_check_branch
        %351 = sbr.rel (%p349) target = $region24
      $region23: #{forward.1} parent=11 // pred_region
        _
      $region24: #{forward.1} parent=11 // pred_fallthru
        _
      // Predicated region
      $region25: #{forward.1} parent=11 // pred_check
        %p352 = pneg %p155
      $region26: #{forward.1} parent=11 // pred_check_branch
        %354 = sbr.rel (%p352) target = $region28
      $region27: #{forward.1} parent=11 // pred_region
        _
      $region28: #{forward.1} parent=11 // pred_fallthru
        _
      // Predicated region
      $region29: #{forward.1} parent=11 // pred_check
        %p355 = pneg %p176
      $region30: #{forward.1} parent=11 // pred_check_branch
        %357 = sbr.rel (%p355) target = $region32
      $region31: #{forward.1} parent=11 // pred_region
        _
      $region32: #{forward.1} parent=11 // pred_fallthru
        _
      // Predicated region
      $region33: #{forward.1} parent=11 // pred_check
        %p358 = pneg %p197
      $region34: #{forward.1} parent=11 // pred_check_branch
        %360 = sbr.rel (%p358) target = $region36
      $region35: #{forward.1} parent=11 // pred_region
        _
      $region36: #{forward.1} parent=11 // pred_fallthru
        _
      // Predicated region
      $region37: #{forward.1} parent=11 // pred_check
        %p361 = pneg %p218
      $region38: #{forward.1} parent=11 // pred_check_branch
        %363 = sbr.rel (%p361) target = $region40
      $region39: #{forward.1} parent=11 // pred_region
        _
      $region40: #{forward.1} parent=11 // pred_fallthru
        _
      // Predicated region
      $region41: #{forward.1} parent=11 // pred_check
        %p364 = pneg %p239
      $region42: #{forward.1} parent=11 // pred_check_branch
        %366 = sbr.rel (%p364) target = $region44
      $region43: #{forward.1} parent=11 // pred_region
        _
      $region44: #{forward.1} parent=11 // pred_fallthru
        _
      // Predicated region
      $region45: #{forward.1} parent=11 // pred_check
        %p367 = pneg %p260
      $region46: #{forward.1} parent=11 // pred_check_branch
        %369 = sbr.rel (%p367) target = $region48
      $region47: #{forward.1} parent=11 // pred_region
        _
      $region48: #{forward.1} parent=11 // pred_fallthru
        _
      // Predicated region
      $region49: #{forward.1} parent=11 // pred_check
        %p370 = pneg %p281
      $region50: #{forward.1} parent=11 // pred_check_branch
        %372 = sbr.rel (%p370) target = $region52
      $region51: #{forward.1} parent=11 // pred_region
        _
      $region52: #{forward.1} parent=11 // pred_fallthru
        _
      // Predicated region
      $region53: #{forward.1} parent=11 // pred_check
        %p373 = pneg %p302
      $region54: #{forward.1} parent=11 // pred_check_branch
        %375 = sbr.rel (%p373) target = $region56
      $region55: #{forward.1} parent=11 // pred_region
        _
      $region56: #{forward.1} parent=11 // pred_fallthru
        _
    $region12: #{forward.1} parent=5 // pred_fallthru
      _
    %p376 = scmp.lt.s32.totalorder %s19, 2
    // Predicated region
    $region57: #{forward.1} parent=5 // pred_check
      %p377 = pneg %p376
    $region58: #{forward.1} parent=5 // pred_check_branch
      %379 = sbr.rel (%p377) target = $region60
    $region59: #{forward.1} parent=5 // pred_region
      // Predicated region
      $region61: #{forward.1} parent=59 // pred_check
        %p380 = pneg %p39
      $region62: #{forward.1} parent=59 // pred_check_branch
        %382 = sbr.rel (%p380) target = $region64
      $region63: #{forward.1} parent=59 // pred_region
        %p383 = scmp.lt.s32.totalorder %s19, 1
        %s384 = scalar_select %p383, %s19, 1
        %s385 = smul.addr %s384, 8
        %s386 = scalar_lea.vmem %s0, %s385
      $region64: #{forward.1} parent=59 // pred_fallthru
        _
      // Predicated region
      $region65: #{forward.1} parent=59 // pred_check
        %p387 = pneg %p65
      $region66: #{forward.1} parent=59 // pred_check_branch
        %389 = sbr.rel (%p387) target = $region68
      $region67: #{forward.1} parent=59 // pred_region
        %p390 = scmp.lt.s32.totalorder %s19, 1
        %s391 = scalar_select %p390, %s19, 1
        %s392 = smul.addr %s391, 8
        %s393 = scalar_lea.vmem %s1, %s392
      $region68: #{forward.1} parent=59 // pred_fallthru
        _
    $region60: #{forward.1} parent=5 // pred_fallthru
      _
    %p394 = scmp.le.s32.totalorder 1, %s19
    %p395 = scmp.lt.s32.totalorder %s19, 3
    %p396 = pnand %p394, %p395
    %p397 = pneg %p396
    // Predicated region
    $region69: #{forward.1} parent=5 // pred_check
      _
    $region70: #{forward.1} parent=5 // pred_check_branch
      %399 = sbr.rel (%p396) target = $region72
    $region71: #{forward.1} parent=5 // pred_region
      %s400 = ssub.s32 %s19, 1
      %p401 = scmp.lt.s32.totalorder %s24, 1
      %s402 = scalar_select %p401, %s24, 1
      %s403 = smul.addr %s402, 8
      %s404 = scalar_lea.vmem %s0, %s403
      %p405 = pneg %p45
      %p406 = pneg %p42
      %p407 = scmp.lt.s32.totalorder %s24, 1
      %s408 = scalar_select %p407, %s24, 1
      %s409 = smul.addr %s408, 8
      %s410 = scalar_lea.vmem %s1, %s409
      %p411 = pneg %p71
      %p412 = pneg %p68
      %p413 = pneg %p92
      %p414 = pneg %p89
      %p415 = pneg %p113
      %p416 = pneg %p110
      %p417 = pneg %p134
      %p418 = pneg %p131
      %p419 = pneg %p155
      %p420 = pneg %p152
      %p421 = pneg %p176
      %p422 = pneg %p173
      %p423 = pneg %p197
      %p424 = pneg %p194
      %p425 = pneg %p218
      %p426 = pneg %p215
      %p427 = pneg %p239
      %p428 = pneg %p236
      %p429 = pneg %p260
      %p430 = pneg %p257
      %p431 = pneg %p281
      %p432 = pneg %p278
      %p433 = pneg %p302
      %p434 = pneg %p299
      %p435 = pneg %p328
      %p436 = pneg %p325
      %p437 = scmp.lt.s32.totalorder %s24, 1
      %s438 = scalar_select %p437, %s24, 1
      %s439 = smul.addr %s438, 8
      %s440 = scalar_lea.vmem %s13, %s439
      %p441 = scmp.lt.s32.totalorder %s24, 1
      %s442 = scalar_select %p441, %s24, 1
      %s443 = smul.addr %s442, 8
      %s444 = scalar_lea.vmem %s0, %s443
      %p445 = scmp.lt.s32.totalorder %s24, 1
      %s446 = scalar_select %p445, %s24, 1
      %s447 = smul.addr %s446, 8
      %s448 = scalar_lea.vmem %s1, %s447
      %p449 = scmp.lt.s32.totalorder %s24, 1
      %s450 = scalar_select %p449, %s24, 1
      %s451 = smul.addr %s450, 8
      %s452 = scalar_lea.vmem %s13, %s451
      %v453 = vld [vmem:[%s444] sm:$0xff]
      %v454 = vld [vmem:[%s448] sm:$0xff]
      %v455 = vld [vmem:[%s2] sm:$0xff]
      %v456 = vlaneseq
      %v457 = vshrl.u32 %v456, 7
      %v458 = vsub.s32 0, %v457
      %v459 = vrot.slane %v454, %v458
      %v460 = vld [vmem:[%s3] sm:$0xff]
      %v461 = vld [vmem:[%s3 + $0x8] sm:$0xff]
      %v462 = vld [vmem:[%s3 + $0x10] sm:$0xff]
      %v463 = vld [vmem:[%s3 + $0x18] sm:$0xff]
      %465 = vset.pattern.permute.xlu0 0
      %466 = vperm.xlu0 %465, %v460
      %v467 = vpop.permute.xlu0 %466
      %470 = vset.pattern.permute.xlu0 0
      %471 = vperm.xlu0 %470, %v461
      %v472 = vpop.permute.xlu0 %471
      %475 = vset.pattern.permute.xlu0 0
      %476 = vperm.xlu0 %475, %v462
      %v477 = vpop.permute.xlu0 %476
      %480 = vset.pattern.permute.xlu0 0
      %481 = vperm.xlu0 %480, %v463
      %v482 = vpop.permute.xlu0 %481
      %v484 = vmul.f32 %v459, %v467
      %v485 = vmul.f32 %v459, %v472
      %v486 = vmul.f32 %v459, %v477
      %v487 = vmul.f32 %v459, %v482
      %v488 = vld [vmem:[%s4] sm:$0xff]
      %v489 = vld [vmem:[%s4 + $0x8] sm:$0xff]
      %v490 = vld [vmem:[%s4 + $0x10] sm:$0xff]
      %v491 = vld [vmem:[%s4 + $0x18] sm:$0xff]
      %493 = vset.pattern.permute.xlu0 0
      %494 = vperm.xlu0 %493, %v488
      %v495 = vpop.permute.xlu0 %494
      %498 = vset.pattern.permute.xlu0 0
      %499 = vperm.xlu0 %498, %v489
      %v500 = vpop.permute.xlu0 %499
      %503 = vset.pattern.permute.xlu0 0
      %504 = vperm.xlu0 %503, %v490
      %v505 = vpop.permute.xlu0 %504
      %508 = vset.pattern.permute.xlu0 0
      %509 = vperm.xlu0 %508, %v491
      %v510 = vpop.permute.xlu0 %509
      %v512 = vadd.f32 %v484, %v495
      %v513 = vadd.f32 %v485, %v500
      %v514 = vadd.f32 %v486, %v505
      %v515 = vadd.f32 %v487, %v510
      %v516 = vmax.f32 %v512, 0.0
      %v517 = vmax.f32 %v513, 0.0
      %v518 = vmax.f32 %v514, 0.0
      %v519 = vmax.f32 %v515, 0.0
      %v520 = vld [vmem:[%s5] sm:$0xff]
      %v521 = vld [vmem:[%s5 + $0x8] sm:$0xff]
      %v522 = vld [vmem:[%s5 + $0x10] sm:$0xff]
      %v523 = vld [vmem:[%s5 + $0x18] sm:$0xff]
      %v524 = vld [vmem:[%s5 + $0x20] sm:$0xff]
      %v525 = vld [vmem:[%s5 + $0x28] sm:$0xff]
      %v526 = vld [vmem:[%s5 + $0x30] sm:$0xff]
      %v527 = vld [vmem:[%s5 + $0x38] sm:$0xff]
      %v528 = vld [vmem:[%s5 + $0x40] sm:$0xff]
      %v529 = vld [vmem:[%s5 + $0x48] sm:$0xff]
      %v530 = vld [vmem:[%s5 + $0x50] sm:$0xff]
      %v531 = vld [vmem:[%s5 + $0x58] sm:$0xff]
      %v532 = vld [vmem:[%s6] sm:$0xff]
      %v533 = vld [vmem:[%s6 + $0x8] sm:$0xff]
      %v534 = vld [vmem:[%s6 + $0x10] sm:$0xff]
      %v535 = vld [vmem:[%s6 + $0x18] sm:$0xff]
      %v536 = vld [vmem:[%s6 + $0x20] sm:$0xff]
      %v537 = vld [vmem:[%s6 + $0x28] sm:$0xff]
      %v538 = vld [vmem:[%s6 + $0x30] sm:$0xff]
      %v539 = vld [vmem:[%s6 + $0x38] sm:$0xff]
      %v540 = vld [vmem:[%s6 + $0x40] sm:$0xff]
      %v541 = vld [vmem:[%s6 + $0x48] sm:$0xff]
      %v542 = vld [vmem:[%s6 + $0x50] sm:$0xff]
      %v543 = vld [vmem:[%s6 + $0x58] sm:$0xff]
      %545 = vset.pattern.permute.xlu0 0
      %546 = vperm.xlu0 %545, %v532
      %v547 = vpop.permute.xlu0 %546
      %550 = vset.pattern.permute.xlu0 0
      %551 = vperm.xlu0 %550, %v533
      %v552 = vpop.permute.xlu0 %551
      %555 = vset.pattern.permute.xlu0 0
      %556 = vperm.xlu0 %555, %v534
      %v557 = vpop.permute.xlu0 %556
      %560 = vset.pattern.permute.xlu0 0
      %561 = vperm.xlu0 %560, %v535
      %v562 = vpop.permute.xlu0 %561
      %565 = vset.pattern.permute.xlu0 0
      %566 = vperm.xlu0 %565, %v536
      %v567 = vpop.permute.xlu0 %566
      %570 = vset.pattern.permute.xlu0 0
      %571 = vperm.xlu0 %570, %v537
      %v572 = vpop.permute.xlu0 %571
      %575 = vset.pattern.permute.xlu0 0
      %576 = vperm.xlu0 %575, %v538
      %v577 = vpop.permute.xlu0 %576
      %580 = vset.pattern.permute.xlu0 0
      %581 = vperm.xlu0 %580, %v539
      %v582 = vpop.permute.xlu0 %581
      %585 = vset.pattern.permute.xlu0 0
      %586 = vperm.xlu0 %585, %v540
      %v587 = vpop.permute.xlu0 %586
      %590 = vset.pattern.permute.xlu0 0
      %591 = vperm.xlu0 %590, %v541
      %v592 = vpop.permute.xlu0 %591
      %595 = vset.pattern.permute.xlu0 0
      %596 = vperm.xlu0 %595, %v542
      %v597 = vpop.permute.xlu0 %596
      %600 = vset.pattern.permute.xlu0 0
      %601 = vperm.xlu0 %600, %v543
      %v602 = vpop.permute.xlu0 %601
      %vm604 = vcmask 261120
      %v606 = vsel %vm604, %v520, 0
      %v609 = vsel %vm604, %v521, 0
      %v612 = vsel %vm604, %v522, 0
      %v615 = vsel %vm604, %v523, 0
      %v618 = vsel %vm604, %v524, 0
      %v621 = vsel %vm604, %v525, 0
      %v624 = vsel %vm604, %v526, 0
      %v627 = vsel %vm604, %v527, 0
      %v630 = vsel %vm604, %v528, 0
      %v633 = vsel %vm604, %v529, 0
      %v636 = vsel %vm604, %v530, 0
      %v639 = vsel %vm604, %v531, 0
      %641 = vmatprep.subr.mxu0 0.0
      %v642 = vand.u32 %v516, 4294901760
      %643 = vmatpush1.msra.mxu0 %v642
      %644 = vmatprep.subr.mxu0 0.0
      %v645 = vand.u32 %v517, 4294901760
      %646 = vmatpush1.msra.mxu0 %v645
      %647 = vmatprep.subr.mxu0 0.0
      %v648 = vand.u32 %v518, 4294901760
      %649 = vmatpush1.msra.mxu0 %v648
      %650 = vmatprep.subr.mxu0 0.0
      %v651 = vand.u32 %v519, 4294901760
      %652 = vmatpush1.msra.mxu0 %v651
      %653 = vmatprep.subr.mxu0 0.0
      %654 = vmatpush1.msra.mxu0 0.0
      %655 = vmatprep.subr.mxu0 0.0
      %656 = vmatpush1.msra.mxu0 0.0
      %657 = vmatprep.subr.mxu0 0.0
      %658 = vmatpush1.msra.mxu0 0.0
      %659 = vmatprep.subr.mxu0 0.0
      %660 = vmatpush1.msra.mxu0 0.0
      %661 = vmatprep.subr.mxu0 0.0
      %662 = vmatpush1.msra.mxu0 0.0
      %663 = vmatprep.subr.mxu0 0.0
      %664 = vmatpush1.msra.mxu0 0.0
      %665 = vmatprep.subr.mxu0 0.0
      %666 = vmatpush1.msra.mxu0 0.0
      %667 = vmatprep.subr.mxu0 0.0
      %668 = vmatpush1.msra.mxu0 0.0
      %669 = vmatprep.subr.mxu0 0.0
      %670 = vmatpush1.msra.mxu0 0.0
      %671 = vmatprep.subr.mxu0 0.0
      %672 = vmatpush1.msra.mxu0 0.0
      %673 = vmatprep.subr.mxu0 0.0
      %674 = vmatpush1.msra.mxu0 0.0
      %675 = vmatprep.subr.mxu0 0.0
      %676 = vmatpush1.msra.mxu0 0.0
      %677 = vmatprep.subr.mxu0 0.0
      %678 = vmatpush1.msra.mxu0 0.0
      %679 = vmatprep.subr.mxu0 0.0
      %680 = vmatpush1.msra.mxu0 0.0
      %681 = vmatprep.subr.mxu0 0.0
      %682 = vmatpush1.msra.mxu0 0.0
      %683 = vmatprep.subr.mxu0 0.0
      %684 = vmatpush1.msra.mxu0 0.0
      %685 = vmatprep.subr.mxu0 0.0
      %686 = vmatpush1.msra.mxu0 0.0
      %687 = vmatprep.subr.mxu0 0.0
      %688 = vmatpush1.msra.mxu0 0.0
      %689 = vmatprep.subr.mxu0 0.0
      %690 = vmatpush1.msra.mxu0 0.0
      %691 = vmatprep.subr.mxu0 0.0
      %692 = vmatpush1.msra.mxu0 0.0
      %693 = vmatprep.subr.mxu0 0.0
      %694 = vmatpush1.msra.mxu0 0.0
      %695 = vmatprep.subr.mxu0 0.0
      %696 = vmatpush1.msra.mxu0 0.0
      %697 = vmatprep.subr.mxu0 0.0
      %698 = vmatpush1.msra.mxu0 0.0
      %699 = vmatprep.subr.mxu0 0.0
      %700 = vmatpush1.msra.mxu0 0.0
      %701 = vmatprep.subr.mxu0 0.0
      %702 = vmatpush1.msra.mxu0 0.0
      %703 = vmatprep.subr.mxu0 0.0
      %704 = vmatpush1.msra.mxu0 0.0
      %705 = vmatprep.subr.mxu0 0.0
      %706 = vmatpush1.msra.mxu0 0.0
      %707 = vmatprep.subr.mxu0 0.0
      %708 = vmatpush1.msra.mxu0 0.0
      %709 = vmatprep.mubr.f32.mxu0 0.0
      %v710 = vand.u32 %v606, 4294901760
      %v711 = vsub.f32 %v606, %v710
      %v712 = vand.u32 %v711, 4294901760
      %v713 = vsub.f32 %v711, %v712
      %v714 = vand.u32 %v713, 4294901760
      %715 = vmatmul.mubr.f32.gmra.mrb[0].mxu0 %v714
      %v716 = vpop.f32.mrb[0].mxu0
      %v717 = vadd.f32 %v547, %v716
      %v718 = vpop.f32.mrb[0].mxu0
      %719 = vmatprep.mubr.f32.mxu0 0.0
      %v720 = vand.u32 %v609, 4294901760
      %v721 = vsub.f32 %v609, %v720
      %v722 = vand.u32 %v721, 4294901760
      %v723 = vsub.f32 %v721, %v722
      %v724 = vand.u32 %v723, 4294901760
      %725 = vmatmul.mubr.f32.gmra.mrb[0].mxu0 %v724
      %v726 = vpop.f32.mrb[0].mxu0
      %v727 = vadd.f32 %v552, %v726
      %v728 = vpop.f32.mrb[0].mxu0
      %729 = vmatprep.mubr.f32.mxu0 0.0
      %v730 = vand.u32 %v612, 4294901760
      %v731 = vsub.f32 %v612, %v730
      %v732 = vand.u32 %v731, 4294901760
      %v733 = vsub.f32 %v731, %v732
      %v734 = vand.u32 %v733, 4294901760
      %735 = vmatmul.mubr.f32.gmra.mrb[0].mxu0 %v734
      %v736 = vpop.f32.mrb[0].mxu0
      %v737 = vadd.f32 %v557, %v736
      %v738 = vpop.f32.mrb[0].mxu0
      %739 = vmatprep.mubr.f32.mxu0 0.0
      %v740 = vand.u32 %v615, 4294901760
      %v741 = vsub.f32 %v615, %v740
      %v742 = vand.u32 %v741, 4294901760
      %v743 = vsub.f32 %v741, %v742
      %v744 = vand.u32 %v743, 4294901760
      %745 = vmatmul.mubr.f32.gmra.mrb[0].mxu0 %v744
      %v746 = vpop.f32.mrb[0].mxu0
      %v747 = vadd.f32 %v562, %v746
      %v748 = vpop.f32.mrb[0].mxu0
      %749 = vmatprep.mubr.f32.mxu0 0.0
      %v750 = vand.u32 %v618, 4294901760
      %v751 = vsub.f32 %v618, %v750
      %v752 = vand.u32 %v751, 4294901760
      %v753 = vsub.f32 %v751, %v752
      %v754 = vand.u32 %v753, 4294901760
      %755 = vmatmul.mubr.f32.gmra.mrb[0].mxu0 %v754
      %v756 = vpop.f32.mrb[0].mxu0
      %v757 = vadd.f32 %v567, %v756
      %v758 = vpop.f32.mrb[0].mxu0
      %759 = vmatprep.mubr.f32.mxu0 0.0
      %v760 = vand.u32 %v621, 4294901760
      %v761 = vsub.f32 %v621, %v760
      %v762 = vand.u32 %v761, 4294901760
      %v763 = vsub.f32 %v761, %v762
      %v764 = vand.u32 %v763, 4294901760
      %765 = vmatmul.mubr.f32.gmra.mrb[0].mxu0 %v764
      %v766 = vpop.f32.mrb[0].mxu0
      %v767 = vadd.f32 %v572, %v766
      %v768 = vpop.f32.mrb[0].mxu0
      %769 = vmatprep.mubr.f32.mxu0 0.0
      %v770 = vand.u32 %v624, 4294901760
      %v771 = vsub.f32 %v624, %v770
      %v772 = vand.u32 %v771, 4294901760
      %v773 = vsub.f32 %v771, %v772
      %v774 = vand.u32 %v773, 4294901760
      %775 = vmatmul.mubr.f32.gmra.mrb[0].mxu0 %v774
      %v776 = vpop.f32.mrb[0].mxu0
      %v777 = vadd.f32 %v577, %v776
      %v778 = vpop.f32.mrb[0].mxu0
      %779 = vmatprep.mubr.f32.mxu0 0.0
      %v780 = vand.u32 %v627, 4294901760
      %v781 = vsub.f32 %v627, %v780
      %v782 = vand.u32 %v781, 4294901760
      %v783 = vsub.f32 %v781, %v782
      %v784 = vand.u32 %v783, 4294901760
      %785 = vmatmul.mubr.f32.gmra.mrb[0].mxu0 %v784
      %v786 = vpop.f32.mrb[0].mxu0
      %v787 = vadd.f32 %v582, %v786
      %v788 = vpop.f32.mrb[0].mxu0
      %789 = vmatprep.mubr.f32.mxu0 0.0
      %v790 = vand.u32 %v630, 4294901760
      %v791 = vsub.f32 %v630, %v790
      %v792 = vand.u32 %v791, 4294901760
      %v793 = vsub.f32 %v791, %v792
      %v794 = vand.u32 %v793, 4294901760
      %795 = vmatmul.mubr.f32.gmra.mrb[0].mxu0 %v794
      %v796 = vpop.f32.mrb[0].mxu0
      %v797 = vadd.f32 %v587, %v796
      %v798 = vpop.f32.mrb[0].mxu0
      %799 = vmatprep.mubr.f32.mxu0 0.0
      %v800 = vand.u32 %v633, 4294901760
      %v801 = vsub.f32 %v633, %v800
      %v802 = vand.u32 %v801, 4294901760
      %v803 = vsub.f32 %v801, %v802
      %v804 = vand.u32 %v803, 4294901760
      %805 = vmatmul.mubr.f32.gmra.mrb[0].mxu0 %v804
      %v806 = vpop.f32.mrb[0].mxu0
      %v807 = vadd.f32 %v592, %v806
      %v808 = vpop.f32.mrb[0].mxu0
      %809 = vmatprep.mubr.f32.mxu0 0.0
      %v810 = vand.u32 %v636, 4294901760
      %v811 = vsub.f32 %v636, %v810
      %v812 = vand.u32 %v811, 4294901760
      %v813 = vsub.f32 %v811, %v812
      %v814 = vand.u32 %v813, 4294901760
      %815 = vmatmul.mubr.f32.gmra.mrb[0].mxu0 %v814
      %v816 = vpop.f32.mrb[0].mxu0
      %v817 = vadd.f32 %v597, %v816
      %v818 = vpop.f32.mrb[0].mxu0
      %819 = vmatprep.mubr.f32.mxu0 0.0
      %v820 = vand.u32 %v639, 4294901760
      %v821 = vsub.f32 %v639, %v820
      %v822 = vand.u32 %v821, 4294901760
      %v823 = vsub.f32 %v821, %v822
      %v824 = vand.u32 %v823, 4294901760
      %825 = vmatmul.mubr.f32.gmra.mrb[0].mxu0 %v824
      %v826 = vpop.f32.mrb[0].mxu0
      %v827 = vadd.f32 %v602, %v826
      %v828 = vpop.f32.mrb[0].mxu0
      %829 = vdwg.mxu0
      %830 = vmatprep.subr.mxu0 0.0
      %v831 = vand.u32 %v516, 4294901760
      %v832 = vsub.f32 %v516, %v831
      %v833 = vand.u32 %v832, 4294901760
      %v834 = vsub.f32 %v832, %v833
      %v835 = vand.u32 %v834, 4294901760
      %836 = vmatpush1.msra.mxu0 %v835
      %837 = vmatprep.subr.mxu0 0.0
      %v838 = vand.u32 %v517, 4294901760
      %v839 = vsub.f32 %v517, %v838
      %v840 = vand.u32 %v839, 4294901760
      %v841 = vsub.f32 %v839, %v840
      %v842 = vand.u32 %v841, 4294901760
      %843 = vmatpush1.msra.mxu0 %v842
      %844 = vmatprep.subr.mxu0 0.0
      %v845 = vand.u32 %v518, 4294901760
      %v846 = vsub.f32 %v518, %v845
      %v847 = vand.u32 %v846, 4294901760
      %v848 = vsub.f32 %v846, %v847
      %v849 = vand.u32 %v848, 4294901760
      %850 = vmatpush1.msra.mxu0 %v849
      %851 = vmatprep.subr.mxu0 0.0
      %v852 = vand.u32 %v519, 4294901760
      %v853 = vsub.f32 %v519, %v852
      %v854 = vand.u32 %v853, 4294901760
      %v855 = vsub.f32 %v853, %v854
      %v856 = vand.u32 %v855, 4294901760
      %857 = vmatpush1.msra.mxu0 %v856
      %858 = vmatprep.subr.mxu0 0.0
      %859 = vmatpush1.msra.mxu0 0.0
      %860 = vmatprep.subr.mxu0 0.0
      %861 = vmatpush1.msra.mxu0 0.0
      %862 = vmatprep.subr.mxu0 0.0
      %863 = vmatpush1.msra.mxu0 0.0
      %864 = vmatprep.subr.mxu0 0.0
      %865 = vmatpush1.msra.mxu0 0.0
      %866 = vmatprep.subr.mxu0 0.0
      %867 = vmatpush1.msra.mxu0 0.0
      %868 = vmatprep.subr.mxu0 0.0
      %869 = vmatpush1.msra.mxu0 0.0
      %870 = vmatprep.subr.mxu0 0.0
      %871 = vmatpush1.msra.mxu0 0.0
      %872 = vmatprep.subr.mxu0 0.0
      %873 = vmatpush1.msra.mxu0 0.0
      %874 = vmatprep.subr.mxu0 0.0
      %875 = vmatpush1.msra.mxu0 0.0
      %876 = vmatprep.subr.mxu0 0.0
      %877 = vmatpush1.msra.mxu0 0.0
      %878 = vmatprep.subr.mxu0 0.0
      %879 = vmatpush1.msra.mxu0 0.0
      %880 = vmatprep.subr.mxu0 0.0
      %881 = vmatpush1.msra.mxu0 0.0
      %882 = vmatprep.subr.mxu0 0.0
      %883 = vmatpush1.msra.mxu0 0.0
      %884 = vmatprep.subr.mxu0 0.0
      %885 = vmatpush1.msra.mxu0 0.0
      %886 = vmatprep.subr.mxu0 0.0
      %887 = vmatpush1.msra.mxu0 0.0
      %888 = vmatprep.subr.mxu0 0.0
      %889 = vmatpush1.msra.mxu0 0.0
      %890 = vmatprep.subr.mxu0 0.0
      %891 = vmatpush1.msra.mxu0 0.0
      %892 = vmatprep.subr.mxu0 0.0
      %893 = vmatpush1.msra.mxu0 0.0
      %894 = vmatprep.subr.mxu0 0.0
      %895 = vmatpush1.msra.mxu0 0.0
      %896 = vmatprep.subr.mxu0 0.0
      %897 = vmatpush1.msra.mxu0 0.0
      %898 = vmatprep.subr.mxu0 0.0
      %899 = vmatpush1.msra.mxu0 0.0
      %900 = vmatprep.subr.mxu0 0.0
      %901 = vmatpush1.msra.mxu0 0.0
      %902 = vmatprep.subr.mxu0 0.0
      %903 = vmatpush1.msra.mxu0 0.0
      %904 = vmatprep.subr.mxu0 0.0
      %905 = vmatpush1.msra.mxu0 0.0
      %906 = vmatprep.subr.mxu0 0.0
      %907 = vmatpush1.msra.mxu0 0.0
      %908 = vmatprep.subr.mxu0 0.0
      %909 = vmatpush1.msra.mxu0 0.0
      %910 = vmatprep.subr.mxu0 0.0
      %911 = vmatpush1.msra.mxu0 0.0
      %912 = vmatprep.subr.mxu0 0.0
      %913 = vmatpush1.msra.mxu0 0.0
      %914 = vmatprep.mubr.f32.mxu0 0.0
      %v915 = vand.u32 %v606, 4294901760
      %916 = vmatmul.mubr.f32.gmra.mrb[0].mxu0 %v915
      %v917 = vpop.f32.mrb[0].mxu0
      %v918 = vadd.f32 %v717, %v917
      %v919 = vpop.f32.mrb[0].mxu0
      %920 = vmatprep.mubr.f32.mxu0 0.0
      %v921 = vand.u32 %v609, 4294901760
      %922 = vmatmul.mubr.f32.gmra.mrb[0].mxu0 %v921
      %v923 = vpop.f32.mrb[0].mxu0
      %v924 = vadd.f32 %v727, %v923
      %v925 = vpop.f32.mrb[0].mxu0
      %926 = vmatprep.mubr.f32.mxu0 0.0
      %v927 = vand.u32 %v612, 4294901760
      %928 = vmatmul.mubr.f32.gmra.mrb[0].mxu0 %v927
      %v929 = vpop.f32.mrb[0].mxu0
      %v930 = vadd.f32 %v737, %v929
      %v931 = vpop.f32.mrb[0].mxu0
      %932 = vmatprep.mubr.f32.mxu0 0.0
      %v933 = vand.u32 %v615, 4294901760
      %934 = vmatmul.mubr.f32.gmra.mrb[0].mxu0 %v933
      %v935 = vpop.f32.mrb[0].mxu0
      %v936 = vadd.f32 %v747, %v935
      %v937 = vpop.f32.mrb[0].mxu0
      %938 = vmatprep.mubr.f32.mxu0 0.0
      %v939 = vand.u32 %v618, 4294901760
      %940 = vmatmul.mubr.f32.gmra.mrb[0].mxu0 %v939
      %v941 = vpop.f32.mrb[0].mxu0
      %v942 = vadd.f32 %v757, %v941
      %v943 = vpop.f32.mrb[0].mxu0
      %944 = vmatprep.mubr.f32.mxu0 0.0
      %v945 = vand.u32 %v621, 4294901760
      %946 = vmatmul.mubr.f32.gmra.mrb[0].mxu0 %v945
      %v947 = vpop.f32.mrb[0].mxu0
      %v948 = vadd.f32 %v767, %v947
      %v949 = vpop.f32.mrb[0].mxu0
      %950 = vmatprep.mubr.f32.mxu0 0.0
      %v951 = vand.u32 %v624, 4294901760
      %952 = vmatmul.mubr.f32.gmra.mrb[0].mxu0 %v951
      %v953 = vpop.f32.mrb[0].mxu0
      %v954 = vadd.f32 %v777, %v953
      %v955 = vpop.f32.mrb[0].mxu0
      %956 = vmatprep.mubr.f32.mxu0 0.0
      %v957 = vand.u32 %v627, 4294901760
      %958 = vmatmul.mubr.f32.gmra.mrb[0].mxu0 %v957
      %v959 = vpop.f32.mrb[0].mxu0
      %v960 = vadd.f32 %v787, %v959
      %v961 = vpop.f32.mrb[0].mxu0
      %962 = vmatprep.mubr.f32.mxu0 0.0
      %v963 = vand.u32 %v630, 4294901760
      %964 = vmatmul.mubr.f32.gmra.mrb[0].mxu0 %v963
      %v965 = vpop.f32.mrb[0].mxu0
      %v966 = vadd.f32 %v797, %v965
      %v967 = vpop.f32.mrb[0].mxu0
      %968 = vmatprep.mubr.f32.mxu0 0.0
      %v969 = vand.u32 %v633, 4294901760
      %970 = vmatmul.mubr.f32.gmra.mrb[0].mxu0 %v969
      %v971 = vpop.f32.mrb[0].mxu0
      %v972 = vadd.f32 %v807, %v971
      %v973 = vpop.f32.mrb[0].mxu0
      %974 = vmatprep.mubr.f32.mxu0 0.0
      %v975 = vand.u32 %v636, 4294901760
      %976 = vmatmul.mubr.f32.gmra.mrb[0].mxu0 %v975
      %v977 = vpop.f32.mrb[0].mxu0
      %v978 = vadd.f32 %v817, %v977
      %v979 = vpop.f32.mrb[0].mxu0
      %980 = vmatprep.mubr.f32.mxu0 0.0
      %v981 = vand.u32 %v639, 4294901760
      %982 = vmatmul.mubr.f32.gmra.mrb[0].mxu0 %v981
      %v983 = vpop.f32.mrb[0].mxu0
      %v984 = vadd.f32 %v827, %v983
      %v985 = vpop.f32.mrb[0].mxu0
      %986 = vdwg.mxu0
      %987 = vmatprep.subr.mxu0 0.0
      %v988 = vand.u32 %v516, 4294901760
      %v989 = vsub.f32 %v516, %v988
      %990 = vmatpush1.msra.mxu0 %v989
      %991 = vmatprep.subr.mxu0 0.0
      %v992 = vand.u32 %v517, 4294901760
      %v993 = vsub.f32 %v517, %v992
      %994 = vmatpush1.msra.mxu0 %v993
      %995 = vmatprep.subr.mxu0 0.0
      %v996 = vand.u32 %v518, 4294901760
      %v997 = vsub.f32 %v518, %v996
      %998 = vmatpush1.msra.mxu0 %v997
      %999 = vmatprep.subr.mxu0 0.0
      %v1000 = vand.u32 %v519, 4294901760
      %v1001 = vsub.f32 %v519, %v1000
      %1002 = vmatpush1.msra.mxu0 %v1001
      %1003 = vmatprep.subr.mxu0 0.0
      %1004 = vmatpush1.msra.mxu0 0.0
      %1005 = vmatprep.subr.mxu0 0.0
      %1006 = vmatpush1.msra.mxu0 0.0
      %1007 = vmatprep.subr.mxu0 0.0
      %1008 = vmatpush1.msra.mxu0 0.0
      %1009 = vmatprep.subr.mxu0 0.0
      %1010 = vmatpush1.msra.mxu0 0.0
      %1011 = vmatprep.subr.mxu0 0.0
      %1012 = vmatpush1.msra.mxu0 0.0
      %1013 = vmatprep.subr.mxu0 0.0
      %1014 = vmatpush1.msra.mxu0 0.0
      %1015 = vmatprep.subr.mxu0 0.0
      %1016 = vmatpush1.msra.mxu0 0.0
      %1017 = vmatprep.subr.mxu0 0.0
      %1018 = vmatpush1.msra.mxu0 0.0
      %1019 = vmatprep.subr.mxu0 0.0
      %1020 = vmatpush1.msra.mxu0 0.0
      %1021 = vmatprep.subr.mxu0 0.0
      %1022 = vmatpush1.msra.mxu0 0.0
      %1023 = vmatprep.subr.mxu0 0.0
      %1024 = vmatpush1.msra.mxu0 0.0
      %1025 = vmatprep.subr.mxu0 0.0
      %1026 = vmatpush1.msra.mxu0 0.0
      %1027 = vmatprep.subr.mxu0 0.0
      %1028 = vmatpush1.msra.mxu0 0.0
      %1029 = vmatprep.subr.mxu0 0.0
      %1030 = vmatpush1.msra.mxu0 0.0
      %1031 = vmatprep.subr.mxu0 0.0
      %1032 = vmatpush1.msra.mxu0 0.0
      %1033 = vmatprep.subr.mxu0 0.0
      %1034 = vmatpush1.msra.mxu0 0.0
      %1035 = vmatprep.subr.mxu0 0.0
      %1036 = vmatpush1.msra.mxu0 0.0
      %1037 = vmatprep.subr.mxu0 0.0
      %1038 = vmatpush1.msra.mxu0 0.0
      %1039 = vmatprep.subr.mxu0 0.0
      %1040 = vmatpush1.msra.mxu0 0.0
      %1041 = vmatprep.subr.mxu0 0.0
      %1042 = vmatpush1.msra.mxu0 0.0
      %1043 = vmatprep.subr.mxu0 0.0
      %1044 = vmatpush1.msra.mxu0 0.0
      %1045 = vmatprep.subr.mxu0 0.0
      %1046 = vmatpush1.msra.mxu0 0.0
      %1047 = vmatprep.subr.mxu0 0.0
      %1048 = vmatpush1.msra.mxu0 0.0
      %1049 = vmatprep.subr.mxu0 0.0
      %1050 = vmatpush1.msra.mxu0 0.0
      %1051 = vmatprep.subr.mxu0 0.0
      %1052 = vmatpush1.msra.mxu0 0.0
      %1053 = vmatprep.subr.mxu0 0.0
      %1054 = vmatpush1.msra.mxu0 0.0
      %1055 = vmatprep.subr.mxu0 0.0
      %1056 = vmatpush1.msra.mxu0 0.0
      %1057 = vmatprep.subr.mxu0 0.0
      %1058 = vmatpush1.msra.mxu0 0.0
      %1059 = vmatprep.mubr.f32.mxu0 0.0
      %v1060 = vand.u32 %v606, 4294901760
      %v1061 = vsub.f32 %v606, %v1060
      %1062 = vmatmul.mubr.f32.gmra.mrb[0].mxu0 %v1061
      %v1063 = vpop.f32.mrb[0].mxu0
      %v1064 = vadd.f32 %v918, %v1063
      %v1065 = vpop.f32.mrb[0].mxu0
      %1066 = vmatprep.mubr.f32.mxu0 0.0
      %v1067 = vand.u32 %v609, 4294901760
      %v1068 = vsub.f32 %v609, %v1067
      %1069 = vmatmul.mubr.f32.gmra.mrb[0].mxu0 %v1068
      %v1070 = vpop.f32.mrb[0].mxu0
      %v1071 = vadd.f32 %v924, %v1070
      %v1072 = vpop.f32.mrb[0].mxu0
      %1073 = vmatprep.mubr.f32.mxu0 0.0
      %v1074 = vand.u32 %v612, 4294901760
      %v1075 = vsub.f32 %v612, %v1074
      %1076 = vmatmul.mubr.f32.gmra.mrb[0].mxu0 %v1075
      %v1077 = vpop.f32.mrb[0].mxu0
      %v1078 = vadd.f32 %v930, %v1077
      %v1079 = vpop.f32.mrb[0].mxu0
      %1080 = vmatprep.mubr.f32.mxu0 0.0
      %v1081 = vand.u32 %v615, 4294901760
      %v1082 = vsub.f32 %v615, %v1081
      %1083 = vmatmul.mubr.f32.gmra.mrb[0].mxu0 %v1082
      %v1084 = vpop.f32.mrb[0].mxu0
      %v1085 = vadd.f32 %v936, %v1084
      %v1086 = vpop.f32.mrb[0].mxu0
      %1087 = vmatprep.mubr.f32.mxu0 0.0
      %v1088 = vand.u32 %v618, 4294901760
      %v1089 = vsub.f32 %v618, %v1088
      %1090 = vmatmul.mubr.f32.gmra.mrb[0].mxu0 %v1089
      %v1091 = vpop.f32.mrb[0].mxu0
      %v1092 = vadd.f32 %v942, %v1091
      %v1093 = vpop.f32.mrb[0].mxu0
      %1094 = vmatprep.mubr.f32.mxu0 0.0
      %v1095 = vand.u32 %v621, 4294901760
      %v1096 = vsub.f32 %v621, %v1095
      %1097 = vmatmul.mubr.f32.gmra.mrb[0].mxu0 %v1096
      %v1098 = vpop.f32.mrb[0].mxu0
      %v1099 = vadd.f32 %v948, %v1098
      %v1100 = vpop.f32.mrb[0].mxu0
      %1101 = vmatprep.mubr.f32.mxu0 0.0
      %v1102 = vand.u32 %v624, 4294901760
      %v1103 = vsub.f32 %v624, %v1102
      %1104 = vmatmul.mubr.f32.gmra.mrb[0].mxu0 %v1103
      %v1105 = vpop.f32.mrb[0].mxu0
      %v1106 = vadd.f32 %v954, %v1105
      %v1107 = vpop.f32.mrb[0].mxu0
      %1108 = vmatprep.mubr.f32.mxu0 0.0
      %v1109 = vand.u32 %v627, 4294901760
      %v1110 = vsub.f32 %v627, %v1109
      %1111 = vmatmul.mubr.f32.gmra.mrb[0].mxu0 %v1110
      %v1112 = vpop.f32.mrb[0].mxu0
      %v1113 = vadd.f32 %v960, %v1112
      %v1114 = vpop.f32.mrb[0].mxu0
      %1115 = vmatprep.mubr.f32.mxu0 0.0
      %v1116 = vand.u32 %v630, 4294901760
      %v1117 = vsub.f32 %v630, %v1116
      %1118 = vmatmul.mubr.f32.gmra.mrb[0].mxu0 %v1117
      %v1119 = vpop.f32.mrb[0].mxu0
      %v1120 = vadd.f32 %v966, %v1119
      %v1121 = vpop.f32.mrb[0].mxu0
      %1122 = vmatprep.mubr.f32.mxu0 0.0
      %v1123 = vand.u32 %v633, 4294901760
      %v1124 = vsub.f32 %v633, %v1123
      %1125 = vmatmul.mubr.f32.gmra.mrb[0].mxu0 %v1124
      %v1126 = vpop.f32.mrb[0].mxu0
      %v1127 = vadd.f32 %v972, %v1126
      %v1128 = vpop.f32.mrb[0].mxu0
      %1129 = vmatprep.mubr.f32.mxu0 0.0
      %v1130 = vand.u32 %v636, 4294901760
      %v1131 = vsub.f32 %v636, %v1130
      %1132 = vmatmul.mubr.f32.gmra.mrb[0].mxu0 %v1131
      %v1133 = vpop.f32.mrb[0].mxu0
      %v1134 = vadd.f32 %v978, %v1133
      %v1135 = vpop.f32.mrb[0].mxu0
      %1136 = vmatprep.mubr.f32.mxu0 0.0
      %v1137 = vand.u32 %v639, 4294901760
      %v1138 = vsub.f32 %v639, %v1137
      %1139 = vmatmul.mubr.f32.gmra.mrb[0].mxu0 %v1138
      %v1140 = vpop.f32.mrb[0].mxu0
      %v1141 = vadd.f32 %v984, %v1140
      %v1142 = vpop.f32.mrb[0].mxu0
      %1143 = vdwg.mxu0
      %1144 = vmatprep.subr.mxu0 0.0
      %v1145 = vand.u32 %v516, 4294901760
      %1146 = vmatpush1.msra.mxu0 %v1145
      %1147 = vmatprep.subr.mxu0 0.0
      %v1148 = vand.u32 %v517, 4294901760
      %1149 = vmatpush1.msra.mxu0 %v1148
      %1150 = vmatprep.subr.mxu0 0.0
      %v1151 = vand.u32 %v518, 4294901760
      %1152 = vmatpush1.msra.mxu0 %v1151
      %1153 = vmatprep.subr.mxu0 0.0
      %v1154 = vand.u32 %v519, 4294901760
      %1155 = vmatpush1.msra.mxu0 %v1154
      %1156 = vmatprep.subr.mxu0 0.0
      %1157 = vmatpush1.msra.mxu0 0.0
      %1158 = vmatprep.subr.mxu0 0.0
      %1159 = vmatpush1.msra.mxu0 0.0
      %1160 = vmatprep.subr.mxu0 0.0
      %1161 = vmatpush1.msra.mxu0 0.0
      %1162 = vmatprep.subr.mxu0 0.0
      %1163 = vmatpush1.msra.mxu0 0.0
      %1164 = vmatprep.subr.mxu0 0.0
      %1165 = vmatpush1.msra.mxu0 0.0
      %1166 = vmatprep.subr.mxu0 0.0
      %1167 = vmatpush1.msra.mxu0 0.0
      %1168 = vmatprep.subr.mxu0 0.0
      %1169 = vmatpush1.msra.mxu0 0.0
      %1170 = vmatprep.subr.mxu0 0.0
      %1171 = vmatpush1.msra.mxu0 0.0
      %1172 = vmatprep.subr.mxu0 0.0
      %1173 = vmatpush1.msra.mxu0 0.0
      %1174 = vmatprep.subr.mxu0 0.0
      %1175 = vmatpush1.msra.mxu0 0.0
      %1176 = vmatprep.subr.mxu0 0.0
      %1177 = vmatpush1.msra.mxu0 0.0
      %1178 = vmatprep.subr.mxu0 0.0
      %1179 = vmatpush1.msra.mxu0 0.0
      %1180 = vmatprep.subr.mxu0 0.0
      %1181 = vmatpush1.msra.mxu0 0.0
      %1182 = vmatprep.subr.mxu0 0.0
      %1183 = vmatpush1.msra.mxu0 0.0
      %1184 = vmatprep.subr.mxu0 0.0
      %1185 = vmatpush1.msra.mxu0 0.0
      %1186 = vmatprep.subr.mxu0 0.0
      %1187 = vmatpush1.msra.mxu0 0.0
      %1188 = vmatprep.subr.mxu0 0.0
      %1189 = vmatpush1.msra.mxu0 0.0
      %1190 = vmatprep.subr.mxu0 0.0
      %1191 = vmatpush1.msra.mxu0 0.0
      %1192 = vmatprep.subr.mxu0 0.0
      %1193 = vmatpush1.msra.mxu0 0.0
      %1194 = vmatprep.subr.mxu0 0.0
      %1195 = vmatpush1.msra.mxu0 0.0
      %1196 = vmatprep.subr.mxu0 0.0
      %1197 = vmatpush1.msra.mxu0 0.0
      %1198 = vmatprep.subr.mxu0 0.0
      %1199 = vmatpush1.msra.mxu0 0.0
      %1200 = vmatprep.subr.mxu0 0.0
      %1201 = vmatpush1.msra.mxu0 0.0
      %1202 = vmatprep.subr.mxu0 0.0
      %1203 = vmatpush1.msra.mxu0 0.0
      %1204 = vmatprep.subr.mxu0 0.0
      %1205 = vmatpush1.msra.mxu0 0.0
      %1206 = vmatprep.subr.mxu0 0.0
      %1207 = vmatpush1.msra.mxu0 0.0
      %1208 = vmatprep.subr.mxu0 0.0
      %1209 = vmatpush1.msra.mxu0 0.0
      %1210 = vmatprep.subr.mxu0 0.0
      %1211 = vmatpush1.msra.mxu0 0.0
      %1212 = vmatprep.mubr.f32.mxu0 0.0
      %v1213 = vand.u32 %v606, 4294901760
      %v1214 = vsub.f32 %v606, %v1213
      %v1215 = vand.u32 %v1214, 4294901760
      %1216 = vmatmul.mubr.f32.gmra.mrb[0].mxu0 %v1215
      %v1217 = vpop.f32.mrb[0].mxu0
      %v1218 = vadd.f32 %v1064, %v1217
      %v1219 = vpop.f32.mrb[0].mxu0
      %1220 = vmatprep.mubr.f32.mxu0 0.0
      %v1221 = vand.u32 %v609, 4294901760
      %v1222 = vsub.f32 %v609, %v1221
      %v1223 = vand.u32 %v1222, 4294901760
      %1224 = vmatmul.mubr.f32.gmra.mrb[0].mxu0 %v1223
      %v1225 = vpop.f32.mrb[0].mxu0
      %v1226 = vadd.f32 %v1071, %v1225
      %v1227 = vpop.f32.mrb[0].mxu0
      %1228 = vmatprep.mubr.f32.mxu0 0.0
      %v1229 = vand.u32 %v612, 4294901760
      %v1230 = vsub.f32 %v612, %v1229
      %v1231 = vand.u32 %v1230, 4294901760
      %1232 = vmatmul.mubr.f32.gmra.mrb[0].mxu0 %v1231
      %v1233 = vpop.f32.mrb[0].mxu0
      %v1234 = vadd.f32 %v1078, %v1233
      %v1235 = vpop.f32.mrb[0].mxu0
      %1236 = vmatprep.mubr.f32.mxu0 0.0
      %v1237 = vand.u32 %v615, 4294901760
      %v1238 = vsub.f32 %v615, %v1237
      %v1239 = vand.u32 %v1238, 4294901760
      %1240 = vmatmul.mubr.f32.gmra.mrb[0].mxu0 %v1239
      %v1241 = vpop.f32.mrb[0].mxu0
      %v1242 = vadd.f32 %v1085, %v1241
      %v1243 = vpop.f32.mrb[0].mxu0
      %1244 = vmatprep.mubr.f32.mxu0 0.0
      %v1245 = vand.u32 %v618, 4294901760
      %v1246 = vsub.f32 %v618, %v1245
      %v1247 = vand.u32 %v1246, 4294901760
      %1248 = vmatmul.mubr.f32.gmra.mrb[0].mxu0 %v1247
      %v1249 = vpop.f32.mrb[0].mxu0
      %v1250 = vadd.f32 %v1092, %v1249
      %v1251 = vpop.f32.mrb[0].mxu0
      %1252 = vmatprep.mubr.f32.mxu0 0.0
      %v1253 = vand.u32 %v621, 4294901760
      %v1254 = vsub.f32 %v621, %v1253
      %v1255 = vand.u32 %v1254, 4294901760
      %1256 = vmatmul.mubr.f32.gmra.mrb[0].mxu0 %v1255
      %v1257 = vpop.f32.mrb[0].mxu0
      %v1258 = vadd.f32 %v1099, %v1257
      %v1259 = vpop.f32.mrb[0].mxu0
      %1260 = vmatprep.mubr.f32.mxu0 0.0
      %v1261 = vand.u32 %v624, 4294901760
      %v1262 = vsub.f32 %v624, %v1261
      %v1263 = vand.u32 %v1262, 4294901760
      %1264 = vmatmul.mubr.f32.gmra.mrb[0].mxu0 %v1263
      %v1265 = vpop.f32.mrb[0].mxu0
      %v1266 = vadd.f32 %v1106, %v1265
      %v1267 = vpop.f32.mrb[0].mxu0
      %1268 = vmatprep.mubr.f32.mxu0 0.0
      %v1269 = vand.u32 %v627, 4294901760
      %v1270 = vsub.f32 %v627, %v1269
      %v1271 = vand.u32 %v1270, 4294901760
      %1272 = vmatmul.mubr.f32.gmra.mrb[0].mxu0 %v1271
      %v1273 = vpop.f32.mrb[0].mxu0
      %v1274 = vadd.f32 %v1113, %v1273
      %v1275 = vpop.f32.mrb[0].mxu0
      %1276 = vmatprep.mubr.f32.mxu0 0.0
      %v1277 = vand.u32 %v630, 4294901760
      %v1278 = vsub.f32 %v630, %v1277
      %v1279 = vand.u32 %v1278, 4294901760
      %1280 = vmatmul.mubr.f32.gmra.mrb[0].mxu0 %v1279
      %v1281 = vpop.f32.mrb[0].mxu0
      %v1282 = vadd.f32 %v1120, %v1281
      %v1283 = vpop.f32.mrb[0].mxu0
      %1284 = vmatprep.mubr.f32.mxu0 0.0
      %v1285 = vand.u32 %v633, 4294901760
      %v1286 = vsub.f32 %v633, %v1285
      %v1287 = vand.u32 %v1286, 4294901760
      %1288 = vmatmul.mubr.f32.gmra.mrb[0].mxu0 %v1287
      %v1289 = vpop.f32.mrb[0].mxu0
      %v1290 = vadd.f32 %v1127, %v1289
      %v1291 = vpop.f32.mrb[0].mxu0
      %1292 = vmatprep.mubr.f32.mxu0 0.0
      %v1293 = vand.u32 %v636, 4294901760
      %v1294 = vsub.f32 %v636, %v1293
      %v1295 = vand.u32 %v1294, 4294901760
      %1296 = vmatmul.mubr.f32.gmra.mrb[0].mxu0 %v1295
      %v1297 = vpop.f32.mrb[0].mxu0
      %v1298 = vadd.f32 %v1134, %v1297
      %v1299 = vpop.f32.mrb[0].mxu0
      %1300 = vmatprep.mubr.f32.mxu0 0.0
      %v1301 = vand.u32 %v639, 4294901760
      %v1302 = vsub.f32 %v639, %v1301
      %v1303 = vand.u32 %v1302, 4294901760
      %1304 = vmatmul.mubr.f32.gmra.mrb[0].mxu0 %v1303
      %v1305 = vpop.f32.mrb[0].mxu0
      %v1306 = vadd.f32 %v1141, %v1305
      %v1307 = vpop.f32.mrb[0].mxu0
      %1308 = vdwg.mxu0
      %1309 = vmatprep.subr.mxu0 0.0
      %v1310 = vand.u32 %v516, 4294901760
      %v1311 = vsub.f32 %v516, %v1310
      %v1312 = vand.u32 %v1311, 4294901760
      %1313 = vmatpush1.msra.mxu0 %v1312
      %1314 = vmatprep.subr.mxu0 0.0
      %v1315 = vand.u32 %v517, 4294901760
      %v1316 = vsub.f32 %v517, %v1315
      %v1317 = vand.u32 %v1316, 4294901760
      %1318 = vmatpush1.msra.mxu0 %v1317
      %1319 = vmatprep.subr.mxu0 0.0
      %v1320 = vand.u32 %v518, 4294901760
      %v1321 = vsub.f32 %v518, %v1320
      %v1322 = vand.u32 %v1321, 4294901760
      %1323 = vmatpush1.msra.mxu0 %v1322
      %1324 = vmatprep.subr.mxu0 0.0
      %v1325 = vand.u32 %v519, 4294901760
      %v1326 = vsub.f32 %v519, %v1325
      %v1327 = vand.u32 %v1326, 4294901760
      %1328 = vmatpush1.msra.mxu0 %v1327
      %1329 = vmatprep.subr.mxu0 0.0
      %1330 = vmatpush1.msra.mxu0 0.0
      %1331 = vmatprep.subr.mxu0 0.0
      %1332 = vmatpush1.msra.mxu0 0.0
      %1333 = vmatprep.subr.mxu0 0.0
      %1334 = vmatpush1.msra.mxu0 0.0
      %1335 = vmatprep.subr.mxu0 0.0
      %1336 = vmatpush1.msra.mxu0 0.0
      %1337 = vmatprep.subr.mxu0 0.0
      %1338 = vmatpush1.msra.mxu0 0.0
      %1339 = vmatprep.subr.mxu0 0.0
      %1340 = vmatpush1.msra.mxu0 0.0
      %1341 = vmatprep.subr.mxu0 0.0
      %1342 = vmatpush1.msra.mxu0 0.0
      %1343 = vmatprep.subr.mxu0 0.0
      %1344 = vmatpush1.msra.mxu0 0.0
      %1345 = vmatprep.subr.mxu0 0.0
      %1346 = vmatpush1.msra.mxu0 0.0
      %1347 = vmatprep.subr.mxu0 0.0
      %1348 = vmatpush1.msra.mxu0 0.0
      %1349 = vmatprep.subr.mxu0 0.0
      %1350 = vmatpush1.msra.mxu0 0.0
      %1351 = vmatprep.subr.mxu0 0.0
      %1352 = vmatpush1.msra.mxu0 0.0
      %1353 = vmatprep.subr.mxu0 0.0
      %1354 = vmatpush1.msra.mxu0 0.0
      %1355 = vmatprep.subr.mxu0 0.0
      %1356 = vmatpush1.msra.mxu0 0.0
      %1357 = vmatprep.subr.mxu0 0.0
      %1358 = vmatpush1.msra.mxu0 0.0
      %1359 = vmatprep.subr.mxu0 0.0
      %1360 = vmatpush1.msra.mxu0 0.0
      %1361 = vmatprep.subr.mxu0 0.0
      %1362 = vmatpush1.msra.mxu0 0.0
      %1363 = vmatprep.subr.mxu0 0.0
      %1364 = vmatpush1.msra.mxu0 0.0
      %1365 = vmatprep.subr.mxu0 0.0
      %1366 = vmatpush1.msra.mxu0 0.0
      %1367 = vmatprep.subr.mxu0 0.0
      %1368 = vmatpush1.msra.mxu0 0.0
      %1369 = vmatprep.subr.mxu0 0.0
      %1370 = vmatpush1.msra.mxu0 0.0
      %1371 = vmatprep.subr.mxu0 0.0
      %1372 = vmatpush1.msra.mxu0 0.0
      %1373 = vmatprep.subr.mxu0 0.0
      %1374 = vmatpush1.msra.mxu0 0.0
      %1375 = vmatprep.subr.mxu0 0.0
      %1376 = vmatpush1.msra.mxu0 0.0
      %1377 = vmatprep.subr.mxu0 0.0
      %1378 = vmatpush1.msra.mxu0 0.0
      %1379 = vmatprep.subr.mxu0 0.0
      %1380 = vmatpush1.msra.mxu0 0.0
      %1381 = vmatprep.subr.mxu0 0.0
      %1382 = vmatpush1.msra.mxu0 0.0
      %1383 = vmatprep.subr.mxu0 0.0
      %1384 = vmatpush1.msra.mxu0 0.0
      %1385 = vmatprep.mubr.f32.mxu0 0.0
      %v1386 = vand.u32 %v606, 4294901760
      %1387 = vmatmul.mubr.f32.gmra.mrb[0].mxu0 %v1386
      %v1388 = vpop.f32.mrb[0].mxu0
      %v1389 = vadd.f32 %v1218, %v1388
      %v1390 = vpop.f32.mrb[0].mxu0
      %1391 = vmatprep.mubr.f32.mxu0 0.0
      %v1392 = vand.u32 %v609, 4294901760
      %1393 = vmatmul.mubr.f32.gmra.mrb[0].mxu0 %v1392
      %v1394 = vpop.f32.mrb[0].mxu0
      %v1395 = vadd.f32 %v1226, %v1394
      %v1396 = vpop.f32.mrb[0].mxu0
      %1397 = vmatprep.mubr.f32.mxu0 0.0
      %v1398 = vand.u32 %v612, 4294901760
      %1399 = vmatmul.mubr.f32.gmra.mrb[0].mxu0 %v1398
      %v1400 = vpop.f32.mrb[0].mxu0
      %v1401 = vadd.f32 %v1234, %v1400
      %v1402 = vpop.f32.mrb[0].mxu0
      %1403 = vmatprep.mubr.f32.mxu0 0.0
      %v1404 = vand.u32 %v615, 4294901760
      %1405 = vmatmul.mubr.f32.gmra.mrb[0].mxu0 %v1404
      %v1406 = vpop.f32.mrb[0].mxu0
      %v1407 = vadd.f32 %v1242, %v1406
      %v1408 = vpop.f32.mrb[0].mxu0
      %1409 = vmatprep.mubr.f32.mxu0 0.0
      %v1410 = vand.u32 %v618, 4294901760
      %1411 = vmatmul.mubr.f32.gmra.mrb[0].mxu0 %v1410
      %v1412 = vpop.f32.mrb[0].mxu0
      %v1413 = vadd.f32 %v1250, %v1412
      %v1414 = vpop.f32.mrb[0].mxu0
      %1415 = vmatprep.mubr.f32.mxu0 0.0
      %v1416 = vand.u32 %v621, 4294901760
      %1417 = vmatmul.mubr.f32.gmra.mrb[0].mxu0 %v1416
      %v1418 = vpop.f32.mrb[0].mxu0
      %v1419 = vadd.f32 %v1258, %v1418
      %v1420 = vpop.f32.mrb[0].mxu0
      %1421 = vmatprep.mubr.f32.mxu0 0.0
      %v1422 = vand.u32 %v624, 4294901760
      %1423 = vmatmul.mubr.f32.gmra.mrb[0].mxu0 %v1422
      %v1424 = vpop.f32.mrb[0].mxu0
      %v1425 = vadd.f32 %v1266, %v1424
      %v1426 = vpop.f32.mrb[0].mxu0
      %1427 = vmatprep.mubr.f32.mxu0 0.0
      %v1428 = vand.u32 %v627, 4294901760
      %1429 = vmatmul.mubr.f32.gmra.mrb[0].mxu0 %v1428
      %v1430 = vpop.f32.mrb[0].mxu0
      %v1431 = vadd.f32 %v1274, %v1430
      %v1432 = vpop.f32.mrb[0].mxu0
      %1433 = vmatprep.mubr.f32.mxu0 0.0
      %v1434 = vand.u32 %v630, 4294901760
      %1435 = vmatmul.mubr.f32.gmra.mrb[0].mxu0 %v1434
      %v1436 = vpop.f32.mrb[0].mxu0
      %v1437 = vadd.f32 %v1282, %v1436
      %v1438 = vpop.f32.mrb[0].mxu0
      %1439 = vmatprep.mubr.f32.mxu0 0.0
      %v1440 = vand.u32 %v633, 4294901760
      %1441 = vmatmul.mubr.f32.gmra.mrb[0].mxu0 %v1440
      %v1442 = vpop.f32.mrb[0].mxu0
      %v1443 = vadd.f32 %v1290, %v1442
      %v1444 = vpop.f32.mrb[0].mxu0
      %1445 = vmatprep.mubr.f32.mxu0 0.0
      %v1446 = vand.u32 %v636, 4294901760
      %1447 = vmatmul.mubr.f32.gmra.mrb[0].mxu0 %v1446
      %v1448 = vpop.f32.mrb[0].mxu0
      %v1449 = vadd.f32 %v1298, %v1448
      %v1450 = vpop.f32.mrb[0].mxu0
      %1451 = vmatprep.mubr.f32.mxu0 0.0
      %v1452 = vand.u32 %v639, 4294901760
      %1453 = vmatmul.mubr.f32.gmra.mrb[0].mxu0 %v1452
      %v1454 = vpop.f32.mrb[0].mxu0
      %v1455 = vadd.f32 %v1306, %v1454
      %v1456 = vpop.f32.mrb[0].mxu0
      %1457 = vdwg.mxu0
      %1458 = vmatprep.subr.mxu0 0.0
      %v1459 = vand.u32 %v516, 4294901760
      %1460 = vmatpush1.msra.mxu0 %v1459
      %1461 = vmatprep.subr.mxu0 0.0
      %v1462 = vand.u32 %v517, 4294901760
      %1463 = vmatpush1.msra.mxu0 %v1462
      %1464 = vmatprep.subr.mxu0 0.0
      %v1465 = vand.u32 %v518, 4294901760
      %1466 = vmatpush1.msra.mxu0 %v1465
      %1467 = vmatprep.subr.mxu0 0.0
      %v1468 = vand.u32 %v519, 4294901760
      %1469 = vmatpush1.msra.mxu0 %v1468
      %1470 = vmatprep.subr.mxu0 0.0
      %1471 = vmatpush1.msra.mxu0 0.0
      %1472 = vmatprep.subr.mxu0 0.0
      %1473 = vmatpush1.msra.mxu0 0.0
      %1474 = vmatprep.subr.mxu0 0.0
      %1475 = vmatpush1.msra.mxu0 0.0
      %1476 = vmatprep.subr.mxu0 0.0
      %1477 = vmatpush1.msra.mxu0 0.0
      %1478 = vmatprep.subr.mxu0 0.0
      %1479 = vmatpush1.msra.mxu0 0.0
      %1480 = vmatprep.subr.mxu0 0.0
      %1481 = vmatpush1.msra.mxu0 0.0
      %1482 = vmatprep.subr.mxu0 0.0
      %1483 = vmatpush1.msra.mxu0 0.0
      %1484 = vmatprep.subr.mxu0 0.0
      %1485 = vmatpush1.msra.mxu0 0.0
      %1486 = vmatprep.subr.mxu0 0.0
      %1487 = vmatpush1.msra.mxu0 0.0
      %1488 = vmatprep.subr.mxu0 0.0
      %1489 = vmatpush1.msra.mxu0 0.0
      %1490 = vmatprep.subr.mxu0 0.0
      %1491 = vmatpush1.msra.mxu0 0.0
      %1492 = vmatprep.subr.mxu0 0.0
      %1493 = vmatpush1.msra.mxu0 0.0
      %1494 = vmatprep.subr.mxu0 0.0
      %1495 = vmatpush1.msra.mxu0 0.0
      %1496 = vmatprep.subr.mxu0 0.0
      %1497 = vmatpush1.msra.mxu0 0.0
      %1498 = vmatprep.subr.mxu0 0.0
      %1499 = vmatpush1.msra.mxu0 0.0
      %1500 = vmatprep.subr.mxu0 0.0
      %1501 = vmatpush1.msra.mxu0 0.0
      %1502 = vmatprep.subr.mxu0 0.0
      %1503 = vmatpush1.msra.mxu0 0.0
      %1504 = vmatprep.subr.mxu0 0.0
      %1505 = vmatpush1.msra.mxu0 0.0
      %1506 = vmatprep.subr.mxu0 0.0
      %1507 = vmatpush1.msra.mxu0 0.0
      %1508 = vmatprep.subr.mxu0 0.0
      %1509 = vmatpush1.msra.mxu0 0.0
      %1510 = vmatprep.subr.mxu0 0.0
      %1511 = vmatpush1.msra.mxu0 0.0
      %1512 = vmatprep.subr.mxu0 0.0
      %1513 = vmatpush1.msra.mxu0 0.0
      %1514 = vmatprep.subr.mxu0 0.0
      %1515 = vmatpush1.msra.mxu0 0.0
      %1516 = vmatprep.subr.mxu0 0.0
      %1517 = vmatpush1.msra.mxu0 0.0
      %1518 = vmatprep.subr.mxu0 0.0
      %1519 = vmatpush1.msra.mxu0 0.0
      %1520 = vmatprep.subr.mxu0 0.0
      %1521 = vmatpush1.msra.mxu0 0.0
      %1522 = vmatprep.subr.mxu0 0.0
      %1523 = vmatpush1.msra.mxu0 0.0
      %1524 = vmatprep.subr.mxu0 0.0
      %1525 = vmatpush1.msra.mxu0 0.0
      %1526 = vmatprep.mubr.f32.mxu0 0.0
      %v1527 = vand.u32 %v606, 4294901760
      %1528 = vmatmul.mubr.f32.gmra.mrb[0].mxu0 %v1527
      %v1529 = vpop.f32.mrb[0].mxu0
      %v1530 = vadd.f32 %v1389, %v1529
      %v1531 = vpop.f32.mrb[0].mxu0
      %1532 = vmatprep.mubr.f32.mxu0 0.0
      %v1533 = vand.u32 %v609, 4294901760
      %1534 = vmatmul.mubr.f32.gmra.mrb[0].mxu0 %v1533
      %v1535 = vpop.f32.mrb[0].mxu0
      %v1536 = vadd.f32 %v1395, %v1535
      %v1537 = vpop.f32.mrb[0].mxu0
      %1538 = vmatprep.mubr.f32.mxu0 0.0
      %v1539 = vand.u32 %v612, 4294901760
      %1540 = vmatmul.mubr.f32.gmra.mrb[0].mxu0 %v1539
      %v1541 = vpop.f32.mrb[0].mxu0
      %v1542 = vadd.f32 %v1401, %v1541
      %v1543 = vpop.f32.mrb[0].mxu0
      %1544 = vmatprep.mubr.f32.mxu0 0.0
      %v1545 = vand.u32 %v615, 4294901760
      %1546 = vmatmul.mubr.f32.gmra.mrb[0].mxu0 %v1545
      %v1547 = vpop.f32.mrb[0].mxu0
      %v1548 = vadd.f32 %v1407, %v1547
      %v1549 = vpop.f32.mrb[0].mxu0
      %1550 = vmatprep.mubr.f32.mxu0 0.0
      %v1551 = vand.u32 %v618, 4294901760
      %1552 = vmatmul.mubr.f32.gmra.mrb[0].mxu0 %v1551
      %v1553 = vpop.f32.mrb[0].mxu0
      %v1554 = vadd.f32 %v1413, %v1553
      %v1555 = vpop.f32.mrb[0].mxu0
      %1556 = vmatprep.mubr.f32.mxu0 0.0
      %v1557 = vand.u32 %v621, 4294901760
      %1558 = vmatmul.mubr.f32.gmra.mrb[0].mxu0 %v1557
      %v1559 = vpop.f32.mrb[0].mxu0
      %v1560 = vadd.f32 %v1419, %v1559
      %v1561 = vpop.f32.mrb[0].mxu0
      %1562 = vmatprep.mubr.f32.mxu0 0.0
      %v1563 = vand.u32 %v624, 4294901760
      %1564 = vmatmul.mubr.f32.gmra.mrb[0].mxu0 %v1563
      %v1565 = vpop.f32.mrb[0].mxu0
      %v1566 = vadd.f32 %v1425, %v1565
      %v1567 = vpop.f32.mrb[0].mxu0
      %1568 = vmatprep.mubr.f32.mxu0 0.0
      %v1569 = vand.u32 %v627, 4294901760
      %1570 = vmatmul.mubr.f32.gmra.mrb[0].mxu0 %v1569
      %v1571 = vpop.f32.mrb[0].mxu0
      %v1572 = vadd.f32 %v1431, %v1571
      %v1573 = vpop.f32.mrb[0].mxu0
      %1574 = vmatprep.mubr.f32.mxu0 0.0
      %v1575 = vand.u32 %v630, 4294901760
      %1576 = vmatmul.mubr.f32.gmra.mrb[0].mxu0 %v1575
      %v1577 = vpop.f32.mrb[0].mxu0
      %v1578 = vadd.f32 %v1437, %v1577
      %v1579 = vpop.f32.mrb[0].mxu0
      %1580 = vmatprep.mubr.f32.mxu0 0.0
      %v1581 = vand.u32 %v633, 4294901760
      %1582 = vmatmul.mubr.f32.gmra.mrb[0].mxu0 %v1581
      %v1583 = vpop.f32.mrb[0].mxu0
      %v1584 = vadd.f32 %v1443, %v1583
      %v1585 = vpop.f32.mrb[0].mxu0
      %1586 = vmatprep.mubr.f32.mxu0 0.0
      %v1587 = vand.u32 %v636, 4294901760
      %1588 = vmatmul.mubr.f32.gmra.mrb[0].mxu0 %v1587
      %v1589 = vpop.f32.mrb[0].mxu0
      %v1590 = vadd.f32 %v1449, %v1589
      %v1591 = vpop.f32.mrb[0].mxu0
      %1592 = vmatprep.mubr.f32.mxu0 0.0
      %v1593 = vand.u32 %v639, 4294901760
      %1594 = vmatmul.mubr.f32.gmra.mrb[0].mxu0 %v1593
      %v1595 = vpop.f32.mrb[0].mxu0
      %v1596 = vadd.f32 %v1455, %v1595
      %v1597 = vpop.f32.mrb[0].mxu0
      %1598 = vdwg.mxu0
      %1599 = vrot.lane.b32.xlu0 %v453, 127
      %v1600 = vpop.permute.xlu0 %1599
      %v1601 = vlaneseq
      %v1602 = vshrl.u32 %v1601, 7
      %v1603 = vsub.s32 0, %v1602
      %v1604 = vrot.slane %v455, %v1603
      %v1605 = vmul.f32 %v1600, %v1604
      %v1606 = vlaneseq
      %v1607 = vshrl.u32 %v1606, 7
      %v1608 = vsub.s32 0, %v1607
      %v1609 = vrot.slane %v1605, %v1608
      %v1610 = vmul.f32 %v1609, %v1530
      %v1611 = vmul.f32 %v1609, %v1536
      %v1612 = vadd.f32 %v1610, 0.0
      %v1613 = vadd.f32 %v1611, 0.0
      %v1614 = vlaneseq
      %v1615 = vshrl.u32 %v1614, 7
      %v1616 = vsub.s32 1, %v1615
      %v1617 = vrot.slane %v1605, %v1616
      %v1618 = vmul.f32 %v1617, %v1542
      %v1619 = vmul.f32 %v1617, %v1548
      %v1620 = vadd.f32 %v1612, %v1618
      %v1621 = vadd.f32 %v1613, %v1619
      %v1622 = vlaneseq
      %v1623 = vshrl.u32 %v1622, 7
      %v1624 = vsub.s32 2, %v1623
      %v1625 = vrot.slane %v1605, %v1624
      %v1626 = vmul.f32 %v1625, %v1554
      %v1627 = vmul.f32 %v1625, %v1560
      %v1628 = vadd.f32 %v1620, %v1626
      %v1629 = vadd.f32 %v1621, %v1627
      %v1630 = vlaneseq
      %v1631 = vshrl.u32 %v1630, 7
      %v1632 = vsub.s32 3, %v1631
      %v1633 = vrot.slane %v1605, %v1632
      %v1634 = vmul.f32 %v1633, %v1566
      %v1635 = vmul.f32 %v1633, %v1572
      %v1636 = vadd.f32 %v1628, %v1634
      %v1637 = vadd.f32 %v1629, %v1635
      %v1638 = vlaneseq
      %v1639 = vshrl.u32 %v1638, 7
      %v1640 = vsub.s32 4, %v1639
      %v1641 = vrot.slane %v1605, %v1640
      %v1642 = vmul.f32 %v1641, %v1578
      %v1643 = vmul.f32 %v1641, %v1584
      %v1644 = vadd.f32 %v1636, %v1642
      %v1645 = vadd.f32 %v1637, %v1643
      %v1646 = vlaneseq
      %v1647 = vshrl.u32 %v1646, 7
      %v1648 = vsub.s32 5, %v1647
      %v1649 = vrot.slane %v1605, %v1648
      %v1650 = vmul.f32 %v1649, %v1590
      %v1651 = vmul.f32 %v1649, %v1596
      %v1652 = vadd.f32 %v1644, %v1650
      %v1653 = vadd.f32 %v1645, %v1651
      %v1654 = vlaneseq
      %v1655 = vshrl.u32 %v1654, 7
      %v1656 = vsub.s32 1, %v1655
      %v1657 = vrot.slane %v454, %v1656
      %v1658 = vmul.f32 %v1657, %v467
      %v1659 = vmul.f32 %v1657, %v472
      %v1660 = vmul.f32 %v1657, %v477
      %v1661 = vmul.f32 %v1657, %v482
      %v1662 = vadd.f32 %v1658, %v495
      %v1663 = vadd.f32 %v1659, %v500
      %v1664 = vadd.f32 %v1660, %v505
      %v1665 = vadd.f32 %v1661, %v510
      %v1666 = vmax.f32 %v1662, 0.0
      %v1667 = vmax.f32 %v1663, 0.0
      %v1668 = vmax.f32 %v1664, 0.0
      %v1669 = vmax.f32 %v1665, 0.0
      %1670 = vmatprep.subr.mxu0 0.0
      %v1671 = vand.u32 %v1666, 4294901760
      %1672 = vmatpush1.msra.mxu0 %v1671
      %1673 = vmatprep.subr.mxu0 0.0
      %v1674 = vand.u32 %v1667, 4294901760
      %1675 = vmatpush1.msra.mxu0 %v1674
      %1676 = vmatprep.subr.mxu0 0.0
      %v1677 = vand.u32 %v1668, 4294901760
      %1678 = vmatpush1.msra.mxu0 %v1677
      %1679 = vmatprep.subr.mxu0 0.0
      %v1680 = vand.u32 %v1669, 4294901760
      %1681 = vmatpush1.msra.mxu0 %v1680
      %1682 = vmatprep.subr.mxu0 0.0
      %1683 = vmatpush1.msra.mxu0 0.0
      %1684 = vmatprep.subr.mxu0 0.0
      %1685 = vmatpush1.msra.mxu0 0.0
      %1686 = vmatprep.subr.mxu0 0.0
      %1687 = vmatpush1.msra.mxu0 0.0
      %1688 = vmatprep.subr.mxu0 0.0
      %1689 = vmatpush1.msra.mxu0 0.0
      %1690 = vmatprep.subr.mxu0 0.0
      %1691 = vmatpush1.msra.mxu0 0.0
      %1692 = vmatprep.subr.mxu0 0.0
      %1693 = vmatpush1.msra.mxu0 0.0
      %1694 = vmatprep.subr.mxu0 0.0
      %1695 = vmatpush1.msra.mxu0 0.0
      %1696 = vmatprep.subr.mxu0 0.0
      %1697 = vmatpush1.msra.mxu0 0.0
      %1698 = vmatprep.subr.mxu0 0.0
      %1699 = vmatpush1.msra.mxu0 0.0
      %1700 = vmatprep.subr.mxu0 0.0
      %1701 = vmatpush1.msra.mxu0 0.0
      %1702 = vmatprep.subr.mxu0 0.0
      %1703 = vmatpush1.msra.mxu0 0.0
      %1704 = vmatprep.subr.mxu0 0.0
      %1705 = vmatpush1.msra.mxu0 0.0
      %1706 = vmatprep.subr.mxu0 0.0
      %1707 = vmatpush1.msra.mxu0 0.0
      %1708 = vmatprep.subr.mxu0 0.0
      %1709 = vmatpush1.msra.mxu0 0.0
      %1710 = vmatprep.subr.mxu0 0.0
      %1711 = vmatpush1.msra.mxu0 0.0
      %1712 = vmatprep.subr.mxu0 0.0
      %1713 = vmatpush1.msra.mxu0 0.0
      %1714 = vmatprep.subr.mxu0 0.0
      %1715 = vmatpush1.msra.mxu0 0.0
      %1716 = vmatprep.subr.mxu0 0.0
      %1717 = vmatpush1.msra.mxu0 0.0
      %1718 = vmatprep.subr.mxu0 0.0
      %1719 = vmatpush1.msra.mxu0 0.0
      %1720 = vmatprep.subr.mxu0 0.0
      %1721 = vmatpush1.msra.mxu0 0.0
      %1722 = vmatprep.subr.mxu0 0.0
      %1723 = vmatpush1.msra.mxu0 0.0
      %1724 = vmatprep.subr.mxu0 0.0
      %1725 = vmatpush1.msra.mxu0 0.0
      %1726 = vmatprep.subr.mxu0 0.0
      %1727 = vmatpush1.msra.mxu0 0.0
      %1728 = vmatprep.subr.mxu0 0.0
      %1729 = vmatpush1.msra.mxu0 0.0
      %1730 = vmatprep.subr.mxu0 0.0
      %1731 = vmatpush1.msra.mxu0 0.0
      %1732 = vmatprep.subr.mxu0 0.0
      %1733 = vmatpush1.msra.mxu0 0.0
      %1734 = vmatprep.subr.mxu0 0.0
      %1735 = vmatpush1.msra.mxu0 0.0
      %1736 = vmatprep.subr.mxu0 0.0
      %1737 = vmatpush1.msra.mxu0 0.0
      %1738 = vmatprep.mubr.f32.mxu0 0.0
      %v1739 = vand.u32 %v606, 4294901760
      %v1740 = vsub.f32 %v606, %v1739
      %v1741 = vand.u32 %v1740, 4294901760
      %v1742 = vsub.f32 %v1740, %v1741
      %v1743 = vand.u32 %v1742, 4294901760
      %1744 = vmatmul.mubr.f32.gmra.mrb[0].mxu0 %v1743
      %v1745 = vpop.f32.mrb[0].mxu0
      %v1746 = vadd.f32 %v547, %v1745
      %v1747 = vpop.f32.mrb[0].mxu0
      %1748 = vmatprep.mubr.f32.mxu0 0.0
      %v1749 = vand.u32 %v609, 4294901760
      %v1750 = vsub.f32 %v609, %v1749
      %v1751 = vand.u32 %v1750, 4294901760
      %v1752 = vsub.f32 %v1750, %v1751
      %v1753 = vand.u32 %v1752, 4294901760
      %1754 = vmatmul.mubr.f32.gmra.mrb[0].mxu0 %v1753
      %v1755 = vpop.f32.mrb[0].mxu0
      %v1756 = vadd.f32 %v552, %v1755
      %v1757 = vpop.f32.mrb[0].mxu0
      %1758 = vmatprep.mubr.f32.mxu0 0.0
      %v1759 = vand.u32 %v612, 4294901760
      %v1760 = vsub.f32 %v612, %v1759
      %v1761 = vand.u32 %v1760, 4294901760
      %v1762 = vsub.f32 %v1760, %v1761
      %v1763 = vand.u32 %v1762, 4294901760
      %1764 = vmatmul.mubr.f32.gmra.mrb[0].mxu0 %v1763
      %v1765 = vpop.f32.mrb[0].mxu0
      %v1766 = vadd.f32 %v557, %v1765
      %v1767 = vpop.f32.mrb[0].mxu0
      %1768 = vmatprep.mubr.f32.mxu0 0.0
      %v1769 = vand.u32 %v615, 4294901760
      %v1770 = vsub.f32 %v615, %v1769
      %v1771 = vand.u32 %v1770, 4294901760
      %v1772 = vsub.f32 %v1770, %v1771
      %v1773 = vand.u32 %v1772, 4294901760
      %1774 = vmatmul.mubr.f32.gmra.mrb[0].mxu0 %v1773
      %v1775 = vpop.f32.mrb[0].mxu0
      %v1776 = vadd.f32 %v562, %v1775
      %v1777 = vpop.f32.mrb[0].mxu0
      %1778 = vmatprep.mubr.f32.mxu0 0.0
      %v1779 = vand.u32 %v618, 4294901760
      %v1780 = vsub.f32 %v618, %v1779
      %v1781 = vand.u32 %v1780, 4294901760
      %v1782 = vsub.f32 %v1780, %v1781
      %v1783 = vand.u32 %v1782, 4294901760
      %1784 = vmatmul.mubr.f32.gmra.mrb[0].mxu0 %v1783
      %v1785 = vpop.f32.mrb[0].mxu0
      %v1786 = vadd.f32 %v567, %v1785
      %v1787 = vpop.f32.mrb[0].mxu0
      %1788 = vmatprep.mubr.f32.mxu0 0.0
      %v1789 = vand.u32 %v621, 4294901760
      %v1790 = vsub.f32 %v621, %v1789
      %v1791 = vand.u32 %v1790, 4294901760
      %v1792 = vsub.f32 %v1790, %v1791
      %v1793 = vand.u32 %v1792, 4294901760
      %1794 = vmatmul.mubr.f32.gmra.mrb[0].mxu0 %v1793
      %v1795 = vpop.f32.mrb[0].mxu0
      %v1796 = vadd.f32 %v572, %v1795
      %v1797 = vpop.f32.mrb[0].mxu0
      %1798 = vmatprep.mubr.f32.mxu0 0.0
      %v1799 = vand.u32 %v624, 4294901760
      %v1800 = vsub.f32 %v624, %v1799
      %v1801 = vand.u32 %v1800, 4294901760
      %v1802 = vsub.f32 %v1800, %v1801
      %v1803 = vand.u32 %v1802, 4294901760
      %1804 = vmatmul.mubr.f32.gmra.mrb[0].mxu0 %v1803
      %v1805 = vpop.f32.mrb[0].mxu0
      %v1806 = vadd.f32 %v577, %v1805
      %v1807 = vpop.f32.mrb[0].mxu0
      %1808 = vmatprep.mubr.f32.mxu0 0.0
      %v1809 = vand.u32 %v627, 4294901760
      %v1810 = vsub.f32 %v627, %v1809
      %v1811 = vand.u32 %v1810, 4294901760
      %v1812 = vsub.f32 %v1810, %v1811
      %v1813 = vand.u32 %v1812, 4294901760
      %1814 = vmatmul.mubr.f32.gmra.mrb[0].mxu0 %v1813
      %v1815 = vpop.f32.mrb[0].mxu0
      %v1816 = vadd.f32 %v582, %v1815
      %v1817 = vpop.f32.mrb[0].mxu0
      %1818 = vmatprep.mubr.f32.mxu0 0.0
      %v1819 = vand.u32 %v630, 4294901760
      %v1820 = vsub.f32 %v630, %v1819
      %v1821 = vand.u32 %v1820, 4294901760
      %v1822 = vsub.f32 %v1820, %v1821
      %v1823 = vand.u32 %v1822, 4294901760
      %1824 = vmatmul.mubr.f32.gmra.mrb[0].mxu0 %v1823
      %v1825 = vpop.f32.mrb[0].mxu0
      %v1826 = vadd.f32 %v587, %v1825
      %v1827 = vpop.f32.mrb[0].mxu0
      %1828 = vmatprep.mubr.f32.mxu0 0.0
      %v1829 = vand.u32 %v633, 4294901760
      %v1830 = vsub.f32 %v633, %v1829
      %v1831 = vand.u32 %v1830, 4294901760
      %v1832 = vsub.f32 %v1830, %v1831
      %v1833 = vand.u32 %v1832, 4294901760
      %1834 = vmatmul.mubr.f32.gmra.mrb[0].mxu0 %v1833
      %v1835 = vpop.f32.mrb[0].mxu0
      %v1836 = vadd.f32 %v592, %v1835
      %v1837 = vpop.f32.mrb[0].mxu0
      %1838 = vmatprep.mubr.f32.mxu0 0.0
      %v1839 = vand.u32 %v636, 4294901760
      %v1840 = vsub.f32 %v636, %v1839
      %v1841 = vand.u32 %v1840, 4294901760
      %v1842 = vsub.f32 %v1840, %v1841
      %v1843 = vand.u32 %v1842, 4294901760
      %1844 = vmatmul.mubr.f32.gmra.mrb[0].mxu0 %v1843
      %v1845 = vpop.f32.mrb[0].mxu0
      %v1846 = vadd.f32 %v597, %v1845
      %v1847 = vpop.f32.mrb[0].mxu0
      %1848 = vmatprep.mubr.f32.mxu0 0.0
      %v1849 = vand.u32 %v639, 4294901760
      %v1850 = vsub.f32 %v639, %v1849
      %v1851 = vand.u32 %v1850, 4294901760
      %v1852 = vsub.f32 %v1850, %v1851
      %v1853 = vand.u32 %v1852, 4294901760
      %1854 = vmatmul.mubr.f32.gmra.mrb[0].mxu0 %v1853
      %v1855 = vpop.f32.mrb[0].mxu0
      %v1856 = vadd.f32 %v602, %v1855
      %v1857 = vpop.f32.mrb[0].mxu0
      %1858 = vdwg.mxu0
      %1859 = vmatprep.subr.mxu0 0.0
      %v1860 = vand.u32 %v1666, 4294901760
      %v1861 = vsub.f32 %v1666, %v1860
      %v1862 = vand.u32 %v1861, 4294901760
      %v1863 = vsub.f32 %v1861, %v1862
      %v1864 = vand.u32 %v1863, 4294901760
      %1865 = vmatpush1.msra.mxu0 %v1864
      %1866 = vmatprep.subr.mxu0 0.0
      %v1867 = vand.u32 %v1667, 4294901760
      %v1868 = vsub.f32 %v1667, %v1867
      %v1869 = vand.u32 %v1868, 4294901760
      %v1870 = vsub.f32 %v1868, %v1869
      %v1871 = vand.u32 %v1870, 4294901760
      %1872 = vmatpush1.msra.mxu0 %v1871
      %1873 = vmatprep.subr.mxu0 0.0
      %v1874 = vand.u32 %v1668, 4294901760
      %v1875 = vsub.f32 %v1668, %v1874
      %v1876 = vand.u32 %v1875, 4294901760
      %v1877 = vsub.f32 %v1875, %v1876
      %v1878 = vand.u32 %v1877, 4294901760
      %1879 = vmatpush1.msra.mxu0 %v1878
      %1880 = vmatprep.subr.mxu0 0.0
      %v1881 = vand.u32 %v1669, 4294901760
      %v1882 = vsub.f32 %v1669, %v1881
      %v1883 = vand.u32 %v1882, 4294901760
      %v1884 = vsub.f32 %v1882, %v1883
      %v1885 = vand.u32 %v1884, 4294901760
      %1886 = vmatpush1.msra.mxu0 %v1885
      %1887 = vmatprep.subr.mxu0 0.0
      %1888 = vmatpush1.msra.mxu0 0.0
      %1889 = vmatprep.subr.mxu0 0.0
      %1890 = vmatpush1.msra.mxu0 0.0
      %1891 = vmatprep.subr.mxu0 0.0
      %1892 = vmatpush1.msra.mxu0 0.0
      %1893 = vmatprep.subr.mxu0 0.0
      %1894 = vmatpush1.msra.mxu0 0.0
      %1895 = vmatprep.subr.mxu0 0.0
      %1896 = vmatpush1.msra.mxu0 0.0
      %1897 = vmatprep.subr.mxu0 0.0
      %1898 = vmatpush1.msra.mxu0 0.0
      %1899 = vmatprep.subr.mxu0 0.0
      %1900 = vmatpush1.msra.mxu0 0.0
      %1901 = vmatprep.subr.mxu0 0.0
      %1902 = vmatpush1.msra.mxu0 0.0
      %1903 = vmatprep.subr.mxu0 0.0
      %1904 = vmatpush1.msra.mxu0 0.0
      %1905 = vmatprep.subr.mxu0 0.0
      %1906 = vmatpush1.msra.mxu0 0.0
      %1907 = vmatprep.subr.mxu0 0.0
      %1908 = vmatpush1.msra.mxu0 0.0
      %1909 = vmatprep.subr.mxu0 0.0
      %1910 = vmatpush1.msra.mxu0 0.0
      %1911 = vmatprep.subr.mxu0 0.0
      %1912 = vmatpush1.msra.mxu0 0.0
      %1913 = vmatprep.subr.mxu0 0.0
      %1914 = vmatpush1.msra.mxu0 0.0
      %1915 = vmatprep.subr.mxu0 0.0
      %1916 = vmatpush1.msra.mxu0 0.0
      %1917 = vmatprep.subr.mxu0 0.0
      %1918 = vmatpush1.msra.mxu0 0.0
      %1919 = vmatprep.subr.mxu0 0.0
      %1920 = vmatpush1.msra.mxu0 0.0
      %1921 = vmatprep.subr.mxu0 0.0
      %1922 = vmatpush1.msra.mxu0 0.0
      %1923 = vmatprep.subr.mxu0 0.0
      %1924 = vmatpush1.msra.mxu0 0.0
      %1925 = vmatprep.subr.mxu0 0.0
      %1926 = vmatpush1.msra.mxu0 0.0
      %1927 = vmatprep.subr.mxu0 0.0
      %1928 = vmatpush1.msra.mxu0 0.0
      %1929 = vmatprep.subr.mxu0 0.0
      %1930 = vmatpush1.msra.mxu0 0.0
      %1931 = vmatprep.subr.mxu0 0.0
      %1932 = vmatpush1.msra.mxu0 0.0
      %1933 = vmatprep.subr.mxu0 0.0
      %1934 = vmatpush1.msra.mxu0 0.0
      %1935 = vmatprep.subr.mxu0 0.0
      %1936 = vmatpush1.msra.mxu0 0.0
      %1937 = vmatprep.subr.mxu0 0.0
      %1938 = vmatpush1.msra.mxu0 0.0
      %1939 = vmatprep.subr.mxu0 0.0
      %1940 = vmatpush1.msra.mxu0 0.0
      %1941 = vmatprep.subr.mxu0 0.0
      %1942 = vmatpush1.msra.mxu0 0.0
      %1943 = vmatprep.mubr.f32.mxu0 0.0
      %v1944 = vand.u32 %v606, 4294901760
      %1945 = vmatmul.mubr.f32.gmra.mrb[0].mxu0 %v1944
      %v1946 = vpop.f32.mrb[0].mxu0
      %v1947 = vadd.f32 %v1746, %v1946
      %v1948 = vpop.f32.mrb[0].mxu0
      %1949 = vmatprep.mubr.f32.mxu0 0.0
      %v1950 = vand.u32 %v609, 4294901760
      %1951 = vmatmul.mubr.f32.gmra.mrb[0].mxu0 %v1950
      %v1952 = vpop.f32.mrb[0].mxu0
      %v1953 = vadd.f32 %v1756, %v1952
      %v1954 = vpop.f32.mrb[0].mxu0
      %1955 = vmatprep.mubr.f32.mxu0 0.0
      %v1956 = vand.u32 %v612, 4294901760
      %1957 = vmatmul.mubr.f32.gmra.mrb[0].mxu0 %v1956
      %v1958 = vpop.f32.mrb[0].mxu0
      %v1959 = vadd.f32 %v1766, %v1958
      %v1960 = vpop.f32.mrb[0].mxu0
      %1961 = vmatprep.mubr.f32.mxu0 0.0
      %v1962 = vand.u32 %v615, 4294901760
      %1963 = vmatmul.mubr.f32.gmra.mrb[0].mxu0 %v1962
      %v1964 = vpop.f32.mrb[0].mxu0
      %v1965 = vadd.f32 %v1776, %v1964
      %v1966 = vpop.f32.mrb[0].mxu0
      %1967 = vmatprep.mubr.f32.mxu0 0.0
      %v1968 = vand.u32 %v618, 4294901760
      %1969 = vmatmul.mubr.f32.gmra.mrb[0].mxu0 %v1968
      %v1970 = vpop.f32.mrb[0].mxu0
      %v1971 = vadd.f32 %v1786, %v1970
      %v1972 = vpop.f32.mrb[0].mxu0
      %1973 = vmatprep.mubr.f32.mxu0 0.0
      %v1974 = vand.u32 %v621, 4294901760
      %1975 = vmatmul.mubr.f32.gmra.mrb[0].mxu0 %v1974
      %v1976 = vpop.f32.mrb[0].mxu0
      %v1977 = vadd.f32 %v1796, %v1976
      %v1978 = vpop.f32.mrb[0].mxu0
      %1979 = vmatprep.mubr.f32.mxu0 0.0
      %v1980 = vand.u32 %v624, 4294901760
      %1981 = vmatmul.mubr.f32.gmra.mrb[0].mxu0 %v1980
      %v1982 = vpop.f32.mrb[0].mxu0
      %v1983 = vadd.f32 %v1806, %v1982
      %v1984 = vpop.f32.mrb[0].mxu0
      %1985 = vmatprep.mubr.f32.mxu0 0.0
      %v1986 = vand.u32 %v627, 4294901760
      %1987 = vmatmul.mubr.f32.gmra.mrb[0].mxu0 %v1986
      %v1988 = vpop.f32.mrb[0].mxu0
      %v1989 = vadd.f32 %v1816, %v1988
      %v1990 = vpop.f32.mrb[0].mxu0
      %1991 = vmatprep.mubr.f32.mxu0 0.0
      %v1992 = vand.u32 %v630, 4294901760
      %1993 = vmatmul.mubr.f32.gmra.mrb[0].mxu0 %v1992
      %v1994 = vpop.f32.mrb[0].mxu0
      %v1995 = vadd.f32 %v1826, %v1994
      %v1996 = vpop.f32.mrb[0].mxu0
      %1997 = vmatprep.mubr.f32.mxu0 0.0
      %v1998 = vand.u32 %v633, 4294901760
      %1999 = vmatmul.mubr.f32.gmra.mrb[0].mxu0 %v1998
      %v2000 = vpop.f32.mrb[0].mxu0
      %v2001 = vadd.f32 %v1836, %v2000
      %v2002 = vpop.f32.mrb[0].mxu0
      %2003 = vmatprep.mubr.f32.mxu0 0.0
      %v2004 = vand.u32 %v636, 4294901760
      %2005 = vmatmul.mubr.f32.gmra.mrb[0].mxu0 %v2004
      %v2006 = vpop.f32.mrb[0].mxu0
      %v2007 = vadd.f32 %v1846, %v2006
      %v2008 = vpop.f32.mrb[0].mxu0
      %2009 = vmatprep.mubr.f32.mxu0 0.0
      %v2010 = vand.u32 %v639, 4294901760
      %2011 = vmatmul.mubr.f32.gmra.mrb[0].mxu0 %v2010
      %v2012 = vpop.f32.mrb[0].mxu0
      %v2013 = vadd.f32 %v1856, %v2012
      %v2014 = vpop.f32.mrb[0].mxu0
      %2015 = vdwg.mxu0
      %2016 = vmatprep.subr.mxu0 0.0
      %v2017 = vand.u32 %v1666, 4294901760
      %v2018 = vsub.f32 %v1666, %v2017
      %2019 = vmatpush1.msra.mxu0 %v2018
      %2020 = vmatprep.subr.mxu0 0.0
      %v2021 = vand.u32 %v1667, 4294901760
      %v2022 = vsub.f32 %v1667, %v2021
      %2023 = vmatpush1.msra.mxu0 %v2022
      %2024 = vmatprep.subr.mxu0 0.0
      %v2025 = vand.u32 %v1668, 4294901760
      %v2026 = vsub.f32 %v1668, %v2025
      %2027 = vmatpush1.msra.mxu0 %v2026
      %2028 = vmatprep.subr.mxu0 0.0
      %v2029 = vand.u32 %v1669, 4294901760
      %v2030 = vsub.f32 %v1669, %v2029
      %2031 = vmatpush1.msra.mxu0 %v2030
      %2032 = vmatprep.subr.mxu0 0.0
      %2033 = vmatpush1.msra.mxu0 0.0
      %2034 = vmatprep.subr.mxu0 0.0
      %2035 = vmatpush1.msra.mxu0 0.0
      %2036 = vmatprep.subr.mxu0 0.0
      %2037 = vmatpush1.msra.mxu0 0.0
      %2038 = vmatprep.subr.mxu0 0.0
      %2039 = vmatpush1.msra.mxu0 0.0
      %2040 = vmatprep.subr.mxu0 0.0
      %2041 = vmatpush1.msra.mxu0 0.0
      %2042 = vmatprep.subr.mxu0 0.0
      %2043 = vmatpush1.msra.mxu0 0.0
      %2044 = vmatprep.subr.mxu0 0.0
      %2045 = vmatpush1.msra.mxu0 0.0
      %2046 = vmatprep.subr.mxu0 0.0
      %2047 = vmatpush1.msra.mxu0 0.0
      %2048 = vmatprep.subr.mxu0 0.0
      %2049 = vmatpush1.msra.mxu0 0.0
      %2050 = vmatprep.subr.mxu0 0.0
      %2051 = vmatpush1.msra.mxu0 0.0
      %2052 = vmatprep.subr.mxu0 0.0
      %2053 = vmatpush1.msra.mxu0 0.0
      %2054 = vmatprep.subr.mxu0 0.0
      %2055 = vmatpush1.msra.mxu0 0.0
      %2056 = vmatprep.subr.mxu0 0.0
      %2057 = vmatpush1.msra.mxu0 0.0
      %2058 = vmatprep.subr.mxu0 0.0
      %2059 = vmatpush1.msra.mxu0 0.0
      %2060 = vmatprep.subr.mxu0 0.0
      %2061 = vmatpush1.msra.mxu0 0.0
      %2062 = vmatprep.subr.mxu0 0.0
      %2063 = vmatpush1.msra.mxu0 0.0
      %2064 = vmatprep.subr.mxu0 0.0
      %2065 = vmatpush1.msra.mxu0 0.0
      %2066 = vmatprep.subr.mxu0 0.0
      %2067 = vmatpush1.msra.mxu0 0.0
      %2068 = vmatprep.subr.mxu0 0.0
      %2069 = vmatpush1.msra.mxu0 0.0
      %2070 = vmatprep.subr.mxu0 0.0
      %2071 = vmatpush1.msra.mxu0 0.0
      %2072 = vmatprep.subr.mxu0 0.0
      %2073 = vmatpush1.msra.mxu0 0.0
      %2074 = vmatprep.subr.mxu0 0.0
      %2075 = vmatpush1.msra.mxu0 0.0
      %2076 = vmatprep.subr.mxu0 0.0
      %2077 = vmatpush1.msra.mxu0 0.0
      %2078 = vmatprep.subr.mxu0 0.0
      %2079 = vmatpush1.msra.mxu0 0.0
      %2080 = vmatprep.subr.mxu0 0.0
      %2081 = vmatpush1.msra.mxu0 0.0
      %2082 = vmatprep.subr.mxu0 0.0
      %2083 = vmatpush1.msra.mxu0 0.0
      %2084 = vmatprep.subr.mxu0 0.0
      %2085 = vmatpush1.msra.mxu0 0.0
      %2086 = vmatprep.subr.mxu0 0.0
      %2087 = vmatpush1.msra.mxu0 0.0
      %2088 = vmatprep.mubr.f32.mxu0 0.0
      %v2089 = vand.u32 %v606, 4294901760
      %v2090 = vsub.f32 %v606, %v2089
      %2091 = vmatmul.mubr.f32.gmra.mrb[0].mxu0 %v2090
      %v2092 = vpop.f32.mrb[0].mxu0
      %v2093 = vadd.f32 %v1947, %v2092
      %v2094 = vpop.f32.mrb[0].mxu0
      %2095 = vmatprep.mubr.f32.mxu0 0.0
      %v2096 = vand.u32 %v609, 4294901760
      %v2097 = vsub.f32 %v609, %v2096
      %2098 = vmatmul.mubr.f32.gmra.mrb[0].mxu0 %v2097
      %v2099 = vpop.f32.mrb[0].mxu0
      %v2100 = vadd.f32 %v1953, %v2099
      %v2101 = vpop.f32.mrb[0].mxu0
      %2102 = vmatprep.mubr.f32.mxu0 0.0
      %v2103 = vand.u32 %v612, 4294901760
      %v2104 = vsub.f32 %v612, %v2103
      %2105 = vmatmul.mubr.f32.gmra.mrb[0].mxu0 %v2104
      %v2106 = vpop.f32.mrb[0].mxu0
      %v2107 = vadd.f32 %v1959, %v2106
      %v2108 = vpop.f32.mrb[0].mxu0
      %2109 = vmatprep.mubr.f32.mxu0 0.0
      %v2110 = vand.u32 %v615, 4294901760
      %v2111 = vsub.f32 %v615, %v2110
      %2112 = vmatmul.mubr.f32.gmra.mrb[0].mxu0 %v2111
      %v2113 = vpop.f32.mrb[0].mxu0
      %v2114 = vadd.f32 %v1965, %v2113
      %v2115 = vpop.f32.mrb[0].mxu0
      %2116 = vmatprep.mubr.f32.mxu0 0.0
      %v2117 = vand.u32 %v618, 4294901760
      %v2118 = vsub.f32 %v618, %v2117
      %2119 = vmatmul.mubr.f32.gmra.mrb[0].mxu0 %v2118
      %v2120 = vpop.f32.mrb[0].mxu0
      %v2121 = vadd.f32 %v1971, %v2120
      %v2122 = vpop.f32.mrb[0].mxu0
      %2123 = vmatprep.mubr.f32.mxu0 0.0
      %v2124 = vand.u32 %v621, 4294901760
      %v2125 = vsub.f32 %v621, %v2124
      %2126 = vmatmul.mubr.f32.gmra.mrb[0].mxu0 %v2125
      %v2127 = vpop.f32.mrb[0].mxu0
      %v2128 = vadd.f32 %v1977, %v2127
      %v2129 = vpop.f32.mrb[0].mxu0
      %2130 = vmatprep.mubr.f32.mxu0 0.0
      %v2131 = vand.u32 %v624, 4294901760
      %v2132 = vsub.f32 %v624, %v2131
      %2133 = vmatmul.mubr.f32.gmra.mrb[0].mxu0 %v2132
      %v2134 = vpop.f32.mrb[0].mxu0
      %v2135 = vadd.f32 %v1983, %v2134
      %v2136 = vpop.f32.mrb[0].mxu0
      %2137 = vmatprep.mubr.f32.mxu0 0.0
      %v2138 = vand.u32 %v627, 4294901760
      %v2139 = vsub.f32 %v627, %v2138
      %2140 = vmatmul.mubr.f32.gmra.mrb[0].mxu0 %v2139
      %v2141 = vpop.f32.mrb[0].mxu0
      %v2142 = vadd.f32 %v1989, %v2141
      %v2143 = vpop.f32.mrb[0].mxu0
      %2144 = vmatprep.mubr.f32.mxu0 0.0
      %v2145 = vand.u32 %v630, 4294901760
      %v2146 = vsub.f32 %v630, %v2145
      %2147 = vmatmul.mubr.f32.gmra.mrb[0].mxu0 %v2146
      %v2148 = vpop.f32.mrb[0].mxu0
      %v2149 = vadd.f32 %v1995, %v2148
      %v2150 = vpop.f32.mrb[0].mxu0
      %2151 = vmatprep.mubr.f32.mxu0 0.0
      %v2152 = vand.u32 %v633, 4294901760
      %v2153 = vsub.f32 %v633, %v2152
      %2154 = vmatmul.mubr.f32.gmra.mrb[0].mxu0 %v2153
      %v2155 = vpop.f32.mrb[0].mxu0
      %v2156 = vadd.f32 %v2001, %v2155
      %v2157 = vpop.f32.mrb[0].mxu0
      %2158 = vmatprep.mubr.f32.mxu0 0.0
      %v2159 = vand.u32 %v636, 4294901760
      %v2160 = vsub.f32 %v636, %v2159
      %2161 = vmatmul.mubr.f32.gmra.mrb[0].mxu0 %v2160
      %v2162 = vpop.f32.mrb[0].mxu0
      %v2163 = vadd.f32 %v2007, %v2162
      %v2164 = vpop.f32.mrb[0].mxu0
      %2165 = vmatprep.mubr.f32.mxu0 0.0
      %v2166 = vand.u32 %v639, 4294901760
      %v2167 = vsub.f32 %v639, %v2166
      %2168 = vmatmul.mubr.f32.gmra.mrb[0].mxu0 %v2167
      %v2169 = vpop.f32.mrb[0].mxu0
      %v2170 = vadd.f32 %v2013, %v2169
      %v2171 = vpop.f32.mrb[0].mxu0
      %2172 = vdwg.mxu0
      %2173 = vmatprep.subr.mxu0 0.0
      %v2174 = vand.u32 %v1666, 4294901760
      %2175 = vmatpush1.msra.mxu0 %v2174
      %2176 = vmatprep.subr.mxu0 0.0
      %v2177 = vand.u32 %v1667, 4294901760
      %2178 = vmatpush1.msra.mxu0 %v2177
      %2179 = vmatprep.subr.mxu0 0.0
      %v2180 = vand.u32 %v1668, 4294901760
      %2181 = vmatpush1.msra.mxu0 %v2180
      %2182 = vmatprep.subr.mxu0 0.0
      %v2183 = vand.u32 %v1669, 4294901760
      %2184 = vmatpush1.msra.mxu0 %v2183
      %2185 = vmatprep.subr.mxu0 0.0
      %2186 = vmatpush1.msra.mxu0 0.0
      %2187 = vmatprep.subr.mxu0 0.0
      %2188 = vmatpush1.msra.mxu0 0.0
      %2189 = vmatprep.subr.mxu0 0.0
      %2190 = vmatpush1.msra.mxu0 0.0
      %2191 = vmatprep.subr.mxu0 0.0
      %2192 = vmatpush1.msra.mxu0 0.0
      %2193 = vmatprep.subr.mxu0 0.0
      %2194 = vmatpush1.msra.mxu0 0.0
      %2195 = vmatprep.subr.mxu0 0.0
      %2196 = vmatpush1.msra.mxu0 0.0
      %2197 = vmatprep.subr.mxu0 0.0
      %2198 = vmatpush1.msra.mxu0 0.0
      %2199 = vmatprep.subr.mxu0 0.0
      %2200 = vmatpush1.msra.mxu0 0.0
      %2201 = vmatprep.subr.mxu0 0.0
      %2202 = vmatpush1.msra.mxu0 0.0
      %2203 = vmatprep.subr.mxu0 0.0
      %2204 = vmatpush1.msra.mxu0 0.0
      %2205 = vmatprep.subr.mxu0 0.0
      %2206 = vmatpush1.msra.mxu0 0.0
      %2207 = vmatprep.subr.mxu0 0.0
      %2208 = vmatpush1.msra.mxu0 0.0
      %2209 = vmatprep.subr.mxu0 0.0
      %2210 = vmatpush1.msra.mxu0 0.0
      %2211 = vmatprep.subr.mxu0 0.0
      %2212 = vmatpush1.msra.mxu0 0.0
      %2213 = vmatprep.subr.mxu0 0.0
      %2214 = vmatpush1.msra.mxu0 0.0
      %2215 = vmatprep.subr.mxu0 0.0
      %2216 = vmatpush1.msra.mxu0 0.0
      %2217 = vmatprep.subr.mxu0 0.0
      %2218 = vmatpush1.msra.mxu0 0.0
      %2219 = vmatprep.subr.mxu0 0.0
      %2220 = vmatpush1.msra.mxu0 0.0
      %2221 = vmatprep.subr.mxu0 0.0
      %2222 = vmatpush1.msra.mxu0 0.0
      %2223 = vmatprep.subr.mxu0 0.0
      %2224 = vmatpush1.msra.mxu0 0.0
      %2225 = vmatprep.subr.mxu0 0.0
      %2226 = vmatpush1.msra.mxu0 0.0
      %2227 = vmatprep.subr.mxu0 0.0
      %2228 = vmatpush1.msra.mxu0 0.0
      %2229 = vmatprep.subr.mxu0 0.0
      %2230 = vmatpush1.msra.mxu0 0.0
      %2231 = vmatprep.subr.mxu0 0.0
      %2232 = vmatpush1.msra.mxu0 0.0
      %2233 = vmatprep.subr.mxu0 0.0
      %2234 = vmatpush1.msra.mxu0 0.0
      %2235 = vmatprep.subr.mxu0 0.0
      %2236 = vmatpush1.msra.mxu0 0.0
      %2237 = vmatprep.subr.mxu0 0.0
      %2238 = vmatpush1.msra.mxu0 0.0
      %2239 = vmatprep.subr.mxu0 0.0
      %2240 = vmatpush1.msra.mxu0 0.0
      %2241 = vmatprep.mubr.f32.mxu0 0.0
      %v2242 = vand.u32 %v606, 4294901760
      %v2243 = vsub.f32 %v606, %v2242
      %v2244 = vand.u32 %v2243, 4294901760
      %2245 = vmatmul.mubr.f32.gmra.mrb[0].mxu0 %v2244
      %v2246 = vpop.f32.mrb[0].mxu0
      %v2247 = vadd.f32 %v2093, %v2246
      %v2248 = vpop.f32.mrb[0].mxu0
      %2249 = vmatprep.mubr.f32.mxu0 0.0
      %v2250 = vand.u32 %v609, 4294901760
      %v2251 = vsub.f32 %v609, %v2250
      %v2252 = vand.u32 %v2251, 4294901760
      %2253 = vmatmul.mubr.f32.gmra.mrb[0].mxu0 %v2252
      %v2254 = vpop.f32.mrb[0].mxu0
      %v2255 = vadd.f32 %v2100, %v2254
      %v2256 = vpop.f32.mrb[0].mxu0
      %2257 = vmatprep.mubr.f32.mxu0 0.0
      %v2258 = vand.u32 %v612, 4294901760
      %v2259 = vsub.f32 %v612, %v2258
      %v2260 = vand.u32 %v2259, 4294901760
      %2261 = vmatmul.mubr.f32.gmra.mrb[0].mxu0 %v2260
      %v2262 = vpop.f32.mrb[0].mxu0
      %v2263 = vadd.f32 %v2107, %v2262
      %v2264 = vpop.f32.mrb[0].mxu0
      %2265 = vmatprep.mubr.f32.mxu0 0.0
      %v2266 = vand.u32 %v615, 4294901760
      %v2267 = vsub.f32 %v615, %v2266
      %v2268 = vand.u32 %v2267, 4294901760
      %2269 = vmatmul.mubr.f32.gmra.mrb[0].mxu0 %v2268
      %v2270 = vpop.f32.mrb[0].mxu0
      %v2271 = vadd.f32 %v2114, %v2270
      %v2272 = vpop.f32.mrb[0].mxu0
      %2273 = vmatprep.mubr.f32.mxu0 0.0
      %v2274 = vand.u32 %v618, 4294901760
      %v2275 = vsub.f32 %v618, %v2274
      %v2276 = vand.u32 %v2275, 4294901760
      %2277 = vmatmul.mubr.f32.gmra.mrb[0].mxu0 %v2276
      %v2278 = vpop.f32.mrb[0].mxu0
      %v2279 = vadd.f32 %v2121, %v2278
      %v2280 = vpop.f32.mrb[0].mxu0
      %2281 = vmatprep.mubr.f32.mxu0 0.0
      %v2282 = vand.u32 %v621, 4294901760
      %v2283 = vsub.f32 %v621, %v2282
      %v2284 = vand.u32 %v2283, 4294901760
      %2285 = vmatmul.mubr.f32.gmra.mrb[0].mxu0 %v2284
      %v2286 = vpop.f32.mrb[0].mxu0
      %v2287 = vadd.f32 %v2128, %v2286
      %v2288 = vpop.f32.mrb[0].mxu0
      %2289 = vmatprep.mubr.f32.mxu0 0.0
      %v2290 = vand.u32 %v624, 4294901760
      %v2291 = vsub.f32 %v624, %v2290
      %v2292 = vand.u32 %v2291, 4294901760
      %2293 = vmatmul.mubr.f32.gmra.mrb[0].mxu0 %v2292
      %v2294 = vpop.f32.mrb[0].mxu0
      %v2295 = vadd.f32 %v2135, %v2294
      %v2296 = vpop.f32.mrb[0].mxu0
      %2297 = vmatprep.mubr.f32.mxu0 0.0
      %v2298 = vand.u32 %v627, 4294901760
      %v2299 = vsub.f32 %v627, %v2298
      %v2300 = vand.u32 %v2299, 4294901760
      %2301 = vmatmul.mubr.f32.gmra.mrb[0].mxu0 %v2300
      %v2302 = vpop.f32.mrb[0].mxu0
      %v2303 = vadd.f32 %v2142, %v2302
      %v2304 = vpop.f32.mrb[0].mxu0
      %2305 = vmatprep.mubr.f32.mxu0 0.0
      %v2306 = vand.u32 %v630, 4294901760
      %v2307 = vsub.f32 %v630, %v2306
      %v2308 = vand.u32 %v2307, 4294901760
      %2309 = vmatmul.mubr.f32.gmra.mrb[0].mxu0 %v2308
      %v2310 = vpop.f32.mrb[0].mxu0
      %v2311 = vadd.f32 %v2149, %v2310
      %v2312 = vpop.f32.mrb[0].mxu0
      %2313 = vmatprep.mubr.f32.mxu0 0.0
      %v2314 = vand.u32 %v633, 4294901760
      %v2315 = vsub.f32 %v633, %v2314
      %v2316 = vand.u32 %v2315, 4294901760
      %2317 = vmatmul.mubr.f32.gmra.mrb[0].mxu0 %v2316
      %v2318 = vpop.f32.mrb[0].mxu0
      %v2319 = vadd.f32 %v2156, %v2318
      %v2320 = vpop.f32.mrb[0].mxu0
      %2321 = vmatprep.mubr.f32.mxu0 0.0
      %v2322 = vand.u32 %v636, 4294901760
      %v2323 = vsub.f32 %v636, %v2322
      %v2324 = vand.u32 %v2323, 4294901760
      %2325 = vmatmul.mubr.f32.gmra.mrb[0].mxu0 %v2324
      %v2326 = vpop.f32.mrb[0].mxu0
      %v2327 = vadd.f32 %v2163, %v2326
      %v2328 = vpop.f32.mrb[0].mxu0
      %2329 = vmatprep.mubr.f32.mxu0 0.0
      %v2330 = vand.u32 %v639, 4294901760
      %v2331 = vsub.f32 %v639, %v2330
      %v2332 = vand.u32 %v2331, 4294901760
      %2333 = vmatmul.mubr.f32.gmra.mrb[0].mxu0 %v2332
      %v2334 = vpop.f32.mrb[0].mxu0
      %v2335 = vadd.f32 %v2170, %v2334
      %v2336 = vpop.f32.mrb[0].mxu0
      %2337 = vdwg.mxu0
      %2338 = vmatprep.subr.mxu0 0.0
      %v2339 = vand.u32 %v1666, 4294901760
      %v2340 = vsub.f32 %v1666, %v2339
      %v2341 = vand.u32 %v2340, 4294901760
      %2342 = vmatpush1.msra.mxu0 %v2341
      %2343 = vmatprep.subr.mxu0 0.0
      %v2344 = vand.u32 %v1667, 4294901760
      %v2345 = vsub.f32 %v1667, %v2344
      %v2346 = vand.u32 %v2345, 4294901760
      %2347 = vmatpush1.msra.mxu0 %v2346
      %2348 = vmatprep.subr.mxu0 0.0
      %v2349 = vand.u32 %v1668, 4294901760
      %v2350 = vsub.f32 %v1668, %v2349
      %v2351 = vand.u32 %v2350, 4294901760
      %2352 = vmatpush1.msra.mxu0 %v2351
      %2353 = vmatprep.subr.mxu0 0.0
      %v2354 = vand.u32 %v1669, 4294901760
      %v2355 = vsub.f32 %v1669, %v2354
      %v2356 = vand.u32 %v2355, 4294901760
      %2357 = vmatpush1.msra.mxu0 %v2356
      %2358 = vmatprep.subr.mxu0 0.0
      %2359 = vmatpush1.msra.mxu0 0.0
      %2360 = vmatprep.subr.mxu0 0.0
      %2361 = vmatpush1.msra.mxu0 0.0
      %2362 = vmatprep.subr.mxu0 0.0
      %2363 = vmatpush1.msra.mxu0 0.0
      %2364 = vmatprep.subr.mxu0 0.0
      %2365 = vmatpush1.msra.mxu0 0.0
      %2366 = vmatprep.subr.mxu0 0.0
      %2367 = vmatpush1.msra.mxu0 0.0
      %2368 = vmatprep.subr.mxu0 0.0
      %2369 = vmatpush1.msra.mxu0 0.0
      %2370 = vmatprep.subr.mxu0 0.0
      %2371 = vmatpush1.msra.mxu0 0.0
      %2372 = vmatprep.subr.mxu0 0.0
      %2373 = vmatpush1.msra.mxu0 0.0
      %2374 = vmatprep.subr.mxu0 0.0
      %2375 = vmatpush1.msra.mxu0 0.0
      %2376 = vmatprep.subr.mxu0 0.0
      %2377 = vmatpush1.msra.mxu0 0.0
      %2378 = vmatprep.subr.mxu0 0.0
      %2379 = vmatpush1.msra.mxu0 0.0
      %2380 = vmatprep.subr.mxu0 0.0
      %2381 = vmatpush1.msra.mxu0 0.0
      %2382 = vmatprep.subr.mxu0 0.0
      %2383 = vmatpush1.msra.mxu0 0.0
      %2384 = vmatprep.subr.mxu0 0.0
      %2385 = vmatpush1.msra.mxu0 0.0
      %2386 = vmatprep.subr.mxu0 0.0
      %2387 = vmatpush1.msra.mxu0 0.0
      %2388 = vmatprep.subr.mxu0 0.0
      %2389 = vmatpush1.msra.mxu0 0.0
      %2390 = vmatprep.subr.mxu0 0.0
      %2391 = vmatpush1.msra.mxu0 0.0
      %2392 = vmatprep.subr.mxu0 0.0
      %2393 = vmatpush1.msra.mxu0 0.0
      %2394 = vmatprep.subr.mxu0 0.0
      %2395 = vmatpush1.msra.mxu0 0.0
      %2396 = vmatprep.subr.mxu0 0.0
      %2397 = vmatpush1.msra.mxu0 0.0
      %2398 = vmatprep.subr.mxu0 0.0
      %2399 = vmatpush1.msra.mxu0 0.0
      %2400 = vmatprep.subr.mxu0 0.0
      %2401 = vmatpush1.msra.mxu0 0.0
      %2402 = vmatprep.subr.mxu0 0.0
      %2403 = vmatpush1.msra.mxu0 0.0
      %2404 = vmatprep.subr.mxu0 0.0
      %2405 = vmatpush1.msra.mxu0 0.0
      %2406 = vmatprep.subr.mxu0 0.0
      %2407 = vmatpush1.msra.mxu0 0.0
      %2408 = vmatprep.subr.mxu0 0.0
      %2409 = vmatpush1.msra.mxu0 0.0
      %2410 = vmatprep.subr.mxu0 0.0
      %2411 = vmatpush1.msra.mxu0 0.0
      %2412 = vmatprep.subr.mxu0 0.0
      %2413 = vmatpush1.msra.mxu0 0.0
      %2414 = vmatprep.mubr.f32.mxu0 0.0
      %v2415 = vand.u32 %v606, 4294901760
      %2416 = vmatmul.mubr.f32.gmra.mrb[0].mxu0 %v2415
      %v2417 = vpop.f32.mrb[0].mxu0
      %v2418 = vadd.f32 %v2247, %v2417
      %v2419 = vpop.f32.mrb[0].mxu0
      %2420 = vmatprep.mubr.f32.mxu0 0.0
      %v2421 = vand.u32 %v609, 4294901760
      %2422 = vmatmul.mubr.f32.gmra.mrb[0].mxu0 %v2421
      %v2423 = vpop.f32.mrb[0].mxu0
      %v2424 = vadd.f32 %v2255, %v2423
      %v2425 = vpop.f32.mrb[0].mxu0
      %2426 = vmatprep.mubr.f32.mxu0 0.0
      %v2427 = vand.u32 %v612, 4294901760
      %2428 = vmatmul.mubr.f32.gmra.mrb[0].mxu0 %v2427
      %v2429 = vpop.f32.mrb[0].mxu0
      %v2430 = vadd.f32 %v2263, %v2429
      %v2431 = vpop.f32.mrb[0].mxu0
      %2432 = vmatprep.mubr.f32.mxu0 0.0
      %v2433 = vand.u32 %v615, 4294901760
      %2434 = vmatmul.mubr.f32.gmra.mrb[0].mxu0 %v2433
      %v2435 = vpop.f32.mrb[0].mxu0
      %v2436 = vadd.f32 %v2271, %v2435
      %v2437 = vpop.f32.mrb[0].mxu0
      %2438 = vmatprep.mubr.f32.mxu0 0.0
      %v2439 = vand.u32 %v618, 4294901760
      %2440 = vmatmul.mubr.f32.gmra.mrb[0].mxu0 %v2439
      %v2441 = vpop.f32.mrb[0].mxu0
      %v2442 = vadd.f32 %v2279, %v2441
      %v2443 = vpop.f32.mrb[0].mxu0
      %2444 = vmatprep.mubr.f32.mxu0 0.0
      %v2445 = vand.u32 %v621, 4294901760
      %2446 = vmatmul.mubr.f32.gmra.mrb[0].mxu0 %v2445
      %v2447 = vpop.f32.mrb[0].mxu0
      %v2448 = vadd.f32 %v2287, %v2447
      %v2449 = vpop.f32.mrb[0].mxu0
      %2450 = vmatprep.mubr.f32.mxu0 0.0
      %v2451 = vand.u32 %v624, 4294901760
      %2452 = vmatmul.mubr.f32.gmra.mrb[0].mxu0 %v2451
      %v2453 = vpop.f32.mrb[0].mxu0
      %v2454 = vadd.f32 %v2295, %v2453
      %v2455 = vpop.f32.mrb[0].mxu0
      %2456 = vmatprep.mubr.f32.mxu0 0.0
      %v2457 = vand.u32 %v627, 4294901760
      %2458 = vmatmul.mubr.f32.gmra.mrb[0].mxu0 %v2457
      %v2459 = vpop.f32.mrb[0].mxu0
      %v2460 = vadd.f32 %v2303, %v2459
      %v2461 = vpop.f32.mrb[0].mxu0
      %2462 = vmatprep.mubr.f32.mxu0 0.0
      %v2463 = vand.u32 %v630, 4294901760
      %2464 = vmatmul.mubr.f32.gmra.mrb[0].mxu0 %v2463
      %v2465 = vpop.f32.mrb[0].mxu0
      %v2466 = vadd.f32 %v2311, %v2465
      %v2467 = vpop.f32.mrb[0].mxu0
      %2468 = vmatprep.mubr.f32.mxu0 0.0
      %v2469 = vand.u32 %v633, 4294901760
      %2470 = vmatmul.mubr.f32.gmra.mrb[0].mxu0 %v2469
      %v2471 = vpop.f32.mrb[0].mxu0
      %v2472 = vadd.f32 %v2319, %v2471
      %v2473 = vpop.f32.mrb[0].mxu0
      %2474 = vmatprep.mubr.f32.mxu0 0.0
      %v2475 = vand.u32 %v636, 4294901760
      %2476 = vmatmul.mubr.f32.gmra.mrb[0].mxu0 %v2475
      %v2477 = vpop.f32.mrb[0].mxu0
      %v2478 = vadd.f32 %v2327, %v2477
      %v2479 = vpop.f32.mrb[0].mxu0
      %2480 = vmatprep.mubr.f32.mxu0 0.0
      %v2481 = vand.u32 %v639, 4294901760
      %2482 = vmatmul.mubr.f32.gmra.mrb[0].mxu0 %v2481
      %v2483 = vpop.f32.mrb[0].mxu0
      %v2484 = vadd.f32 %v2335, %v2483
      %v2485 = vpop.f32.mrb[0].mxu0
      %2486 = vdwg.mxu0
      %2487 = vmatprep.subr.mxu0 0.0
      %v2488 = vand.u32 %v1666, 4294901760
      %2489 = vmatpush1.msra.mxu0 %v2488
      %2490 = vmatprep.subr.mxu0 0.0
      %v2491 = vand.u32 %v1667, 4294901760
      %2492 = vmatpush1.msra.mxu0 %v2491
      %2493 = vmatprep.subr.mxu0 0.0
      %v2494 = vand.u32 %v1668, 4294901760
      %2495 = vmatpush1.msra.mxu0 %v2494
      %2496 = vmatprep.subr.mxu0 0.0
      %v2497 = vand.u32 %v1669, 4294901760
      %2498 = vmatpush1.msra.mxu0 %v2497
      %2499 = vmatprep.subr.mxu0 0.0
      %2500 = vmatpush1.msra.mxu0 0.0
      %2501 = vmatprep.subr.mxu0 0.0
      %2502 = vmatpush1.msra.mxu0 0.0
      %2503 = vmatprep.subr.mxu0 0.0
      %2504 = vmatpush1.msra.mxu0 0.0
      %2505 = vmatprep.subr.mxu0 0.0
      %2506 = vmatpush1.msra.mxu0 0.0
      %2507 = vmatprep.subr.mxu0 0.0
      %2508 = vmatpush1.msra.mxu0 0.0
      %2509 = vmatprep.subr.mxu0 0.0
      %2510 = vmatpush1.msra.mxu0 0.0
      %2511 = vmatprep.subr.mxu0 0.0
      %2512 = vmatpush1.msra.mxu0 0.0
      %2513 = vmatprep.subr.mxu0 0.0
      %2514 = vmatpush1.msra.mxu0 0.0
      %2515 = vmatprep.subr.mxu0 0.0
      %2516 = vmatpush1.msra.mxu0 0.0
      %2517 = vmatprep.subr.mxu0 0.0
      %2518 = vmatpush1.msra.mxu0 0.0
      %2519 = vmatprep.subr.mxu0 0.0
      %2520 = vmatpush1.msra.mxu0 0.0
      %2521 = vmatprep.subr.mxu0 0.0
      %2522 = vmatpush1.msra.mxu0 0.0
      %2523 = vmatprep.subr.mxu0 0.0
      %2524 = vmatpush1.msra.mxu0 0.0
      %2525 = vmatprep.subr.mxu0 0.0
      %2526 = vmatpush1.msra.mxu0 0.0
      %2527 = vmatprep.subr.mxu0 0.0
      %2528 = vmatpush1.msra.mxu0 0.0
      %2529 = vmatprep.subr.mxu0 0.0
      %2530 = vmatpush1.msra.mxu0 0.0
      %2531 = vmatprep.subr.mxu0 0.0
      %2532 = vmatpush1.msra.mxu0 0.0
      %2533 = vmatprep.subr.mxu0 0.0
      %2534 = vmatpush1.msra.mxu0 0.0
      %2535 = vmatprep.subr.mxu0 0.0
      %2536 = vmatpush1.msra.mxu0 0.0
      %2537 = vmatprep.subr.mxu0 0.0
      %2538 = vmatpush1.msra.mxu0 0.0
      %2539 = vmatprep.subr.mxu0 0.0
      %2540 = vmatpush1.msra.mxu0 0.0
      %2541 = vmatprep.subr.mxu0 0.0
      %2542 = vmatpush1.msra.mxu0 0.0
      %2543 = vmatprep.subr.mxu0 0.0
      %2544 = vmatpush1.msra.mxu0 0.0
      %2545 = vmatprep.subr.mxu0 0.0
      %2546 = vmatpush1.msra.mxu0 0.0
      %2547 = vmatprep.subr.mxu0 0.0
      %2548 = vmatpush1.msra.mxu0 0.0
      %2549 = vmatprep.subr.mxu0 0.0
      %2550 = vmatpush1.msra.mxu0 0.0
      %2551 = vmatprep.subr.mxu0 0.0
      %2552 = vmatpush1.msra.mxu0 0.0
      %2553 = vmatprep.subr.mxu0 0.0
      %2554 = vmatpush1.msra.mxu0 0.0
      %2555 = vmatprep.mubr.f32.mxu0 0.0
      %v2556 = vand.u32 %v606, 4294901760
      %2557 = vmatmul.mubr.f32.gmra.mrb[0].mxu0 %v2556
      %v2558 = vpop.f32.mrb[0].mxu0
      %v2559 = vadd.f32 %v2418, %v2558
      %v2560 = vpop.f32.mrb[0].mxu0
      %2561 = vmatprep.mubr.f32.mxu0 0.0
      %v2562 = vand.u32 %v609, 4294901760
      %2563 = vmatmul.mubr.f32.gmra.mrb[0].mxu0 %v2562
      %v2564 = vpop.f32.mrb[0].mxu0
      %v2565 = vadd.f32 %v2424, %v2564
      %v2566 = vpop.f32.mrb[0].mxu0
      %2567 = vmatprep.mubr.f32.mxu0 0.0
      %v2568 = vand.u32 %v612, 4294901760
      %2569 = vmatmul.mubr.f32.gmra.mrb[0].mxu0 %v2568
      %v2570 = vpop.f32.mrb[0].mxu0
      %v2571 = vadd.f32 %v2430, %v2570
      %v2572 = vpop.f32.mrb[0].mxu0
      %2573 = vmatprep.mubr.f32.mxu0 0.0
      %v2574 = vand.u32 %v615, 4294901760
      %2575 = vmatmul.mubr.f32.gmra.mrb[0].mxu0 %v2574
      %v2576 = vpop.f32.mrb[0].mxu0
      %v2577 = vadd.f32 %v2436, %v2576
      %v2578 = vpop.f32.mrb[0].mxu0
      %2579 = vmatprep.mubr.f32.mxu0 0.0
      %v2580 = vand.u32 %v618, 4294901760
      %2581 = vmatmul.mubr.f32.gmra.mrb[0].mxu0 %v2580
      %v2582 = vpop.f32.mrb[0].mxu0
      %v2583 = vadd.f32 %v2442, %v2582
      %v2584 = vpop.f32.mrb[0].mxu0
      %2585 = vmatprep.mubr.f32.mxu0 0.0
      %v2586 = vand.u32 %v621, 4294901760
      %2587 = vmatmul.mubr.f32.gmra.mrb[0].mxu0 %v2586
      %v2588 = vpop.f32.mrb[0].mxu0
      %v2589 = vadd.f32 %v2448, %v2588
      %v2590 = vpop.f32.mrb[0].mxu0
      %2591 = vmatprep.mubr.f32.mxu0 0.0
      %v2592 = vand.u32 %v624, 4294901760
      %2593 = vmatmul.mubr.f32.gmra.mrb[0].mxu0 %v2592
      %v2594 = vpop.f32.mrb[0].mxu0
      %v2595 = vadd.f32 %v2454, %v2594
      %v2596 = vpop.f32.mrb[0].mxu0
      %2597 = vmatprep.mubr.f32.mxu0 0.0
      %v2598 = vand.u32 %v627, 4294901760
      %2599 = vmatmul.mubr.f32.gmra.mrb[0].mxu0 %v2598
      %v2600 = vpop.f32.mrb[0].mxu0
      %v2601 = vadd.f32 %v2460, %v2600
      %v2602 = vpop.f32.mrb[0].mxu0
      %2603 = vmatprep.mubr.f32.mxu0 0.0
      %v2604 = vand.u32 %v630, 4294901760
      %2605 = vmatmul.mubr.f32.gmra.mrb[0].mxu0 %v2604
      %v2606 = vpop.f32.mrb[0].mxu0
      %v2607 = vadd.f32 %v2466, %v2606
      %v2608 = vpop.f32.mrb[0].mxu0
      %2609 = vmatprep.mubr.f32.mxu0 0.0
      %v2610 = vand.u32 %v633, 4294901760
      %2611 = vmatmul.mubr.f32.gmra.mrb[0].mxu0 %v2610
      %v2612 = vpop.f32.mrb[0].mxu0
      %v2613 = vadd.f32 %v2472, %v2612
      %v2614 = vpop.f32.mrb[0].mxu0
      %2615 = vmatprep.mubr.f32.mxu0 0.0
      %v2616 = vand.u32 %v636, 4294901760
      %2617 = vmatmul.mubr.f32.gmra.mrb[0].mxu0 %v2616
      %v2618 = vpop.f32.mrb[0].mxu0
      %v2619 = vadd.f32 %v2478, %v2618
      %v2620 = vpop.f32.mrb[0].mxu0
      %2621 = vmatprep.mubr.f32.mxu0 0.0
      %v2622 = vand.u32 %v639, 4294901760
      %2623 = vmatmul.mubr.f32.gmra.mrb[0].mxu0 %v2622
      %v2624 = vpop.f32.mrb[0].mxu0
      %v2625 = vadd.f32 %v2484, %v2624
      %v2626 = vpop.f32.mrb[0].mxu0
      %2627 = vdwg.mxu0
      %2628 = vrot.lane.b32.xlu0 %v453, 119
      %v2629 = vpop.permute.xlu0 %2628
      %v2630 = vlaneseq
      %v2631 = vshrl.u32 %v2630, 7
      %v2632 = vsub.s32 1, %v2631
      %v2633 = vrot.slane %v455, %v2632
      %v2634 = vmul.f32 %v2629, %v2633
      %v2635 = vlaneseq
      %v2636 = vshrl.u32 %v2635, 7
      %v2637 = vsub.s32 0, %v2636
      %v2638 = vrot.slane %v2634, %v2637
      %v2639 = vmul.f32 %v2638, %v2559
      %v2640 = vmul.f32 %v2638, %v2565
      %v2641 = vadd.f32 %v1652, %v2639
      %v2642 = vadd.f32 %v1653, %v2640
      %v2643 = vlaneseq
      %v2644 = vshrl.u32 %v2643, 7
      %v2645 = vsub.s32 1, %v2644
      %v2646 = vrot.slane %v2634, %v2645
      %v2647 = vmul.f32 %v2646, %v2571
      %v2648 = vmul.f32 %v2646, %v2577
      %v2649 = vadd.f32 %v2641, %v2647
      %v2650 = vadd.f32 %v2642, %v2648
      %v2651 = vlaneseq
      %v2652 = vshrl.u32 %v2651, 7
      %v2653 = vsub.s32 2, %v2652
      %v2654 = vrot.slane %v2634, %v2653
      %v2655 = vmul.f32 %v2654, %v2583
      %v2656 = vmul.f32 %v2654, %v2589
      %v2657 = vadd.f32 %v2649, %v2655
      %v2658 = vadd.f32 %v2650, %v2656
      %v2659 = vlaneseq
      %v2660 = vshrl.u32 %v2659, 7
      %v2661 = vsub.s32 3, %v2660
      %v2662 = vrot.slane %v2634, %v2661
      %v2663 = vmul.f32 %v2662, %v2595
      %v2664 = vmul.f32 %v2662, %v2601
      %v2665 = vadd.f32 %v2657, %v2663
      %v2666 = vadd.f32 %v2658, %v2664
      %v2667 = vlaneseq
      %v2668 = vshrl.u32 %v2667, 7
      %v2669 = vsub.s32 4, %v2668
      %v2670 = vrot.slane %v2634, %v2669
      %v2671 = vmul.f32 %v2670, %v2607
      %v2672 = vmul.f32 %v2670, %v2613
      %v2673 = vadd.f32 %v2665, %v2671
      %v2674 = vadd.f32 %v2666, %v2672
      %v2675 = vlaneseq
      %v2676 = vshrl.u32 %v2675, 7
      %v2677 = vsub.s32 5, %v2676
      %v2678 = vrot.slane %v2634, %v2677
      %v2679 = vmul.f32 %v2678, %v2619
      %v2680 = vmul.f32 %v2678, %v2625
      %v2681 = vadd.f32 %v2673, %v2679
      %v2682 = vadd.f32 %v2674, %v2680
      %v2683 = vlaneseq
      %v2684 = vshrl.u32 %v2683, 7
      %v2685 = vsub.s32 2, %v2684
      %v2686 = vrot.slane %v454, %v2685
      %v2687 = vmul.f32 %v2686, %v467
      %v2688 = vmul.f32 %v2686, %v472
      %v2689 = vmul.f32 %v2686, %v477
      %v2690 = vmul.f32 %v2686, %v482
      %v2691 = vadd.f32 %v2687, %v495
      %v2692 = vadd.f32 %v2688, %v500
      %v2693 = vadd.f32 %v2689, %v505
      %v2694 = vadd.f32 %v2690, %v510
      %v2695 = vmax.f32 %v2691, 0.0
      %v2696 = vmax.f32 %v2692, 0.0
      %v2697 = vmax.f32 %v2693, 0.0
      %v2698 = vmax.f32 %v2694, 0.0
      %2699 = vmatprep.subr.mxu0 0.0
      %v2700 = vand.u32 %v2695, 4294901760
      %2701 = vmatpush1.msra.mxu0 %v2700
      %2702 = vmatprep.subr.mxu0 0.0
      %v2703 = vand.u32 %v2696, 4294901760
      %2704 = vmatpush1.msra.mxu0 %v2703
      %2705 = vmatprep.subr.mxu0 0.0
      %v2706 = vand.u32 %v2697, 4294901760
      %2707 = vmatpush1.msra.mxu0 %v2706
      %2708 = vmatprep.subr.mxu0 0.0
      %v2709 = vand.u32 %v2698, 4294901760
      %2710 = vmatpush1.msra.mxu0 %v2709
      %2711 = vmatprep.subr.mxu0 0.0
      %2712 = vmatpush1.msra.mxu0 0.0
      %2713 = vmatprep.subr.mxu0 0.0
      %2714 = vmatpush1.msra.mxu0 0.0
      %2715 = vmatprep.subr.mxu0 0.0
      %2716 = vmatpush1.msra.mxu0 0.0
      %2717 = vmatprep.subr.mxu0 0.0
      %2718 = vmatpush1.msra.mxu0 0.0
      %2719 = vmatprep.subr.mxu0 0.0
      %2720 = vmatpush1.msra.mxu0 0.0
      %2721 = vmatprep.subr.mxu0 0.0
      %2722 = vmatpush1.msra.mxu0 0.0
      %2723 = vmatprep.subr.mxu0 0.0
      %2724 = vmatpush1.msra.mxu0 0.0
      %2725 = vmatprep.subr.mxu0 0.0
      %2726 = vmatpush1.msra.mxu0 0.0
      %2727 = vmatprep.subr.mxu0 0.0
      %2728 = vmatpush1.msra.mxu0 0.0
      %2729 = vmatprep.subr.mxu0 0.0
      %2730 = vmatpush1.msra.mxu0 0.0
      %2731 = vmatprep.subr.mxu0 0.0
      %2732 = vmatpush1.msra.mxu0 0.0
      %2733 = vmatprep.subr.mxu0 0.0
      %2734 = vmatpush1.msra.mxu0 0.0
      %2735 = vmatprep.subr.mxu0 0.0
      %2736 = vmatpush1.msra.mxu0 0.0
      %2737 = vmatprep.subr.mxu0 0.0
      %2738 = vmatpush1.msra.mxu0 0.0
      %2739 = vmatprep.subr.mxu0 0.0
      %2740 = vmatpush1.msra.mxu0 0.0
      %2741 = vmatprep.subr.mxu0 0.0
      %2742 = vmatpush1.msra.mxu0 0.0
      %2743 = vmatprep.subr.mxu0 0.0
      %2744 = vmatpush1.msra.mxu0 0.0
      %2745 = vmatprep.subr.mxu0 0.0
      %2746 = vmatpush1.msra.mxu0 0.0
      %2747 = vmatprep.subr.mxu0 0.0
      %2748 = vmatpush1.msra.mxu0 0.0
      %2749 = vmatprep.subr.mxu0 0.0
      %2750 = vmatpush1.msra.mxu0 0.0
      %2751 = vmatprep.subr.mxu0 0.0
      %2752 = vmatpush1.msra.mxu0 0.0
      %2753 = vmatprep.subr.mxu0 0.0
      %2754 = vmatpush1.msra.mxu0 0.0
      %2755 = vmatprep.subr.mxu0 0.0
      %2756 = vmatpush1.msra.mxu0 0.0
      %2757 = vmatprep.subr.mxu0 0.0
      %2758 = vmatpush1.msra.mxu0 0.0
      %2759 = vmatprep.subr.mxu0 0.0
      %2760 = vmatpush1.msra.mxu0 0.0
      %2761 = vmatprep.subr.mxu0 0.0
      %2762 = vmatpush1.msra.mxu0 0.0
      %2763 = vmatprep.subr.mxu0 0.0
      %2764 = vmatpush1.msra.mxu0 0.0
      %2765 = vmatprep.subr.mxu0 0.0
      %2766 = vmatpush1.msra.mxu0 0.0
      %2767 = vmatprep.mubr.f32.mxu0 0.0
      %v2768 = vand.u32 %v606, 4294901760
      %v2769 = vsub.f32 %v606, %v2768
      %v2770 = vand.u32 %v2769, 4294901760
      %v2771 = vsub.f32 %v2769, %v2770
      %v2772 = vand.u32 %v2771, 4294901760
      %2773 = vmatmul.mubr.f32.gmra.mrb[0].mxu0 %v2772
      %v2774 = vpop.f32.mrb[0].mxu0
      %v2775 = vadd.f32 %v547, %v2774
      %v2776 = vpop.f32.mrb[0].mxu0
      %2777 = vmatprep.mubr.f32.mxu0 0.0
      %v2778 = vand.u32 %v609, 4294901760
      %v2779 = vsub.f32 %v609, %v2778
      %v2780 = vand.u32 %v2779, 4294901760
      %v2781 = vsub.f32 %v2779, %v2780
      %v2782 = vand.u32 %v2781, 4294901760
      %2783 = vmatmul.mubr.f32.gmra.mrb[0].mxu0 %v2782
      %v2784 = vpop.f32.mrb[0].mxu0
      %v2785 = vadd.f32 %v552, %v2784
      %v2786 = vpop.f32.mrb[0].mxu0
      %2787 = vmatprep.mubr.f32.mxu0 0.0
      %v2788 = vand.u32 %v612, 4294901760
      %v2789 = vsub.f32 %v612, %v2788
      %v2790 = vand.u32 %v2789, 4294901760
      %v2791 = vsub.f32 %v2789, %v2790
      %v2792 = vand.u32 %v2791, 4294901760
      %2793 = vmatmul.mubr.f32.gmra.mrb[0].mxu0 %v2792
      %v2794 = vpop.f32.mrb[0].mxu0
      %v2795 = vadd.f32 %v557, %v2794
      %v2796 = vpop.f32.mrb[0].mxu0
      %2797 = vmatprep.mubr.f32.mxu0 0.0
      %v2798 = vand.u32 %v615, 4294901760
      %v2799 = vsub.f32 %v615, %v2798
      %v2800 = vand.u32 %v2799, 4294901760
      %v2801 = vsub.f32 %v2799, %v2800
      %v2802 = vand.u32 %v2801, 4294901760
      %2803 = vmatmul.mubr.f32.gmra.mrb[0].mxu0 %v2802
      %v2804 = vpop.f32.mrb[0].mxu0
      %v2805 = vadd.f32 %v562, %v2804
      %v2806 = vpop.f32.mrb[0].mxu0
      %2807 = vmatprep.mubr.f32.mxu0 0.0
      %v2808 = vand.u32 %v618, 4294901760
      %v2809 = vsub.f32 %v618, %v2808
      %v2810 = vand.u32 %v2809, 4294901760
      %v2811 = vsub.f32 %v2809, %v2810
      %v2812 = vand.u32 %v2811, 4294901760
      %2813 = vmatmul.mubr.f32.gmra.mrb[0].mxu0 %v2812
      %v2814 = vpop.f32.mrb[0].mxu0
      %v2815 = vadd.f32 %v567, %v2814
      %v2816 = vpop.f32.mrb[0].mxu0
      %2817 = vmatprep.mubr.f32.mxu0 0.0
      %v2818 = vand.u32 %v621, 4294901760
      %v2819 = vsub.f32 %v621, %v2818
      %v2820 = vand.u32 %v2819, 4294901760
      %v2821 = vsub.f32 %v2819, %v2820
      %v2822 = vand.u32 %v2821, 4294901760
      %2823 = vmatmul.mubr.f32.gmra.mrb[0].mxu0 %v2822
      %v2824 = vpop.f32.mrb[0].mxu0
      %v2825 = vadd.f32 %v572, %v2824
      %v2826 = vpop.f32.mrb[0].mxu0
      %2827 = vmatprep.mubr.f32.mxu0 0.0
      %v2828 = vand.u32 %v624, 4294901760
      %v2829 = vsub.f32 %v624, %v2828
      %v2830 = vand.u32 %v2829, 4294901760
      %v2831 = vsub.f32 %v2829, %v2830
      %v2832 = vand.u32 %v2831, 4294901760
      %2833 = vmatmul.mubr.f32.gmra.mrb[0].mxu0 %v2832
      %v2834 = vpop.f32.mrb[0].mxu0
      %v2835 = vadd.f32 %v577, %v2834
      %v2836 = vpop.f32.mrb[0].mxu0
      %2837 = vmatprep.mubr.f32.mxu0 0.0
      %v2838 = vand.u32 %v627, 4294901760
      %v2839 = vsub.f32 %v627, %v2838
      %v2840 = vand.u32 %v2839, 4294901760
      %v2841 = vsub.f32 %v2839, %v2840
      %v2842 = vand.u32 %v2841, 4294901760
      %2843 = vmatmul.mubr.f32.gmra.mrb[0].mxu0 %v2842
      %v2844 = vpop.f32.mrb[0].mxu0
      %v2845 = vadd.f32 %v582, %v2844
      %v2846 = vpop.f32.mrb[0].mxu0
      %2847 = vmatprep.mubr.f32.mxu0 0.0
      %v2848 = vand.u32 %v630, 4294901760
      %v2849 = vsub.f32 %v630, %v2848
      %v2850 = vand.u32 %v2849, 4294901760
      %v2851 = vsub.f32 %v2849, %v2850
      %v2852 = vand.u32 %v2851, 4294901760
      %2853 = vmatmul.mubr.f32.gmra.mrb[0].mxu0 %v2852
      %v2854 = vpop.f32.mrb[0].mxu0
      %v2855 = vadd.f32 %v587, %v2854
      %v2856 = vpop.f32.mrb[0].mxu0
      %2857 = vmatprep.mubr.f32.mxu0 0.0
      %v2858 = vand.u32 %v633, 4294901760
      %v2859 = vsub.f32 %v633, %v2858
      %v2860 = vand.u32 %v2859, 4294901760
      %v2861 = vsub.f32 %v2859, %v2860
      %v2862 = vand.u32 %v2861, 4294901760
      %2863 = vmatmul.mubr.f32.gmra.mrb[0].mxu0 %v2862
      %v2864 = vpop.f32.mrb[0].mxu0
      %v2865 = vadd.f32 %v592, %v2864
      %v2866 = vpop.f32.mrb[0].mxu0
      %2867 = vmatprep.mubr.f32.mxu0 0.0
      %v2868 = vand.u32 %v636, 4294901760
      %v2869 = vsub.f32 %v636, %v2868
      %v2870 = vand.u32 %v2869, 4294901760
      %v2871 = vsub.f32 %v2869, %v2870
      %v2872 = vand.u32 %v2871, 4294901760
      %2873 = vmatmul.mubr.f32.gmra.mrb[0].mxu0 %v2872
      %v2874 = vpop.f32.mrb[0].mxu0
      %v2875 = vadd.f32 %v597, %v2874
      %v2876 = vpop.f32.mrb[0].mxu0
      %2877 = vmatprep.mubr.f32.mxu0 0.0
      %v2878 = vand.u32 %v639, 4294901760
      %v2879 = vsub.f32 %v639, %v2878
      %v2880 = vand.u32 %v2879, 4294901760
      %v2881 = vsub.f32 %v2879, %v2880
      %v2882 = vand.u32 %v2881, 4294901760
      %2883 = vmatmul.mubr.f32.gmra.mrb[0].mxu0 %v2882
      %v2884 = vpop.f32.mrb[0].mxu0
      %v2885 = vadd.f32 %v602, %v2884
      %v2886 = vpop.f32.mrb[0].mxu0
      %2887 = vdwg.mxu0
      %2888 = vmatprep.subr.mxu0 0.0
      %v2889 = vand.u32 %v2695, 4294901760
      %v2890 = vsub.f32 %v2695, %v2889
      %v2891 = vand.u32 %v2890, 4294901760
      %v2892 = vsub.f32 %v2890, %v2891
      %v2893 = vand.u32 %v2892, 4294901760
      %2894 = vmatpush1.msra.mxu0 %v2893
      %2895 = vmatprep.subr.mxu0 0.0
      %v2896 = vand.u32 %v2696, 4294901760
      %v2897 = vsub.f32 %v2696, %v2896
      %v2898 = vand.u32 %v2897, 4294901760
      %v2899 = vsub.f32 %v2897, %v2898
      %v2900 = vand.u32 %v2899, 4294901760
      %2901 = vmatpush1.msra.mxu0 %v2900
      %2902 = vmatprep.subr.mxu0 0.0
      %v2903 = vand.u32 %v2697, 4294901760
      %v2904 = vsub.f32 %v2697, %v2903
      %v2905 = vand.u32 %v2904, 4294901760
      %v2906 = vsub.f32 %v2904, %v2905
      %v2907 = vand.u32 %v2906, 4294901760
      %2908 = vmatpush1.msra.mxu0 %v2907
      %2909 = vmatprep.subr.mxu0 0.0
      %v2910 = vand.u32 %v2698, 4294901760
      %v2911 = vsub.f32 %v2698, %v2910
      %v2912 = vand.u32 %v2911, 4294901760
      %v2913 = vsub.f32 %v2911, %v2912
      %v2914 = vand.u32 %v2913, 4294901760
      %2915 = vmatpush1.msra.mxu0 %v2914
      %2916 = vmatprep.subr.mxu0 0.0
      %2917 = vmatpush1.msra.mxu0 0.0
      %2918 = vmatprep.subr.mxu0 0.0
      %2919 = vmatpush1.msra.mxu0 0.0
      %2920 = vmatprep.subr.mxu0 0.0
      %2921 = vmatpush1.msra.mxu0 0.0
      %2922 = vmatprep.subr.mxu0 0.0
      %2923 = vmatpush1.msra.mxu0 0.0
      %2924 = vmatprep.subr.mxu0 0.0
      %2925 = vmatpush1.msra.mxu0 0.0
      %2926 = vmatprep.subr.mxu0 0.0
      %2927 = vmatpush1.msra.mxu0 0.0
      %2928 = vmatprep.subr.mxu0 0.0
      %2929 = vmatpush1.msra.mxu0 0.0
      %2930 = vmatprep.subr.mxu0 0.0
      %2931 = vmatpush1.msra.mxu0 0.0
      %2932 = vmatprep.subr.mxu0 0.0
      %2933 = vmatpush1.msra.mxu0 0.0
      %2934 = vmatprep.subr.mxu0 0.0
      %2935 = vmatpush1.msra.mxu0 0.0
      %2936 = vmatprep.subr.mxu0 0.0
      %2937 = vmatpush1.msra.mxu0 0.0
      %2938 = vmatprep.subr.mxu0 0.0
      %2939 = vmatpush1.msra.mxu0 0.0
      %2940 = vmatprep.subr.mxu0 0.0
      %2941 = vmatpush1.msra.mxu0 0.0
      %2942 = vmatprep.subr.mxu0 0.0
      %2943 = vmatpush1.msra.mxu0 0.0
      %2944 = vmatprep.subr.mxu0 0.0
      %2945 = vmatpush1.msra.mxu0 0.0
      %2946 = vmatprep.subr.mxu0 0.0
      %2947 = vmatpush1.msra.mxu0 0.0
      %2948 = vmatprep.subr.mxu0 0.0
      %2949 = vmatpush1.msra.mxu0 0.0
      %2950 = vmatprep.subr.mxu0 0.0
      %2951 = vmatpush1.msra.mxu0 0.0
      %2952 = vmatprep.subr.mxu0 0.0
      %2953 = vmatpush1.msra.mxu0 0.0
      %2954 = vmatprep.subr.mxu0 0.0
      %2955 = vmatpush1.msra.mxu0 0.0
      %2956 = vmatprep.subr.mxu0 0.0
      %2957 = vmatpush1.msra.mxu0 0.0
      %2958 = vmatprep.subr.mxu0 0.0
      %2959 = vmatpush1.msra.mxu0 0.0
      %2960 = vmatprep.subr.mxu0 0.0
      %2961 = vmatpush1.msra.mxu0 0.0
      %2962 = vmatprep.subr.mxu0 0.0
      %2963 = vmatpush1.msra.mxu0 0.0
      %2964 = vmatprep.subr.mxu0 0.0
      %2965 = vmatpush1.msra.mxu0 0.0
      %2966 = vmatprep.subr.mxu0 0.0
      %2967 = vmatpush1.msra.mxu0 0.0
      %2968 = vmatprep.subr.mxu0 0.0
      %2969 = vmatpush1.msra.mxu0 0.0
      %2970 = vmatprep.subr.mxu0 0.0
      %2971 = vmatpush1.msra.mxu0 0.0
      %2972 = vmatprep.mubr.f32.mxu0 0.0
      %v2973 = vand.u32 %v606, 4294901760
      %2974 = vmatmul.mubr.f32.gmra.mrb[0].mxu0 %v2973
      %v2975 = vpop.f32.mrb[0].mxu0
      %v2976 = vadd.f32 %v2775, %v2975
      %v2977 = vpop.f32.mrb[0].mxu0
      %2978 = vmatprep.mubr.f32.mxu0 0.0
      %v2979 = vand.u32 %v609, 4294901760
      %2980 = vmatmul.mubr.f32.gmra.mrb[0].mxu0 %v2979
      %v2981 = vpop.f32.mrb[0].mxu0
      %v2982 = vadd.f32 %v2785, %v2981
      %v2983 = vpop.f32.mrb[0].mxu0
      %2984 = vmatprep.mubr.f32.mxu0 0.0
      %v2985 = vand.u32 %v612, 4294901760
      %2986 = vmatmul.mubr.f32.gmra.mrb[0].mxu0 %v2985
      %v2987 = vpop.f32.mrb[0].mxu0
      %v2988 = vadd.f32 %v2795, %v2987
      %v2989 = vpop.f32.mrb[0].mxu0
      %2990 = vmatprep.mubr.f32.mxu0 0.0
      %v2991 = vand.u32 %v615, 4294901760
      %2992 = vmatmul.mubr.f32.gmra.mrb[0].mxu0 %v2991
      %v2993 = vpop.f32.mrb[0].mxu0
      %v2994 = vadd.f32 %v2805, %v2993
      %v2995 = vpop.f32.mrb[0].mxu0
      %2996 = vmatprep.mubr.f32.mxu0 0.0
      %v2997 = vand.u32 %v618, 4294901760
      %2998 = vmatmul.mubr.f32.gmra.mrb[0].mxu0 %v2997
      %v2999 = vpop.f32.mrb[0].mxu0
      %v3000 = vadd.f32 %v2815, %v2999
      %v3001 = vpop.f32.mrb[0].mxu0
      %3002 = vmatprep.mubr.f32.mxu0 0.0
      %v3003 = vand.u32 %v621, 4294901760
      %3004 = vmatmul.mubr.f32.gmra.mrb[0].mxu0 %v3003
      %v3005 = vpop.f32.mrb[0].mxu0
      %v3006 = vadd.f32 %v2825, %v3005
      %v3007 = vpop.f32.mrb[0].mxu0
      %3008 = vmatprep.mubr.f32.mxu0 0.0
      %v3009 = vand.u32 %v624, 4294901760
      %3010 = vmatmul.mubr.f32.gmra.mrb[0].mxu0 %v3009
      %v3011 = vpop.f32.mrb[0].mxu0
      %v3012 = vadd.f32 %v2835, %v3011
      %v3013 = vpop.f32.mrb[0].mxu0
      %3014 = vmatprep.mubr.f32.mxu0 0.0
      %v3015 = vand.u32 %v627, 4294901760
      %3016 = vmatmul.mubr.f32.gmra.mrb[0].mxu0 %v3015
      %v3017 = vpop.f32.mrb[0].mxu0
      %v3018 = vadd.f32 %v2845, %v3017
      %v3019 = vpop.f32.mrb[0].mxu0
      %3020 = vmatprep.mubr.f32.mxu0 0.0
      %v3021 = vand.u32 %v630, 4294901760
      %3022 = vmatmul.mubr.f32.gmra.mrb[0].mxu0 %v3021
      %v3023 = vpop.f32.mrb[0].mxu0
      %v3024 = vadd.f32 %v2855, %v3023
      %v3025 = vpop.f32.mrb[0].mxu0
      %3026 = vmatprep.mubr.f32.mxu0 0.0
      %v3027 = vand.u32 %v633, 4294901760
      %3028 = vmatmul.mubr.f32.gmra.mrb[0].mxu0 %v3027
      %v3029 = vpop.f32.mrb[0].mxu0
      %v3030 = vadd.f32 %v2865, %v3029
      %v3031 = vpop.f32.mrb[0].mxu0
      %3032 = vmatprep.mubr.f32.mxu0 0.0
      %v3033 = vand.u32 %v636, 4294901760
      %3034 = vmatmul.mubr.f32.gmra.mrb[0].mxu0 %v3033
      %v3035 = vpop.f32.mrb[0].mxu0
      %v3036 = vadd.f32 %v2875, %v3035
      %v3037 = vpop.f32.mrb[0].mxu0
      %3038 = vmatprep.mubr.f32.mxu0 0.0
      %v3039 = vand.u32 %v639, 4294901760
      %3040 = vmatmul.mubr.f32.gmra.mrb[0].mxu0 %v3039
      %v3041 = vpop.f32.mrb[0].mxu0
      %v3042 = vadd.f32 %v2885, %v3041
      %v3043 = vpop.f32.mrb[0].mxu0
      %3044 = vdwg.mxu0
      %3045 = vmatprep.subr.mxu0 0.0
      %v3046 = vand.u32 %v2695, 4294901760
      %v3047 = vsub.f32 %v2695, %v3046
      %3048 = vmatpush1.msra.mxu0 %v3047
      %3049 = vmatprep.subr.mxu0 0.0
      %v3050 = vand.u32 %v2696, 4294901760
      %v3051 = vsub.f32 %v2696, %v3050
      %3052 = vmatpush1.msra.mxu0 %v3051
      %3053 = vmatprep.subr.mxu0 0.0
      %v3054 = vand.u32 %v2697, 4294901760
      %v3055 = vsub.f32 %v2697, %v3054
      %3056 = vmatpush1.msra.mxu0 %v3055
      %3057 = vmatprep.subr.mxu0 0.0
      %v3058 = vand.u32 %v2698, 4294901760
      %v3059 = vsub.f32 %v2698, %v3058
      %3060 = vmatpush1.msra.mxu0 %v3059
      %3061 = vmatprep.subr.mxu0 0.0
      %3062 = vmatpush1.msra.mxu0 0.0
      %3063 = vmatprep.subr.mxu0 0.0
      %3064 = vmatpush1.msra.mxu0 0.0
      %3065 = vmatprep.subr.mxu0 0.0
      %3066 = vmatpush1.msra.mxu0 0.0
      %3067 = vmatprep.subr.mxu0 0.0
      %3068 = vmatpush1.msra.mxu0 0.0
      %3069 = vmatprep.subr.mxu0 0.0
      %3070 = vmatpush1.msra.mxu0 0.0
      %3071 = vmatprep.subr.mxu0 0.0
      %3072 = vmatpush1.msra.mxu0 0.0
      %3073 = vmatprep.subr.mxu0 0.0
      %3074 = vmatpush1.msra.mxu0 0.0
      %3075 = vmatprep.subr.mxu0 0.0
      %3076 = vmatpush1.msra.mxu0 0.0
      %3077 = vmatprep.subr.mxu0 0.0
      %3078 = vmatpush1.msra.mxu0 0.0
      %3079 = vmatprep.subr.mxu0 0.0
      %3080 = vmatpush1.msra.mxu0 0.0
      %3081 = vmatprep.subr.mxu0 0.0
      %3082 = vmatpush1.msra.mxu0 0.0
      %3083 = vmatprep.subr.mxu0 0.0
      %3084 = vmatpush1.msra.mxu0 0.0
      %3085 = vmatprep.subr.mxu0 0.0
      %3086 = vmatpush1.msra.mxu0 0.0
      %3087 = vmatprep.subr.mxu0 0.0
      %3088 = vmatpush1.msra.mxu0 0.0
      %3089 = vmatprep.subr.mxu0 0.0
      %3090 = vmatpush1.msra.mxu0 0.0
      %3091 = vmatprep.subr.mxu0 0.0
      %3092 = vmatpush1.msra.mxu0 0.0
      %3093 = vmatprep.subr.mxu0 0.0
      %3094 = vmatpush1.msra.mxu0 0.0
      %3095 = vmatprep.subr.mxu0 0.0
      %3096 = vmatpush1.msra.mxu0 0.0
      %3097 = vmatprep.subr.mxu0 0.0
      %3098 = vmatpush1.msra.mxu0 0.0
      %3099 = vmatprep.subr.mxu0 0.0
      %3100 = vmatpush1.msra.mxu0 0.0
      %3101 = vmatprep.subr.mxu0 0.0
      %3102 = vmatpush1.msra.mxu0 0.0
      %3103 = vmatprep.subr.mxu0 0.0
      %3104 = vmatpush1.msra.mxu0 0.0
      %3105 = vmatprep.subr.mxu0 0.0
      %3106 = vmatpush1.msra.mxu0 0.0
      %3107 = vmatprep.subr.mxu0 0.0
      %3108 = vmatpush1.msra.mxu0 0.0
      %3109 = vmatprep.subr.mxu0 0.0
      %3110 = vmatpush1.msra.mxu0 0.0
      %3111 = vmatprep.subr.mxu0 0.0
      %3112 = vmatpush1.msra.mxu0 0.0
      %3113 = vmatprep.subr.mxu0 0.0
      %3114 = vmatpush1.msra.mxu0 0.0
      %3115 = vmatprep.subr.mxu0 0.0
      %3116 = vmatpush1.msra.mxu0 0.0
      %3117 = vmatprep.mubr.f32.mxu0 0.0
      %v3118 = vand.u32 %v606, 4294901760
      %v3119 = vsub.f32 %v606, %v3118
      %3120 = vmatmul.mubr.f32.gmra.mrb[0].mxu0 %v3119
      %v3121 = vpop.f32.mrb[0].mxu0
      %v3122 = vadd.f32 %v2976, %v3121
      %v3123 = vpop.f32.mrb[0].mxu0
      %3124 = vmatprep.mubr.f32.mxu0 0.0
      %v3125 = vand.u32 %v609, 4294901760
      %v3126 = vsub.f32 %v609, %v3125
      %3127 = vmatmul.mubr.f32.gmra.mrb[0].mxu0 %v3126
      %v3128 = vpop.f32.mrb[0].mxu0
      %v3129 = vadd.f32 %v2982, %v3128
      %v3130 = vpop.f32.mrb[0].mxu0
      %3131 = vmatprep.mubr.f32.mxu0 0.0
      %v3132 = vand.u32 %v612, 4294901760
      %v3133 = vsub.f32 %v612, %v3132
      %3134 = vmatmul.mubr.f32.gmra.mrb[0].mxu0 %v3133
      %v3135 = vpop.f32.mrb[0].mxu0
      %v3136 = vadd.f32 %v2988, %v3135
      %v3137 = vpop.f32.mrb[0].mxu0
      %3138 = vmatprep.mubr.f32.mxu0 0.0
      %v3139 = vand.u32 %v615, 4294901760
      %v3140 = vsub.f32 %v615, %v3139
      %3141 = vmatmul.mubr.f32.gmra.mrb[0].mxu0 %v3140
      %v3142 = vpop.f32.mrb[0].mxu0
      %v3143 = vadd.f32 %v2994, %v3142
      %v3144 = vpop.f32.mrb[0].mxu0
      %3145 = vmatprep.mubr.f32.mxu0 0.0
      %v3146 = vand.u32 %v618, 4294901760
      %v3147 = vsub.f32 %v618, %v3146
      %3148 = vmatmul.mubr.f32.gmra.mrb[0].mxu0 %v3147
      %v3149 = vpop.f32.mrb[0].mxu0
      %v3150 = vadd.f32 %v3000, %v3149
      %v3151 = vpop.f32.mrb[0].mxu0
      %3152 = vmatprep.mubr.f32.mxu0 0.0
      %v3153 = vand.u32 %v621, 4294901760
      %v3154 = vsub.f32 %v621, %v3153
      %3155 = vmatmul.mubr.f32.gmra.mrb[0].mxu0 %v3154
      %v3156 = vpop.f32.mrb[0].mxu0
      %v3157 = vadd.f32 %v3006, %v3156
      %v3158 = vpop.f32.mrb[0].mxu0
      %3159 = vmatprep.mubr.f32.mxu0 0.0
      %v3160 = vand.u32 %v624, 4294901760
      %v3161 = vsub.f32 %v624, %v3160
      %3162 = vmatmul.mubr.f32.gmra.mrb[0].mxu0 %v3161
      %v3163 = vpop.f32.mrb[0].mxu0
      %v3164 = vadd.f32 %v3012, %v3163
      %v3165 = vpop.f32.mrb[0].mxu0
      %3166 = vmatprep.mubr.f32.mxu0 0.0
      %v3167 = vand.u32 %v627, 4294901760
      %v3168 = vsub.f32 %v627, %v3167
      %3169 = vmatmul.mubr.f32.gmra.mrb[0].mxu0 %v3168
      %v3170 = vpop.f32.mrb[0].mxu0
      %v3171 = vadd.f32 %v3018, %v3170
      %v3172 = vpop.f32.mrb[0].mxu0
      %3173 = vmatprep.mubr.f32.mxu0 0.0
      %v3174 = vand.u32 %v630, 4294901760
      %v3175 = vsub.f32 %v630, %v3174
      %3176 = vmatmul.mubr.f32.gmra.mrb[0].mxu0 %v3175
      %v3177 = vpop.f32.mrb[0].mxu0
      %v3178 = vadd.f32 %v3024, %v3177
      %v3179 = vpop.f32.mrb[0].mxu0
      %3180 = vmatprep.mubr.f32.mxu0 0.0
      %v3181 = vand.u32 %v633, 4294901760
      %v3182 = vsub.f32 %v633, %v3181
      %3183 = vmatmul.mubr.f32.gmra.mrb[0].mxu0 %v3182
      %v3184 = vpop.f32.mrb[0].mxu0
      %v3185 = vadd.f32 %v3030, %v3184
      %v3186 = vpop.f32.mrb[0].mxu0
      %3187 = vmatprep.mubr.f32.mxu0 0.0
      %v3188 = vand.u32 %v636, 4294901760
      %v3189 = vsub.f32 %v636, %v3188
      %3190 = vmatmul.mubr.f32.gmra.mrb[0].mxu0 %v3189
      %v3191 = vpop.f32.mrb[0].mxu0
      %v3192 = vadd.f32 %v3036, %v3191
      %v3193 = vpop.f32.mrb[0].mxu0
      %3194 = vmatprep.mubr.f32.mxu0 0.0
      %v3195 = vand.u32 %v639, 4294901760
      %v3196 = vsub.f32 %v639, %v3195
      %3197 = vmatmul.mubr.f32.gmra.mrb[0].mxu0 %v3196
      %v3198 = vpop.f32.mrb[0].mxu0
      %v3199 = vadd.f32 %v3042, %v3198
      %v3200 = vpop.f32.mrb[0].mxu0
      %3201 = vdwg.mxu0
      %3202 = vmatprep.subr.mxu0 0.0
      %v3203 = vand.u32 %v2695, 4294901760
      %3204 = vmatpush1.msra.mxu0 %v3203
      %3205 = vmatprep.subr.mxu0 0.0
      %v3206 = vand.u32 %v2696, 4294901760
      %3207 = vmatpush1.msra.mxu0 %v3206
      %3208 = vmatprep.subr.mxu0 0.0
      %v3209 = vand.u32 %v2697, 4294901760
      %3210 = vmatpush1.msra.mxu0 %v3209
      %3211 = vmatprep.subr.mxu0 0.0
      %v3212 = vand.u32 %v2698, 4294901760
      %3213 = vmatpush1.msra.mxu0 %v3212
      %3214 = vmatprep.subr.mxu0 0.0
      %3215 = vmatpush1.msra.mxu0 0.0
      %3216 = vmatprep.subr.mxu0 0.0
      %3217 = vmatpush1.msra.mxu0 0.0
      %3218 = vmatprep.subr.mxu0 0.0
      %3219 = vmatpush1.msra.mxu0 0.0
      %3220 = vmatprep.subr.mxu0 0.0
      %3221 = vmatpush1.msra.mxu0 0.0
      %3222 = vmatprep.subr.mxu0 0.0
      %3223 = vmatpush1.msra.mxu0 0.0
      %3224 = vmatprep.subr.mxu0 0.0
      %3225 = vmatpush1.msra.mxu0 0.0
      %3226 = vmatprep.subr.mxu0 0.0
      %3227 = vmatpush1.msra.mxu0 0.0
      %3228 = vmatprep.subr.mxu0 0.0
      %3229 = vmatpush1.msra.mxu0 0.0
      %3230 = vmatprep.subr.mxu0 0.0
      %3231 = vmatpush1.msra.mxu0 0.0
      %3232 = vmatprep.subr.mxu0 0.0
      %3233 = vmatpush1.msra.mxu0 0.0
      %3234 = vmatprep.subr.mxu0 0.0
      %3235 = vmatpush1.msra.mxu0 0.0
      %3236 = vmatprep.subr.mxu0 0.0
      %3237 = vmatpush1.msra.mxu0 0.0
      %3238 = vmatprep.subr.mxu0 0.0
      %3239 = vmatpush1.msra.mxu0 0.0
      %3240 = vmatprep.subr.mxu0 0.0
      %3241 = vmatpush1.msra.mxu0 0.0
      %3242 = vmatprep.subr.mxu0 0.0
      %3243 = vmatpush1.msra.mxu0 0.0
      %3244 = vmatprep.subr.mxu0 0.0
      %3245 = vmatpush1.msra.mxu0 0.0
      %3246 = vmatprep.subr.mxu0 0.0
      %3247 = vmatpush1.msra.mxu0 0.0
      %3248 = vmatprep.subr.mxu0 0.0
      %3249 = vmatpush1.msra.mxu0 0.0
      %3250 = vmatprep.subr.mxu0 0.0
      %3251 = vmatpush1.msra.mxu0 0.0
      %3252 = vmatprep.subr.mxu0 0.0
      %3253 = vmatpush1.msra.mxu0 0.0
      %3254 = vmatprep.subr.mxu0 0.0
      %3255 = vmatpush1.msra.mxu0 0.0
      %3256 = vmatprep.subr.mxu0 0.0
      %3257 = vmatpush1.msra.mxu0 0.0
      %3258 = vmatprep.subr.mxu0 0.0
      %3259 = vmatpush1.msra.mxu0 0.0
      %3260 = vmatprep.subr.mxu0 0.0
      %3261 = vmatpush1.msra.mxu0 0.0
      %3262 = vmatprep.subr.mxu0 0.0
      %3263 = vmatpush1.msra.mxu0 0.0
      %3264 = vmatprep.subr.mxu0 0.0
      %3265 = vmatpush1.msra.mxu0 0.0
      %3266 = vmatprep.subr.mxu0 0.0
      %3267 = vmatpush1.msra.mxu0 0.0
      %3268 = vmatprep.subr.mxu0 0.0
      %3269 = vmatpush1.msra.mxu0 0.0
      %3270 = vmatprep.mubr.f32.mxu0 0.0
      %v3271 = vand.u32 %v606, 4294901760
      %v3272 = vsub.f32 %v606, %v3271
      %v3273 = vand.u32 %v3272, 4294901760
      %3274 = vmatmul.mubr.f32.gmra.mrb[0].mxu0 %v3273
      %v3275 = vpop.f32.mrb[0].mxu0
      %v3276 = vadd.f32 %v3122, %v3275
      %v3277 = vpop.f32.mrb[0].mxu0
      %3278 = vmatprep.mubr.f32.mxu0 0.0
      %v3279 = vand.u32 %v609, 4294901760
      %v3280 = vsub.f32 %v609, %v3279
      %v3281 = vand.u32 %v3280, 4294901760
      %3282 = vmatmul.mubr.f32.gmra.mrb[0].mxu0 %v3281
      %v3283 = vpop.f32.mrb[0].mxu0
      %v3284 = vadd.f32 %v3129, %v3283
      %v3285 = vpop.f32.mrb[0].mxu0
      %3286 = vmatprep.mubr.f32.mxu0 0.0
      %v3287 = vand.u32 %v612, 4294901760
      %v3288 = vsub.f32 %v612, %v3287
      %v3289 = vand.u32 %v3288, 4294901760
      %3290 = vmatmul.mubr.f32.gmra.mrb[0].mxu0 %v3289
      %v3291 = vpop.f32.mrb[0].mxu0
      %v3292 = vadd.f32 %v3136, %v3291
      %v3293 = vpop.f32.mrb[0].mxu0
      %3294 = vmatprep.mubr.f32.mxu0 0.0
      %v3295 = vand.u32 %v615, 4294901760
      %v3296 = vsub.f32 %v615, %v3295
      %v3297 = vand.u32 %v3296, 4294901760
      %3298 = vmatmul.mubr.f32.gmra.mrb[0].mxu0 %v3297
      %v3299 = vpop.f32.mrb[0].mxu0
      %v3300 = vadd.f32 %v3143, %v3299
      %v3301 = vpop.f32.mrb[0].mxu0
      %3302 = vmatprep.mubr.f32.mxu0 0.0
      %v3303 = vand.u32 %v618, 4294901760
      %v3304 = vsub.f32 %v618, %v3303
      %v3305 = vand.u32 %v3304, 4294901760
      %3306 = vmatmul.mubr.f32.gmra.mrb[0].mxu0 %v3305
      %v3307 = vpop.f32.mrb[0].mxu0
      %v3308 = vadd.f32 %v3150, %v3307
      %v3309 = vpop.f32.mrb[0].mxu0
      %3310 = vmatprep.mubr.f32.mxu0 0.0
      %v3311 = vand.u32 %v621, 4294901760
      %v3312 = vsub.f32 %v621, %v3311
      %v3313 = vand.u32 %v3312, 4294901760
      %3314 = vmatmul.mubr.f32.gmra.mrb[0].mxu0 %v3313
      %v3315 = vpop.f32.mrb[0].mxu0
      %v3316 = vadd.f32 %v3157, %v3315
      %v3317 = vpop.f32.mrb[0].mxu0
      %3318 = vmatprep.mubr.f32.mxu0 0.0
      %v3319 = vand.u32 %v624, 4294901760
      %v3320 = vsub.f32 %v624, %v3319
      %v3321 = vand.u32 %v3320, 4294901760
      %3322 = vmatmul.mubr.f32.gmra.mrb[0].mxu0 %v3321
      %v3323 = vpop.f32.mrb[0].mxu0
      %v3324 = vadd.f32 %v3164, %v3323
      %v3325 = vpop.f32.mrb[0].mxu0
      %3326 = vmatprep.mubr.f32.mxu0 0.0
      %v3327 = vand.u32 %v627, 4294901760
      %v3328 = vsub.f32 %v627, %v3327
      %v3329 = vand.u32 %v3328, 4294901760
      %3330 = vmatmul.mubr.f32.gmra.mrb[0].mxu0 %v3329
      %v3331 = vpop.f32.mrb[0].mxu0
      %v3332 = vadd.f32 %v3171, %v3331
      %v3333 = vpop.f32.mrb[0].mxu0
      %3334 = vmatprep.mubr.f32.mxu0 0.0
      %v3335 = vand.u32 %v630, 4294901760
      %v3336 = vsub.f32 %v630, %v3335
      %v3337 = vand.u32 %v3336, 4294901760
      %3338 = vmatmul.mubr.f32.gmra.mrb[0].mxu0 %v3337
      %v3339 = vpop.f32.mrb[0].mxu0
      %v3340 = vadd.f32 %v3178, %v3339
      %v3341 = vpop.f32.mrb[0].mxu0
      %3342 = vmatprep.mubr.f32.mxu0 0.0
      %v3343 = vand.u32 %v633, 4294901760
      %v3344 = vsub.f32 %v633, %v3343
      %v3345 = vand.u32 %v3344, 4294901760
      %3346 = vmatmul.mubr.f32.gmra.mrb[0].mxu0 %v3345
      %v3347 = vpop.f32.mrb[0].mxu0
      %v3348 = vadd.f32 %v3185, %v3347
      %v3349 = vpop.f32.mrb[0].mxu0
      %3350 = vmatprep.mubr.f32.mxu0 0.0
      %v3351 = vand.u32 %v636, 4294901760
      %v3352 = vsub.f32 %v636, %v3351
      %v3353 = vand.u32 %v3352, 4294901760
      %3354 = vmatmul.mubr.f32.gmra.mrb[0].mxu0 %v3353
      %v3355 = vpop.f32.mrb[0].mxu0
      %v3356 = vadd.f32 %v3192, %v3355
      %v3357 = vpop.f32.mrb[0].mxu0
      %3358 = vmatprep.mubr.f32.mxu0 0.0
      %v3359 = vand.u32 %v639, 4294901760
      %v3360 = vsub.f32 %v639, %v3359
      %v3361 = vand.u32 %v3360, 4294901760
      %3362 = vmatmul.mubr.f32.gmra.mrb[0].mxu0 %v3361
      %v3363 = vpop.f32.mrb[0].mxu0
      %v3364 = vadd.f32 %v3199, %v3363
      %v3365 = vpop.f32.mrb[0].mxu0
      %3366 = vdwg.mxu0
      %3367 = vmatprep.subr.mxu0 0.0
      %v3368 = vand.u32 %v2695, 4294901760
      %v3369 = vsub.f32 %v2695, %v3368
      %v3370 = vand.u32 %v3369, 4294901760
      %3371 = vmatpush1.msra.mxu0 %v3370
      %3372 = vmatprep.subr.mxu0 0.0
      %v3373 = vand.u32 %v2696, 4294901760
      %v3374 = vsub.f32 %v2696, %v3373
      %v3375 = vand.u32 %v3374, 4294901760
      %3376 = vmatpush1.msra.mxu0 %v3375
      %3377 = vmatprep.subr.mxu0 0.0
      %v3378 = vand.u32 %v2697, 4294901760
      %v3379 = vsub.f32 %v2697, %v3378
      %v3380 = vand.u32 %v3379, 4294901760
      %3381 = vmatpush1.msra.mxu0 %v3380
      %3382 = vmatprep.subr.mxu0 0.0
      %v3383 = vand.u32 %v2698, 4294901760
      %v3384 = vsub.f32 %v2698, %v3383
      %v3385 = vand.u32 %v3384, 4294901760
      %3386 = vmatpush1.msra.mxu0 %v3385
      %3387 = vmatprep.subr.mxu0 0.0
      %3388 = vmatpush1.msra.mxu0 0.0
      %3389 = vmatprep.subr.mxu0 0.0
      %3390 = vmatpush1.msra.mxu0 0.0
      %3391 = vmatprep.subr.mxu0 0.0
      %3392 = vmatpush1.msra.mxu0 0.0
      %3393 = vmatprep.subr.mxu0 0.0
      %3394 = vmatpush1.msra.mxu0 0.0
      %3395 = vmatprep.subr.mxu0 0.0
      %3396 = vmatpush1.msra.mxu0 0.0
      %3397 = vmatprep.subr.mxu0 0.0
      %3398 = vmatpush1.msra.mxu0 0.0
      %3399 = vmatprep.subr.mxu0 0.0
      %3400 = vmatpush1.msra.mxu0 0.0
      %3401 = vmatprep.subr.mxu0 0.0
      %3402 = vmatpush1.msra.mxu0 0.0
      %3403 = vmatprep.subr.mxu0 0.0
      %3404 = vmatpush1.msra.mxu0 0.0
      %3405 = vmatprep.subr.mxu0 0.0
      %3406 = vmatpush1.msra.mxu0 0.0
      %3407 = vmatprep.subr.mxu0 0.0
      %3408 = vmatpush1.msra.mxu0 0.0
      %3409 = vmatprep.subr.mxu0 0.0
      %3410 = vmatpush1.msra.mxu0 0.0
      %3411 = vmatprep.subr.mxu0 0.0
      %3412 = vmatpush1.msra.mxu0 0.0
      %3413 = vmatprep.subr.mxu0 0.0
      %3414 = vmatpush1.msra.mxu0 0.0
      %3415 = vmatprep.subr.mxu0 0.0
      %3416 = vmatpush1.msra.mxu0 0.0
      %3417 = vmatprep.subr.mxu0 0.0
      %3418 = vmatpush1.msra.mxu0 0.0
      %3419 = vmatprep.subr.mxu0 0.0
      %3420 = vmatpush1.msra.mxu0 0.0
      %3421 = vmatprep.subr.mxu0 0.0
      %3422 = vmatpush1.msra.mxu0 0.0
      %3423 = vmatprep.subr.mxu0 0.0
      %3424 = vmatpush1.msra.mxu0 0.0
      %3425 = vmatprep.subr.mxu0 0.0
      %3426 = vmatpush1.msra.mxu0 0.0
      %3427 = vmatprep.subr.mxu0 0.0
      %3428 = vmatpush1.msra.mxu0 0.0
      %3429 = vmatprep.subr.mxu0 0.0
      %3430 = vmatpush1.msra.mxu0 0.0
      %3431 = vmatprep.subr.mxu0 0.0
      %3432 = vmatpush1.msra.mxu0 0.0
      %3433 = vmatprep.subr.mxu0 0.0
      %3434 = vmatpush1.msra.mxu0 0.0
      %3435 = vmatprep.subr.mxu0 0.0
      %3436 = vmatpush1.msra.mxu0 0.0
      %3437 = vmatprep.subr.mxu0 0.0
      %3438 = vmatpush1.msra.mxu0 0.0
      %3439 = vmatprep.subr.mxu0 0.0
      %3440 = vmatpush1.msra.mxu0 0.0
      %3441 = vmatprep.subr.mxu0 0.0
      %3442 = vmatpush1.msra.mxu0 0.0
      %3443 = vmatprep.mubr.f32.mxu0 0.0
      %v3444 = vand.u32 %v606, 4294901760
      %3445 = vmatmul.mubr.f32.gmra.mrb[0].mxu0 %v3444
      %v3446 = vpop.f32.mrb[0].mxu0
      %v3447 = vadd.f32 %v3276, %v3446
      %v3448 = vpop.f32.mrb[0].mxu0
      %3449 = vmatprep.mubr.f32.mxu0 0.0
      %v3450 = vand.u32 %v609, 4294901760
      %3451 = vmatmul.mubr.f32.gmra.mrb[0].mxu0 %v3450
      %v3452 = vpop.f32.mrb[0].mxu0
      %v3453 = vadd.f32 %v3284, %v3452
      %v3454 = vpop.f32.mrb[0].mxu0
      %3455 = vmatprep.mubr.f32.mxu0 0.0
      %v3456 = vand.u32 %v612, 4294901760
      %3457 = vmatmul.mubr.f32.gmra.mrb[0].mxu0 %v3456
      %v3458 = vpop.f32.mrb[0].mxu0
      %v3459 = vadd.f32 %v3292, %v3458
      %v3460 = vpop.f32.mrb[0].mxu0
      %3461 = vmatprep.mubr.f32.mxu0 0.0
      %v3462 = vand.u32 %v615, 4294901760
      %3463 = vmatmul.mubr.f32.gmra.mrb[0].mxu0 %v3462
      %v3464 = vpop.f32.mrb[0].mxu0
      %v3465 = vadd.f32 %v3300, %v3464
      %v3466 = vpop.f32.mrb[0].mxu0
      %3467 = vmatprep.mubr.f32.mxu0 0.0
      %v3468 = vand.u32 %v618, 4294901760
      %3469 = vmatmul.mubr.f32.gmra.mrb[0].mxu0 %v3468
      %v3470 = vpop.f32.mrb[0].mxu0
      %v3471 = vadd.f32 %v3308, %v3470
      %v3472 = vpop.f32.mrb[0].mxu0
      %3473 = vmatprep.mubr.f32.mxu0 0.0
      %v3474 = vand.u32 %v621, 4294901760
      %3475 = vmatmul.mubr.f32.gmra.mrb[0].mxu0 %v3474
      %v3476 = vpop.f32.mrb[0].mxu0
      %v3477 = vadd.f32 %v3316, %v3476
      %v3478 = vpop.f32.mrb[0].mxu0
      %3479 = vmatprep.mubr.f32.mxu0 0.0
      %v3480 = vand.u32 %v624, 4294901760
      %3481 = vmatmul.mubr.f32.gmra.mrb[0].mxu0 %v3480
      %v3482 = vpop.f32.mrb[0].mxu0
      %v3483 = vadd.f32 %v3324, %v3482
      %v3484 = vpop.f32.mrb[0].mxu0
      %3485 = vmatprep.mubr.f32.mxu0 0.0
      %v3486 = vand.u32 %v627, 4294901760
      %3487 = vmatmul.mubr.f32.gmra.mrb[0].mxu0 %v3486
      %v3488 = vpop.f32.mrb[0].mxu0
      %v3489 = vadd.f32 %v3332, %v3488
      %v3490 = vpop.f32.mrb[0].mxu0
      %3491 = vmatprep.mubr.f32.mxu0 0.0
      %v3492 = vand.u32 %v630, 4294901760
      %3493 = vmatmul.mubr.f32.gmra.mrb[0].mxu0 %v3492
      %v3494 = vpop.f32.mrb[0].mxu0
      %v3495 = vadd.f32 %v3340, %v3494
      %v3496 = vpop.f32.mrb[0].mxu0
      %3497 = vmatprep.mubr.f32.mxu0 0.0
      %v3498 = vand.u32 %v633, 4294901760
      %3499 = vmatmul.mubr.f32.gmra.mrb[0].mxu0 %v3498
      %v3500 = vpop.f32.mrb[0].mxu0
      %v3501 = vadd.f32 %v3348, %v3500
      %v3502 = vpop.f32.mrb[0].mxu0
      %3503 = vmatprep.mubr.f32.mxu0 0.0
      %v3504 = vand.u32 %v636, 4294901760
      %3505 = vmatmul.mubr.f32.gmra.mrb[0].mxu0 %v3504
      %v3506 = vpop.f32.mrb[0].mxu0
      %v3507 = vadd.f32 %v3356, %v3506
      %v3508 = vpop.f32.mrb[0].mxu0
      %3509 = vmatprep.mubr.f32.mxu0 0.0
      %v3510 = vand.u32 %v639, 4294901760
      %3511 = vmatmul.mubr.f32.gmra.mrb[0].mxu0 %v3510
      %v3512 = vpop.f32.mrb[0].mxu0
      %v3513 = vadd.f32 %v3364, %v3512
      %v3514 = vpop.f32.mrb[0].mxu0
      %3515 = vdwg.mxu0
      %3516 = vmatprep.subr.mxu0 0.0
      %v3517 = vand.u32 %v2695, 4294901760
      %3518 = vmatpush1.msra.mxu0 %v3517
      %3519 = vmatprep.subr.mxu0 0.0
      %v3520 = vand.u32 %v2696, 4294901760
      %3521 = vmatpush1.msra.mxu0 %v3520
      %3522 = vmatprep.subr.mxu0 0.0
      %v3523 = vand.u32 %v2697, 4294901760
      %3524 = vmatpush1.msra.mxu0 %v3523
      %3525 = vmatprep.subr.mxu0 0.0
      %v3526 = vand.u32 %v2698, 4294901760
      %3527 = vmatpush1.msra.mxu0 %v3526
      %3528 = vmatprep.subr.mxu0 0.0
      %3529 = vmatpush1.msra.mxu0 0.0
      %3530 = vmatprep.subr.mxu0 0.0
      %3531 = vmatpush1.msra.mxu0 0.0
      %3532 = vmatprep.subr.mxu0 0.0
      %3533 = vmatpush1.msra.mxu0 0.0
      %3534 = vmatprep.subr.mxu0 0.0
      %3535 = vmatpush1.msra.mxu0 0.0
      %3536 = vmatprep.subr.mxu0 0.0
      %3537 = vmatpush1.msra.mxu0 0.0
      %3538 = vmatprep.subr.mxu0 0.0
      %3539 = vmatpush1.msra.mxu0 0.0
      %3540 = vmatprep.subr.mxu0 0.0
      %3541 = vmatpush1.msra.mxu0 0.0
      %3542 = vmatprep.subr.mxu0 0.0
      %3543 = vmatpush1.msra.mxu0 0.0
      %3544 = vmatprep.subr.mxu0 0.0
      %3545 = vmatpush1.msra.mxu0 0.0
      %3546 = vmatprep.subr.mxu0 0.0
      %3547 = vmatpush1.msra.mxu0 0.0
      %3548 = vmatprep.subr.mxu0 0.0
      %3549 = vmatpush1.msra.mxu0 0.0
      %3550 = vmatprep.subr.mxu0 0.0
      %3551 = vmatpush1.msra.mxu0 0.0
      %3552 = vmatprep.subr.mxu0 0.0
      %3553 = vmatpush1.msra.mxu0 0.0
      %3554 = vmatprep.subr.mxu0 0.0
      %3555 = vmatpush1.msra.mxu0 0.0
      %3556 = vmatprep.subr.mxu0 0.0
      %3557 = vmatpush1.msra.mxu0 0.0
      %3558 = vmatprep.subr.mxu0 0.0
      %3559 = vmatpush1.msra.mxu0 0.0
      %3560 = vmatprep.subr.mxu0 0.0
      %3561 = vmatpush1.msra.mxu0 0.0
      %3562 = vmatprep.subr.mxu0 0.0
      %3563 = vmatpush1.msra.mxu0 0.0
      %3564 = vmatprep.subr.mxu0 0.0
      %3565 = vmatpush1.msra.mxu0 0.0
      %3566 = vmatprep.subr.mxu0 0.0
      %3567 = vmatpush1.msra.mxu0 0.0
      %3568 = vmatprep.subr.mxu0 0.0
      %3569 = vmatpush1.msra.mxu0 0.0
      %3570 = vmatprep.subr.mxu0 0.0
      %3571 = vmatpush1.msra.mxu0 0.0
      %3572 = vmatprep.subr.mxu0 0.0
      %3573 = vmatpush1.msra.mxu0 0.0
      %3574 = vmatprep.subr.mxu0 0.0
      %3575 = vmatpush1.msra.mxu0 0.0
      %3576 = vmatprep.subr.mxu0 0.0
      %3577 = vmatpush1.msra.mxu0 0.0
      %3578 = vmatprep.subr.mxu0 0.0
      %3579 = vmatpush1.msra.mxu0 0.0
      %3580 = vmatprep.subr.mxu0 0.0
      %3581 = vmatpush1.msra.mxu0 0.0
      %3582 = vmatprep.subr.mxu0 0.0
      %3583 = vmatpush1.msra.mxu0 0.0
      %3584 = vmatprep.mubr.f32.mxu0 0.0
      %v3585 = vand.u32 %v606, 4294901760
      %3586 = vmatmul.mubr.f32.gmra.mrb[0].mxu0 %v3585
      %v3587 = vpop.f32.mrb[0].mxu0
      %v3588 = vadd.f32 %v3447, %v3587
      %v3589 = vpop.f32.mrb[0].mxu0
      %3590 = vmatprep.mubr.f32.mxu0 0.0
      %v3591 = vand.u32 %v609, 4294901760
      %3592 = vmatmul.mubr.f32.gmra.mrb[0].mxu0 %v3591
      %v3593 = vpop.f32.mrb[0].mxu0
      %v3594 = vadd.f32 %v3453, %v3593
      %v3595 = vpop.f32.mrb[0].mxu0
      %3596 = vmatprep.mubr.f32.mxu0 0.0
      %v3597 = vand.u32 %v612, 4294901760
      %3598 = vmatmul.mubr.f32.gmra.mrb[0].mxu0 %v3597
      %v3599 = vpop.f32.mrb[0].mxu0
      %v3600 = vadd.f32 %v3459, %v3599
      %v3601 = vpop.f32.mrb[0].mxu0
      %3602 = vmatprep.mubr.f32.mxu0 0.0
      %v3603 = vand.u32 %v615, 4294901760
      %3604 = vmatmul.mubr.f32.gmra.mrb[0].mxu0 %v3603
      %v3605 = vpop.f32.mrb[0].mxu0
      %v3606 = vadd.f32 %v3465, %v3605
      %v3607 = vpop.f32.mrb[0].mxu0
      %3608 = vmatprep.mubr.f32.mxu0 0.0
      %v3609 = vand.u32 %v618, 4294901760
      %3610 = vmatmul.mubr.f32.gmra.mrb[0].mxu0 %v3609
      %v3611 = vpop.f32.mrb[0].mxu0
      %v3612 = vadd.f32 %v3471, %v3611
      %v3613 = vpop.f32.mrb[0].mxu0
      %3614 = vmatprep.mubr.f32.mxu0 0.0
      %v3615 = vand.u32 %v621, 4294901760
      %3616 = vmatmul.mubr.f32.gmra.mrb[0].mxu0 %v3615
      %v3617 = vpop.f32.mrb[0].mxu0
      %v3618 = vadd.f32 %v3477, %v3617
      %v3619 = vpop.f32.mrb[0].mxu0
      %3620 = vmatprep.mubr.f32.mxu0 0.0
      %v3621 = vand.u32 %v624, 4294901760
      %3622 = vmatmul.mubr.f32.gmra.mrb[0].mxu0 %v3621
      %v3623 = vpop.f32.mrb[0].mxu0
      %v3624 = vadd.f32 %v3483, %v3623
      %v3625 = vpop.f32.mrb[0].mxu0
      %3626 = vmatprep.mubr.f32.mxu0 0.0
      %v3627 = vand.u32 %v627, 4294901760
      %3628 = vmatmul.mubr.f32.gmra.mrb[0].mxu0 %v3627
      %v3629 = vpop.f32.mrb[0].mxu0
      %v3630 = vadd.f32 %v3489, %v3629
      %v3631 = vpop.f32.mrb[0].mxu0
      %3632 = vmatprep.mubr.f32.mxu0 0.0
      %v3633 = vand.u32 %v630, 4294901760
      %3634 = vmatmul.mubr.f32.gmra.mrb[0].mxu0 %v3633
      %v3635 = vpop.f32.mrb[0].mxu0
      %v3636 = vadd.f32 %v3495, %v3635
      %v3637 = vpop.f32.mrb[0].mxu0
      %3638 = vmatprep.mubr.f32.mxu0 0.0
      %v3639 = vand.u32 %v633, 4294901760
      %3640 = vmatmul.mubr.f32.gmra.mrb[0].mxu0 %v3639
      %v3641 = vpop.f32.mrb[0].mxu0
      %v3642 = vadd.f32 %v3501, %v3641
      %v3643 = vpop.f32.mrb[0].mxu0
      %3644 = vmatprep.mubr.f32.mxu0 0.0
      %v3645 = vand.u32 %v636, 4294901760
      %3646 = vmatmul.mubr.f32.gmra.mrb[0].mxu0 %v3645
      %v3647 = vpop.f32.mrb[0].mxu0
      %v3648 = vadd.f32 %v3507, %v3647
      %v3649 = vpop.f32.mrb[0].mxu0
      %3650 = vmatprep.mubr.f32.mxu0 0.0
      %v3651 = vand.u32 %v639, 4294901760
      %3652 = vmatmul.mubr.f32.gmra.mrb[0].mxu0 %v3651
      %v3653 = vpop.f32.mrb[0].mxu0
      %v3654 = vadd.f32 %v3513, %v3653
      %v3655 = vpop.f32.mrb[0].mxu0
      %3656 = vdwg.mxu0
      %3657 = vrot.lane.b32.xlu0 %v453, 1
      %v3658 = vpop.permute.xlu0 %3657
      %v3659 = vlaneseq
      %v3660 = vshrl.u32 %v3659, 7
      %v3661 = vsub.s32 2, %v3660
      %v3662 = vrot.slane %v455, %v3661
      %v3663 = vmul.f32 %v3658, %v3662
      %v3664 = vlaneseq
      %v3665 = vshrl.u32 %v3664, 7
      %v3666 = vsub.s32 0, %v3665
      %v3667 = vrot.slane %v3663, %v3666
      %v3668 = vmul.f32 %v3667, %v3588
      %v3669 = vmul.f32 %v3667, %v3594
      %v3670 = vadd.f32 %v2681, %v3668
      %v3671 = vadd.f32 %v2682, %v3669
      %v3672 = vlaneseq
      %v3673 = vshrl.u32 %v3672, 7
      %v3674 = vsub.s32 1, %v3673
      %v3675 = vrot.slane %v3663, %v3674
      %v3676 = vmul.f32 %v3675, %v3600
      %v3677 = vmul.f32 %v3675, %v3606
      %v3678 = vadd.f32 %v3670, %v3676
      %v3679 = vadd.f32 %v3671, %v3677
      %v3680 = vlaneseq
      %v3681 = vshrl.u32 %v3680, 7
      %v3682 = vsub.s32 2, %v3681
      %v3683 = vrot.slane %v3663, %v3682
      %v3684 = vmul.f32 %v3683, %v3612
      %v3685 = vmul.f32 %v3683, %v3618
      %v3686 = vadd.f32 %v3678, %v3684
      %v3687 = vadd.f32 %v3679, %v3685
      %v3688 = vlaneseq
      %v3689 = vshrl.u32 %v3688, 7
      %v3690 = vsub.s32 3, %v3689
      %v3691 = vrot.slane %v3663, %v3690
      %v3692 = vmul.f32 %v3691, %v3624
      %v3693 = vmul.f32 %v3691, %v3630
      %v3694 = vadd.f32 %v3686, %v3692
      %v3695 = vadd.f32 %v3687, %v3693
      %v3696 = vlaneseq
      %v3697 = vshrl.u32 %v3696, 7
      %v3698 = vsub.s32 4, %v3697
      %v3699 = vrot.slane %v3663, %v3698
      %v3700 = vmul.f32 %v3699, %v3636
      %v3701 = vmul.f32 %v3699, %v3642
      %v3702 = vadd.f32 %v3694, %v3700
      %v3703 = vadd.f32 %v3695, %v3701
      %v3704 = vlaneseq
      %v3705 = vshrl.u32 %v3704, 7
      %v3706 = vsub.s32 5, %v3705
      %v3707 = vrot.slane %v3663, %v3706
      %v3708 = vmul.f32 %v3707, %v3648
      %v3709 = vmul.f32 %v3707, %v3654
      %v3710 = vadd.f32 %v3702, %v3708
      %v3711 = vadd.f32 %v3703, %v3709
      %v3712 = vlaneseq
      %v3713 = vshrl.u32 %v3712, 7
      %v3714 = vsub.s32 3, %v3713
      %v3715 = vrot.slane %v454, %v3714
      %v3716 = vmul.f32 %v3715, %v467
      %v3717 = vmul.f32 %v3715, %v472
      %v3718 = vmul.f32 %v3715, %v477
      %v3719 = vmul.f32 %v3715, %v482
      %v3720 = vadd.f32 %v3716, %v495
      %v3721 = vadd.f32 %v3717, %v500
      %v3722 = vadd.f32 %v3718, %v505
      %v3723 = vadd.f32 %v3719, %v510
      %v3724 = vmax.f32 %v3720, 0.0
      %v3725 = vmax.f32 %v3721, 0.0
      %v3726 = vmax.f32 %v3722, 0.0
      %v3727 = vmax.f32 %v3723, 0.0
      %3728 = vmatprep.subr.mxu0 0.0
      %v3729 = vand.u32 %v3724, 4294901760
      %3730 = vmatpush1.msra.mxu0 %v3729
      %3731 = vmatprep.subr.mxu0 0.0
      %v3732 = vand.u32 %v3725, 4294901760
      %3733 = vmatpush1.msra.mxu0 %v3732
      %3734 = vmatprep.subr.mxu0 0.0
      %v3735 = vand.u32 %v3726, 4294901760
      %3736 = vmatpush1.msra.mxu0 %v3735
      %3737 = vmatprep.subr.mxu0 0.0
      %v3738 = vand.u32 %v3727, 4294901760
      %3739 = vmatpush1.msra.mxu0 %v3738
      %3740 = vmatprep.subr.mxu0 0.0
      %3741 = vmatpush1.msra.mxu0 0.0
      %3742 = vmatprep.subr.mxu0 0.0
      %3743 = vmatpush1.msra.mxu0 0.0
      %3744 = vmatprep.subr.mxu0 0.0
      %3745 = vmatpush1.msra.mxu0 0.0
      %3746 = vmatprep.subr.mxu0 0.0
      %3747 = vmatpush1.msra.mxu0 0.0
      %3748 = vmatprep.subr.mxu0 0.0
      %3749 = vmatpush1.msra.mxu0 0.0
      %3750 = vmatprep.subr.mxu0 0.0
      %3751 = vmatpush1.msra.mxu0 0.0
      %3752 = vmatprep.subr.mxu0 0.0
      %3753 = vmatpush1.msra.mxu0 0.0
      %3754 = vmatprep.subr.mxu0 0.0
      %3755 = vmatpush1.msra.mxu0 0.0
      %3756 = vmatprep.subr.mxu0 0.0
      %3757 = vmatpush1.msra.mxu0 0.0
      %3758 = vmatprep.subr.mxu0 0.0
      %3759 = vmatpush1.msra.mxu0 0.0
      %3760 = vmatprep.subr.mxu0 0.0
      %3761 = vmatpush1.msra.mxu0 0.0
      %3762 = vmatprep.subr.mxu0 0.0
      %3763 = vmatpush1.msra.mxu0 0.0
      %3764 = vmatprep.subr.mxu0 0.0
      %3765 = vmatpush1.msra.mxu0 0.0
      %3766 = vmatprep.subr.mxu0 0.0
      %3767 = vmatpush1.msra.mxu0 0.0
      %3768 = vmatprep.subr.mxu0 0.0
      %3769 = vmatpush1.msra.mxu0 0.0
      %3770 = vmatprep.subr.mxu0 0.0
      %3771 = vmatpush1.msra.mxu0 0.0
      %3772 = vmatprep.subr.mxu0 0.0
      %3773 = vmatpush1.msra.mxu0 0.0
      %3774 = vmatprep.subr.mxu0 0.0
      %3775 = vmatpush1.msra.mxu0 0.0
      %3776 = vmatprep.subr.mxu0 0.0
      %3777 = vmatpush1.msra.mxu0 0.0
      %3778 = vmatprep.subr.mxu0 0.0
      %3779 = vmatpush1.msra.mxu0 0.0
      %3780 = vmatprep.subr.mxu0 0.0
      %3781 = vmatpush1.msra.mxu0 0.0
      %3782 = vmatprep.subr.mxu0 0.0
      %3783 = vmatpush1.msra.mxu0 0.0
      %3784 = vmatprep.subr.mxu0 0.0
      %3785 = vmatpush1.msra.mxu0 0.0
      %3786 = vmatprep.subr.mxu0 0.0
      %3787 = vmatpush1.msra.mxu0 0.0
      %3788 = vmatprep.subr.mxu0 0.0
      %3789 = vmatpush1.msra.mxu0 0.0
      %3790 = vmatprep.subr.mxu0 0.0
      %3791 = vmatpush1.msra.mxu0 0.0
      %3792 = vmatprep.subr.mxu0 0.0
      %3793 = vmatpush1.msra.mxu0 0.0
      %3794 = vmatprep.subr.mxu0 0.0
      %3795 = vmatpush1.msra.mxu0 0.0
      %3796 = vmatprep.mubr.f32.mxu0 0.0
      %v3797 = vand.u32 %v606, 4294901760
      %v3798 = vsub.f32 %v606, %v3797
      %v3799 = vand.u32 %v3798, 4294901760
      %v3800 = vsub.f32 %v3798, %v3799
      %v3801 = vand.u32 %v3800, 4294901760
      %3802 = vmatmul.mubr.f32.gmra.mrb[0].mxu0 %v3801
      %v3803 = vpop.f32.mrb[0].mxu0
      %v3804 = vadd.f32 %v547, %v3803
      %v3805 = vpop.f32.mrb[0].mxu0
      %3806 = vmatprep.mubr.f32.mxu0 0.0
      %v3807 = vand.u32 %v609, 4294901760
      %v3808 = vsub.f32 %v609, %v3807
      %v3809 = vand.u32 %v3808, 4294901760
      %v3810 = vsub.f32 %v3808, %v3809
      %v3811 = vand.u32 %v3810, 4294901760
      %3812 = vmatmul.mubr.f32.gmra.mrb[0].mxu0 %v3811
      %v3813 = vpop.f32.mrb[0].mxu0
      %v3814 = vadd.f32 %v552, %v3813
      %v3815 = vpop.f32.mrb[0].mxu0
      %3816 = vmatprep.mubr.f32.mxu0 0.0
      %v3817 = vand.u32 %v612, 4294901760
      %v3818 = vsub.f32 %v612, %v3817
      %v3819 = vand.u32 %v3818, 4294901760
      %v3820 = vsub.f32 %v3818, %v3819
      %v3821 = vand.u32 %v3820, 4294901760
      %3822 = vmatmul.mubr.f32.gmra.mrb[0].mxu0 %v3821
      %v3823 = vpop.f32.mrb[0].mxu0
      %v3824 = vadd.f32 %v557, %v3823
      %v3825 = vpop.f32.mrb[0].mxu0
      %3826 = vmatprep.mubr.f32.mxu0 0.0
      %v3827 = vand.u32 %v615, 4294901760
      %v3828 = vsub.f32 %v615, %v3827
      %v3829 = vand.u32 %v3828, 4294901760
      %v3830 = vsub.f32 %v3828, %v3829
      %v3831 = vand.u32 %v3830, 4294901760
      %3832 = vmatmul.mubr.f32.gmra.mrb[0].mxu0 %v3831
      %v3833 = vpop.f32.mrb[0].mxu0
      %v3834 = vadd.f32 %v562, %v3833
      %v3835 = vpop.f32.mrb[0].mxu0
      %3836 = vmatprep.mubr.f32.mxu0 0.0
      %v3837 = vand.u32 %v618, 4294901760
      %v3838 = vsub.f32 %v618, %v3837
      %v3839 = vand.u32 %v3838, 4294901760
      %v3840 = vsub.f32 %v3838, %v3839
      %v3841 = vand.u32 %v3840, 4294901760
      %3842 = vmatmul.mubr.f32.gmra.mrb[0].mxu0 %v3841
      %v3843 = vpop.f32.mrb[0].mxu0
      %v3844 = vadd.f32 %v567, %v3843
      %v3845 = vpop.f32.mrb[0].mxu0
      %3846 = vmatprep.mubr.f32.mxu0 0.0
      %v3847 = vand.u32 %v621, 4294901760
      %v3848 = vsub.f32 %v621, %v3847
      %v3849 = vand.u32 %v3848, 4294901760
      %v3850 = vsub.f32 %v3848, %v3849
      %v3851 = vand.u32 %v3850, 4294901760
      %3852 = vmatmul.mubr.f32.gmra.mrb[0].mxu0 %v3851
      %v3853 = vpop.f32.mrb[0].mxu0
      %v3854 = vadd.f32 %v572, %v3853
      %v3855 = vpop.f32.mrb[0].mxu0
      %3856 = vmatprep.mubr.f32.mxu0 0.0
      %v3857 = vand.u32 %v624, 4294901760
      %v3858 = vsub.f32 %v624, %v3857
      %v3859 = vand.u32 %v3858, 4294901760
      %v3860 = vsub.f32 %v3858, %v3859
      %v3861 = vand.u32 %v3860, 4294901760
      %3862 = vmatmul.mubr.f32.gmra.mrb[0].mxu0 %v3861
      %v3863 = vpop.f32.mrb[0].mxu0
      %v3864 = vadd.f32 %v577, %v3863
      %v3865 = vpop.f32.mrb[0].mxu0
      %3866 = vmatprep.mubr.f32.mxu0 0.0
      %v3867 = vand.u32 %v627, 4294901760
      %v3868 = vsub.f32 %v627, %v3867
      %v3869 = vand.u32 %v3868, 4294901760
      %v3870 = vsub.f32 %v3868, %v3869
      %v3871 = vand.u32 %v3870, 4294901760
      %3872 = vmatmul.mubr.f32.gmra.mrb[0].mxu0 %v3871
      %v3873 = vpop.f32.mrb[0].mxu0
      %v3874 = vadd.f32 %v582, %v3873
      %v3875 = vpop.f32.mrb[0].mxu0
      %3876 = vmatprep.mubr.f32.mxu0 0.0
      %v3877 = vand.u32 %v630, 4294901760
      %v3878 = vsub.f32 %v630, %v3877
      %v3879 = vand.u32 %v3878, 4294901760
      %v3880 = vsub.f32 %v3878, %v3879
      %v3881 = vand.u32 %v3880, 4294901760
      %3882 = vmatmul.mubr.f32.gmra.mrb[0].mxu0 %v3881
      %v3883 = vpop.f32.mrb[0].mxu0
      %v3884 = vadd.f32 %v587, %v3883
      %v3885 = vpop.f32.mrb[0].mxu0
      %3886 = vmatprep.mubr.f32.mxu0 0.0
      %v3887 = vand.u32 %v633, 4294901760
      %v3888 = vsub.f32 %v633, %v3887
      %v3889 = vand.u32 %v3888, 4294901760
      %v3890 = vsub.f32 %v3888, %v3889
      %v3891 = vand.u32 %v3890, 4294901760
      %3892 = vmatmul.mubr.f32.gmra.mrb[0].mxu0 %v3891
      %v3893 = vpop.f32.mrb[0].mxu0
      %v3894 = vadd.f32 %v592, %v3893
      %v3895 = vpop.f32.mrb[0].mxu0
      %3896 = vmatprep.mubr.f32.mxu0 0.0
      %v3897 = vand.u32 %v636, 4294901760
      %v3898 = vsub.f32 %v636, %v3897
      %v3899 = vand.u32 %v3898, 4294901760
      %v3900 = vsub.f32 %v3898, %v3899
      %v3901 = vand.u32 %v3900, 4294901760
      %3902 = vmatmul.mubr.f32.gmra.mrb[0].mxu0 %v3901
      %v3903 = vpop.f32.mrb[0].mxu0
      %v3904 = vadd.f32 %v597, %v3903
      %v3905 = vpop.f32.mrb[0].mxu0
      %3906 = vmatprep.mubr.f32.mxu0 0.0
      %v3907 = vand.u32 %v639, 4294901760
      %v3908 = vsub.f32 %v639, %v3907
      %v3909 = vand.u32 %v3908, 4294901760
      %v3910 = vsub.f32 %v3908, %v3909
      %v3911 = vand.u32 %v3910, 4294901760
      %3912 = vmatmul.mubr.f32.gmra.mrb[0].mxu0 %v3911
      %v3913 = vpop.f32.mrb[0].mxu0
      %v3914 = vadd.f32 %v602, %v3913
      %v3915 = vpop.f32.mrb[0].mxu0
      %3916 = vdwg.mxu0
      %3917 = vmatprep.subr.mxu0 0.0
      %v3918 = vand.u32 %v3724, 4294901760
      %v3919 = vsub.f32 %v3724, %v3918
      %v3920 = vand.u32 %v3919, 4294901760
      %v3921 = vsub.f32 %v3919, %v3920
      %v3922 = vand.u32 %v3921, 4294901760
      %3923 = vmatpush1.msra.mxu0 %v3922
      %3924 = vmatprep.subr.mxu0 0.0
      %v3925 = vand.u32 %v3725, 4294901760
      %v3926 = vsub.f32 %v3725, %v3925
      %v3927 = vand.u32 %v3926, 4294901760
      %v3928 = vsub.f32 %v3926, %v3927
      %v3929 = vand.u32 %v3928, 4294901760
      %3930 = vmatpush1.msra.mxu0 %v3929
      %3931 = vmatprep.subr.mxu0 0.0
      %v3932 = vand.u32 %v3726, 4294901760
      %v3933 = vsub.f32 %v3726, %v3932
      %v3934 = vand.u32 %v3933, 4294901760
      %v3935 = vsub.f32 %v3933, %v3934
      %v3936 = vand.u32 %v3935, 4294901760
      %3937 = vmatpush1.msra.mxu0 %v3936
      %3938 = vmatprep.subr.mxu0 0.0
      %v3939 = vand.u32 %v3727, 4294901760
      %v3940 = vsub.f32 %v3727, %v3939
      %v3941 = vand.u32 %v3940, 4294901760
      %v3942 = vsub.f32 %v3940, %v3941
      %v3943 = vand.u32 %v3942, 4294901760
      %3944 = vmatpush1.msra.mxu0 %v3943
      %3945 = vmatprep.subr.mxu0 0.0
      %3946 = vmatpush1.msra.mxu0 0.0
      %3947 = vmatprep.subr.mxu0 0.0
      %3948 = vmatpush1.msra.mxu0 0.0
      %3949 = vmatprep.subr.mxu0 0.0
      %3950 = vmatpush1.msra.mxu0 0.0
      %3951 = vmatprep.subr.mxu0 0.0
      %3952 = vmatpush1.msra.mxu0 0.0
      %3953 = vmatprep.subr.mxu0 0.0
      %3954 = vmatpush1.msra.mxu0 0.0
      %3955 = vmatprep.subr.mxu0 0.0
      %3956 = vmatpush1.msra.mxu0 0.0
      %3957 = vmatprep.subr.mxu0 0.0
      %3958 = vmatpush1.msra.mxu0 0.0
      %3959 = vmatprep.subr.mxu0 0.0
      %3960 = vmatpush1.msra.mxu0 0.0
      %3961 = vmatprep.subr.mxu0 0.0
      %3962 = vmatpush1.msra.mxu0 0.0
      %3963 = vmatprep.subr.mxu0 0.0
      %3964 = vmatpush1.msra.mxu0 0.0
      %3965 = vmatprep.subr.mxu0 0.0
      %3966 = vmatpush1.msra.mxu0 0.0
      %3967 = vmatprep.subr.mxu0 0.0
      %3968 = vmatpush1.msra.mxu0 0.0
      %3969 = vmatprep.subr.mxu0 0.0
      %3970 = vmatpush1.msra.mxu0 0.0
      %3971 = vmatprep.subr.mxu0 0.0
      %3972 = vmatpush1.msra.mxu0 0.0
      %3973 = vmatprep.subr.mxu0 0.0
      %3974 = vmatpush1.msra.mxu0 0.0
      %3975 = vmatprep.subr.mxu0 0.0
      %3976 = vmatpush1.msra.mxu0 0.0
      %3977 = vmatprep.subr.mxu0 0.0
      %3978 = vmatpush1.msra.mxu0 0.0
      %3979 = vmatprep.subr.mxu0 0.0
      %3980 = vmatpush1.msra.mxu0 0.0
      %3981 = vmatprep.subr.mxu0 0.0
      %3982 = vmatpush1.msra.mxu0 0.0
      %3983 = vmatprep.subr.mxu0 0.0
      %3984 = vmatpush1.msra.mxu0 0.0
      %3985 = vmatprep.subr.mxu0 0.0
      %3986 = vmatpush1.msra.mxu0 0.0
      %3987 = vmatprep.subr.mxu0 0.0
      %3988 = vmatpush1.msra.mxu0 0.0
      %3989 = vmatprep.subr.mxu0 0.0
      %3990 = vmatpush1.msra.mxu0 0.0
      %3991 = vmatprep.subr.mxu0 0.0
      %3992 = vmatpush1.msra.mxu0 0.0
      %3993 = vmatprep.subr.mxu0 0.0
      %3994 = vmatpush1.msra.mxu0 0.0
      %3995 = vmatprep.subr.mxu0 0.0
      %3996 = vmatpush1.msra.mxu0 0.0
      %3997 = vmatprep.subr.mxu0 0.0
      %3998 = vmatpush1.msra.mxu0 0.0
      %3999 = vmatprep.subr.mxu0 0.0
      %4000 = vmatpush1.msra.mxu0 0.0
      %4001 = vmatprep.mubr.f32.mxu0 0.0
      %v4002 = vand.u32 %v606, 4294901760
      %4003 = vmatmul.mubr.f32.gmra.mrb[0].mxu0 %v4002
      %v4004 = vpop.f32.mrb[0].mxu0
      %v4005 = vadd.f32 %v3804, %v4004
      %v4006 = vpop.f32.mrb[0].mxu0
      %4007 = vmatprep.mubr.f32.mxu0 0.0
      %v4008 = vand.u32 %v609, 4294901760
      %4009 = vmatmul.mubr.f32.gmra.mrb[0].mxu0 %v4008
      %v4010 = vpop.f32.mrb[0].mxu0
      %v4011 = vadd.f32 %v3814, %v4010
      %v4012 = vpop.f32.mrb[0].mxu0
      %4013 = vmatprep.mubr.f32.mxu0 0.0
      %v4014 = vand.u32 %v612, 4294901760
      %4015 = vmatmul.mubr.f32.gmra.mrb[0].mxu0 %v4014
      %v4016 = vpop.f32.mrb[0].mxu0
      %v4017 = vadd.f32 %v3824, %v4016
      %v4018 = vpop.f32.mrb[0].mxu0
      %4019 = vmatprep.mubr.f32.mxu0 0.0
      %v4020 = vand.u32 %v615, 4294901760
      %4021 = vmatmul.mubr.f32.gmra.mrb[0].mxu0 %v4020
      %v4022 = vpop.f32.mrb[0].mxu0
      %v4023 = vadd.f32 %v3834, %v4022
      %v4024 = vpop.f32.mrb[0].mxu0
      %4025 = vmatprep.mubr.f32.mxu0 0.0
      %v4026 = vand.u32 %v618, 4294901760
      %4027 = vmatmul.mubr.f32.gmra.mrb[0].mxu0 %v4026
      %v4028 = vpop.f32.mrb[0].mxu0
      %v4029 = vadd.f32 %v3844, %v4028
      %v4030 = vpop.f32.mrb[0].mxu0
      %4031 = vmatprep.mubr.f32.mxu0 0.0
      %v4032 = vand.u32 %v621, 4294901760
      %4033 = vmatmul.mubr.f32.gmra.mrb[0].mxu0 %v4032
      %v4034 = vpop.f32.mrb[0].mxu0
      %v4035 = vadd.f32 %v3854, %v4034
      %v4036 = vpop.f32.mrb[0].mxu0
      %4037 = vmatprep.mubr.f32.mxu0 0.0
      %v4038 = vand.u32 %v624, 4294901760
      %4039 = vmatmul.mubr.f32.gmra.mrb[0].mxu0 %v4038
      %v4040 = vpop.f32.mrb[0].mxu0
      %v4041 = vadd.f32 %v3864, %v4040
      %v4042 = vpop.f32.mrb[0].mxu0
      %4043 = vmatprep.mubr.f32.mxu0 0.0
      %v4044 = vand.u32 %v627, 4294901760
      %4045 = vmatmul.mubr.f32.gmra.mrb[0].mxu0 %v4044
      %v4046 = vpop.f32.mrb[0].mxu0
      %v4047 = vadd.f32 %v3874, %v4046
      %v4048 = vpop.f32.mrb[0].mxu0
      %4049 = vmatprep.mubr.f32.mxu0 0.0
      %v4050 = vand.u32 %v630, 4294901760
      %4051 = vmatmul.mubr.f32.gmra.mrb[0].mxu0 %v4050
      %v4052 = vpop.f32.mrb[0].mxu0
      %v4053 = vadd.f32 %v3884, %v4052
      %v4054 = vpop.f32.mrb[0].mxu0
      %4055 = vmatprep.mubr.f32.mxu0 0.0
      %v4056 = vand.u32 %v633, 4294901760
      %4057 = vmatmul.mubr.f32.gmra.mrb[0].mxu0 %v4056
      %v4058 = vpop.f32.mrb[0].mxu0
      %v4059 = vadd.f32 %v3894, %v4058
      %v4060 = vpop.f32.mrb[0].mxu0
      %4061 = vmatprep.mubr.f32.mxu0 0.0
      %v4062 = vand.u32 %v636, 4294901760
      %4063 = vmatmul.mubr.f32.gmra.mrb[0].mxu0 %v4062
      %v4064 = vpop.f32.mrb[0].mxu0
      %v4065 = vadd.f32 %v3904, %v4064
      %v4066 = vpop.f32.mrb[0].mxu0
      %4067 = vmatprep.mubr.f32.mxu0 0.0
      %v4068 = vand.u32 %v639, 4294901760
      %4069 = vmatmul.mubr.f32.gmra.mrb[0].mxu0 %v4068
      %v4070 = vpop.f32.mrb[0].mxu0
      %v4071 = vadd.f32 %v3914, %v4070
      %v4072 = vpop.f32.mrb[0].mxu0
      %4073 = vdwg.mxu0
      %4074 = vmatprep.subr.mxu0 0.0
      %v4075 = vand.u32 %v3724, 4294901760
      %v4076 = vsub.f32 %v3724, %v4075
      %4077 = vmatpush1.msra.mxu0 %v4076
      %4078 = vmatprep.subr.mxu0 0.0
      %v4079 = vand.u32 %v3725, 4294901760
      %v4080 = vsub.f32 %v3725, %v4079
      %4081 = vmatpush1.msra.mxu0 %v4080
      %4082 = vmatprep.subr.mxu0 0.0
      %v4083 = vand.u32 %v3726, 4294901760
      %v4084 = vsub.f32 %v3726, %v4083
      %4085 = vmatpush1.msra.mxu0 %v4084
      %4086 = vmatprep.subr.mxu0 0.0
      %v4087 = vand.u32 %v3727, 4294901760
      %v4088 = vsub.f32 %v3727, %v4087
      %4089 = vmatpush1.msra.mxu0 %v4088
      %4090 = vmatprep.subr.mxu0 0.0
      %4091 = vmatpush1.msra.mxu0 0.0
      %4092 = vmatprep.subr.mxu0 0.0
      %4093 = vmatpush1.msra.mxu0 0.0
      %4094 = vmatprep.subr.mxu0 0.0
      %4095 = vmatpush1.msra.mxu0 0.0
      %4096 = vmatprep.subr.mxu0 0.0
      %4097 = vmatpush1.msra.mxu0 0.0
      %4098 = vmatprep.subr.mxu0 0.0
      %4099 = vmatpush1.msra.mxu0 0.0
      %4100 = vmatprep.subr.mxu0 0.0
      %4101 = vmatpush1.msra.mxu0 0.0
      %4102 = vmatprep.subr.mxu0 0.0
      %4103 = vmatpush1.msra.mxu0 0.0
      %4104 = vmatprep.subr.mxu0 0.0
      %4105 = vmatpush1.msra.mxu0 0.0
      %4106 = vmatprep.subr.mxu0 0.0
      %4107 = vmatpush1.msra.mxu0 0.0
      %4108 = vmatprep.subr.mxu0 0.0
      %4109 = vmatpush1.msra.mxu0 0.0
      %4110 = vmatprep.subr.mxu0 0.0
      %4111 = vmatpush1.msra.mxu0 0.0
      %4112 = vmatprep.subr.mxu0 0.0
      %4113 = vmatpush1.msra.mxu0 0.0
      %4114 = vmatprep.subr.mxu0 0.0
      %4115 = vmatpush1.msra.mxu0 0.0
      %4116 = vmatprep.subr.mxu0 0.0
      %4117 = vmatpush1.msra.mxu0 0.0
      %4118 = vmatprep.subr.mxu0 0.0
      %4119 = vmatpush1.msra.mxu0 0.0
      %4120 = vmatprep.subr.mxu0 0.0
      %4121 = vmatpush1.msra.mxu0 0.0
      %4122 = vmatprep.subr.mxu0 0.0
      %4123 = vmatpush1.msra.mxu0 0.0
      %4124 = vmatprep.subr.mxu0 0.0
      %4125 = vmatpush1.msra.mxu0 0.0
      %4126 = vmatprep.subr.mxu0 0.0
      %4127 = vmatpush1.msra.mxu0 0.0
      %4128 = vmatprep.subr.mxu0 0.0
      %4129 = vmatpush1.msra.mxu0 0.0
      %4130 = vmatprep.subr.mxu0 0.0
      %4131 = vmatpush1.msra.mxu0 0.0
      %4132 = vmatprep.subr.mxu0 0.0
      %4133 = vmatpush1.msra.mxu0 0.0
      %4134 = vmatprep.subr.mxu0 0.0
      %4135 = vmatpush1.msra.mxu0 0.0
      %4136 = vmatprep.subr.mxu0 0.0
      %4137 = vmatpush1.msra.mxu0 0.0
      %4138 = vmatprep.subr.mxu0 0.0
      %4139 = vmatpush1.msra.mxu0 0.0
      %4140 = vmatprep.subr.mxu0 0.0
      %4141 = vmatpush1.msra.mxu0 0.0
      %4142 = vmatprep.subr.mxu0 0.0
      %4143 = vmatpush1.msra.mxu0 0.0
      %4144 = vmatprep.subr.mxu0 0.0
      %4145 = vmatpush1.msra.mxu0 0.0
      %4146 = vmatprep.mubr.f32.mxu0 0.0
      %v4147 = vand.u32 %v606, 4294901760
      %v4148 = vsub.f32 %v606, %v4147
      %4149 = vmatmul.mubr.f32.gmra.mrb[0].mxu0 %v4148
      %v4150 = vpop.f32.mrb[0].mxu0
      %v4151 = vadd.f32 %v4005, %v4150
      %v4152 = vpop.f32.mrb[0].mxu0
      %4153 = vmatprep.mubr.f32.mxu0 0.0
      %v4154 = vand.u32 %v609, 4294901760
      %v4155 = vsub.f32 %v609, %v4154
      %4156 = vmatmul.mubr.f32.gmra.mrb[0].mxu0 %v4155
      %v4157 = vpop.f32.mrb[0].mxu0
      %v4158 = vadd.f32 %v4011, %v4157
      %v4159 = vpop.f32.mrb[0].mxu0
      %4160 = vmatprep.mubr.f32.mxu0 0.0
      %v4161 = vand.u32 %v612, 4294901760
      %v4162 = vsub.f32 %v612, %v4161
      %4163 = vmatmul.mubr.f32.gmra.mrb[0].mxu0 %v4162
      %v4164 = vpop.f32.mrb[0].mxu0
      %v4165 = vadd.f32 %v4017, %v4164
      %v4166 = vpop.f32.mrb[0].mxu0
      %4167 = vmatprep.mubr.f32.mxu0 0.0
      %v4168 = vand.u32 %v615, 4294901760
      %v4169 = vsub.f32 %v615, %v4168
      %4170 = vmatmul.mubr.f32.gmra.mrb[0].mxu0 %v4169
      %v4171 = vpop.f32.mrb[0].mxu0
      %v4172 = vadd.f32 %v4023, %v4171
      %v4173 = vpop.f32.mrb[0].mxu0
      %4174 = vmatprep.mubr.f32.mxu0 0.0
      %v4175 = vand.u32 %v618, 4294901760
      %v4176 = vsub.f32 %v618, %v4175
      %4177 = vmatmul.mubr.f32.gmra.mrb[0].mxu0 %v4176
      %v4178 = vpop.f32.mrb[0].mxu0
      %v4179 = vadd.f32 %v4029, %v4178
      %v4180 = vpop.f32.mrb[0].mxu0
      %4181 = vmatprep.mubr.f32.mxu0 0.0
      %v4182 = vand.u32 %v621, 4294901760
      %v4183 = vsub.f32 %v621, %v4182
      %4184 = vmatmul.mubr.f32.gmra.mrb[0].mxu0 %v4183
      %v4185 = vpop.f32.mrb[0].mxu0
      %v4186 = vadd.f32 %v4035, %v4185
      %v4187 = vpop.f32.mrb[0].mxu0
      %4188 = vmatprep.mubr.f32.mxu0 0.0
      %v4189 = vand.u32 %v624, 4294901760
      %v4190 = vsub.f32 %v624, %v4189
      %4191 = vmatmul.mubr.f32.gmra.mrb[0].mxu0 %v4190
      %v4192 = vpop.f32.mrb[0].mxu0
      %v4193 = vadd.f32 %v4041, %v4192
      %v4194 = vpop.f32.mrb[0].mxu0
      %4195 = vmatprep.mubr.f32.mxu0 0.0
      %v4196 = vand.u32 %v627, 4294901760
      %v4197 = vsub.f32 %v627, %v4196
      %4198 = vmatmul.mubr.f32.gmra.mrb[0].mxu0 %v4197
      %v4199 = vpop.f32.mrb[0].mxu0
      %v4200 = vadd.f32 %v4047, %v4199
      %v4201 = vpop.f32.mrb[0].mxu0
      %4202 = vmatprep.mubr.f32.mxu0 0.0
      %v4203 = vand.u32 %v630, 4294901760
      %v4204 = vsub.f32 %v630, %v4203
      %4205 = vmatmul.mubr.f32.gmra.mrb[0].mxu0 %v4204
      %v4206 = vpop.f32.mrb[0].mxu0
      %v4207 = vadd.f32 %v4053, %v4206
      %v4208 = vpop.f32.mrb[0].mxu0
      %4209 = vmatprep.mubr.f32.mxu0 0.0
      %v4210 = vand.u32 %v633, 4294901760
      %v4211 = vsub.f32 %v633, %v4210
      %4212 = vmatmul.mubr.f32.gmra.mrb[0].mxu0 %v4211
      %v4213 = vpop.f32.mrb[0].mxu0
      %v4214 = vadd.f32 %v4059, %v4213
      %v4215 = vpop.f32.mrb[0].mxu0
      %4216 = vmatprep.mubr.f32.mxu0 0.0
      %v4217 = vand.u32 %v636, 4294901760
      %v4218 = vsub.f32 %v636, %v4217
      %4219 = vmatmul.mubr.f32.gmra.mrb[0].mxu0 %v4218
      %v4220 = vpop.f32.mrb[0].mxu0
      %v4221 = vadd.f32 %v4065, %v4220
      %v4222 = vpop.f32.mrb[0].mxu0
      %4223 = vmatprep.mubr.f32.mxu0 0.0
      %v4224 = vand.u32 %v639, 4294901760
      %v4225 = vsub.f32 %v639, %v4224
      %4226 = vmatmul.mubr.f32.gmra.mrb[0].mxu0 %v4225
      %v4227 = vpop.f32.mrb[0].mxu0
      %v4228 = vadd.f32 %v4071, %v4227
      %v4229 = vpop.f32.mrb[0].mxu0
      %4230 = vdwg.mxu0
      %4231 = vmatprep.subr.mxu0 0.0
      %v4232 = vand.u32 %v3724, 4294901760
      %4233 = vmatpush1.msra.mxu0 %v4232
      %4234 = vmatprep.subr.mxu0 0.0
      %v4235 = vand.u32 %v3725, 4294901760
      %4236 = vmatpush1.msra.mxu0 %v4235
      %4237 = vmatprep.subr.mxu0 0.0
      %v4238 = vand.u32 %v3726, 4294901760
      %4239 = vmatpush1.msra.mxu0 %v4238
      %4240 = vmatprep.subr.mxu0 0.0
      %v4241 = vand.u32 %v3727, 4294901760
      %4242 = vmatpush1.msra.mxu0 %v4241
      %4243 = vmatprep.subr.mxu0 0.0
      %4244 = vmatpush1.msra.mxu0 0.0
      %4245 = vmatprep.subr.mxu0 0.0
      %4246 = vmatpush1.msra.mxu0 0.0
      %4247 = vmatprep.subr.mxu0 0.0
      %4248 = vmatpush1.msra.mxu0 0.0
      %4249 = vmatprep.subr.mxu0 0.0
      %4250 = vmatpush1.msra.mxu0 0.0
      %4251 = vmatprep.subr.mxu0 0.0
      %4252 = vmatpush1.msra.mxu0 0.0
      %4253 = vmatprep.subr.mxu0 0.0
      %4254 = vmatpush1.msra.mxu0 0.0
      %4255 = vmatprep.subr.mxu0 0.0
      %4256 = vmatpush1.msra.mxu0 0.0
      %4257 = vmatprep.subr.mxu0 0.0
      %4258 = vmatpush1.msra.mxu0 0.0
      %4259 = vmatprep.subr.mxu0 0.0
      %4260 = vmatpush1.msra.mxu0 0.0
      %4261 = vmatprep.subr.mxu0 0.0
      %4262 = vmatpush1.msra.mxu0 0.0
      %4263 = vmatprep.subr.mxu0 0.0
      %4264 = vmatpush1.msra.mxu0 0.0
      %4265 = vmatprep.subr.mxu0 0.0
      %4266 = vmatpush1.msra.mxu0 0.0
      %4267 = vmatprep.subr.mxu0 0.0
      %4268 = vmatpush1.msra.mxu0 0.0
      %4269 = vmatprep.subr.mxu0 0.0
      %4270 = vmatpush1.msra.mxu0 0.0
      %4271 = vmatprep.subr.mxu0 0.0
      %4272 = vmatpush1.msra.mxu0 0.0
      %4273 = vmatprep.subr.mxu0 0.0
      %4274 = vmatpush1.msra.mxu0 0.0
      %4275 = vmatprep.subr.mxu0 0.0
      %4276 = vmatpush1.msra.mxu0 0.0
      %4277 = vmatprep.subr.mxu0 0.0
      %4278 = vmatpush1.msra.mxu0 0.0
      %4279 = vmatprep.subr.mxu0 0.0
      %4280 = vmatpush1.msra.mxu0 0.0
      %4281 = vmatprep.subr.mxu0 0.0
      %4282 = vmatpush1.msra.mxu0 0.0
      %4283 = vmatprep.subr.mxu0 0.0
      %4284 = vmatpush1.msra.mxu0 0.0
      %4285 = vmatprep.subr.mxu0 0.0
      %4286 = vmatpush1.msra.mxu0 0.0
      %4287 = vmatprep.subr.mxu0 0.0
      %4288 = vmatpush1.msra.mxu0 0.0
      %4289 = vmatprep.subr.mxu0 0.0
      %4290 = vmatpush1.msra.mxu0 0.0
      %4291 = vmatprep.subr.mxu0 0.0
      %4292 = vmatpush1.msra.mxu0 0.0
      %4293 = vmatprep.subr.mxu0 0.0
      %4294 = vmatpush1.msra.mxu0 0.0
      %4295 = vmatprep.subr.mxu0 0.0
      %4296 = vmatpush1.msra.mxu0 0.0
      %4297 = vmatprep.subr.mxu0 0.0
      %4298 = vmatpush1.msra.mxu0 0.0
      %4299 = vmatprep.mubr.f32.mxu0 0.0
      %v4300 = vand.u32 %v606, 4294901760
      %v4301 = vsub.f32 %v606, %v4300
      %v4302 = vand.u32 %v4301, 4294901760
      %4303 = vmatmul.mubr.f32.gmra.mrb[0].mxu0 %v4302
      %v4304 = vpop.f32.mrb[0].mxu0
      %v4305 = vadd.f32 %v4151, %v4304
      %v4306 = vpop.f32.mrb[0].mxu0
      %4307 = vmatprep.mubr.f32.mxu0 0.0
      %v4308 = vand.u32 %v609, 4294901760
      %v4309 = vsub.f32 %v609, %v4308
      %v4310 = vand.u32 %v4309, 4294901760
      %4311 = vmatmul.mubr.f32.gmra.mrb[0].mxu0 %v4310
      %v4312 = vpop.f32.mrb[0].mxu0
      %v4313 = vadd.f32 %v4158, %v4312
      %v4314 = vpop.f32.mrb[0].mxu0
      %4315 = vmatprep.mubr.f32.mxu0 0.0
      %v4316 = vand.u32 %v612, 4294901760
      %v4317 = vsub.f32 %v612, %v4316
      %v4318 = vand.u32 %v4317, 4294901760
      %4319 = vmatmul.mubr.f32.gmra.mrb[0].mxu0 %v4318
      %v4320 = vpop.f32.mrb[0].mxu0
      %v4321 = vadd.f32 %v4165, %v4320
      %v4322 = vpop.f32.mrb[0].mxu0
      %4323 = vmatprep.mubr.f32.mxu0 0.0
      %v4324 = vand.u32 %v615, 4294901760
      %v4325 = vsub.f32 %v615, %v4324
      %v4326 = vand.u32 %v4325, 4294901760
      %4327 = vmatmul.mubr.f32.gmra.mrb[0].mxu0 %v4326
      %v4328 = vpop.f32.mrb[0].mxu0
      %v4329 = vadd.f32 %v4172, %v4328
      %v4330 = vpop.f32.mrb[0].mxu0
      %4331 = vmatprep.mubr.f32.mxu0 0.0
      %v4332 = vand.u32 %v618, 4294901760
      %v4333 = vsub.f32 %v618, %v4332
      %v4334 = vand.u32 %v4333, 4294901760
      %4335 = vmatmul.mubr.f32.gmra.mrb[0].mxu0 %v4334
      %v4336 = vpop.f32.mrb[0].mxu0
      %v4337 = vadd.f32 %v4179, %v4336
      %v4338 = vpop.f32.mrb[0].mxu0
      %4339 = vmatprep.mubr.f32.mxu0 0.0
      %v4340 = vand.u32 %v621, 4294901760
      %v4341 = vsub.f32 %v621, %v4340
      %v4342 = vand.u32 %v4341, 4294901760
      %4343 = vmatmul.mubr.f32.gmra.mrb[0].mxu0 %v4342
      %v4344 = vpop.f32.mrb[0].mxu0
      %v4345 = vadd.f32 %v4186, %v4344
      %v4346 = vpop.f32.mrb[0].mxu0
      %4347 = vmatprep.mubr.f32.mxu0 0.0
      %v4348 = vand.u32 %v624, 4294901760
      %v4349 = vsub.f32 %v624, %v4348
      %v4350 = vand.u32 %v4349, 4294901760
      %4351 = vmatmul.mubr.f32.gmra.mrb[0].mxu0 %v4350
      %v4352 = vpop.f32.mrb[0].mxu0
      %v4353 = vadd.f32 %v4193, %v4352
      %v4354 = vpop.f32.mrb[0].mxu0
      %4355 = vmatprep.mubr.f32.mxu0 0.0
      %v4356 = vand.u32 %v627, 4294901760
      %v4357 = vsub.f32 %v627, %v4356
      %v4358 = vand.u32 %v4357, 4294901760
      %4359 = vmatmul.mubr.f32.gmra.mrb[0].mxu0 %v4358
      %v4360 = vpop.f32.mrb[0].mxu0
      %v4361 = vadd.f32 %v4200, %v4360
      %v4362 = vpop.f32.mrb[0].mxu0
      %4363 = vmatprep.mubr.f32.mxu0 0.0
      %v4364 = vand.u32 %v630, 4294901760
      %v4365 = vsub.f32 %v630, %v4364
      %v4366 = vand.u32 %v4365, 4294901760
      %4367 = vmatmul.mubr.f32.gmra.mrb[0].mxu0 %v4366
      %v4368 = vpop.f32.mrb[0].mxu0
      %v4369 = vadd.f32 %v4207, %v4368
      %v4370 = vpop.f32.mrb[0].mxu0
      %4371 = vmatprep.mubr.f32.mxu0 0.0
      %v4372 = vand.u32 %v633, 4294901760
      %v4373 = vsub.f32 %v633, %v4372
      %v4374 = vand.u32 %v4373, 4294901760
      %4375 = vmatmul.mubr.f32.gmra.mrb[0].mxu0 %v4374
      %v4376 = vpop.f32.mrb[0].mxu0
      %v4377 = vadd.f32 %v4214, %v4376
      %v4378 = vpop.f32.mrb[0].mxu0
      %4379 = vmatprep.mubr.f32.mxu0 0.0
      %v4380 = vand.u32 %v636, 4294901760
      %v4381 = vsub.f32 %v636, %v4380
      %v4382 = vand.u32 %v4381, 4294901760
      %4383 = vmatmul.mubr.f32.gmra.mrb[0].mxu0 %v4382
      %v4384 = vpop.f32.mrb[0].mxu0
      %v4385 = vadd.f32 %v4221, %v4384
      %v4386 = vpop.f32.mrb[0].mxu0
      %4387 = vmatprep.mubr.f32.mxu0 0.0
      %v4388 = vand.u32 %v639, 4294901760
      %v4389 = vsub.f32 %v639, %v4388
      %v4390 = vand.u32 %v4389, 4294901760
      %4391 = vmatmul.mubr.f32.gmra.mrb[0].mxu0 %v4390
      %v4392 = vpop.f32.mrb[0].mxu0
      %v4393 = vadd.f32 %v4228, %v4392
      %v4394 = vpop.f32.mrb[0].mxu0
      %4395 = vdwg.mxu0
      %4396 = vmatprep.subr.mxu0 0.0
      %v4397 = vand.u32 %v3724, 4294901760
      %v4398 = vsub.f32 %v3724, %v4397
      %v4399 = vand.u32 %v4398, 4294901760
      %4400 = vmatpush1.msra.mxu0 %v4399
      %4401 = vmatprep.subr.mxu0 0.0
      %v4402 = vand.u32 %v3725, 4294901760
      %v4403 = vsub.f32 %v3725, %v4402
      %v4404 = vand.u32 %v4403, 4294901760
      %4405 = vmatpush1.msra.mxu0 %v4404
      %4406 = vmatprep.subr.mxu0 0.0
      %v4407 = vand.u32 %v3726, 4294901760
      %v4408 = vsub.f32 %v3726, %v4407
      %v4409 = vand.u32 %v4408, 4294901760
      %4410 = vmatpush1.msra.mxu0 %v4409
      %4411 = vmatprep.subr.mxu0 0.0
      %v4412 = vand.u32 %v3727, 4294901760
      %v4413 = vsub.f32 %v3727, %v4412
      %v4414 = vand.u32 %v4413, 4294901760
      %4415 = vmatpush1.msra.mxu0 %v4414
      %4416 = vmatprep.subr.mxu0 0.0
      %4417 = vmatpush1.msra.mxu0 0.0
      %4418 = vmatprep.subr.mxu0 0.0
      %4419 = vmatpush1.msra.mxu0 0.0
      %4420 = vmatprep.subr.mxu0 0.0
      %4421 = vmatpush1.msra.mxu0 0.0
      %4422 = vmatprep.subr.mxu0 0.0
      %4423 = vmatpush1.msra.mxu0 0.0
      %4424 = vmatprep.subr.mxu0 0.0
      %4425 = vmatpush1.msra.mxu0 0.0
      %4426 = vmatprep.subr.mxu0 0.0
      %4427 = vmatpush1.msra.mxu0 0.0
      %4428 = vmatprep.subr.mxu0 0.0
      %4429 = vmatpush1.msra.mxu0 0.0
      %4430 = vmatprep.subr.mxu0 0.0
      %4431 = vmatpush1.msra.mxu0 0.0
      %4432 = vmatprep.subr.mxu0 0.0
      %4433 = vmatpush1.msra.mxu0 0.0
      %4434 = vmatprep.subr.mxu0 0.0
      %4435 = vmatpush1.msra.mxu0 0.0
      %4436 = vmatprep.subr.mxu0 0.0
      %4437 = vmatpush1.msra.mxu0 0.0
      %4438 = vmatprep.subr.mxu0 0.0
      %4439 = vmatpush1.msra.mxu0 0.0
      %4440 = vmatprep.subr.mxu0 0.0
      %4441 = vmatpush1.msra.mxu0 0.0
      %4442 = vmatprep.subr.mxu0 0.0
      %4443 = vmatpush1.msra.mxu0 0.0
      %4444 = vmatprep.subr.mxu0 0.0
      %4445 = vmatpush1.msra.mxu0 0.0
      %4446 = vmatprep.subr.mxu0 0.0
      %4447 = vmatpush1.msra.mxu0 0.0
      %4448 = vmatprep.subr.mxu0 0.0
      %4449 = vmatpush1.msra.mxu0 0.0
      %4450 = vmatprep.subr.mxu0 0.0
      %4451 = vmatpush1.msra.mxu0 0.0
      %4452 = vmatprep.subr.mxu0 0.0
      %4453 = vmatpush1.msra.mxu0 0.0
      %4454 = vmatprep.subr.mxu0 0.0
      %4455 = vmatpush1.msra.mxu0 0.0
      %4456 = vmatprep.subr.mxu0 0.0
      %4457 = vmatpush1.msra.mxu0 0.0
      %4458 = vmatprep.subr.mxu0 0.0
      %4459 = vmatpush1.msra.mxu0 0.0
      %4460 = vmatprep.subr.mxu0 0.0
      %4461 = vmatpush1.msra.mxu0 0.0
      %4462 = vmatprep.subr.mxu0 0.0
      %4463 = vmatpush1.msra.mxu0 0.0
      %4464 = vmatprep.subr.mxu0 0.0
      %4465 = vmatpush1.msra.mxu0 0.0
      %4466 = vmatprep.subr.mxu0 0.0
      %4467 = vmatpush1.msra.mxu0 0.0
      %4468 = vmatprep.subr.mxu0 0.0
      %4469 = vmatpush1.msra.mxu0 0.0
      %4470 = vmatprep.subr.mxu0 0.0
      %4471 = vmatpush1.msra.mxu0 0.0
      %4472 = vmatprep.mubr.f32.mxu0 0.0
      %v4473 = vand.u32 %v606, 4294901760
      %4474 = vmatmul.mubr.f32.gmra.mrb[0].mxu0 %v4473
      %v4475 = vpop.f32.mrb[0].mxu0
      %v4476 = vadd.f32 %v4305, %v4475
      %v4477 = vpop.f32.mrb[0].mxu0
      %4478 = vmatprep.mubr.f32.mxu0 0.0
      %v4479 = vand.u32 %v609, 4294901760
      %4480 = vmatmul.mubr.f32.gmra.mrb[0].mxu0 %v4479
      %v4481 = vpop.f32.mrb[0].mxu0
      %v4482 = vadd.f32 %v4313, %v4481
      %v4483 = vpop.f32.mrb[0].mxu0
      %4484 = vmatprep.mubr.f32.mxu0 0.0
      %v4485 = vand.u32 %v612, 4294901760
      %4486 = vmatmul.mubr.f32.gmra.mrb[0].mxu0 %v4485
      %v4487 = vpop.f32.mrb[0].mxu0
      %v4488 = vadd.f32 %v4321, %v4487
      %v4489 = vpop.f32.mrb[0].mxu0
      %4490 = vmatprep.mubr.f32.mxu0 0.0
      %v4491 = vand.u32 %v615, 4294901760
      %4492 = vmatmul.mubr.f32.gmra.mrb[0].mxu0 %v4491
      %v4493 = vpop.f32.mrb[0].mxu0
      %v4494 = vadd.f32 %v4329, %v4493
      %v4495 = vpop.f32.mrb[0].mxu0
      %4496 = vmatprep.mubr.f32.mxu0 0.0
      %v4497 = vand.u32 %v618, 4294901760
      %4498 = vmatmul.mubr.f32.gmra.mrb[0].mxu0 %v4497
      %v4499 = vpop.f32.mrb[0].mxu0
      %v4500 = vadd.f32 %v4337, %v4499
      %v4501 = vpop.f32.mrb[0].mxu0
      %4502 = vmatprep.mubr.f32.mxu0 0.0
      %v4503 = vand.u32 %v621, 4294901760
      %4504 = vmatmul.mubr.f32.gmra.mrb[0].mxu0 %v4503
      %v4505 = vpop.f32.mrb[0].mxu0
      %v4506 = vadd.f32 %v4345, %v4505
      %v4507 = vpop.f32.mrb[0].mxu0
      %4508 = vmatprep.mubr.f32.mxu0 0.0
      %v4509 = vand.u32 %v624, 4294901760
      %4510 = vmatmul.mubr.f32.gmra.mrb[0].mxu0 %v4509
      %v4511 = vpop.f32.mrb[0].mxu0
      %v4512 = vadd.f32 %v4353, %v4511
      %v4513 = vpop.f32.mrb[0].mxu0
      %4514 = vmatprep.mubr.f32.mxu0 0.0
      %v4515 = vand.u32 %v627, 4294901760
      %4516 = vmatmul.mubr.f32.gmra.mrb[0].mxu0 %v4515
      %v4517 = vpop.f32.mrb[0].mxu0
      %v4518 = vadd.f32 %v4361, %v4517
      %v4519 = vpop.f32.mrb[0].mxu0
      %4520 = vmatprep.mubr.f32.mxu0 0.0
      %v4521 = vand.u32 %v630, 4294901760
      %4522 = vmatmul.mubr.f32.gmra.mrb[0].mxu0 %v4521
      %v4523 = vpop.f32.mrb[0].mxu0
      %v4524 = vadd.f32 %v4369, %v4523
      %v4525 = vpop.f32.mrb[0].mxu0
      %4526 = vmatprep.mubr.f32.mxu0 0.0
      %v4527 = vand.u32 %v633, 4294901760
      %4528 = vmatmul.mubr.f32.gmra.mrb[0].mxu0 %v4527
      %v4529 = vpop.f32.mrb[0].mxu0
      %v4530 = vadd.f32 %v4377, %v4529
      %v4531 = vpop.f32.mrb[0].mxu0
      %4532 = vmatprep.mubr.f32.mxu0 0.0
      %v4533 = vand.u32 %v636, 4294901760
      %4534 = vmatmul.mubr.f32.gmra.mrb[0].mxu0 %v4533
      %v4535 = vpop.f32.mrb[0].mxu0
      %v4536 = vadd.f32 %v4385, %v4535
      %v4537 = vpop.f32.mrb[0].mxu0
      %4538 = vmatprep.mubr.f32.mxu0 0.0
      %v4539 = vand.u32 %v639, 4294901760
      %4540 = vmatmul.mubr.f32.gmra.mrb[0].mxu0 %v4539
      %v4541 = vpop.f32.mrb[0].mxu0
      %v4542 = vadd.f32 %v4393, %v4541
      %v4543 = vpop.f32.mrb[0].mxu0
      %4544 = vdwg.mxu0
      %4545 = vmatprep.subr.mxu0 0.0
      %v4546 = vand.u32 %v3724, 4294901760
      %4547 = vmatpush1.msra.mxu0 %v4546
      %4548 = vmatprep.subr.mxu0 0.0
      %v4549 = vand.u32 %v3725, 4294901760
      %4550 = vmatpush1.msra.mxu0 %v4549
      %4551 = vmatprep.subr.mxu0 0.0
      %v4552 = vand.u32 %v3726, 4294901760
      %4553 = vmatpush1.msra.mxu0 %v4552
      %4554 = vmatprep.subr.mxu0 0.0
      %v4555 = vand.u32 %v3727, 4294901760
      %4556 = vmatpush1.msra.mxu0 %v4555
      %4557 = vmatprep.subr.mxu0 0.0
      %4558 = vmatpush1.msra.mxu0 0.0
      %4559 = vmatprep.subr.mxu0 0.0
      %4560 = vmatpush1.msra.mxu0 0.0
      %4561 = vmatprep.subr.mxu0 0.0
      %4562 = vmatpush1.msra.mxu0 0.0
      %4563 = vmatprep.subr.mxu0 0.0
      %4564 = vmatpush1.msra.mxu0 0.0
      %4565 = vmatprep.subr.mxu0 0.0
      %4566 = vmatpush1.msra.mxu0 0.0
      %4567 = vmatprep.subr.mxu0 0.0
      %4568 = vmatpush1.msra.mxu0 0.0
      %4569 = vmatprep.subr.mxu0 0.0
      %4570 = vmatpush1.msra.mxu0 0.0
      %4571 = vmatprep.subr.mxu0 0.0
      %4572 = vmatpush1.msra.mxu0 0.0
      %4573 = vmatprep.subr.mxu0 0.0
      %4574 = vmatpush1.msra.mxu0 0.0
      %4575 = vmatprep.subr.mxu0 0.0
      %4576 = vmatpush1.msra.mxu0 0.0
      %4577 = vmatprep.subr.mxu0 0.0
      %4578 = vmatpush1.msra.mxu0 0.0
      %4579 = vmatprep.subr.mxu0 0.0
      %4580 = vmatpush1.msra.mxu0 0.0
      %4581 = vmatprep.subr.mxu0 0.0
      %4582 = vmatpush1.msra.mxu0 0.0
      %4583 = vmatprep.subr.mxu0 0.0
      %4584 = vmatpush1.msra.mxu0 0.0
      %4585 = vmatprep.subr.mxu0 0.0
      %4586 = vmatpush1.msra.mxu0 0.0
      %4587 = vmatprep.subr.mxu0 0.0
      %4588 = vmatpush1.msra.mxu0 0.0
      %4589 = vmatprep.subr.mxu0 0.0
      %4590 = vmatpush1.msra.mxu0 0.0
      %4591 = vmatprep.subr.mxu0 0.0
      %4592 = vmatpush1.msra.mxu0 0.0
      %4593 = vmatprep.subr.mxu0 0.0
      %4594 = vmatpush1.msra.mxu0 0.0
      %4595 = vmatprep.subr.mxu0 0.0
      %4596 = vmatpush1.msra.mxu0 0.0
      %4597 = vmatprep.subr.mxu0 0.0
      %4598 = vmatpush1.msra.mxu0 0.0
      %4599 = vmatprep.subr.mxu0 0.0
      %4600 = vmatpush1.msra.mxu0 0.0
      %4601 = vmatprep.subr.mxu0 0.0
      %4602 = vmatpush1.msra.mxu0 0.0
      %4603 = vmatprep.subr.mxu0 0.0
      %4604 = vmatpush1.msra.mxu0 0.0
      %4605 = vmatprep.subr.mxu0 0.0
      %4606 = vmatpush1.msra.mxu0 0.0
      %4607 = vmatprep.subr.mxu0 0.0
      %4608 = vmatpush1.msra.mxu0 0.0
      %4609 = vmatprep.subr.mxu0 0.0
      %4610 = vmatpush1.msra.mxu0 0.0
      %4611 = vmatprep.subr.mxu0 0.0
      %4612 = vmatpush1.msra.mxu0 0.0
      %4613 = vmatprep.mubr.f32.mxu0 0.0
      %v4614 = vand.u32 %v606, 4294901760
      %4615 = vmatmul.mubr.f32.gmra.mrb[0].mxu0 %v4614
      %v4616 = vpop.f32.mrb[0].mxu0
      %v4617 = vadd.f32 %v4476, %v4616
      %v4618 = vpop.f32.mrb[0].mxu0
      %4619 = vmatprep.mubr.f32.mxu0 0.0
      %v4620 = vand.u32 %v609, 4294901760
      %4621 = vmatmul.mubr.f32.gmra.mrb[0].mxu0 %v4620
      %v4622 = vpop.f32.mrb[0].mxu0
      %v4623 = vadd.f32 %v4482, %v4622
      %v4624 = vpop.f32.mrb[0].mxu0
      %4625 = vmatprep.mubr.f32.mxu0 0.0
      %v4626 = vand.u32 %v612, 4294901760
      %4627 = vmatmul.mubr.f32.gmra.mrb[0].mxu0 %v4626
      %v4628 = vpop.f32.mrb[0].mxu0
      %v4629 = vadd.f32 %v4488, %v4628
      %v4630 = vpop.f32.mrb[0].mxu0
      %4631 = vmatprep.mubr.f32.mxu0 0.0
      %v4632 = vand.u32 %v615, 4294901760
      %4633 = vmatmul.mubr.f32.gmra.mrb[0].mxu0 %v4632
      %v4634 = vpop.f32.mrb[0].mxu0
      %v4635 = vadd.f32 %v4494, %v4634
      %v4636 = vpop.f32.mrb[0].mxu0
      %4637 = vmatprep.mubr.f32.mxu0 0.0
      %v4638 = vand.u32 %v618, 4294901760
      %4639 = vmatmul.mubr.f32.gmra.mrb[0].mxu0 %v4638
      %v4640 = vpop.f32.mrb[0].mxu0
      %v4641 = vadd.f32 %v4500, %v4640
      %v4642 = vpop.f32.mrb[0].mxu0
      %4643 = vmatprep.mubr.f32.mxu0 0.0
      %v4644 = vand.u32 %v621, 4294901760
      %4645 = vmatmul.mubr.f32.gmra.mrb[0].mxu0 %v4644
      %v4646 = vpop.f32.mrb[0].mxu0
      %v4647 = vadd.f32 %v4506, %v4646
      %v4648 = vpop.f32.mrb[0].mxu0
      %4649 = vmatprep.mubr.f32.mxu0 0.0
      %v4650 = vand.u32 %v624, 4294901760
      %4651 = vmatmul.mubr.f32.gmra.mrb[0].mxu0 %v4650
      %v4652 = vpop.f32.mrb[0].mxu0
      %v4653 = vadd.f32 %v4512, %v4652
      %v4654 = vpop.f32.mrb[0].mxu0
      %4655 = vmatprep.mubr.f32.mxu0 0.0
      %v4656 = vand.u32 %v627, 4294901760
      %4657 = vmatmul.mubr.f32.gmra.mrb[0].mxu0 %v4656
      %v4658 = vpop.f32.mrb[0].mxu0
      %v4659 = vadd.f32 %v4518, %v4658
      %v4660 = vpop.f32.mrb[0].mxu0
      %4661 = vmatprep.mubr.f32.mxu0 0.0
      %v4662 = vand.u32 %v630, 4294901760
      %4663 = vmatmul.mubr.f32.gmra.mrb[0].mxu0 %v4662
      %v4664 = vpop.f32.mrb[0].mxu0
      %v4665 = vadd.f32 %v4524, %v4664
      %v4666 = vpop.f32.mrb[0].mxu0
      %4667 = vmatprep.mubr.f32.mxu0 0.0
      %v4668 = vand.u32 %v633, 4294901760
      %4669 = vmatmul.mubr.f32.gmra.mrb[0].mxu0 %v4668
      %v4670 = vpop.f32.mrb[0].mxu0
      %v4671 = vadd.f32 %v4530, %v4670
      %v4672 = vpop.f32.mrb[0].mxu0
      %4673 = vmatprep.mubr.f32.mxu0 0.0
      %v4674 = vand.u32 %v636, 4294901760
      %4675 = vmatmul.mubr.f32.gmra.mrb[0].mxu0 %v4674
      %v4676 = vpop.f32.mrb[0].mxu0
      %v4677 = vadd.f32 %v4536, %v4676
      %v4678 = vpop.f32.mrb[0].mxu0
      %4679 = vmatprep.mubr.f32.mxu0 0.0
      %v4680 = vand.u32 %v639, 4294901760
      %4681 = vmatmul.mubr.f32.gmra.mrb[0].mxu0 %v4680
      %v4682 = vpop.f32.mrb[0].mxu0
      %v4683 = vadd.f32 %v4542, %v4682
      %v4684 = vpop.f32.mrb[0].mxu0
      %4685 = vdwg.mxu0
      %4686 = vrot.lane.b32.xlu0 %v453, 9
      %v4687 = vpop.permute.xlu0 %4686
      %v4688 = vlaneseq
      %v4689 = vshrl.u32 %v4688, 7
      %v4690 = vsub.s32 3, %v4689
      %v4691 = vrot.slane %v455, %v4690
      %v4692 = vmul.f32 %v4687, %v4691
      %v4693 = vlaneseq
      %v4694 = vshrl.u32 %v4693, 7
      %v4695 = vsub.s32 0, %v4694
      %v4696 = vrot.slane %v4692, %v4695
      %v4697 = vmul.f32 %v4696, %v4617
      %v4698 = vmul.f32 %v4696, %v4623
      %v4699 = vadd.f32 %v3710, %v4697
      %v4700 = vadd.f32 %v3711, %v4698
      %v4701 = vlaneseq
      %v4702 = vshrl.u32 %v4701, 7
      %v4703 = vsub.s32 1, %v4702
      %v4704 = vrot.slane %v4692, %v4703
      %v4705 = vmul.f32 %v4704, %v4629
      %v4706 = vmul.f32 %v4704, %v4635
      %v4707 = vadd.f32 %v4699, %v4705
      %v4708 = vadd.f32 %v4700, %v4706
      %v4709 = vlaneseq
      %v4710 = vshrl.u32 %v4709, 7
      %v4711 = vsub.s32 2, %v4710
      %v4712 = vrot.slane %v4692, %v4711
      %v4713 = vmul.f32 %v4712, %v4641
      %v4714 = vmul.f32 %v4712, %v4647
      %v4715 = vadd.f32 %v4707, %v4713
      %v4716 = vadd.f32 %v4708, %v4714
      %v4717 = vlaneseq
      %v4718 = vshrl.u32 %v4717, 7
      %v4719 = vsub.s32 3, %v4718
      %v4720 = vrot.slane %v4692, %v4719
      %v4721 = vmul.f32 %v4720, %v4653
      %v4722 = vmul.f32 %v4720, %v4659
      %v4723 = vadd.f32 %v4715, %v4721
      %v4724 = vadd.f32 %v4716, %v4722
      %v4725 = vlaneseq
      %v4726 = vshrl.u32 %v4725, 7
      %v4727 = vsub.s32 4, %v4726
      %v4728 = vrot.slane %v4692, %v4727
      %v4729 = vmul.f32 %v4728, %v4665
      %v4730 = vmul.f32 %v4728, %v4671
      %v4731 = vadd.f32 %v4723, %v4729
      %v4732 = vadd.f32 %v4724, %v4730
      %v4733 = vlaneseq
      %v4734 = vshrl.u32 %v4733, 7
      %v4735 = vsub.s32 5, %v4734
      %v4736 = vrot.slane %v4692, %v4735
      %v4737 = vmul.f32 %v4736, %v4677
      %v4738 = vmul.f32 %v4736, %v4683
      %v4739 = vadd.f32 %v4731, %v4737
      %v4740 = vadd.f32 %v4732, %v4738
      %v4741 = vld [vmem:[%s7] sm:$0xff]
      %v4742 = vld [vmem:[%s7 + $0x8] sm:$0xff]
      %vm4743 = vcmask 64512
      %v4745 = vsel %vm4743, %v4741, 0
      %v4748 = vsel %vm4743, %v4742, 0
      %4750 = vmatprep.subr.mxu0 0.0
      %v4751 = vand.u32 %v453, 4294901760
      %4752 = vmatpush1.msra.mxu0 %v4751
      %4753 = vmatprep.subr.mxu0 0.0
      %4754 = vmatpush1.msra.mxu0 0.0
      %4755 = vmatprep.subr.mxu0 0.0
      %4756 = vmatpush1.msra.mxu0 0.0
      %4757 = vmatprep.subr.mxu0 0.0
      %4758 = vmatpush1.msra.mxu0 0.0
      %4759 = vmatprep.subr.mxu0 0.0
      %4760 = vmatpush1.msra.mxu0 0.0
      %4761 = vmatprep.subr.mxu0 0.0
      %4762 = vmatpush1.msra.mxu0 0.0
      %4763 = vmatprep.subr.mxu0 0.0
      %4764 = vmatpush1.msra.mxu0 0.0
      %4765 = vmatprep.subr.mxu0 0.0
      %4766 = vmatpush1.msra.mxu0 0.0
      %4767 = vmatprep.subr.mxu0 0.0
      %4768 = vmatpush1.msra.mxu0 0.0
      %4769 = vmatprep.subr.mxu0 0.0
      %4770 = vmatpush1.msra.mxu0 0.0
      %4771 = vmatprep.subr.mxu0 0.0
      %4772 = vmatpush1.msra.mxu0 0.0
      %4773 = vmatprep.subr.mxu0 0.0
      %4774 = vmatpush1.msra.mxu0 0.0
      %4775 = vmatprep.subr.mxu0 0.0
      %4776 = vmatpush1.msra.mxu0 0.0
      %4777 = vmatprep.subr.mxu0 0.0
      %4778 = vmatpush1.msra.mxu0 0.0
      %4779 = vmatprep.subr.mxu0 0.0
      %4780 = vmatpush1.msra.mxu0 0.0
      %4781 = vmatprep.subr.mxu0 0.0
      %4782 = vmatpush1.msra.mxu0 0.0
      %4783 = vmatprep.subr.mxu0 0.0
      %4784 = vmatpush1.msra.mxu0 0.0
      %4785 = vmatprep.subr.mxu0 0.0
      %4786 = vmatpush1.msra.mxu0 0.0
      %4787 = vmatprep.subr.mxu0 0.0
      %4788 = vmatpush1.msra.mxu0 0.0
      %4789 = vmatprep.subr.mxu0 0.0
      %4790 = vmatpush1.msra.mxu0 0.0
      %4791 = vmatprep.subr.mxu0 0.0
      %4792 = vmatpush1.msra.mxu0 0.0
      %4793 = vmatprep.subr.mxu0 0.0
      %4794 = vmatpush1.msra.mxu0 0.0
      %4795 = vmatprep.subr.mxu0 0.0
      %4796 = vmatpush1.msra.mxu0 0.0
      %4797 = vmatprep.subr.mxu0 0.0
      %4798 = vmatpush1.msra.mxu0 0.0
      %4799 = vmatprep.subr.mxu0 0.0
      %4800 = vmatpush1.msra.mxu0 0.0
      %4801 = vmatprep.subr.mxu0 0.0
      %4802 = vmatpush1.msra.mxu0 0.0
      %4803 = vmatprep.subr.mxu0 0.0
      %4804 = vmatpush1.msra.mxu0 0.0
      %4805 = vmatprep.subr.mxu0 0.0
      %4806 = vmatpush1.msra.mxu0 0.0
      %4807 = vmatprep.subr.mxu0 0.0
      %4808 = vmatpush1.msra.mxu0 0.0
      %4809 = vmatprep.subr.mxu0 0.0
      %4810 = vmatpush1.msra.mxu0 0.0
      %4811 = vmatprep.subr.mxu0 0.0
      %4812 = vmatpush1.msra.mxu0 0.0
      %4813 = vmatprep.subr.mxu0 0.0
      %4814 = vmatpush1.msra.mxu0 0.0
      %4815 = vmatprep.mubr.f32.mxu0 0.0
      %v4816 = vand.u32 %v4745, 4294901760
      %v4817 = vsub.f32 %v4745, %v4816
      %v4818 = vand.u32 %v4817, 4294901760
      %v4819 = vsub.f32 %v4817, %v4818
      %v4820 = vand.u32 %v4819, 4294901760
      %4821 = vmatmul.mubr.f32.gmra.mrb[0].mxu0 %v4820
      %v4822 = vpop.f32.mrb[0].mxu0
      %v4823 = vadd.f32 0.0, %v4822
      %v4824 = vpop.f32.mrb[0].mxu0
      %4825 = vmatprep.mubr.f32.mxu0 0.0
      %v4826 = vand.u32 %v4748, 4294901760
      %v4827 = vsub.f32 %v4748, %v4826
      %v4828 = vand.u32 %v4827, 4294901760
      %v4829 = vsub.f32 %v4827, %v4828
      %v4830 = vand.u32 %v4829, 4294901760
      %4831 = vmatmul.mubr.f32.gmra.mrb[0].mxu0 %v4830
      %v4832 = vpop.f32.mrb[0].mxu0
      %v4833 = vadd.f32 0.0, %v4832
      %v4834 = vpop.f32.mrb[0].mxu0
      %4835 = vdwg.mxu0
      %4836 = vmatprep.subr.mxu0 0.0
      %v4837 = vand.u32 %v453, 4294901760
      %v4838 = vsub.f32 %v453, %v4837
      %v4839 = vand.u32 %v4838, 4294901760
      %v4840 = vsub.f32 %v4838, %v4839
      %v4841 = vand.u32 %v4840, 4294901760
      %4842 = vmatpush1.msra.mxu0 %v4841
      %4843 = vmatprep.subr.mxu0 0.0
      %4844 = vmatpush1.msra.mxu0 0.0
      %4845 = vmatprep.subr.mxu0 0.0
      %4846 = vmatpush1.msra.mxu0 0.0
      %4847 = vmatprep.subr.mxu0 0.0
      %4848 = vmatpush1.msra.mxu0 0.0
      %4849 = vmatprep.subr.mxu0 0.0
      %4850 = vmatpush1.msra.mxu0 0.0
      %4851 = vmatprep.subr.mxu0 0.0
      %4852 = vmatpush1.msra.mxu0 0.0
      %4853 = vmatprep.subr.mxu0 0.0
      %4854 = vmatpush1.msra.mxu0 0.0
      %4855 = vmatprep.subr.mxu0 0.0
      %4856 = vmatpush1.msra.mxu0 0.0
      %4857 = vmatprep.subr.mxu0 0.0
      %4858 = vmatpush1.msra.mxu0 0.0
      %4859 = vmatprep.subr.mxu0 0.0
      %4860 = vmatpush1.msra.mxu0 0.0
      %4861 = vmatprep.subr.mxu0 0.0
      %4862 = vmatpush1.msra.mxu0 0.0
      %4863 = vmatprep.subr.mxu0 0.0
      %4864 = vmatpush1.msra.mxu0 0.0
      %4865 = vmatprep.subr.mxu0 0.0
      %4866 = vmatpush1.msra.mxu0 0.0
      %4867 = vmatprep.subr.mxu0 0.0
      %4868 = vmatpush1.msra.mxu0 0.0
      %4869 = vmatprep.subr.mxu0 0.0
      %4870 = vmatpush1.msra.mxu0 0.0
      %4871 = vmatprep.subr.mxu0 0.0
      %4872 = vmatpush1.msra.mxu0 0.0
      %4873 = vmatprep.subr.mxu0 0.0
      %4874 = vmatpush1.msra.mxu0 0.0
      %4875 = vmatprep.subr.mxu0 0.0
      %4876 = vmatpush1.msra.mxu0 0.0
      %4877 = vmatprep.subr.mxu0 0.0
      %4878 = vmatpush1.msra.mxu0 0.0
      %4879 = vmatprep.subr.mxu0 0.0
      %4880 = vmatpush1.msra.mxu0 0.0
      %4881 = vmatprep.subr.mxu0 0.0
      %4882 = vmatpush1.msra.mxu0 0.0
      %4883 = vmatprep.subr.mxu0 0.0
      %4884 = vmatpush1.msra.mxu0 0.0
      %4885 = vmatprep.subr.mxu0 0.0
      %4886 = vmatpush1.msra.mxu0 0.0
      %4887 = vmatprep.subr.mxu0 0.0
      %4888 = vmatpush1.msra.mxu0 0.0
      %4889 = vmatprep.subr.mxu0 0.0
      %4890 = vmatpush1.msra.mxu0 0.0
      %4891 = vmatprep.subr.mxu0 0.0
      %4892 = vmatpush1.msra.mxu0 0.0
      %4893 = vmatprep.subr.mxu0 0.0
      %4894 = vmatpush1.msra.mxu0 0.0
      %4895 = vmatprep.subr.mxu0 0.0
      %4896 = vmatpush1.msra.mxu0 0.0
      %4897 = vmatprep.subr.mxu0 0.0
      %4898 = vmatpush1.msra.mxu0 0.0
      %4899 = vmatprep.subr.mxu0 0.0
      %4900 = vmatpush1.msra.mxu0 0.0
      %4901 = vmatprep.subr.mxu0 0.0
      %4902 = vmatpush1.msra.mxu0 0.0
      %4903 = vmatprep.subr.mxu0 0.0
      %4904 = vmatpush1.msra.mxu0 0.0
      %4905 = vmatprep.mubr.f32.mxu0 0.0
      %v4906 = vand.u32 %v4745, 4294901760
      %4907 = vmatmul.mubr.f32.gmra.mrb[0].mxu0 %v4906
      %v4908 = vpop.f32.mrb[0].mxu0
      %v4909 = vadd.f32 %v4823, %v4908
      %v4910 = vpop.f32.mrb[0].mxu0
      %4911 = vmatprep.mubr.f32.mxu0 0.0
      %v4912 = vand.u32 %v4748, 4294901760
      %4913 = vmatmul.mubr.f32.gmra.mrb[0].mxu0 %v4912
      %v4914 = vpop.f32.mrb[0].mxu0
      %v4915 = vadd.f32 %v4833, %v4914
      %v4916 = vpop.f32.mrb[0].mxu0
      %4917 = vdwg.mxu0
      %4918 = vmatprep.subr.mxu0 0.0
      %v4919 = vand.u32 %v453, 4294901760
      %v4920 = vsub.f32 %v453, %v4919
      %4921 = vmatpush1.msra.mxu0 %v4920
      %4922 = vmatprep.subr.mxu0 0.0
      %4923 = vmatpush1.msra.mxu0 0.0
      %4924 = vmatprep.subr.mxu0 0.0
      %4925 = vmatpush1.msra.mxu0 0.0
      %4926 = vmatprep.subr.mxu0 0.0
      %4927 = vmatpush1.msra.mxu0 0.0
      %4928 = vmatprep.subr.mxu0 0.0
      %4929 = vmatpush1.msra.mxu0 0.0
      %4930 = vmatprep.subr.mxu0 0.0
      %4931 = vmatpush1.msra.mxu0 0.0
      %4932 = vmatprep.subr.mxu0 0.0
      %4933 = vmatpush1.msra.mxu0 0.0
      %4934 = vmatprep.subr.mxu0 0.0
      %4935 = vmatpush1.msra.mxu0 0.0
      %4936 = vmatprep.subr.mxu0 0.0
      %4937 = vmatpush1.msra.mxu0 0.0
      %4938 = vmatprep.subr.mxu0 0.0
      %4939 = vmatpush1.msra.mxu0 0.0
      %4940 = vmatprep.subr.mxu0 0.0
      %4941 = vmatpush1.msra.mxu0 0.0
      %4942 = vmatprep.subr.mxu0 0.0
      %4943 = vmatpush1.msra.mxu0 0.0
      %4944 = vmatprep.subr.mxu0 0.0
      %4945 = vmatpush1.msra.mxu0 0.0
      %4946 = vmatprep.subr.mxu0 0.0
      %4947 = vmatpush1.msra.mxu0 0.0
      %4948 = vmatprep.subr.mxu0 0.0
      %4949 = vmatpush1.msra.mxu0 0.0
      %4950 = vmatprep.subr.mxu0 0.0
      %4951 = vmatpush1.msra.mxu0 0.0
      %4952 = vmatprep.subr.mxu0 0.0
      %4953 = vmatpush1.msra.mxu0 0.0
      %4954 = vmatprep.subr.mxu0 0.0
      %4955 = vmatpush1.msra.mxu0 0.0
      %4956 = vmatprep.subr.mxu0 0.0
      %4957 = vmatpush1.msra.mxu0 0.0
      %4958 = vmatprep.subr.mxu0 0.0
      %4959 = vmatpush1.msra.mxu0 0.0
      %4960 = vmatprep.subr.mxu0 0.0
      %4961 = vmatpush1.msra.mxu0 0.0
      %4962 = vmatprep.subr.mxu0 0.0
      %4963 = vmatpush1.msra.mxu0 0.0
      %4964 = vmatprep.subr.mxu0 0.0
      %4965 = vmatpush1.msra.mxu0 0.0
      %4966 = vmatprep.subr.mxu0 0.0
      %4967 = vmatpush1.msra.mxu0 0.0
      %4968 = vmatprep.subr.mxu0 0.0
      %4969 = vmatpush1.msra.mxu0 0.0
      %4970 = vmatprep.subr.mxu0 0.0
      %4971 = vmatpush1.msra.mxu0 0.0
      %4972 = vmatprep.subr.mxu0 0.0
      %4973 = vmatpush1.msra.mxu0 0.0
      %4974 = vmatprep.subr.mxu0 0.0
      %4975 = vmatpush1.msra.mxu0 0.0
      %4976 = vmatprep.subr.mxu0 0.0
      %4977 = vmatpush1.msra.mxu0 0.0
      %4978 = vmatprep.subr.mxu0 0.0
      %4979 = vmatpush1.msra.mxu0 0.0
      %4980 = vmatprep.subr.mxu0 0.0
      %4981 = vmatpush1.msra.mxu0 0.0
      %4982 = vmatprep.subr.mxu0 0.0
      %4983 = vmatpush1.msra.mxu0 0.0
      %4984 = vmatprep.mubr.f32.mxu0 0.0
      %v4985 = vand.u32 %v4745, 4294901760
      %v4986 = vsub.f32 %v4745, %v4985
      %4987 = vmatmul.mubr.f32.gmra.mrb[0].mxu0 %v4986
      %v4988 = vpop.f32.mrb[0].mxu0
      %v4989 = vadd.f32 %v4909, %v4988
      %v4990 = vpop.f32.mrb[0].mxu0
      %4991 = vmatprep.mubr.f32.mxu0 0.0
      %v4992 = vand.u32 %v4748, 4294901760
      %v4993 = vsub.f32 %v4748, %v4992
      %4994 = vmatmul.mubr.f32.gmra.mrb[0].mxu0 %v4993
      %v4995 = vpop.f32.mrb[0].mxu0
      %v4996 = vadd.f32 %v4915, %v4995
      %v4997 = vpop.f32.mrb[0].mxu0
      %4998 = vdwg.mxu0
      %4999 = vmatprep.subr.mxu0 0.0
      %v5000 = vand.u32 %v453, 4294901760
      %5001 = vmatpush1.msra.mxu0 %v5000
      %5002 = vmatprep.subr.mxu0 0.0
      %5003 = vmatpush1.msra.mxu0 0.0
      %5004 = vmatprep.subr.mxu0 0.0
      %5005 = vmatpush1.msra.mxu0 0.0
      %5006 = vmatprep.subr.mxu0 0.0
      %5007 = vmatpush1.msra.mxu0 0.0
      %5008 = vmatprep.subr.mxu0 0.0
      %5009 = vmatpush1.msra.mxu0 0.0
      %5010 = vmatprep.subr.mxu0 0.0
      %5011 = vmatpush1.msra.mxu0 0.0
      %5012 = vmatprep.subr.mxu0 0.0
      %5013 = vmatpush1.msra.mxu0 0.0
      %5014 = vmatprep.subr.mxu0 0.0
      %5015 = vmatpush1.msra.mxu0 0.0
      %5016 = vmatprep.subr.mxu0 0.0
      %5017 = vmatpush1.msra.mxu0 0.0
      %5018 = vmatprep.subr.mxu0 0.0
      %5019 = vmatpush1.msra.mxu0 0.0
      %5020 = vmatprep.subr.mxu0 0.0
      %5021 = vmatpush1.msra.mxu0 0.0
      %5022 = vmatprep.subr.mxu0 0.0
      %5023 = vmatpush1.msra.mxu0 0.0
      %5024 = vmatprep.subr.mxu0 0.0
      %5025 = vmatpush1.msra.mxu0 0.0
      %5026 = vmatprep.subr.mxu0 0.0
      %5027 = vmatpush1.msra.mxu0 0.0
      %5028 = vmatprep.subr.mxu0 0.0
      %5029 = vmatpush1.msra.mxu0 0.0
      %5030 = vmatprep.subr.mxu0 0.0
      %5031 = vmatpush1.msra.mxu0 0.0
      %5032 = vmatprep.subr.mxu0 0.0
      %5033 = vmatpush1.msra.mxu0 0.0
      %5034 = vmatprep.subr.mxu0 0.0
      %5035 = vmatpush1.msra.mxu0 0.0
      %5036 = vmatprep.subr.mxu0 0.0
      %5037 = vmatpush1.msra.mxu0 0.0
      %5038 = vmatprep.subr.mxu0 0.0
      %5039 = vmatpush1.msra.mxu0 0.0
      %5040 = vmatprep.subr.mxu0 0.0
      %5041 = vmatpush1.msra.mxu0 0.0
      %5042 = vmatprep.subr.mxu0 0.0
      %5043 = vmatpush1.msra.mxu0 0.0
      %5044 = vmatprep.subr.mxu0 0.0
      %5045 = vmatpush1.msra.mxu0 0.0
      %5046 = vmatprep.subr.mxu0 0.0
      %5047 = vmatpush1.msra.mxu0 0.0
      %5048 = vmatprep.subr.mxu0 0.0
      %5049 = vmatpush1.msra.mxu0 0.0
      %5050 = vmatprep.subr.mxu0 0.0
      %5051 = vmatpush1.msra.mxu0 0.0
      %5052 = vmatprep.subr.mxu0 0.0
      %5053 = vmatpush1.msra.mxu0 0.0
      %5054 = vmatprep.subr.mxu0 0.0
      %5055 = vmatpush1.msra.mxu0 0.0
      %5056 = vmatprep.subr.mxu0 0.0
      %5057 = vmatpush1.msra.mxu0 0.0
      %5058 = vmatprep.subr.mxu0 0.0
      %5059 = vmatpush1.msra.mxu0 0.0
      %5060 = vmatprep.subr.mxu0 0.0
      %5061 = vmatpush1.msra.mxu0 0.0
      %5062 = vmatprep.subr.mxu0 0.0
      %5063 = vmatpush1.msra.mxu0 0.0
      %5064 = vmatprep.mubr.f32.mxu0 0.0
      %v5065 = vand.u32 %v4745, 4294901760
      %v5066 = vsub.f32 %v4745, %v5065
      %v5067 = vand.u32 %v5066, 4294901760
      %5068 = vmatmul.mubr.f32.gmra.mrb[0].mxu0 %v5067
      %v5069 = vpop.f32.mrb[0].mxu0
      %v5070 = vadd.f32 %v4989, %v5069
      %v5071 = vpop.f32.mrb[0].mxu0
      %5072 = vmatprep.mubr.f32.mxu0 0.0
      %v5073 = vand.u32 %v4748, 4294901760
      %v5074 = vsub.f32 %v4748, %v5073
      %v5075 = vand.u32 %v5074, 4294901760
      %5076 = vmatmul.mubr.f32.gmra.mrb[0].mxu0 %v5075
      %v5077 = vpop.f32.mrb[0].mxu0
      %v5078 = vadd.f32 %v4996, %v5077
      %v5079 = vpop.f32.mrb[0].mxu0
      %5080 = vdwg.mxu0
      %5081 = vmatprep.subr.mxu0 0.0
      %v5082 = vand.u32 %v453, 4294901760
      %v5083 = vsub.f32 %v453, %v5082
      %v5084 = vand.u32 %v5083, 4294901760
      %5085 = vmatpush1.msra.mxu0 %v5084
      %5086 = vmatprep.subr.mxu0 0.0
      %5087 = vmatpush1.msra.mxu0 0.0
      %5088 = vmatprep.subr.mxu0 0.0
      %5089 = vmatpush1.msra.mxu0 0.0
      %5090 = vmatprep.subr.mxu0 0.0
      %5091 = vmatpush1.msra.mxu0 0.0
      %5092 = vmatprep.subr.mxu0 0.0
      %5093 = vmatpush1.msra.mxu0 0.0
      %5094 = vmatprep.subr.mxu0 0.0
      %5095 = vmatpush1.msra.mxu0 0.0
      %5096 = vmatprep.subr.mxu0 0.0
      %5097 = vmatpush1.msra.mxu0 0.0
      %5098 = vmatprep.subr.mxu0 0.0
      %5099 = vmatpush1.msra.mxu0 0.0
      %5100 = vmatprep.subr.mxu0 0.0
      %5101 = vmatpush1.msra.mxu0 0.0
      %5102 = vmatprep.subr.mxu0 0.0
      %5103 = vmatpush1.msra.mxu0 0.0
      %5104 = vmatprep.subr.mxu0 0.0
      %5105 = vmatpush1.msra.mxu0 0.0
      %5106 = vmatprep.subr.mxu0 0.0
      %5107 = vmatpush1.msra.mxu0 0.0
      %5108 = vmatprep.subr.mxu0 0.0
      %5109 = vmatpush1.msra.mxu0 0.0
      %5110 = vmatprep.subr.mxu0 0.0
      %5111 = vmatpush1.msra.mxu0 0.0
      %5112 = vmatprep.subr.mxu0 0.0
      %5113 = vmatpush1.msra.mxu0 0.0
      %5114 = vmatprep.subr.mxu0 0.0
      %5115 = vmatpush1.msra.mxu0 0.0
      %5116 = vmatprep.subr.mxu0 0.0
      %5117 = vmatpush1.msra.mxu0 0.0
      %5118 = vmatprep.subr.mxu0 0.0
      %5119 = vmatpush1.msra.mxu0 0.0
      %5120 = vmatprep.subr.mxu0 0.0
      %5121 = vmatpush1.msra.mxu0 0.0
      %5122 = vmatprep.subr.mxu0 0.0
      %5123 = vmatpush1.msra.mxu0 0.0
      %5124 = vmatprep.subr.mxu0 0.0
      %5125 = vmatpush1.msra.mxu0 0.0
      %5126 = vmatprep.subr.mxu0 0.0
      %5127 = vmatpush1.msra.mxu0 0.0
      %5128 = vmatprep.subr.mxu0 0.0
      %5129 = vmatpush1.msra.mxu0 0.0
      %5130 = vmatprep.subr.mxu0 0.0
      %5131 = vmatpush1.msra.mxu0 0.0
      %5132 = vmatprep.subr.mxu0 0.0
      %5133 = vmatpush1.msra.mxu0 0.0
      %5134 = vmatprep.subr.mxu0 0.0
      %5135 = vmatpush1.msra.mxu0 0.0
      %5136 = vmatprep.subr.mxu0 0.0
      %5137 = vmatpush1.msra.mxu0 0.0
      %5138 = vmatprep.subr.mxu0 0.0
      %5139 = vmatpush1.msra.mxu0 0.0
      %5140 = vmatprep.subr.mxu0 0.0
      %5141 = vmatpush1.msra.mxu0 0.0
      %5142 = vmatprep.subr.mxu0 0.0
      %5143 = vmatpush1.msra.mxu0 0.0
      %5144 = vmatprep.subr.mxu0 0.0
      %5145 = vmatpush1.msra.mxu0 0.0
      %5146 = vmatprep.subr.mxu0 0.0
      %5147 = vmatpush1.msra.mxu0 0.0
      %5148 = vmatprep.mubr.f32.mxu0 0.0
      %v5149 = vand.u32 %v4745, 4294901760
      %5150 = vmatmul.mubr.f32.gmra.mrb[0].mxu0 %v5149
      %v5151 = vpop.f32.mrb[0].mxu0
      %v5152 = vadd.f32 %v5070, %v5151
      %v5153 = vpop.f32.mrb[0].mxu0
      %5154 = vmatprep.mubr.f32.mxu0 0.0
      %v5155 = vand.u32 %v4748, 4294901760
      %5156 = vmatmul.mubr.f32.gmra.mrb[0].mxu0 %v5155
      %v5157 = vpop.f32.mrb[0].mxu0
      %v5158 = vadd.f32 %v5078, %v5157
      %v5159 = vpop.f32.mrb[0].mxu0
      %5160 = vdwg.mxu0
      %5161 = vmatprep.subr.mxu0 0.0
      %v5162 = vand.u32 %v453, 4294901760
      %5163 = vmatpush1.msra.mxu0 %v5162
      %5164 = vmatprep.subr.mxu0 0.0
      %5165 = vmatpush1.msra.mxu0 0.0
      %5166 = vmatprep.subr.mxu0 0.0
      %5167 = vmatpush1.msra.mxu0 0.0
      %5168 = vmatprep.subr.mxu0 0.0
      %5169 = vmatpush1.msra.mxu0 0.0
      %5170 = vmatprep.subr.mxu0 0.0
      %5171 = vmatpush1.msra.mxu0 0.0
      %5172 = vmatprep.subr.mxu0 0.0
      %5173 = vmatpush1.msra.mxu0 0.0
      %5174 = vmatprep.subr.mxu0 0.0
      %5175 = vmatpush1.msra.mxu0 0.0
      %5176 = vmatprep.subr.mxu0 0.0
      %5177 = vmatpush1.msra.mxu0 0.0
      %5178 = vmatprep.subr.mxu0 0.0
      %5179 = vmatpush1.msra.mxu0 0.0
      %5180 = vmatprep.subr.mxu0 0.0
      %5181 = vmatpush1.msra.mxu0 0.0
      %5182 = vmatprep.subr.mxu0 0.0
      %5183 = vmatpush1.msra.mxu0 0.0
      %5184 = vmatprep.subr.mxu0 0.0
      %5185 = vmatpush1.msra.mxu0 0.0
      %5186 = vmatprep.subr.mxu0 0.0
      %5187 = vmatpush1.msra.mxu0 0.0
      %5188 = vmatprep.subr.mxu0 0.0
      %5189 = vmatpush1.msra.mxu0 0.0
      %5190 = vmatprep.subr.mxu0 0.0
      %5191 = vmatpush1.msra.mxu0 0.0
      %5192 = vmatprep.subr.mxu0 0.0
      %5193 = vmatpush1.msra.mxu0 0.0
      %5194 = vmatprep.subr.mxu0 0.0
      %5195 = vmatpush1.msra.mxu0 0.0
      %5196 = vmatprep.subr.mxu0 0.0
      %5197 = vmatpush1.msra.mxu0 0.0
      %5198 = vmatprep.subr.mxu0 0.0
      %5199 = vmatpush1.msra.mxu0 0.0
      %5200 = vmatprep.subr.mxu0 0.0
      %5201 = vmatpush1.msra.mxu0 0.0
      %5202 = vmatprep.subr.mxu0 0.0
      %5203 = vmatpush1.msra.mxu0 0.0
      %5204 = vmatprep.subr.mxu0 0.0
      %5205 = vmatpush1.msra.mxu0 0.0
      %5206 = vmatprep.subr.mxu0 0.0
      %5207 = vmatpush1.msra.mxu0 0.0
      %5208 = vmatprep.subr.mxu0 0.0
      %5209 = vmatpush1.msra.mxu0 0.0
      %5210 = vmatprep.subr.mxu0 0.0
      %5211 = vmatpush1.msra.mxu0 0.0
      %5212 = vmatprep.subr.mxu0 0.0
      %5213 = vmatpush1.msra.mxu0 0.0
      %5214 = vmatprep.subr.mxu0 0.0
      %5215 = vmatpush1.msra.mxu0 0.0
      %5216 = vmatprep.subr.mxu0 0.0
      %5217 = vmatpush1.msra.mxu0 0.0
      %5218 = vmatprep.subr.mxu0 0.0
      %5219 = vmatpush1.msra.mxu0 0.0
      %5220 = vmatprep.subr.mxu0 0.0
      %5221 = vmatpush1.msra.mxu0 0.0
      %5222 = vmatprep.subr.mxu0 0.0
      %5223 = vmatpush1.msra.mxu0 0.0
      %5224 = vmatprep.subr.mxu0 0.0
      %5225 = vmatpush1.msra.mxu0 0.0
      %5226 = vmatprep.mubr.f32.mxu0 0.0
      %v5227 = vand.u32 %v4745, 4294901760
      %5228 = vmatmul.mubr.f32.gmra.mrb[0].mxu0 %v5227
      %v5229 = vpop.f32.mrb[0].mxu0
      %v5230 = vadd.f32 %v5152, %v5229
      %v5231 = vpop.f32.mrb[0].mxu0
      %5232 = vmatprep.mubr.f32.mxu0 0.0
      %v5233 = vand.u32 %v4748, 4294901760
      %5234 = vmatmul.mubr.f32.gmra.mrb[0].mxu0 %v5233
      %v5235 = vpop.f32.mrb[0].mxu0
      %v5236 = vadd.f32 %v5158, %v5235
      %v5237 = vpop.f32.mrb[0].mxu0
      %5238 = vdwg.mxu0
      %v5239 = vadd.f32 %v4739, %v5230
      %v5240 = vadd.f32 %v4740, %v5236
      %v5241 = vld [vmem:[%s8] sm:$0xff]
      %v5242 = vld [vmem:[%s8 + $0x8] sm:$0xff]
      %5244 = vset.pattern.permute.xlu0 0
      %5245 = vperm.xlu0 %5244, %v5241
      %v5246 = vpop.permute.xlu0 %5245
      %5249 = vset.pattern.permute.xlu0 0
      %5250 = vperm.xlu0 %5249, %v5242
      %v5251 = vpop.permute.xlu0 %5250
      %v5253 = vadd.f32 %v5239, %v5246
      %v5254 = vadd.f32 %v5240, %v5251
      %v5255 = vmax.f32 %v5253, 0.0
      %v5256 = vmax.f32 %v5254, 0.0
      %v5257 = vlaneseq
      %v5258 = vshrl.u32 %v5257, 7
      %v5259 = vsub.s32 4, %v5258
      %v5260 = vrot.slane %v455, %v5259
      %v5261 = vmul.f32 %v5255, %v5260
      %v5262 = vmul.f32 %v5256, %v5260
      %5263 = vrot.lane.b32.xlu0 %v5261, 10
      %v5264 = vpop.permute.xlu0 %5263
      %5265 = vrot.lane.b32.xlu0 %v5262, 10
      %v5266 = vpop.permute.xlu0 %5265
      %5267 = vrot.lane.b32.xlu0 %v5261, 9
      %v5268 = vpop.permute.xlu0 %5267
      %5269 = vrot.lane.b32.xlu0 %v5262, 9
      %v5270 = vpop.permute.xlu0 %5269
      %5271 = vrot.lane.b32.xlu0 %v5261, 8
      %v5272 = vpop.permute.xlu0 %5271
      %5273 = vrot.lane.b32.xlu0 %v5262, 8
      %v5274 = vpop.permute.xlu0 %5273
      %5275 = vrot.lane.b32.xlu0 %v5261, 1
      %v5276 = vpop.permute.xlu0 %5275
      %5277 = vrot.lane.b32.xlu0 %v5262, 1
      %v5278 = vpop.permute.xlu0 %5277
      %5279 = vrot.lane.b32.xlu0 %v5261, 127
      %v5280 = vpop.permute.xlu0 %5279
      %5281 = vrot.lane.b32.xlu0 %v5262, 127
      %v5282 = vpop.permute.xlu0 %5281
      %5283 = vrot.lane.b32.xlu0 %v5261, 120
      %v5284 = vpop.permute.xlu0 %5283
      %5285 = vrot.lane.b32.xlu0 %v5262, 120
      %v5286 = vpop.permute.xlu0 %5285
      %5287 = vrot.lane.b32.xlu0 %v5261, 119
      %v5288 = vpop.permute.xlu0 %5287
      %5289 = vrot.lane.b32.xlu0 %v5262, 119
      %v5290 = vpop.permute.xlu0 %5289
      %5291 = vrot.lane.b32.xlu0 %v5261, 118
      %v5292 = vpop.permute.xlu0 %5291
      %5293 = vrot.lane.b32.xlu0 %v5262, 118
      %v5294 = vpop.permute.xlu0 %5293
      %v5295 = vld [vmem:[%s9] sm:$0xff]
      %v5296 = vld [vmem:[%s9 + $0x8] sm:$0xff]
      %v5297 = vld [vmem:[%s9 + $0x10] sm:$0xff]
      %v5298 = vld [vmem:[%s9 + $0x18] sm:$0xff]
      %v5299 = vld [vmem:[%s10] sm:$0xff]
      %v5300 = vld [vmem:[%s10 + $0x8] sm:$0xff]
      %5302 = vset.pattern.permute.xlu0 0
      %5303 = vperm.xlu0 %5302, %v5299
      %v5304 = vpop.permute.xlu0 %5303
      %5307 = vset.pattern.permute.xlu0 0
      %5308 = vperm.xlu0 %5307, %v5300
      %v5309 = vpop.permute.xlu0 %5308
      %vm5311 = vcmask 130048
      %v5313 = vsel %vm5311, %v5296, 0
      %v5316 = vsel %vm5311, %v5298, 0
      %5318 = vmatprep.subr.mxu0 0.0
      %v5319 = vand.u32 %v5264, 4294901760
      %5320 = vmatpush1.msra.mxu0 %v5319
      %5321 = vmatprep.subr.mxu0 0.0
      %v5322 = vand.u32 %v5266, 4294901760
      %5323 = vmatpush1.msra.mxu0 %v5322
      %5324 = vmatprep.subr.mxu0 0.0
      %v5325 = vand.u32 %v5268, 4294901760
      %5326 = vmatpush1.msra.mxu0 %v5325
      %5327 = vmatprep.subr.mxu0 0.0
      %v5328 = vand.u32 %v5270, 4294901760
      %5329 = vmatpush1.msra.mxu0 %v5328
      %5330 = vmatprep.subr.mxu0 0.0
      %v5331 = vand.u32 %v5272, 4294901760
      %5332 = vmatpush1.msra.mxu0 %v5331
      %5333 = vmatprep.subr.mxu0 0.0
      %v5334 = vand.u32 %v5274, 4294901760
      %5335 = vmatpush1.msra.mxu0 %v5334
      %5336 = vmatprep.subr.mxu0 0.0
      %v5337 = vand.u32 %v5276, 4294901760
      %5338 = vmatpush1.msra.mxu0 %v5337
      %5339 = vmatprep.subr.mxu0 0.0
      %v5340 = vand.u32 %v5278, 4294901760
      %5341 = vmatpush1.msra.mxu0 %v5340
      %5342 = vmatprep.subr.mxu0 0.0
      %v5343 = vand.u32 %v5261, 4294901760
      %5344 = vmatpush1.msra.mxu0 %v5343
      %5345 = vmatprep.subr.mxu0 0.0
      %v5346 = vand.u32 %v5262, 4294901760
      %5347 = vmatpush1.msra.mxu0 %v5346
      %5348 = vmatprep.subr.mxu0 0.0
      %v5349 = vand.u32 %v5280, 4294901760
      %5350 = vmatpush1.msra.mxu0 %v5349
      %5351 = vmatprep.subr.mxu0 0.0
      %v5352 = vand.u32 %v5282, 4294901760
      %5353 = vmatpush1.msra.mxu0 %v5352
      %5354 = vmatprep.subr.mxu0 0.0
      %v5355 = vand.u32 %v5284, 4294901760
      %5356 = vmatpush1.msra.mxu0 %v5355
      %5357 = vmatprep.subr.mxu0 0.0
      %v5358 = vand.u32 %v5286, 4294901760
      %5359 = vmatpush1.msra.mxu0 %v5358
      %5360 = vmatprep.subr.mxu0 0.0
      %v5361 = vand.u32 %v5288, 4294901760
      %5362 = vmatpush1.msra.mxu0 %v5361
      %5363 = vmatprep.subr.mxu0 0.0
      %v5364 = vand.u32 %v5290, 4294901760
      %5365 = vmatpush1.msra.mxu0 %v5364
      %5366 = vmatprep.subr.mxu0 0.0
      %v5367 = vand.u32 %v5292, 4294901760
      %5368 = vmatpush1.msra.mxu0 %v5367
      %5369 = vmatprep.subr.mxu0 0.0
      %v5370 = vand.u32 %v5294, 4294901760
      %5371 = vmatpush1.msra.mxu0 %v5370
      %5372 = vmatprep.subr.mxu0 0.0
      %5373 = vmatpush1.msra.mxu0 0.0
      %5374 = vmatprep.subr.mxu0 0.0
      %5375 = vmatpush1.msra.mxu0 0.0
      %5376 = vmatprep.subr.mxu0 0.0
      %5377 = vmatpush1.msra.mxu0 0.0
      %5378 = vmatprep.subr.mxu0 0.0
      %5379 = vmatpush1.msra.mxu0 0.0
      %5380 = vmatprep.subr.mxu0 0.0
      %5381 = vmatpush1.msra.mxu0 0.0
      %5382 = vmatprep.subr.mxu0 0.0
      %5383 = vmatpush1.msra.mxu0 0.0
      %5384 = vmatprep.subr.mxu0 0.0
      %5385 = vmatpush1.msra.mxu0 0.0
      %5386 = vmatprep.subr.mxu0 0.0
      %5387 = vmatpush1.msra.mxu0 0.0
      %5388 = vmatprep.subr.mxu0 0.0
      %5389 = vmatpush1.msra.mxu0 0.0
      %5390 = vmatprep.subr.mxu0 0.0
      %5391 = vmatpush1.msra.mxu0 0.0
      %5392 = vmatprep.subr.mxu0 0.0
      %5393 = vmatpush1.msra.mxu0 0.0
      %5394 = vmatprep.subr.mxu0 0.0
      %5395 = vmatpush1.msra.mxu0 0.0
      %5396 = vmatprep.subr.mxu0 0.0
      %5397 = vmatpush1.msra.mxu0 0.0
      %5398 = vmatprep.subr.mxu0 0.0
      %5399 = vmatpush1.msra.mxu0 0.0
      %v5400 = vand.u32 %v5313, 4294901760
      %v5401 = vsub.f32 %v5313, %v5400
      %v5402 = vand.u32 %v5401, 4294901760
      %v5403 = vsub.f32 %v5401, %v5402
      %v5404 = vand.u32 %v5403, 4294901760
      %5405 = vmatprep.mubr.f32.mxu0 %v5404
      %v5406 = vand.u32 %v5295, 4294901760
      %v5407 = vsub.f32 %v5295, %v5406
      %v5408 = vand.u32 %v5407, 4294901760
      %v5409 = vsub.f32 %v5407, %v5408
      %v5410 = vand.u32 %v5409, 4294901760
      %5411 = vmatmul.mubr.f32.gmra.mrb[0].mxu0 %v5410
      %v5412 = vpop.f32.mrb[0].mxu0
      %v5413 = vadd.f32 %v5304, %v5412
      %v5414 = vpop.f32.mrb[0].mxu0
      %v5415 = vand.u32 %v5316, 4294901760
      %v5416 = vsub.f32 %v5316, %v5415
      %v5417 = vand.u32 %v5416, 4294901760
      %v5418 = vsub.f32 %v5416, %v5417
      %v5419 = vand.u32 %v5418, 4294901760
      %5420 = vmatprep.mubr.f32.mxu0 %v5419
      %v5421 = vand.u32 %v5297, 4294901760
      %v5422 = vsub.f32 %v5297, %v5421
      %v5423 = vand.u32 %v5422, 4294901760
      %v5424 = vsub.f32 %v5422, %v5423
      %v5425 = vand.u32 %v5424, 4294901760
      %5426 = vmatmul.mubr.f32.gmra.mrb[0].mxu0 %v5425
      %v5427 = vpop.f32.mrb[0].mxu0
      %v5428 = vadd.f32 %v5309, %v5427
      %v5429 = vpop.f32.mrb[0].mxu0
      %5430 = vdwg.mxu0
      %5431 = vmatprep.subr.mxu0 0.0
      %v5432 = vand.u32 %v5264, 4294901760
      %v5433 = vsub.f32 %v5264, %v5432
      %v5434 = vand.u32 %v5433, 4294901760
      %v5435 = vsub.f32 %v5433, %v5434
      %v5436 = vand.u32 %v5435, 4294901760
      %5437 = vmatpush1.msra.mxu0 %v5436
      %5438 = vmatprep.subr.mxu0 0.0
      %v5439 = vand.u32 %v5266, 4294901760
      %v5440 = vsub.f32 %v5266, %v5439
      %v5441 = vand.u32 %v5440, 4294901760
      %v5442 = vsub.f32 %v5440, %v5441
      %v5443 = vand.u32 %v5442, 4294901760
      %5444 = vmatpush1.msra.mxu0 %v5443
      %5445 = vmatprep.subr.mxu0 0.0
      %v5446 = vand.u32 %v5268, 4294901760
      %v5447 = vsub.f32 %v5268, %v5446
      %v5448 = vand.u32 %v5447, 4294901760
      %v5449 = vsub.f32 %v5447, %v5448
      %v5450 = vand.u32 %v5449, 4294901760
      %5451 = vmatpush1.msra.mxu0 %v5450
      %5452 = vmatprep.subr.mxu0 0.0
      %v5453 = vand.u32 %v5270, 4294901760
      %v5454 = vsub.f32 %v5270, %v5453
      %v5455 = vand.u32 %v5454, 4294901760
      %v5456 = vsub.f32 %v5454, %v5455
      %v5457 = vand.u32 %v5456, 4294901760
      %5458 = vmatpush1.msra.mxu0 %v5457
      %5459 = vmatprep.subr.mxu0 0.0
      %v5460 = vand.u32 %v5272, 4294901760
      %v5461 = vsub.f32 %v5272, %v5460
      %v5462 = vand.u32 %v5461, 4294901760
      %v5463 = vsub.f32 %v5461, %v5462
      %v5464 = vand.u32 %v5463, 4294901760
      %5465 = vmatpush1.msra.mxu0 %v5464
      %5466 = vmatprep.subr.mxu0 0.0
      %v5467 = vand.u32 %v5274, 4294901760
      %v5468 = vsub.f32 %v5274, %v5467
      %v5469 = vand.u32 %v5468, 4294901760
      %v5470 = vsub.f32 %v5468, %v5469
      %v5471 = vand.u32 %v5470, 4294901760
      %5472 = vmatpush1.msra.mxu0 %v5471
      %5473 = vmatprep.subr.mxu0 0.0
      %v5474 = vand.u32 %v5276, 4294901760
      %v5475 = vsub.f32 %v5276, %v5474
      %v5476 = vand.u32 %v5475, 4294901760
      %v5477 = vsub.f32 %v5475, %v5476
      %v5478 = vand.u32 %v5477, 4294901760
      %5479 = vmatpush1.msra.mxu0 %v5478
      %5480 = vmatprep.subr.mxu0 0.0
      %v5481 = vand.u32 %v5278, 4294901760
      %v5482 = vsub.f32 %v5278, %v5481
      %v5483 = vand.u32 %v5482, 4294901760
      %v5484 = vsub.f32 %v5482, %v5483
      %v5485 = vand.u32 %v5484, 4294901760
      %5486 = vmatpush1.msra.mxu0 %v5485
      %5487 = vmatprep.subr.mxu0 0.0
      %v5488 = vand.u32 %v5261, 4294901760
      %v5489 = vsub.f32 %v5261, %v5488
      %v5490 = vand.u32 %v5489, 4294901760
      %v5491 = vsub.f32 %v5489, %v5490
      %v5492 = vand.u32 %v5491, 4294901760
      %5493 = vmatpush1.msra.mxu0 %v5492
      %5494 = vmatprep.subr.mxu0 0.0
      %v5495 = vand.u32 %v5262, 4294901760
      %v5496 = vsub.f32 %v5262, %v5495
      %v5497 = vand.u32 %v5496, 4294901760
      %v5498 = vsub.f32 %v5496, %v5497
      %v5499 = vand.u32 %v5498, 4294901760
      %5500 = vmatpush1.msra.mxu0 %v5499
      %5501 = vmatprep.subr.mxu0 0.0
      %v5502 = vand.u32 %v5280, 4294901760
      %v5503 = vsub.f32 %v5280, %v5502
      %v5504 = vand.u32 %v5503, 4294901760
      %v5505 = vsub.f32 %v5503, %v5504
      %v5506 = vand.u32 %v5505, 4294901760
      %5507 = vmatpush1.msra.mxu0 %v5506
      %5508 = vmatprep.subr.mxu0 0.0
      %v5509 = vand.u32 %v5282, 4294901760
      %v5510 = vsub.f32 %v5282, %v5509
      %v5511 = vand.u32 %v5510, 4294901760
      %v5512 = vsub.f32 %v5510, %v5511
      %v5513 = vand.u32 %v5512, 4294901760
      %5514 = vmatpush1.msra.mxu0 %v5513
      %5515 = vmatprep.subr.mxu0 0.0
      %v5516 = vand.u32 %v5284, 4294901760
      %v5517 = vsub.f32 %v5284, %v5516
      %v5518 = vand.u32 %v5517, 4294901760
      %v5519 = vsub.f32 %v5517, %v5518
      %v5520 = vand.u32 %v5519, 4294901760
      %5521 = vmatpush1.msra.mxu0 %v5520
      %5522 = vmatprep.subr.mxu0 0.0
      %v5523 = vand.u32 %v5286, 4294901760
      %v5524 = vsub.f32 %v5286, %v5523
      %v5525 = vand.u32 %v5524, 4294901760
      %v5526 = vsub.f32 %v5524, %v5525
      %v5527 = vand.u32 %v5526, 4294901760
      %5528 = vmatpush1.msra.mxu0 %v5527
      %5529 = vmatprep.subr.mxu0 0.0
      %v5530 = vand.u32 %v5288, 4294901760
      %v5531 = vsub.f32 %v5288, %v5530
      %v5532 = vand.u32 %v5531, 4294901760
      %v5533 = vsub.f32 %v5531, %v5532
      %v5534 = vand.u32 %v5533, 4294901760
      %5535 = vmatpush1.msra.mxu0 %v5534
      %5536 = vmatprep.subr.mxu0 0.0
      %v5537 = vand.u32 %v5290, 4294901760
      %v5538 = vsub.f32 %v5290, %v5537
      %v5539 = vand.u32 %v5538, 4294901760
      %v5540 = vsub.f32 %v5538, %v5539
      %v5541 = vand.u32 %v5540, 4294901760
      %5542 = vmatpush1.msra.mxu0 %v5541
      %5543 = vmatprep.subr.mxu0 0.0
      %v5544 = vand.u32 %v5292, 4294901760
      %v5545 = vsub.f32 %v5292, %v5544
      %v5546 = vand.u32 %v5545, 4294901760
      %v5547 = vsub.f32 %v5545, %v5546
      %v5548 = vand.u32 %v5547, 4294901760
      %5549 = vmatpush1.msra.mxu0 %v5548
      %5550 = vmatprep.subr.mxu0 0.0
      %v5551 = vand.u32 %v5294, 4294901760
      %v5552 = vsub.f32 %v5294, %v5551
      %v5553 = vand.u32 %v5552, 4294901760
      %v5554 = vsub.f32 %v5552, %v5553
      %v5555 = vand.u32 %v5554, 4294901760
      %5556 = vmatpush1.msra.mxu0 %v5555
      %5557 = vmatprep.subr.mxu0 0.0
      %5558 = vmatpush1.msra.mxu0 0.0
      %5559 = vmatprep.subr.mxu0 0.0
      %5560 = vmatpush1.msra.mxu0 0.0
      %5561 = vmatprep.subr.mxu0 0.0
      %5562 = vmatpush1.msra.mxu0 0.0
      %5563 = vmatprep.subr.mxu0 0.0
      %5564 = vmatpush1.msra.mxu0 0.0
      %5565 = vmatprep.subr.mxu0 0.0
      %5566 = vmatpush1.msra.mxu0 0.0
      %5567 = vmatprep.subr.mxu0 0.0
      %5568 = vmatpush1.msra.mxu0 0.0
      %5569 = vmatprep.subr.mxu0 0.0
      %5570 = vmatpush1.msra.mxu0 0.0
      %5571 = vmatprep.subr.mxu0 0.0
      %5572 = vmatpush1.msra.mxu0 0.0
      %5573 = vmatprep.subr.mxu0 0.0
      %5574 = vmatpush1.msra.mxu0 0.0
      %5575 = vmatprep.subr.mxu0 0.0
      %5576 = vmatpush1.msra.mxu0 0.0
      %5577 = vmatprep.subr.mxu0 0.0
      %5578 = vmatpush1.msra.mxu0 0.0
      %5579 = vmatprep.subr.mxu0 0.0
      %5580 = vmatpush1.msra.mxu0 0.0
      %5581 = vmatprep.subr.mxu0 0.0
      %5582 = vmatpush1.msra.mxu0 0.0
      %5583 = vmatprep.subr.mxu0 0.0
      %5584 = vmatpush1.msra.mxu0 0.0
      %v5585 = vand.u32 %v5313, 4294901760
      %5586 = vmatprep.mubr.f32.mxu0 %v5585
      %v5587 = vand.u32 %v5295, 4294901760
      %5588 = vmatmul.mubr.f32.gmra.mrb[0].mxu0 %v5587
      %v5589 = vpop.f32.mrb[0].mxu0
      %v5590 = vadd.f32 %v5413, %v5589
      %v5591 = vpop.f32.mrb[0].mxu0
      %v5592 = vand.u32 %v5316, 4294901760
      %5593 = vmatprep.mubr.f32.mxu0 %v5592
      %v5594 = vand.u32 %v5297, 4294901760
      %5595 = vmatmul.mubr.f32.gmra.mrb[0].mxu0 %v5594
      %v5596 = vpop.f32.mrb[0].mxu0
      %v5597 = vadd.f32 %v5428, %v5596
      %v5598 = vpop.f32.mrb[0].mxu0
      %5599 = vdwg.mxu0
      %5600 = vmatprep.subr.mxu0 0.0
      %v5601 = vand.u32 %v5264, 4294901760
      %v5602 = vsub.f32 %v5264, %v5601
      %5603 = vmatpush1.msra.mxu0 %v5602
      %5604 = vmatprep.subr.mxu0 0.0
      %v5605 = vand.u32 %v5266, 4294901760
      %v5606 = vsub.f32 %v5266, %v5605
      %5607 = vmatpush1.msra.mxu0 %v5606
      %5608 = vmatprep.subr.mxu0 0.0
      %v5609 = vand.u32 %v5268, 4294901760
      %v5610 = vsub.f32 %v5268, %v5609
      %5611 = vmatpush1.msra.mxu0 %v5610
      %5612 = vmatprep.subr.mxu0 0.0
      %v5613 = vand.u32 %v5270, 4294901760
      %v5614 = vsub.f32 %v5270, %v5613
      %5615 = vmatpush1.msra.mxu0 %v5614
      %5616 = vmatprep.subr.mxu0 0.0
      %v5617 = vand.u32 %v5272, 4294901760
      %v5618 = vsub.f32 %v5272, %v5617
      %5619 = vmatpush1.msra.mxu0 %v5618
      %5620 = vmatprep.subr.mxu0 0.0
      %v5621 = vand.u32 %v5274, 4294901760
      %v5622 = vsub.f32 %v5274, %v5621
      %5623 = vmatpush1.msra.mxu0 %v5622
      %5624 = vmatprep.subr.mxu0 0.0
      %v5625 = vand.u32 %v5276, 4294901760
      %v5626 = vsub.f32 %v5276, %v5625
      %5627 = vmatpush1.msra.mxu0 %v5626
      %5628 = vmatprep.subr.mxu0 0.0
      %v5629 = vand.u32 %v5278, 4294901760
      %v5630 = vsub.f32 %v5278, %v5629
      %5631 = vmatpush1.msra.mxu0 %v5630
      %5632 = vmatprep.subr.mxu0 0.0
      %v5633 = vand.u32 %v5261, 4294901760
      %v5634 = vsub.f32 %v5261, %v5633
      %5635 = vmatpush1.msra.mxu0 %v5634
      %5636 = vmatprep.subr.mxu0 0.0
      %v5637 = vand.u32 %v5262, 4294901760
      %v5638 = vsub.f32 %v5262, %v5637
      %5639 = vmatpush1.msra.mxu0 %v5638
      %5640 = vmatprep.subr.mxu0 0.0
      %v5641 = vand.u32 %v5280, 4294901760
      %v5642 = vsub.f32 %v5280, %v5641
      %5643 = vmatpush1.msra.mxu0 %v5642
      %5644 = vmatprep.subr.mxu0 0.0
      %v5645 = vand.u32 %v5282, 4294901760
      %v5646 = vsub.f32 %v5282, %v5645
      %5647 = vmatpush1.msra.mxu0 %v5646
      %5648 = vmatprep.subr.mxu0 0.0
      %v5649 = vand.u32 %v5284, 4294901760
      %v5650 = vsub.f32 %v5284, %v5649
      %5651 = vmatpush1.msra.mxu0 %v5650
      %5652 = vmatprep.subr.mxu0 0.0
      %v5653 = vand.u32 %v5286, 4294901760
      %v5654 = vsub.f32 %v5286, %v5653
      %5655 = vmatpush1.msra.mxu0 %v5654
      %5656 = vmatprep.subr.mxu0 0.0
      %v5657 = vand.u32 %v5288, 4294901760
      %v5658 = vsub.f32 %v5288, %v5657
      %5659 = vmatpush1.msra.mxu0 %v5658
      %5660 = vmatprep.subr.mxu0 0.0
      %v5661 = vand.u32 %v5290, 4294901760
      %v5662 = vsub.f32 %v5290, %v5661
      %5663 = vmatpush1.msra.mxu0 %v5662
      %5664 = vmatprep.subr.mxu0 0.0
      %v5665 = vand.u32 %v5292, 4294901760
      %v5666 = vsub.f32 %v5292, %v5665
      %5667 = vmatpush1.msra.mxu0 %v5666
      %5668 = vmatprep.subr.mxu0 0.0
      %v5669 = vand.u32 %v5294, 4294901760
      %v5670 = vsub.f32 %v5294, %v5669
      %5671 = vmatpush1.msra.mxu0 %v5670
      %5672 = vmatprep.subr.mxu0 0.0
      %5673 = vmatpush1.msra.mxu0 0.0
      %5674 = vmatprep.subr.mxu0 0.0
      %5675 = vmatpush1.msra.mxu0 0.0
      %5676 = vmatprep.subr.mxu0 0.0
      %5677 = vmatpush1.msra.mxu0 0.0
      %5678 = vmatprep.subr.mxu0 0.0
      %5679 = vmatpush1.msra.mxu0 0.0
      %5680 = vmatprep.subr.mxu0 0.0
      %5681 = vmatpush1.msra.mxu0 0.0
      %5682 = vmatprep.subr.mxu0 0.0
      %5683 = vmatpush1.msra.mxu0 0.0
      %5684 = vmatprep.subr.mxu0 0.0
      %5685 = vmatpush1.msra.mxu0 0.0
      %5686 = vmatprep.subr.mxu0 0.0
      %5687 = vmatpush1.msra.mxu0 0.0
      %5688 = vmatprep.subr.mxu0 0.0
      %5689 = vmatpush1.msra.mxu0 0.0
      %5690 = vmatprep.subr.mxu0 0.0
      %5691 = vmatpush1.msra.mxu0 0.0
      %5692 = vmatprep.subr.mxu0 0.0
      %5693 = vmatpush1.msra.mxu0 0.0
      %5694 = vmatprep.subr.mxu0 0.0
      %5695 = vmatpush1.msra.mxu0 0.0
      %5696 = vmatprep.subr.mxu0 0.0
      %5697 = vmatpush1.msra.mxu0 0.0
      %5698 = vmatprep.subr.mxu0 0.0
      %5699 = vmatpush1.msra.mxu0 0.0
      %v5700 = vand.u32 %v5313, 4294901760
      %v5701 = vsub.f32 %v5313, %v5700
      %5702 = vmatprep.mubr.f32.mxu0 %v5701
      %v5703 = vand.u32 %v5295, 4294901760
      %v5704 = vsub.f32 %v5295, %v5703
      %5705 = vmatmul.mubr.f32.gmra.mrb[0].mxu0 %v5704
      %v5706 = vpop.f32.mrb[0].mxu0
      %v5707 = vadd.f32 %v5590, %v5706
      %v5708 = vpop.f32.mrb[0].mxu0
      %v5709 = vand.u32 %v5316, 4294901760
      %v5710 = vsub.f32 %v5316, %v5709
      %5711 = vmatprep.mubr.f32.mxu0 %v5710
      %v5712 = vand.u32 %v5297, 4294901760
      %v5713 = vsub.f32 %v5297, %v5712
      %5714 = vmatmul.mubr.f32.gmra.mrb[0].mxu0 %v5713
      %v5715 = vpop.f32.mrb[0].mxu0
      %v5716 = vadd.f32 %v5597, %v5715
      %v5717 = vpop.f32.mrb[0].mxu0
      %5718 = vdwg.mxu0
      %5719 = vmatprep.subr.mxu0 0.0
      %v5720 = vand.u32 %v5264, 4294901760
      %5721 = vmatpush1.msra.mxu0 %v5720
      %5722 = vmatprep.subr.mxu0 0.0
      %v5723 = vand.u32 %v5266, 4294901760
      %5724 = vmatpush1.msra.mxu0 %v5723
      %5725 = vmatprep.subr.mxu0 0.0
      %v5726 = vand.u32 %v5268, 4294901760
      %5727 = vmatpush1.msra.mxu0 %v5726
      %5728 = vmatprep.subr.mxu0 0.0
      %v5729 = vand.u32 %v5270, 4294901760
      %5730 = vmatpush1.msra.mxu0 %v5729
      %5731 = vmatprep.subr.mxu0 0.0
      %v5732 = vand.u32 %v5272, 4294901760
      %5733 = vmatpush1.msra.mxu0 %v5732
      %5734 = vmatprep.subr.mxu0 0.0
      %v5735 = vand.u32 %v5274, 4294901760
      %5736 = vmatpush1.msra.mxu0 %v5735
      %5737 = vmatprep.subr.mxu0 0.0
      %v5738 = vand.u32 %v5276, 4294901760
      %5739 = vmatpush1.msra.mxu0 %v5738
      %5740 = vmatprep.subr.mxu0 0.0
      %v5741 = vand.u32 %v5278, 4294901760
      %5742 = vmatpush1.msra.mxu0 %v5741
      %5743 = vmatprep.subr.mxu0 0.0
      %v5744 = vand.u32 %v5261, 4294901760
      %5745 = vmatpush1.msra.mxu0 %v5744
      %5746 = vmatprep.subr.mxu0 0.0
      %v5747 = vand.u32 %v5262, 4294901760
      %5748 = vmatpush1.msra.mxu0 %v5747
      %5749 = vmatprep.subr.mxu0 0.0
      %v5750 = vand.u32 %v5280, 4294901760
      %5751 = vmatpush1.msra.mxu0 %v5750
      %5752 = vmatprep.subr.mxu0 0.0
      %v5753 = vand.u32 %v5282, 4294901760
      %5754 = vmatpush1.msra.mxu0 %v5753
      %5755 = vmatprep.subr.mxu0 0.0
      %v5756 = vand.u32 %v5284, 4294901760
      %5757 = vmatpush1.msra.mxu0 %v5756
      %5758 = vmatprep.subr.mxu0 0.0
      %v5759 = vand.u32 %v5286, 4294901760
      %5760 = vmatpush1.msra.mxu0 %v5759
      %5761 = vmatprep.subr.mxu0 0.0
      %v5762 = vand.u32 %v5288, 4294901760
      %5763 = vmatpush1.msra.mxu0 %v5762
      %5764 = vmatprep.subr.mxu0 0.0
      %v5765 = vand.u32 %v5290, 4294901760
      %5766 = vmatpush1.msra.mxu0 %v5765
      %5767 = vmatprep.subr.mxu0 0.0
      %v5768 = vand.u32 %v5292, 4294901760
      %5769 = vmatpush1.msra.mxu0 %v5768
      %5770 = vmatprep.subr.mxu0 0.0
      %v5771 = vand.u32 %v5294, 4294901760
      %5772 = vmatpush1.msra.mxu0 %v5771
      %5773 = vmatprep.subr.mxu0 0.0
      %5774 = vmatpush1.msra.mxu0 0.0
      %5775 = vmatprep.subr.mxu0 0.0
      %5776 = vmatpush1.msra.mxu0 0.0
      %5777 = vmatprep.subr.mxu0 0.0
      %5778 = vmatpush1.msra.mxu0 0.0
      %5779 = vmatprep.subr.mxu0 0.0
      %5780 = vmatpush1.msra.mxu0 0.0
      %5781 = vmatprep.subr.mxu0 0.0
      %5782 = vmatpush1.msra.mxu0 0.0
      %5783 = vmatprep.subr.mxu0 0.0
      %5784 = vmatpush1.msra.mxu0 0.0
      %5785 = vmatprep.subr.mxu0 0.0
      %5786 = vmatpush1.msra.mxu0 0.0
      %5787 = vmatprep.subr.mxu0 0.0
      %5788 = vmatpush1.msra.mxu0 0.0
      %5789 = vmatprep.subr.mxu0 0.0
      %5790 = vmatpush1.msra.mxu0 0.0
      %5791 = vmatprep.subr.mxu0 0.0
      %5792 = vmatpush1.msra.mxu0 0.0
      %5793 = vmatprep.subr.mxu0 0.0
      %5794 = vmatpush1.msra.mxu0 0.0
      %5795 = vmatprep.subr.mxu0 0.0
      %5796 = vmatpush1.msra.mxu0 0.0
      %5797 = vmatprep.subr.mxu0 0.0
      %5798 = vmatpush1.msra.mxu0 0.0
      %5799 = vmatprep.subr.mxu0 0.0
      %5800 = vmatpush1.msra.mxu0 0.0
      %v5801 = vand.u32 %v5313, 4294901760
      %v5802 = vsub.f32 %v5313, %v5801
      %v5803 = vand.u32 %v5802, 4294901760
      %5804 = vmatprep.mubr.f32.mxu0 %v5803
      %v5805 = vand.u32 %v5295, 4294901760
      %v5806 = vsub.f32 %v5295, %v5805
      %v5807 = vand.u32 %v5806, 4294901760
      %5808 = vmatmul.mubr.f32.gmra.mrb[0].mxu0 %v5807
      %v5809 = vpop.f32.mrb[0].mxu0
      %v5810 = vadd.f32 %v5707, %v5809
      %v5811 = vpop.f32.mrb[0].mxu0
      %v5812 = vand.u32 %v5316, 4294901760
      %v5813 = vsub.f32 %v5316, %v5812
      %v5814 = vand.u32 %v5813, 4294901760
      %5815 = vmatprep.mubr.f32.mxu0 %v5814
      %v5816 = vand.u32 %v5297, 4294901760
      %v5817 = vsub.f32 %v5297, %v5816
      %v5818 = vand.u32 %v5817, 4294901760
      %5819 = vmatmul.mubr.f32.gmra.mrb[0].mxu0 %v5818
      %v5820 = vpop.f32.mrb[0].mxu0
      %v5821 = vadd.f32 %v5716, %v5820
      %v5822 = vpop.f32.mrb[0].mxu0
      %5823 = vdwg.mxu0
      %5824 = vmatprep.subr.mxu0 0.0
      %v5825 = vand.u32 %v5264, 4294901760
      %v5826 = vsub.f32 %v5264, %v5825
      %v5827 = vand.u32 %v5826, 4294901760
      %5828 = vmatpush1.msra.mxu0 %v5827
      %5829 = vmatprep.subr.mxu0 0.0
      %v5830 = vand.u32 %v5266, 4294901760
      %v5831 = vsub.f32 %v5266, %v5830
      %v5832 = vand.u32 %v5831, 4294901760
      %5833 = vmatpush1.msra.mxu0 %v5832
      %5834 = vmatprep.subr.mxu0 0.0
      %v5835 = vand.u32 %v5268, 4294901760
      %v5836 = vsub.f32 %v5268, %v5835
      %v5837 = vand.u32 %v5836, 4294901760
      %5838 = vmatpush1.msra.mxu0 %v5837
      %5839 = vmatprep.subr.mxu0 0.0
      %v5840 = vand.u32 %v5270, 4294901760
      %v5841 = vsub.f32 %v5270, %v5840
      %v5842 = vand.u32 %v5841, 4294901760
      %5843 = vmatpush1.msra.mxu0 %v5842
      %5844 = vmatprep.subr.mxu0 0.0
      %v5845 = vand.u32 %v5272, 4294901760
      %v5846 = vsub.f32 %v5272, %v5845
      %v5847 = vand.u32 %v5846, 4294901760
      %5848 = vmatpush1.msra.mxu0 %v5847
      %5849 = vmatprep.subr.mxu0 0.0
      %v5850 = vand.u32 %v5274, 4294901760
      %v5851 = vsub.f32 %v5274, %v5850
      %v5852 = vand.u32 %v5851, 4294901760
      %5853 = vmatpush1.msra.mxu0 %v5852
      %5854 = vmatprep.subr.mxu0 0.0
      %v5855 = vand.u32 %v5276, 4294901760
      %v5856 = vsub.f32 %v5276, %v5855
      %v5857 = vand.u32 %v5856, 4294901760
      %5858 = vmatpush1.msra.mxu0 %v5857
      %5859 = vmatprep.subr.mxu0 0.0
      %v5860 = vand.u32 %v5278, 4294901760
      %v5861 = vsub.f32 %v5278, %v5860
      %v5862 = vand.u32 %v5861, 4294901760
      %5863 = vmatpush1.msra.mxu0 %v5862
      %5864 = vmatprep.subr.mxu0 0.0
      %v5865 = vand.u32 %v5261, 4294901760
      %v5866 = vsub.f32 %v5261, %v5865
      %v5867 = vand.u32 %v5866, 4294901760
      %5868 = vmatpush1.msra.mxu0 %v5867
      %5869 = vmatprep.subr.mxu0 0.0
      %v5870 = vand.u32 %v5262, 4294901760
      %v5871 = vsub.f32 %v5262, %v5870
      %v5872 = vand.u32 %v5871, 4294901760
      %5873 = vmatpush1.msra.mxu0 %v5872
      %5874 = vmatprep.subr.mxu0 0.0
      %v5875 = vand.u32 %v5280, 4294901760
      %v5876 = vsub.f32 %v5280, %v5875
      %v5877 = vand.u32 %v5876, 4294901760
      %5878 = vmatpush1.msra.mxu0 %v5877
      %5879 = vmatprep.subr.mxu0 0.0
      %v5880 = vand.u32 %v5282, 4294901760
      %v5881 = vsub.f32 %v5282, %v5880
      %v5882 = vand.u32 %v5881, 4294901760
      %5883 = vmatpush1.msra.mxu0 %v5882
      %5884 = vmatprep.subr.mxu0 0.0
      %v5885 = vand.u32 %v5284, 4294901760
      %v5886 = vsub.f32 %v5284, %v5885
      %v5887 = vand.u32 %v5886, 4294901760
      %5888 = vmatpush1.msra.mxu0 %v5887
      %5889 = vmatprep.subr.mxu0 0.0
      %v5890 = vand.u32 %v5286, 4294901760
      %v5891 = vsub.f32 %v5286, %v5890
      %v5892 = vand.u32 %v5891, 4294901760
      %5893 = vmatpush1.msra.mxu0 %v5892
      %5894 = vmatprep.subr.mxu0 0.0
      %v5895 = vand.u32 %v5288, 4294901760
      %v5896 = vsub.f32 %v5288, %v5895
      %v5897 = vand.u32 %v5896, 4294901760
      %5898 = vmatpush1.msra.mxu0 %v5897
      %5899 = vmatprep.subr.mxu0 0.0
      %v5900 = vand.u32 %v5290, 4294901760
      %v5901 = vsub.f32 %v5290, %v5900
      %v5902 = vand.u32 %v5901, 4294901760
      %5903 = vmatpush1.msra.mxu0 %v5902
      %5904 = vmatprep.subr.mxu0 0.0
      %v5905 = vand.u32 %v5292, 4294901760
      %v5906 = vsub.f32 %v5292, %v5905
      %v5907 = vand.u32 %v5906, 4294901760
      %5908 = vmatpush1.msra.mxu0 %v5907
      %5909 = vmatprep.subr.mxu0 0.0
      %v5910 = vand.u32 %v5294, 4294901760
      %v5911 = vsub.f32 %v5294, %v5910
      %v5912 = vand.u32 %v5911, 4294901760
      %5913 = vmatpush1.msra.mxu0 %v5912
      %5914 = vmatprep.subr.mxu0 0.0
      %5915 = vmatpush1.msra.mxu0 0.0
      %5916 = vmatprep.subr.mxu0 0.0
      %5917 = vmatpush1.msra.mxu0 0.0
      %5918 = vmatprep.subr.mxu0 0.0
      %5919 = vmatpush1.msra.mxu0 0.0
      %5920 = vmatprep.subr.mxu0 0.0
      %5921 = vmatpush1.msra.mxu0 0.0
      %5922 = vmatprep.subr.mxu0 0.0
      %5923 = vmatpush1.msra.mxu0 0.0
      %5924 = vmatprep.subr.mxu0 0.0
      %5925 = vmatpush1.msra.mxu0 0.0
      %5926 = vmatprep.subr.mxu0 0.0
      %5927 = vmatpush1.msra.mxu0 0.0
      %5928 = vmatprep.subr.mxu0 0.0
      %5929 = vmatpush1.msra.mxu0 0.0
      %5930 = vmatprep.subr.mxu0 0.0
      %5931 = vmatpush1.msra.mxu0 0.0
      %5932 = vmatprep.subr.mxu0 0.0
      %5933 = vmatpush1.msra.mxu0 0.0
      %5934 = vmatprep.subr.mxu0 0.0
      %5935 = vmatpush1.msra.mxu0 0.0
      %5936 = vmatprep.subr.mxu0 0.0
      %5937 = vmatpush1.msra.mxu0 0.0
      %5938 = vmatprep.subr.mxu0 0.0
      %5939 = vmatpush1.msra.mxu0 0.0
      %5940 = vmatprep.subr.mxu0 0.0
      %5941 = vmatpush1.msra.mxu0 0.0
      %v5942 = vand.u32 %v5313, 4294901760
      %5943 = vmatprep.mubr.f32.mxu0 %v5942
      %v5944 = vand.u32 %v5295, 4294901760
      %5945 = vmatmul.mubr.f32.gmra.mrb[0].mxu0 %v5944
      %v5946 = vpop.f32.mrb[0].mxu0
      %v5947 = vadd.f32 %v5810, %v5946
      %v5948 = vpop.f32.mrb[0].mxu0
      %v5949 = vand.u32 %v5316, 4294901760
      %5950 = vmatprep.mubr.f32.mxu0 %v5949
      %v5951 = vand.u32 %v5297, 4294901760
      %5952 = vmatmul.mubr.f32.gmra.mrb[0].mxu0 %v5951
      %v5953 = vpop.f32.mrb[0].mxu0
      %v5954 = vadd.f32 %v5821, %v5953
      %v5955 = vpop.f32.mrb[0].mxu0
      %5956 = vdwg.mxu0
      %5957 = vmatprep.subr.mxu0 0.0
      %v5958 = vand.u32 %v5264, 4294901760
      %5959 = vmatpush1.msra.mxu0 %v5958
      %5960 = vmatprep.subr.mxu0 0.0
      %v5961 = vand.u32 %v5266, 4294901760
      %5962 = vmatpush1.msra.mxu0 %v5961
      %5963 = vmatprep.subr.mxu0 0.0
      %v5964 = vand.u32 %v5268, 4294901760
      %5965 = vmatpush1.msra.mxu0 %v5964
      %5966 = vmatprep.subr.mxu0 0.0
      %v5967 = vand.u32 %v5270, 4294901760
      %5968 = vmatpush1.msra.mxu0 %v5967
      %5969 = vmatprep.subr.mxu0 0.0
      %v5970 = vand.u32 %v5272, 4294901760
      %5971 = vmatpush1.msra.mxu0 %v5970
      %5972 = vmatprep.subr.mxu0 0.0
      %v5973 = vand.u32 %v5274, 4294901760
      %5974 = vmatpush1.msra.mxu0 %v5973
      %5975 = vmatprep.subr.mxu0 0.0
      %v5976 = vand.u32 %v5276, 4294901760
      %5977 = vmatpush1.msra.mxu0 %v5976
      %5978 = vmatprep.subr.mxu0 0.0
      %v5979 = vand.u32 %v5278, 4294901760
      %5980 = vmatpush1.msra.mxu0 %v5979
      %5981 = vmatprep.subr.mxu0 0.0
      %v5982 = vand.u32 %v5261, 4294901760
      %5983 = vmatpush1.msra.mxu0 %v5982
      %5984 = vmatprep.subr.mxu0 0.0
      %v5985 = vand.u32 %v5262, 4294901760
      %5986 = vmatpush1.msra.mxu0 %v5985
      %5987 = vmatprep.subr.mxu0 0.0
      %v5988 = vand.u32 %v5280, 4294901760
      %5989 = vmatpush1.msra.mxu0 %v5988
      %5990 = vmatprep.subr.mxu0 0.0
      %v5991 = vand.u32 %v5282, 4294901760
      %5992 = vmatpush1.msra.mxu0 %v5991
      %5993 = vmatprep.subr.mxu0 0.0
      %v5994 = vand.u32 %v5284, 4294901760
      %5995 = vmatpush1.msra.mxu0 %v5994
      %5996 = vmatprep.subr.mxu0 0.0
      %v5997 = vand.u32 %v5286, 4294901760
      %5998 = vmatpush1.msra.mxu0 %v5997
      %5999 = vmatprep.subr.mxu0 0.0
      %v6000 = vand.u32 %v5288, 4294901760
      %6001 = vmatpush1.msra.mxu0 %v6000
      %6002 = vmatprep.subr.mxu0 0.0
      %v6003 = vand.u32 %v5290, 4294901760
      %6004 = vmatpush1.msra.mxu0 %v6003
      %6005 = vmatprep.subr.mxu0 0.0
      %v6006 = vand.u32 %v5292, 4294901760
      %6007 = vmatpush1.msra.mxu0 %v6006
      %6008 = vmatprep.subr.mxu0 0.0
      %v6009 = vand.u32 %v5294, 4294901760
      %6010 = vmatpush1.msra.mxu0 %v6009
      %6011 = vmatprep.subr.mxu0 0.0
      %6012 = vmatpush1.msra.mxu0 0.0
      %6013 = vmatprep.subr.mxu0 0.0
      %6014 = vmatpush1.msra.mxu0 0.0
      %6015 = vmatprep.subr.mxu0 0.0
      %6016 = vmatpush1.msra.mxu0 0.0
      %6017 = vmatprep.subr.mxu0 0.0
      %6018 = vmatpush1.msra.mxu0 0.0
      %6019 = vmatprep.subr.mxu0 0.0
      %6020 = vmatpush1.msra.mxu0 0.0
      %6021 = vmatprep.subr.mxu0 0.0
      %6022 = vmatpush1.msra.mxu0 0.0
      %6023 = vmatprep.subr.mxu0 0.0
      %6024 = vmatpush1.msra.mxu0 0.0
      %6025 = vmatprep.subr.mxu0 0.0
      %6026 = vmatpush1.msra.mxu0 0.0
      %6027 = vmatprep.subr.mxu0 0.0
      %6028 = vmatpush1.msra.mxu0 0.0
      %6029 = vmatprep.subr.mxu0 0.0
      %6030 = vmatpush1.msra.mxu0 0.0
      %6031 = vmatprep.subr.mxu0 0.0
      %6032 = vmatpush1.msra.mxu0 0.0
      %6033 = vmatprep.subr.mxu0 0.0
      %6034 = vmatpush1.msra.mxu0 0.0
      %6035 = vmatprep.subr.mxu0 0.0
      %6036 = vmatpush1.msra.mxu0 0.0
      %6037 = vmatprep.subr.mxu0 0.0
      %6038 = vmatpush1.msra.mxu0 0.0
      %v6039 = vand.u32 %v5313, 4294901760
      %6040 = vmatprep.mubr.f32.mxu0 %v6039
      %v6041 = vand.u32 %v5295, 4294901760
      %6042 = vmatmul.mubr.f32.gmra.mrb[0].mxu0 %v6041
      %v6043 = vpop.f32.mrb[0].mxu0
      %v6044 = vadd.f32 %v5947, %v6043
      %v6045 = vpop.f32.mrb[0].mxu0
      %v6046 = vand.u32 %v5316, 4294901760
      %6047 = vmatprep.mubr.f32.mxu0 %v6046
      %v6048 = vand.u32 %v5297, 4294901760
      %6049 = vmatmul.mubr.f32.gmra.mrb[0].mxu0 %v6048
      %v6050 = vpop.f32.mrb[0].mxu0
      %v6051 = vadd.f32 %v5954, %v6050
      %v6052 = vpop.f32.mrb[0].mxu0
      %6053 = vdwg.mxu0
      %v6054 = vmax.f32 %v6044, 0.0
      %v6055 = vmax.f32 %v6051, 0.0
      %v6056 = vmul.f32 %v6054, %v5260
      %v6057 = vmul.f32 %v6055, %v5260
      %6058 = vrot.lane.b32.xlu0 %v6056, 10
      %v6059 = vpop.permute.xlu0 %6058
      %6060 = vrot.lane.b32.xlu0 %v6057, 10
      %v6061 = vpop.permute.xlu0 %6060
      %6062 = vrot.lane.b32.xlu0 %v6056, 9
      %v6063 = vpop.permute.xlu0 %6062
      %6064 = vrot.lane.b32.xlu0 %v6057, 9
      %v6065 = vpop.permute.xlu0 %6064
      %6066 = vrot.lane.b32.xlu0 %v6056, 8
      %v6067 = vpop.permute.xlu0 %6066
      %6068 = vrot.lane.b32.xlu0 %v6057, 8
      %v6069 = vpop.permute.xlu0 %6068
      %6070 = vrot.lane.b32.xlu0 %v6056, 1
      %v6071 = vpop.permute.xlu0 %6070
      %6072 = vrot.lane.b32.xlu0 %v6057, 1
      %v6073 = vpop.permute.xlu0 %6072
      %6074 = vrot.lane.b32.xlu0 %v6056, 127
      %v6075 = vpop.permute.xlu0 %6074
      %6076 = vrot.lane.b32.xlu0 %v6057, 127
      %v6077 = vpop.permute.xlu0 %6076
      %6078 = vrot.lane.b32.xlu0 %v6056, 120
      %v6079 = vpop.permute.xlu0 %6078
      %6080 = vrot.lane.b32.xlu0 %v6057, 120
      %v6081 = vpop.permute.xlu0 %6080
      %6082 = vrot.lane.b32.xlu0 %v6056, 119
      %v6083 = vpop.permute.xlu0 %6082
      %6084 = vrot.lane.b32.xlu0 %v6057, 119
      %v6085 = vpop.permute.xlu0 %6084
      %6086 = vrot.lane.b32.xlu0 %v6056, 118
      %v6087 = vpop.permute.xlu0 %6086
      %6088 = vrot.lane.b32.xlu0 %v6057, 118
      %v6089 = vpop.permute.xlu0 %6088
      %v6090 = vld [vmem:[%s9 + $0x20] sm:$0xff]
      %v6091 = vld [vmem:[%s9 + $0x28] sm:$0xff]
      %v6092 = vld [vmem:[%s9 + $0x30] sm:$0xff]
      %v6093 = vld [vmem:[%s9 + $0x38] sm:$0xff]
      %v6094 = vld [vmem:[%s10 + $0x10] sm:$0xff]
      %v6095 = vld [vmem:[%s10 + $0x18] sm:$0xff]
      %6097 = vset.pattern.permute.xlu0 0
      %6098 = vperm.xlu0 %6097, %v6094
      %v6099 = vpop.permute.xlu0 %6098
      %6102 = vset.pattern.permute.xlu0 0
      %6103 = vperm.xlu0 %6102, %v6095
      %v6104 = vpop.permute.xlu0 %6103
      %v6107 = vsel %vm5311, %v6091, 0
      %v6110 = vsel %vm5311, %v6093, 0
      %6112 = vmatprep.subr.mxu0 0.0
      %v6113 = vand.u32 %v6059, 4294901760
      %6114 = vmatpush1.msra.mxu0 %v6113
      %6115 = vmatprep.subr.mxu0 0.0
      %v6116 = vand.u32 %v6061, 4294901760
      %6117 = vmatpush1.msra.mxu0 %v6116
      %6118 = vmatprep.subr.mxu0 0.0
      %v6119 = vand.u32 %v6063, 4294901760
      %6120 = vmatpush1.msra.mxu0 %v6119
      %6121 = vmatprep.subr.mxu0 0.0
      %v6122 = vand.u32 %v6065, 4294901760
      %6123 = vmatpush1.msra.mxu0 %v6122
      %6124 = vmatprep.subr.mxu0 0.0
      %v6125 = vand.u32 %v6067, 4294901760
      %6126 = vmatpush1.msra.mxu0 %v6125
      %6127 = vmatprep.subr.mxu0 0.0
      %v6128 = vand.u32 %v6069, 4294901760
      %6129 = vmatpush1.msra.mxu0 %v6128
      %6130 = vmatprep.subr.mxu0 0.0
      %v6131 = vand.u32 %v6071, 4294901760
      %6132 = vmatpush1.msra.mxu0 %v6131
      %6133 = vmatprep.subr.mxu0 0.0
      %v6134 = vand.u32 %v6073, 4294901760
      %6135 = vmatpush1.msra.mxu0 %v6134
      %6136 = vmatprep.subr.mxu0 0.0
      %v6137 = vand.u32 %v6056, 4294901760
      %6138 = vmatpush1.msra.mxu0 %v6137
      %6139 = vmatprep.subr.mxu0 0.0
      %v6140 = vand.u32 %v6057, 4294901760
      %6141 = vmatpush1.msra.mxu0 %v6140
      %6142 = vmatprep.subr.mxu0 0.0
      %v6143 = vand.u32 %v6075, 4294901760
      %6144 = vmatpush1.msra.mxu0 %v6143
      %6145 = vmatprep.subr.mxu0 0.0
      %v6146 = vand.u32 %v6077, 4294901760
      %6147 = vmatpush1.msra.mxu0 %v6146
      %6148 = vmatprep.subr.mxu0 0.0
      %v6149 = vand.u32 %v6079, 4294901760
      %6150 = vmatpush1.msra.mxu0 %v6149
      %6151 = vmatprep.subr.mxu0 0.0
      %v6152 = vand.u32 %v6081, 4294901760
      %6153 = vmatpush1.msra.mxu0 %v6152
      %6154 = vmatprep.subr.mxu0 0.0
      %v6155 = vand.u32 %v6083, 4294901760
      %6156 = vmatpush1.msra.mxu0 %v6155
      %6157 = vmatprep.subr.mxu0 0.0
      %v6158 = vand.u32 %v6085, 4294901760
      %6159 = vmatpush1.msra.mxu0 %v6158
      %6160 = vmatprep.subr.mxu0 0.0
      %v6161 = vand.u32 %v6087, 4294901760
      %6162 = vmatpush1.msra.mxu0 %v6161
      %6163 = vmatprep.subr.mxu0 0.0
      %v6164 = vand.u32 %v6089, 4294901760
      %6165 = vmatpush1.msra.mxu0 %v6164
      %6166 = vmatprep.subr.mxu0 0.0
      %6167 = vmatpush1.msra.mxu0 0.0
      %6168 = vmatprep.subr.mxu0 0.0
      %6169 = vmatpush1.msra.mxu0 0.0
      %6170 = vmatprep.subr.mxu0 0.0
      %6171 = vmatpush1.msra.mxu0 0.0
      %6172 = vmatprep.subr.mxu0 0.0
      %6173 = vmatpush1.msra.mxu0 0.0
      %6174 = vmatprep.subr.mxu0 0.0
      %6175 = vmatpush1.msra.mxu0 0.0
      %6176 = vmatprep.subr.mxu0 0.0
      %6177 = vmatpush1.msra.mxu0 0.0
      %6178 = vmatprep.subr.mxu0 0.0
      %6179 = vmatpush1.msra.mxu0 0.0
      %6180 = vmatprep.subr.mxu0 0.0
      %6181 = vmatpush1.msra.mxu0 0.0
      %6182 = vmatprep.subr.mxu0 0.0
      %6183 = vmatpush1.msra.mxu0 0.0
      %6184 = vmatprep.subr.mxu0 0.0
      %6185 = vmatpush1.msra.mxu0 0.0
      %6186 = vmatprep.subr.mxu0 0.0
      %6187 = vmatpush1.msra.mxu0 0.0
      %6188 = vmatprep.subr.mxu0 0.0
      %6189 = vmatpush1.msra.mxu0 0.0
      %6190 = vmatprep.subr.mxu0 0.0
      %6191 = vmatpush1.msra.mxu0 0.0
      %6192 = vmatprep.subr.mxu0 0.0
      %6193 = vmatpush1.msra.mxu0 0.0
      %v6194 = vand.u32 %v6107, 4294901760
      %v6195 = vsub.f32 %v6107, %v6194
      %v6196 = vand.u32 %v6195, 4294901760
      %v6197 = vsub.f32 %v6195, %v6196
      %v6198 = vand.u32 %v6197, 4294901760
      %6199 = vmatprep.mubr.f32.mxu0 %v6198
      %v6200 = vand.u32 %v6090, 4294901760
      %v6201 = vsub.f32 %v6090, %v6200
      %v6202 = vand.u32 %v6201, 4294901760
      %v6203 = vsub.f32 %v6201, %v6202
      %v6204 = vand.u32 %v6203, 4294901760
      %6205 = vmatmul.mubr.f32.gmra.mrb[0].mxu0 %v6204
      %v6206 = vpop.f32.mrb[0].mxu0
      %v6207 = vadd.f32 %v6099, %v6206
      %v6208 = vpop.f32.mrb[0].mxu0
      %v6209 = vand.u32 %v6110, 4294901760
      %v6210 = vsub.f32 %v6110, %v6209
      %v6211 = vand.u32 %v6210, 4294901760
      %v6212 = vsub.f32 %v6210, %v6211
      %v6213 = vand.u32 %v6212, 4294901760
      %6214 = vmatprep.mubr.f32.mxu0 %v6213
      %v6215 = vand.u32 %v6092, 4294901760
      %v6216 = vsub.f32 %v6092, %v6215
      %v6217 = vand.u32 %v6216, 4294901760
      %v6218 = vsub.f32 %v6216, %v6217
      %v6219 = vand.u32 %v6218, 4294901760
      %6220 = vmatmul.mubr.f32.gmra.mrb[0].mxu0 %v6219
      %v6221 = vpop.f32.mrb[0].mxu0
      %v6222 = vadd.f32 %v6104, %v6221
      %v6223 = vpop.f32.mrb[0].mxu0
      %6224 = vdwg.mxu0
      %6225 = vmatprep.subr.mxu0 0.0
      %v6226 = vand.u32 %v6059, 4294901760
      %v6227 = vsub.f32 %v6059, %v6226
      %v6228 = vand.u32 %v6227, 4294901760
      %v6229 = vsub.f32 %v6227, %v6228
      %v6230 = vand.u32 %v6229, 4294901760
      %6231 = vmatpush1.msra.mxu0 %v6230
      %6232 = vmatprep.subr.mxu0 0.0
      %v6233 = vand.u32 %v6061, 4294901760
      %v6234 = vsub.f32 %v6061, %v6233
      %v6235 = vand.u32 %v6234, 4294901760
      %v6236 = vsub.f32 %v6234, %v6235
      %v6237 = vand.u32 %v6236, 4294901760
      %6238 = vmatpush1.msra.mxu0 %v6237
      %6239 = vmatprep.subr.mxu0 0.0
      %v6240 = vand.u32 %v6063, 4294901760
      %v6241 = vsub.f32 %v6063, %v6240
      %v6242 = vand.u32 %v6241, 4294901760
      %v6243 = vsub.f32 %v6241, %v6242
      %v6244 = vand.u32 %v6243, 4294901760
      %6245 = vmatpush1.msra.mxu0 %v6244
      %6246 = vmatprep.subr.mxu0 0.0
      %v6247 = vand.u32 %v6065, 4294901760
      %v6248 = vsub.f32 %v6065, %v6247
      %v6249 = vand.u32 %v6248, 4294901760
      %v6250 = vsub.f32 %v6248, %v6249
      %v6251 = vand.u32 %v6250, 4294901760
      %6252 = vmatpush1.msra.mxu0 %v6251
      %6253 = vmatprep.subr.mxu0 0.0
      %v6254 = vand.u32 %v6067, 4294901760
      %v6255 = vsub.f32 %v6067, %v6254
      %v6256 = vand.u32 %v6255, 4294901760
      %v6257 = vsub.f32 %v6255, %v6256
      %v6258 = vand.u32 %v6257, 4294901760
      %6259 = vmatpush1.msra.mxu0 %v6258
      %6260 = vmatprep.subr.mxu0 0.0
      %v6261 = vand.u32 %v6069, 4294901760
      %v6262 = vsub.f32 %v6069, %v6261
      %v6263 = vand.u32 %v6262, 4294901760
      %v6264 = vsub.f32 %v6262, %v6263
      %v6265 = vand.u32 %v6264, 4294901760
      %6266 = vmatpush1.msra.mxu0 %v6265
      %6267 = vmatprep.subr.mxu0 0.0
      %v6268 = vand.u32 %v6071, 4294901760
      %v6269 = vsub.f32 %v6071, %v6268
      %v6270 = vand.u32 %v6269, 4294901760
      %v6271 = vsub.f32 %v6269, %v6270
      %v6272 = vand.u32 %v6271, 4294901760
      %6273 = vmatpush1.msra.mxu0 %v6272
      %6274 = vmatprep.subr.mxu0 0.0
      %v6275 = vand.u32 %v6073, 4294901760
      %v6276 = vsub.f32 %v6073, %v6275
      %v6277 = vand.u32 %v6276, 4294901760
      %v6278 = vsub.f32 %v6276, %v6277
      %v6279 = vand.u32 %v6278, 4294901760
      %6280 = vmatpush1.msra.mxu0 %v6279
      %6281 = vmatprep.subr.mxu0 0.0
      %v6282 = vand.u32 %v6056, 4294901760
      %v6283 = vsub.f32 %v6056, %v6282
      %v6284 = vand.u32 %v6283, 4294901760
      %v6285 = vsub.f32 %v6283, %v6284
      %v6286 = vand.u32 %v6285, 4294901760
      %6287 = vmatpush1.msra.mxu0 %v6286
      %6288 = vmatprep.subr.mxu0 0.0
      %v6289 = vand.u32 %v6057, 4294901760
      %v6290 = vsub.f32 %v6057, %v6289
      %v6291 = vand.u32 %v6290, 4294901760
      %v6292 = vsub.f32 %v6290, %v6291
      %v6293 = vand.u32 %v6292, 4294901760
      %6294 = vmatpush1.msra.mxu0 %v6293
      %6295 = vmatprep.subr.mxu0 0.0
      %v6296 = vand.u32 %v6075, 4294901760
      %v6297 = vsub.f32 %v6075, %v6296
      %v6298 = vand.u32 %v6297, 4294901760
      %v6299 = vsub.f32 %v6297, %v6298
      %v6300 = vand.u32 %v6299, 4294901760
      %6301 = vmatpush1.msra.mxu0 %v6300
      %6302 = vmatprep.subr.mxu0 0.0
      %v6303 = vand.u32 %v6077, 4294901760
      %v6304 = vsub.f32 %v6077, %v6303
      %v6305 = vand.u32 %v6304, 4294901760
      %v6306 = vsub.f32 %v6304, %v6305
      %v6307 = vand.u32 %v6306, 4294901760
      %6308 = vmatpush1.msra.mxu0 %v6307
      %6309 = vmatprep.subr.mxu0 0.0
      %v6310 = vand.u32 %v6079, 4294901760
      %v6311 = vsub.f32 %v6079, %v6310
      %v6312 = vand.u32 %v6311, 4294901760
      %v6313 = vsub.f32 %v6311, %v6312
      %v6314 = vand.u32 %v6313, 4294901760
      %6315 = vmatpush1.msra.mxu0 %v6314
      %6316 = vmatprep.subr.mxu0 0.0
      %v6317 = vand.u32 %v6081, 4294901760
      %v6318 = vsub.f32 %v6081, %v6317
      %v6319 = vand.u32 %v6318, 4294901760
      %v6320 = vsub.f32 %v6318, %v6319
      %v6321 = vand.u32 %v6320, 4294901760
      %6322 = vmatpush1.msra.mxu0 %v6321
      %6323 = vmatprep.subr.mxu0 0.0
      %v6324 = vand.u32 %v6083, 4294901760
      %v6325 = vsub.f32 %v6083, %v6324
      %v6326 = vand.u32 %v6325, 4294901760
      %v6327 = vsub.f32 %v6325, %v6326
      %v6328 = vand.u32 %v6327, 4294901760
      %6329 = vmatpush1.msra.mxu0 %v6328
      %6330 = vmatprep.subr.mxu0 0.0
      %v6331 = vand.u32 %v6085, 4294901760
      %v6332 = vsub.f32 %v6085, %v6331
      %v6333 = vand.u32 %v6332, 4294901760
      %v6334 = vsub.f32 %v6332, %v6333
      %v6335 = vand.u32 %v6334, 4294901760
      %6336 = vmatpush1.msra.mxu0 %v6335
      %6337 = vmatprep.subr.mxu0 0.0
      %v6338 = vand.u32 %v6087, 4294901760
      %v6339 = vsub.f32 %v6087, %v6338
      %v6340 = vand.u32 %v6339, 4294901760
      %v6341 = vsub.f32 %v6339, %v6340
      %v6342 = vand.u32 %v6341, 4294901760
      %6343 = vmatpush1.msra.mxu0 %v6342
      %6344 = vmatprep.subr.mxu0 0.0
      %v6345 = vand.u32 %v6089, 4294901760
      %v6346 = vsub.f32 %v6089, %v6345
      %v6347 = vand.u32 %v6346, 4294901760
      %v6348 = vsub.f32 %v6346, %v6347
      %v6349 = vand.u32 %v6348, 4294901760
      %6350 = vmatpush1.msra.mxu0 %v6349
      %6351 = vmatprep.subr.mxu0 0.0
      %6352 = vmatpush1.msra.mxu0 0.0
      %6353 = vmatprep.subr.mxu0 0.0
      %6354 = vmatpush1.msra.mxu0 0.0
      %6355 = vmatprep.subr.mxu0 0.0
      %6356 = vmatpush1.msra.mxu0 0.0
      %6357 = vmatprep.subr.mxu0 0.0
      %6358 = vmatpush1.msra.mxu0 0.0
      %6359 = vmatprep.subr.mxu0 0.0
      %6360 = vmatpush1.msra.mxu0 0.0
      %6361 = vmatprep.subr.mxu0 0.0
      %6362 = vmatpush1.msra.mxu0 0.0
      %6363 = vmatprep.subr.mxu0 0.0
      %6364 = vmatpush1.msra.mxu0 0.0
      %6365 = vmatprep.subr.mxu0 0.0
      %6366 = vmatpush1.msra.mxu0 0.0
      %6367 = vmatprep.subr.mxu0 0.0
      %6368 = vmatpush1.msra.mxu0 0.0
      %6369 = vmatprep.subr.mxu0 0.0
      %6370 = vmatpush1.msra.mxu0 0.0
      %6371 = vmatprep.subr.mxu0 0.0
      %6372 = vmatpush1.msra.mxu0 0.0
      %6373 = vmatprep.subr.mxu0 0.0
      %6374 = vmatpush1.msra.mxu0 0.0
      %6375 = vmatprep.subr.mxu0 0.0
      %6376 = vmatpush1.msra.mxu0 0.0
      %6377 = vmatprep.subr.mxu0 0.0
      %6378 = vmatpush1.msra.mxu0 0.0
      %v6379 = vand.u32 %v6107, 4294901760
      %6380 = vmatprep.mubr.f32.mxu0 %v6379
      %v6381 = vand.u32 %v6090, 4294901760
      %6382 = vmatmul.mubr.f32.gmra.mrb[0].mxu0 %v6381
      %v6383 = vpop.f32.mrb[0].mxu0
      %v6384 = vadd.f32 %v6207, %v6383
      %v6385 = vpop.f32.mrb[0].mxu0
      %v6386 = vand.u32 %v6110, 4294901760
      %6387 = vmatprep.mubr.f32.mxu0 %v6386
      %v6388 = vand.u32 %v6092, 4294901760
      %6389 = vmatmul.mubr.f32.gmra.mrb[0].mxu0 %v6388
      %v6390 = vpop.f32.mrb[0].mxu0
      %v6391 = vadd.f32 %v6222, %v6390
      %v6392 = vpop.f32.mrb[0].mxu0
      %6393 = vdwg.mxu0
      %6394 = vmatprep.subr.mxu0 0.0
      %v6395 = vand.u32 %v6059, 4294901760
      %v6396 = vsub.f32 %v6059, %v6395
      %6397 = vmatpush1.msra.mxu0 %v6396
      %6398 = vmatprep.subr.mxu0 0.0
      %v6399 = vand.u32 %v6061, 4294901760
      %v6400 = vsub.f32 %v6061, %v6399
      %6401 = vmatpush1.msra.mxu0 %v6400
      %6402 = vmatprep.subr.mxu0 0.0
      %v6403 = vand.u32 %v6063, 4294901760
      %v6404 = vsub.f32 %v6063, %v6403
      %6405 = vmatpush1.msra.mxu0 %v6404
      %6406 = vmatprep.subr.mxu0 0.0
      %v6407 = vand.u32 %v6065, 4294901760
      %v6408 = vsub.f32 %v6065, %v6407
      %6409 = vmatpush1.msra.mxu0 %v6408
      %6410 = vmatprep.subr.mxu0 0.0
      %v6411 = vand.u32 %v6067, 4294901760
      %v6412 = vsub.f32 %v6067, %v6411
      %6413 = vmatpush1.msra.mxu0 %v6412
      %6414 = vmatprep.subr.mxu0 0.0
      %v6415 = vand.u32 %v6069, 4294901760
      %v6416 = vsub.f32 %v6069, %v6415
      %6417 = vmatpush1.msra.mxu0 %v6416
      %6418 = vmatprep.subr.mxu0 0.0
      %v6419 = vand.u32 %v6071, 4294901760
      %v6420 = vsub.f32 %v6071, %v6419
      %6421 = vmatpush1.msra.mxu0 %v6420
      %6422 = vmatprep.subr.mxu0 0.0
      %v6423 = vand.u32 %v6073, 4294901760
      %v6424 = vsub.f32 %v6073, %v6423
      %6425 = vmatpush1.msra.mxu0 %v6424
      %6426 = vmatprep.subr.mxu0 0.0
      %v6427 = vand.u32 %v6056, 4294901760
      %v6428 = vsub.f32 %v6056, %v6427
      %6429 = vmatpush1.msra.mxu0 %v6428
      %6430 = vmatprep.subr.mxu0 0.0
      %v6431 = vand.u32 %v6057, 4294901760
      %v6432 = vsub.f32 %v6057, %v6431
      %6433 = vmatpush1.msra.mxu0 %v6432
      %6434 = vmatprep.subr.mxu0 0.0
      %v6435 = vand.u32 %v6075, 4294901760
      %v6436 = vsub.f32 %v6075, %v6435
      %6437 = vmatpush1.msra.mxu0 %v6436
      %6438 = vmatprep.subr.mxu0 0.0
      %v6439 = vand.u32 %v6077, 4294901760
      %v6440 = vsub.f32 %v6077, %v6439
      %6441 = vmatpush1.msra.mxu0 %v6440
      %6442 = vmatprep.subr.mxu0 0.0
      %v6443 = vand.u32 %v6079, 4294901760
      %v6444 = vsub.f32 %v6079, %v6443
      %6445 = vmatpush1.msra.mxu0 %v6444
      %6446 = vmatprep.subr.mxu0 0.0
      %v6447 = vand.u32 %v6081, 4294901760
      %v6448 = vsub.f32 %v6081, %v6447
      %6449 = vmatpush1.msra.mxu0 %v6448
      %6450 = vmatprep.subr.mxu0 0.0
      %v6451 = vand.u32 %v6083, 4294901760
      %v6452 = vsub.f32 %v6083, %v6451
      %6453 = vmatpush1.msra.mxu0 %v6452
      %6454 = vmatprep.subr.mxu0 0.0
      %v6455 = vand.u32 %v6085, 4294901760
      %v6456 = vsub.f32 %v6085, %v6455
      %6457 = vmatpush1.msra.mxu0 %v6456
      %6458 = vmatprep.subr.mxu0 0.0
      %v6459 = vand.u32 %v6087, 4294901760
      %v6460 = vsub.f32 %v6087, %v6459
      %6461 = vmatpush1.msra.mxu0 %v6460
      %6462 = vmatprep.subr.mxu0 0.0
      %v6463 = vand.u32 %v6089, 4294901760
      %v6464 = vsub.f32 %v6089, %v6463
      %6465 = vmatpush1.msra.mxu0 %v6464
      %6466 = vmatprep.subr.mxu0 0.0
      %6467 = vmatpush1.msra.mxu0 0.0
      %6468 = vmatprep.subr.mxu0 0.0
      %6469 = vmatpush1.msra.mxu0 0.0
      %6470 = vmatprep.subr.mxu0 0.0
      %6471 = vmatpush1.msra.mxu0 0.0
      %6472 = vmatprep.subr.mxu0 0.0
      %6473 = vmatpush1.msra.mxu0 0.0
      %6474 = vmatprep.subr.mxu0 0.0
      %6475 = vmatpush1.msra.mxu0 0.0
      %6476 = vmatprep.subr.mxu0 0.0
      %6477 = vmatpush1.msra.mxu0 0.0
      %6478 = vmatprep.subr.mxu0 0.0
      %6479 = vmatpush1.msra.mxu0 0.0
      %6480 = vmatprep.subr.mxu0 0.0
      %6481 = vmatpush1.msra.mxu0 0.0
      %6482 = vmatprep.subr.mxu0 0.0
      %6483 = vmatpush1.msra.mxu0 0.0
      %6484 = vmatprep.subr.mxu0 0.0
      %6485 = vmatpush1.msra.mxu0 0.0
      %6486 = vmatprep.subr.mxu0 0.0
      %6487 = vmatpush1.msra.mxu0 0.0
      %6488 = vmatprep.subr.mxu0 0.0
      %6489 = vmatpush1.msra.mxu0 0.0
      %6490 = vmatprep.subr.mxu0 0.0
      %6491 = vmatpush1.msra.mxu0 0.0
      %6492 = vmatprep.subr.mxu0 0.0
      %6493 = vmatpush1.msra.mxu0 0.0
      %v6494 = vand.u32 %v6107, 4294901760
      %v6495 = vsub.f32 %v6107, %v6494
      %6496 = vmatprep.mubr.f32.mxu0 %v6495
      %v6497 = vand.u32 %v6090, 4294901760
      %v6498 = vsub.f32 %v6090, %v6497
      %6499 = vmatmul.mubr.f32.gmra.mrb[0].mxu0 %v6498
      %v6500 = vpop.f32.mrb[0].mxu0
      %v6501 = vadd.f32 %v6384, %v6500
      %v6502 = vpop.f32.mrb[0].mxu0
      %v6503 = vand.u32 %v6110, 4294901760
      %v6504 = vsub.f32 %v6110, %v6503
      %6505 = vmatprep.mubr.f32.mxu0 %v6504
      %v6506 = vand.u32 %v6092, 4294901760
      %v6507 = vsub.f32 %v6092, %v6506
      %6508 = vmatmul.mubr.f32.gmra.mrb[0].mxu0 %v6507
      %v6509 = vpop.f32.mrb[0].mxu0
      %v6510 = vadd.f32 %v6391, %v6509
      %v6511 = vpop.f32.mrb[0].mxu0
      %6512 = vdwg.mxu0
      %6513 = vmatprep.subr.mxu0 0.0
      %v6514 = vand.u32 %v6059, 4294901760
      %6515 = vmatpush1.msra.mxu0 %v6514
      %6516 = vmatprep.subr.mxu0 0.0
      %v6517 = vand.u32 %v6061, 4294901760
      %6518 = vmatpush1.msra.mxu0 %v6517
      %6519 = vmatprep.subr.mxu0 0.0
      %v6520 = vand.u32 %v6063, 4294901760
      %6521 = vmatpush1.msra.mxu0 %v6520
      %6522 = vmatprep.subr.mxu0 0.0
      %v6523 = vand.u32 %v6065, 4294901760
      %6524 = vmatpush1.msra.mxu0 %v6523
      %6525 = vmatprep.subr.mxu0 0.0
      %v6526 = vand.u32 %v6067, 4294901760
      %6527 = vmatpush1.msra.mxu0 %v6526
      %6528 = vmatprep.subr.mxu0 0.0
      %v6529 = vand.u32 %v6069, 4294901760
      %6530 = vmatpush1.msra.mxu0 %v6529
      %6531 = vmatprep.subr.mxu0 0.0
      %v6532 = vand.u32 %v6071, 4294901760
      %6533 = vmatpush1.msra.mxu0 %v6532
      %6534 = vmatprep.subr.mxu0 0.0
      %v6535 = vand.u32 %v6073, 4294901760
      %6536 = vmatpush1.msra.mxu0 %v6535
      %6537 = vmatprep.subr.mxu0 0.0
      %v6538 = vand.u32 %v6056, 4294901760
      %6539 = vmatpush1.msra.mxu0 %v6538
      %6540 = vmatprep.subr.mxu0 0.0
      %v6541 = vand.u32 %v6057, 4294901760
      %6542 = vmatpush1.msra.mxu0 %v6541
      %6543 = vmatprep.subr.mxu0 0.0
      %v6544 = vand.u32 %v6075, 4294901760
      %6545 = vmatpush1.msra.mxu0 %v6544
      %6546 = vmatprep.subr.mxu0 0.0
      %v6547 = vand.u32 %v6077, 4294901760
      %6548 = vmatpush1.msra.mxu0 %v6547
      %6549 = vmatprep.subr.mxu0 0.0
      %v6550 = vand.u32 %v6079, 4294901760
      %6551 = vmatpush1.msra.mxu0 %v6550
      %6552 = vmatprep.subr.mxu0 0.0
      %v6553 = vand.u32 %v6081, 4294901760
      %6554 = vmatpush1.msra.mxu0 %v6553
      %6555 = vmatprep.subr.mxu0 0.0
      %v6556 = vand.u32 %v6083, 4294901760
      %6557 = vmatpush1.msra.mxu0 %v6556
      %6558 = vmatprep.subr.mxu0 0.0
      %v6559 = vand.u32 %v6085, 4294901760
      %6560 = vmatpush1.msra.mxu0 %v6559
      %6561 = vmatprep.subr.mxu0 0.0
      %v6562 = vand.u32 %v6087, 4294901760
      %6563 = vmatpush1.msra.mxu0 %v6562
      %6564 = vmatprep.subr.mxu0 0.0
      %v6565 = vand.u32 %v6089, 4294901760
      %6566 = vmatpush1.msra.mxu0 %v6565
      %6567 = vmatprep.subr.mxu0 0.0
      %6568 = vmatpush1.msra.mxu0 0.0
      %6569 = vmatprep.subr.mxu0 0.0
      %6570 = vmatpush1.msra.mxu0 0.0
      %6571 = vmatprep.subr.mxu0 0.0
      %6572 = vmatpush1.msra.mxu0 0.0
      %6573 = vmatprep.subr.mxu0 0.0
      %6574 = vmatpush1.msra.mxu0 0.0
      %6575 = vmatprep.subr.mxu0 0.0
      %6576 = vmatpush1.msra.mxu0 0.0
      %6577 = vmatprep.subr.mxu0 0.0
      %6578 = vmatpush1.msra.mxu0 0.0
      %6579 = vmatprep.subr.mxu0 0.0
      %6580 = vmatpush1.msra.mxu0 0.0
      %6581 = vmatprep.subr.mxu0 0.0
      %6582 = vmatpush1.msra.mxu0 0.0
      %6583 = vmatprep.subr.mxu0 0.0
      %6584 = vmatpush1.msra.mxu0 0.0
      %6585 = vmatprep.subr.mxu0 0.0
      %6586 = vmatpush1.msra.mxu0 0.0
      %6587 = vmatprep.subr.mxu0 0.0
      %6588 = vmatpush1.msra.mxu0 0.0
      %6589 = vmatprep.subr.mxu0 0.0
      %6590 = vmatpush1.msra.mxu0 0.0
      %6591 = vmatprep.subr.mxu0 0.0
      %6592 = vmatpush1.msra.mxu0 0.0
      %6593 = vmatprep.subr.mxu0 0.0
      %6594 = vmatpush1.msra.mxu0 0.0
      %v6595 = vand.u32 %v6107, 4294901760
      %v6596 = vsub.f32 %v6107, %v6595
      %v6597 = vand.u32 %v6596, 4294901760
      %6598 = vmatprep.mubr.f32.mxu0 %v6597
      %v6599 = vand.u32 %v6090, 4294901760
      %v6600 = vsub.f32 %v6090, %v6599
      %v6601 = vand.u32 %v6600, 4294901760
      %6602 = vmatmul.mubr.f32.gmra.mrb[0].mxu0 %v6601
      %v6603 = vpop.f32.mrb[0].mxu0
      %v6604 = vadd.f32 %v6501, %v6603
      %v6605 = vpop.f32.mrb[0].mxu0
      %v6606 = vand.u32 %v6110, 4294901760
      %v6607 = vsub.f32 %v6110, %v6606
      %v6608 = vand.u32 %v6607, 4294901760
      %6609 = vmatprep.mubr.f32.mxu0 %v6608
      %v6610 = vand.u32 %v6092, 4294901760
      %v6611 = vsub.f32 %v6092, %v6610
      %v6612 = vand.u32 %v6611, 4294901760
      %6613 = vmatmul.mubr.f32.gmra.mrb[0].mxu0 %v6612
      %v6614 = vpop.f32.mrb[0].mxu0
      %v6615 = vadd.f32 %v6510, %v6614
      %v6616 = vpop.f32.mrb[0].mxu0
      %6617 = vdwg.mxu0
      %6618 = vmatprep.subr.mxu0 0.0
      %v6619 = vand.u32 %v6059, 4294901760
      %v6620 = vsub.f32 %v6059, %v6619
      %v6621 = vand.u32 %v6620, 4294901760
      %6622 = vmatpush1.msra.mxu0 %v6621
      %6623 = vmatprep.subr.mxu0 0.0
      %v6624 = vand.u32 %v6061, 4294901760
      %v6625 = vsub.f32 %v6061, %v6624
      %v6626 = vand.u32 %v6625, 4294901760
      %6627 = vmatpush1.msra.mxu0 %v6626
      %6628 = vmatprep.subr.mxu0 0.0
      %v6629 = vand.u32 %v6063, 4294901760
      %v6630 = vsub.f32 %v6063, %v6629
      %v6631 = vand.u32 %v6630, 4294901760
      %6632 = vmatpush1.msra.mxu0 %v6631
      %6633 = vmatprep.subr.mxu0 0.0
      %v6634 = vand.u32 %v6065, 4294901760
      %v6635 = vsub.f32 %v6065, %v6634
      %v6636 = vand.u32 %v6635, 4294901760
      %6637 = vmatpush1.msra.mxu0 %v6636
      %6638 = vmatprep.subr.mxu0 0.0
      %v6639 = vand.u32 %v6067, 4294901760
      %v6640 = vsub.f32 %v6067, %v6639
      %v6641 = vand.u32 %v6640, 4294901760
      %6642 = vmatpush1.msra.mxu0 %v6641
      %6643 = vmatprep.subr.mxu0 0.0
      %v6644 = vand.u32 %v6069, 4294901760
      %v6645 = vsub.f32 %v6069, %v6644
      %v6646 = vand.u32 %v6645, 4294901760
      %6647 = vmatpush1.msra.mxu0 %v6646
      %6648 = vmatprep.subr.mxu0 0.0
      %v6649 = vand.u32 %v6071, 4294901760
      %v6650 = vsub.f32 %v6071, %v6649
      %v6651 = vand.u32 %v6650, 4294901760
      %6652 = vmatpush1.msra.mxu0 %v6651
      %6653 = vmatprep.subr.mxu0 0.0
      %v6654 = vand.u32 %v6073, 4294901760
      %v6655 = vsub.f32 %v6073, %v6654
      %v6656 = vand.u32 %v6655, 4294901760
      %6657 = vmatpush1.msra.mxu0 %v6656
      %6658 = vmatprep.subr.mxu0 0.0
      %v6659 = vand.u32 %v6056, 4294901760
      %v6660 = vsub.f32 %v6056, %v6659
      %v6661 = vand.u32 %v6660, 4294901760
      %6662 = vmatpush1.msra.mxu0 %v6661
      %6663 = vmatprep.subr.mxu0 0.0
      %v6664 = vand.u32 %v6057, 4294901760
      %v6665 = vsub.f32 %v6057, %v6664
      %v6666 = vand.u32 %v6665, 4294901760
      %6667 = vmatpush1.msra.mxu0 %v6666
      %6668 = vmatprep.subr.mxu0 0.0
      %v6669 = vand.u32 %v6075, 4294901760
      %v6670 = vsub.f32 %v6075, %v6669
      %v6671 = vand.u32 %v6670, 4294901760
      %6672 = vmatpush1.msra.mxu0 %v6671
      %6673 = vmatprep.subr.mxu0 0.0
      %v6674 = vand.u32 %v6077, 4294901760
      %v6675 = vsub.f32 %v6077, %v6674
      %v6676 = vand.u32 %v6675, 4294901760
      %6677 = vmatpush1.msra.mxu0 %v6676
      %6678 = vmatprep.subr.mxu0 0.0
      %v6679 = vand.u32 %v6079, 4294901760
      %v6680 = vsub.f32 %v6079, %v6679
      %v6681 = vand.u32 %v6680, 4294901760
      %6682 = vmatpush1.msra.mxu0 %v6681
      %6683 = vmatprep.subr.mxu0 0.0
      %v6684 = vand.u32 %v6081, 4294901760
      %v6685 = vsub.f32 %v6081, %v6684
      %v6686 = vand.u32 %v6685, 4294901760
      %6687 = vmatpush1.msra.mxu0 %v6686
      %6688 = vmatprep.subr.mxu0 0.0
      %v6689 = vand.u32 %v6083, 4294901760
      %v6690 = vsub.f32 %v6083, %v6689
      %v6691 = vand.u32 %v6690, 4294901760
      %6692 = vmatpush1.msra.mxu0 %v6691
      %6693 = vmatprep.subr.mxu0 0.0
      %v6694 = vand.u32 %v6085, 4294901760
      %v6695 = vsub.f32 %v6085, %v6694
      %v6696 = vand.u32 %v6695, 4294901760
      %6697 = vmatpush1.msra.mxu0 %v6696
      %6698 = vmatprep.subr.mxu0 0.0
      %v6699 = vand.u32 %v6087, 4294901760
      %v6700 = vsub.f32 %v6087, %v6699
      %v6701 = vand.u32 %v6700, 4294901760
      %6702 = vmatpush1.msra.mxu0 %v6701
      %6703 = vmatprep.subr.mxu0 0.0
      %v6704 = vand.u32 %v6089, 4294901760
      %v6705 = vsub.f32 %v6089, %v6704
      %v6706 = vand.u32 %v6705, 4294901760
      %6707 = vmatpush1.msra.mxu0 %v6706
      %6708 = vmatprep.subr.mxu0 0.0
      %6709 = vmatpush1.msra.mxu0 0.0
      %6710 = vmatprep.subr.mxu0 0.0
      %6711 = vmatpush1.msra.mxu0 0.0
      %6712 = vmatprep.subr.mxu0 0.0
      %6713 = vmatpush1.msra.mxu0 0.0
      %6714 = vmatprep.subr.mxu0 0.0
      %6715 = vmatpush1.msra.mxu0 0.0
      %6716 = vmatprep.subr.mxu0 0.0
      %6717 = vmatpush1.msra.mxu0 0.0
      %6718 = vmatprep.subr.mxu0 0.0
      %6719 = vmatpush1.msra.mxu0 0.0
      %6720 = vmatprep.subr.mxu0 0.0
      %6721 = vmatpush1.msra.mxu0 0.0
      %6722 = vmatprep.subr.mxu0 0.0
      %6723 = vmatpush1.msra.mxu0 0.0
      %6724 = vmatprep.subr.mxu0 0.0
      %6725 = vmatpush1.msra.mxu0 0.0
      %6726 = vmatprep.subr.mxu0 0.0
      %6727 = vmatpush1.msra.mxu0 0.0
      %6728 = vmatprep.subr.mxu0 0.0
      %6729 = vmatpush1.msra.mxu0 0.0
      %6730 = vmatprep.subr.mxu0 0.0
      %6731 = vmatpush1.msra.mxu0 0.0
      %6732 = vmatprep.subr.mxu0 0.0
      %6733 = vmatpush1.msra.mxu0 0.0
      %6734 = vmatprep.subr.mxu0 0.0
      %6735 = vmatpush1.msra.mxu0 0.0
      %v6736 = vand.u32 %v6107, 4294901760
      %6737 = vmatprep.mubr.f32.mxu0 %v6736
      %v6738 = vand.u32 %v6090, 4294901760
      %6739 = vmatmul.mubr.f32.gmra.mrb[0].mxu0 %v6738
      %v6740 = vpop.f32.mrb[0].mxu0
      %v6741 = vadd.f32 %v6604, %v6740
      %v6742 = vpop.f32.mrb[0].mxu0
      %v6743 = vand.u32 %v6110, 4294901760
      %6744 = vmatprep.mubr.f32.mxu0 %v6743
      %v6745 = vand.u32 %v6092, 4294901760
      %6746 = vmatmul.mubr.f32.gmra.mrb[0].mxu0 %v6745
      %v6747 = vpop.f32.mrb[0].mxu0
      %v6748 = vadd.f32 %v6615, %v6747
      %v6749 = vpop.f32.mrb[0].mxu0
      %6750 = vdwg.mxu0
      %6751 = vmatprep.subr.mxu0 0.0
      %v6752 = vand.u32 %v6059, 4294901760
      %6753 = vmatpush1.msra.mxu0 %v6752
      %6754 = vmatprep.subr.mxu0 0.0
      %v6755 = vand.u32 %v6061, 4294901760
      %6756 = vmatpush1.msra.mxu0 %v6755
      %6757 = vmatprep.subr.mxu0 0.0
      %v6758 = vand.u32 %v6063, 4294901760
      %6759 = vmatpush1.msra.mxu0 %v6758
      %6760 = vmatprep.subr.mxu0 0.0
      %v6761 = vand.u32 %v6065, 4294901760
      %6762 = vmatpush1.msra.mxu0 %v6761
      %6763 = vmatprep.subr.mxu0 0.0
      %v6764 = vand.u32 %v6067, 4294901760
      %6765 = vmatpush1.msra.mxu0 %v6764
      %6766 = vmatprep.subr.mxu0 0.0
      %v6767 = vand.u32 %v6069, 4294901760
      %6768 = vmatpush1.msra.mxu0 %v6767
      %6769 = vmatprep.subr.mxu0 0.0
      %v6770 = vand.u32 %v6071, 4294901760
      %6771 = vmatpush1.msra.mxu0 %v6770
      %6772 = vmatprep.subr.mxu0 0.0
      %v6773 = vand.u32 %v6073, 4294901760
      %6774 = vmatpush1.msra.mxu0 %v6773
      %6775 = vmatprep.subr.mxu0 0.0
      %v6776 = vand.u32 %v6056, 4294901760
      %6777 = vmatpush1.msra.mxu0 %v6776
      %6778 = vmatprep.subr.mxu0 0.0
      %v6779 = vand.u32 %v6057, 4294901760
      %6780 = vmatpush1.msra.mxu0 %v6779
      %6781 = vmatprep.subr.mxu0 0.0
      %v6782 = vand.u32 %v6075, 4294901760
      %6783 = vmatpush1.msra.mxu0 %v6782
      %6784 = vmatprep.subr.mxu0 0.0
      %v6785 = vand.u32 %v6077, 4294901760
      %6786 = vmatpush1.msra.mxu0 %v6785
      %6787 = vmatprep.subr.mxu0 0.0
      %v6788 = vand.u32 %v6079, 4294901760
      %6789 = vmatpush1.msra.mxu0 %v6788
      %6790 = vmatprep.subr.mxu0 0.0
      %v6791 = vand.u32 %v6081, 4294901760
      %6792 = vmatpush1.msra.mxu0 %v6791
      %6793 = vmatprep.subr.mxu0 0.0
      %v6794 = vand.u32 %v6083, 4294901760
      %6795 = vmatpush1.msra.mxu0 %v6794
      %6796 = vmatprep.subr.mxu0 0.0
      %v6797 = vand.u32 %v6085, 4294901760
      %6798 = vmatpush1.msra.mxu0 %v6797
      %6799 = vmatprep.subr.mxu0 0.0
      %v6800 = vand.u32 %v6087, 4294901760
      %6801 = vmatpush1.msra.mxu0 %v6800
      %6802 = vmatprep.subr.mxu0 0.0
      %v6803 = vand.u32 %v6089, 4294901760
      %6804 = vmatpush1.msra.mxu0 %v6803
      %6805 = vmatprep.subr.mxu0 0.0
      %6806 = vmatpush1.msra.mxu0 0.0
      %6807 = vmatprep.subr.mxu0 0.0
      %6808 = vmatpush1.msra.mxu0 0.0
      %6809 = vmatprep.subr.mxu0 0.0
      %6810 = vmatpush1.msra.mxu0 0.0
      %6811 = vmatprep.subr.mxu0 0.0
      %6812 = vmatpush1.msra.mxu0 0.0
      %6813 = vmatprep.subr.mxu0 0.0
      %6814 = vmatpush1.msra.mxu0 0.0
      %6815 = vmatprep.subr.mxu0 0.0
      %6816 = vmatpush1.msra.mxu0 0.0
      %6817 = vmatprep.subr.mxu0 0.0
      %6818 = vmatpush1.msra.mxu0 0.0
      %6819 = vmatprep.subr.mxu0 0.0
      %6820 = vmatpush1.msra.mxu0 0.0
      %6821 = vmatprep.subr.mxu0 0.0
      %6822 = vmatpush1.msra.mxu0 0.0
      %6823 = vmatprep.subr.mxu0 0.0
      %6824 = vmatpush1.msra.mxu0 0.0
      %6825 = vmatprep.subr.mxu0 0.0
      %6826 = vmatpush1.msra.mxu0 0.0
      %6827 = vmatprep.subr.mxu0 0.0
      %6828 = vmatpush1.msra.mxu0 0.0
      %6829 = vmatprep.subr.mxu0 0.0
      %6830 = vmatpush1.msra.mxu0 0.0
      %6831 = vmatprep.subr.mxu0 0.0
      %6832 = vmatpush1.msra.mxu0 0.0
      %v6833 = vand.u32 %v6107, 4294901760
      %6834 = vmatprep.mubr.f32.mxu0 %v6833
      %v6835 = vand.u32 %v6090, 4294901760
      %6836 = vmatmul.mubr.f32.gmra.mrb[0].mxu0 %v6835
      %v6837 = vpop.f32.mrb[0].mxu0
      %v6838 = vadd.f32 %v6741, %v6837
      %v6839 = vpop.f32.mrb[0].mxu0
      %v6840 = vand.u32 %v6110, 4294901760
      %6841 = vmatprep.mubr.f32.mxu0 %v6840
      %v6842 = vand.u32 %v6092, 4294901760
      %6843 = vmatmul.mubr.f32.gmra.mrb[0].mxu0 %v6842
      %v6844 = vpop.f32.mrb[0].mxu0
      %v6845 = vadd.f32 %v6748, %v6844
      %v6846 = vpop.f32.mrb[0].mxu0
      %6847 = vdwg.mxu0
      %v6848 = vmax.f32 %v6838, 0.0
      %v6849 = vmax.f32 %v6845, 0.0
      %v6850 = vmul.f32 %v6848, %v5260
      %v6851 = vmul.f32 %v6849, %v5260
      %6852 = vrot.lane.b32.xlu0 %v6850, 10
      %v6853 = vpop.permute.xlu0 %6852
      %6854 = vrot.lane.b32.xlu0 %v6851, 10
      %v6855 = vpop.permute.xlu0 %6854
      %6856 = vrot.lane.b32.xlu0 %v6850, 9
      %v6857 = vpop.permute.xlu0 %6856
      %6858 = vrot.lane.b32.xlu0 %v6851, 9
      %v6859 = vpop.permute.xlu0 %6858
      %6860 = vrot.lane.b32.xlu0 %v6850, 8
      %v6861 = vpop.permute.xlu0 %6860
      %6862 = vrot.lane.b32.xlu0 %v6851, 8
      %v6863 = vpop.permute.xlu0 %6862
      %6864 = vrot.lane.b32.xlu0 %v6850, 1
      %v6865 = vpop.permute.xlu0 %6864
      %6866 = vrot.lane.b32.xlu0 %v6851, 1
      %v6867 = vpop.permute.xlu0 %6866
      %6868 = vrot.lane.b32.xlu0 %v6850, 127
      %v6869 = vpop.permute.xlu0 %6868
      %6870 = vrot.lane.b32.xlu0 %v6851, 127
      %v6871 = vpop.permute.xlu0 %6870
      %6872 = vrot.lane.b32.xlu0 %v6850, 120
      %v6873 = vpop.permute.xlu0 %6872
      %6874 = vrot.lane.b32.xlu0 %v6851, 120
      %v6875 = vpop.permute.xlu0 %6874
      %6876 = vrot.lane.b32.xlu0 %v6850, 119
      %v6877 = vpop.permute.xlu0 %6876
      %6878 = vrot.lane.b32.xlu0 %v6851, 119
      %v6879 = vpop.permute.xlu0 %6878
      %6880 = vrot.lane.b32.xlu0 %v6850, 118
      %v6881 = vpop.permute.xlu0 %6880
      %6882 = vrot.lane.b32.xlu0 %v6851, 118
      %v6883 = vpop.permute.xlu0 %6882
      %v6884 = vld [vmem:[%s9 + $0x40] sm:$0xff]
      %v6885 = vld [vmem:[%s9 + $0x48] sm:$0xff]
      %v6886 = vld [vmem:[%s9 + $0x50] sm:$0xff]
      %v6887 = vld [vmem:[%s9 + $0x58] sm:$0xff]
      %v6888 = vld [vmem:[%s10 + $0x20] sm:$0xff]
      %v6889 = vld [vmem:[%s10 + $0x28] sm:$0xff]
      %6891 = vset.pattern.permute.xlu0 0
      %6892 = vperm.xlu0 %6891, %v6888
      %v6893 = vpop.permute.xlu0 %6892
      %6896 = vset.pattern.permute.xlu0 0
      %6897 = vperm.xlu0 %6896, %v6889
      %v6898 = vpop.permute.xlu0 %6897
      %v6901 = vsel %vm5311, %v6885, 0
      %v6904 = vsel %vm5311, %v6887, 0
      %6906 = vmatprep.subr.mxu0 0.0
      %v6907 = vand.u32 %v6853, 4294901760
      %6908 = vmatpush1.msra.mxu0 %v6907
      %6909 = vmatprep.subr.mxu0 0.0
      %v6910 = vand.u32 %v6855, 4294901760
      %6911 = vmatpush1.msra.mxu0 %v6910
      %6912 = vmatprep.subr.mxu0 0.0
      %v6913 = vand.u32 %v6857, 4294901760
      %6914 = vmatpush1.msra.mxu0 %v6913
      %6915 = vmatprep.subr.mxu0 0.0
      %v6916 = vand.u32 %v6859, 4294901760
      %6917 = vmatpush1.msra.mxu0 %v6916
      %6918 = vmatprep.subr.mxu0 0.0
      %v6919 = vand.u32 %v6861, 4294901760
      %6920 = vmatpush1.msra.mxu0 %v6919
      %6921 = vmatprep.subr.mxu0 0.0
      %v6922 = vand.u32 %v6863, 4294901760
      %6923 = vmatpush1.msra.mxu0 %v6922
      %6924 = vmatprep.subr.mxu0 0.0
      %v6925 = vand.u32 %v6865, 4294901760
      %6926 = vmatpush1.msra.mxu0 %v6925
      %6927 = vmatprep.subr.mxu0 0.0
      %v6928 = vand.u32 %v6867, 4294901760
      %6929 = vmatpush1.msra.mxu0 %v6928
      %6930 = vmatprep.subr.mxu0 0.0
      %v6931 = vand.u32 %v6850, 4294901760
      %6932 = vmatpush1.msra.mxu0 %v6931
      %6933 = vmatprep.subr.mxu0 0.0
      %v6934 = vand.u32 %v6851, 4294901760
      %6935 = vmatpush1.msra.mxu0 %v6934
      %6936 = vmatprep.subr.mxu0 0.0
      %v6937 = vand.u32 %v6869, 4294901760
      %6938 = vmatpush1.msra.mxu0 %v6937
      %6939 = vmatprep.subr.mxu0 0.0
      %v6940 = vand.u32 %v6871, 4294901760
      %6941 = vmatpush1.msra.mxu0 %v6940
      %6942 = vmatprep.subr.mxu0 0.0
      %v6943 = vand.u32 %v6873, 4294901760
      %6944 = vmatpush1.msra.mxu0 %v6943
      %6945 = vmatprep.subr.mxu0 0.0
      %v6946 = vand.u32 %v6875, 4294901760
      %6947 = vmatpush1.msra.mxu0 %v6946
      %6948 = vmatprep.subr.mxu0 0.0
      %v6949 = vand.u32 %v6877, 4294901760
      %6950 = vmatpush1.msra.mxu0 %v6949
      %6951 = vmatprep.subr.mxu0 0.0
      %v6952 = vand.u32 %v6879, 4294901760
      %6953 = vmatpush1.msra.mxu0 %v6952
      %6954 = vmatprep.subr.mxu0 0.0
      %v6955 = vand.u32 %v6881, 4294901760
      %6956 = vmatpush1.msra.mxu0 %v6955
      %6957 = vmatprep.subr.mxu0 0.0
      %v6958 = vand.u32 %v6883, 4294901760
      %6959 = vmatpush1.msra.mxu0 %v6958
      %6960 = vmatprep.subr.mxu0 0.0
      %6961 = vmatpush1.msra.mxu0 0.0
      %6962 = vmatprep.subr.mxu0 0.0
      %6963 = vmatpush1.msra.mxu0 0.0
      %6964 = vmatprep.subr.mxu0 0.0
      %6965 = vmatpush1.msra.mxu0 0.0
      %6966 = vmatprep.subr.mxu0 0.0
      %6967 = vmatpush1.msra.mxu0 0.0
      %6968 = vmatprep.subr.mxu0 0.0
      %6969 = vmatpush1.msra.mxu0 0.0
      %6970 = vmatprep.subr.mxu0 0.0
      %6971 = vmatpush1.msra.mxu0 0.0
      %6972 = vmatprep.subr.mxu0 0.0
      %6973 = vmatpush1.msra.mxu0 0.0
      %6974 = vmatprep.subr.mxu0 0.0
      %6975 = vmatpush1.msra.mxu0 0.0
      %6976 = vmatprep.subr.mxu0 0.0
      %6977 = vmatpush1.msra.mxu0 0.0
      %6978 = vmatprep.subr.mxu0 0.0
      %6979 = vmatpush1.msra.mxu0 0.0
      %6980 = vmatprep.subr.mxu0 0.0
      %6981 = vmatpush1.msra.mxu0 0.0
      %6982 = vmatprep.subr.mxu0 0.0
      %6983 = vmatpush1.msra.mxu0 0.0
      %6984 = vmatprep.subr.mxu0 0.0
      %6985 = vmatpush1.msra.mxu0 0.0
      %6986 = vmatprep.subr.mxu0 0.0
      %6987 = vmatpush1.msra.mxu0 0.0
      %v6988 = vand.u32 %v6901, 4294901760
      %v6989 = vsub.f32 %v6901, %v6988
      %v6990 = vand.u32 %v6989, 4294901760
      %v6991 = vsub.f32 %v6989, %v6990
      %v6992 = vand.u32 %v6991, 4294901760
      %6993 = vmatprep.mubr.f32.mxu0 %v6992
      %v6994 = vand.u32 %v6884, 4294901760
      %v6995 = vsub.f32 %v6884, %v6994
      %v6996 = vand.u32 %v6995, 4294901760
      %v6997 = vsub.f32 %v6995, %v6996
      %v6998 = vand.u32 %v6997, 4294901760
      %6999 = vmatmul.mubr.f32.gmra.mrb[0].mxu0 %v6998
      %v7000 = vpop.f32.mrb[0].mxu0
      %v7001 = vadd.f32 %v6893, %v7000
      %v7002 = vpop.f32.mrb[0].mxu0
      %v7003 = vand.u32 %v6904, 4294901760
      %v7004 = vsub.f32 %v6904, %v7003
      %v7005 = vand.u32 %v7004, 4294901760
      %v7006 = vsub.f32 %v7004, %v7005
      %v7007 = vand.u32 %v7006, 4294901760
      %7008 = vmatprep.mubr.f32.mxu0 %v7007
      %v7009 = vand.u32 %v6886, 4294901760
      %v7010 = vsub.f32 %v6886, %v7009
      %v7011 = vand.u32 %v7010, 4294901760
      %v7012 = vsub.f32 %v7010, %v7011
      %v7013 = vand.u32 %v7012, 4294901760
      %7014 = vmatmul.mubr.f32.gmra.mrb[0].mxu0 %v7013
      %v7015 = vpop.f32.mrb[0].mxu0
      %v7016 = vadd.f32 %v6898, %v7015
      %v7017 = vpop.f32.mrb[0].mxu0
      %7018 = vdwg.mxu0
      %7019 = vmatprep.subr.mxu0 0.0
      %v7020 = vand.u32 %v6853, 4294901760
      %v7021 = vsub.f32 %v6853, %v7020
      %v7022 = vand.u32 %v7021, 4294901760
      %v7023 = vsub.f32 %v7021, %v7022
      %v7024 = vand.u32 %v7023, 4294901760
      %7025 = vmatpush1.msra.mxu0 %v7024
      %7026 = vmatprep.subr.mxu0 0.0
      %v7027 = vand.u32 %v6855, 4294901760
      %v7028 = vsub.f32 %v6855, %v7027
      %v7029 = vand.u32 %v7028, 4294901760
      %v7030 = vsub.f32 %v7028, %v7029
      %v7031 = vand.u32 %v7030, 4294901760
      %7032 = vmatpush1.msra.mxu0 %v7031
      %7033 = vmatprep.subr.mxu0 0.0
      %v7034 = vand.u32 %v6857, 4294901760
      %v7035 = vsub.f32 %v6857, %v7034
      %v7036 = vand.u32 %v7035, 4294901760
      %v7037 = vsub.f32 %v7035, %v7036
      %v7038 = vand.u32 %v7037, 4294901760
      %7039 = vmatpush1.msra.mxu0 %v7038
      %7040 = vmatprep.subr.mxu0 0.0
      %v7041 = vand.u32 %v6859, 4294901760
      %v7042 = vsub.f32 %v6859, %v7041
      %v7043 = vand.u32 %v7042, 4294901760
      %v7044 = vsub.f32 %v7042, %v7043
      %v7045 = vand.u32 %v7044, 4294901760
      %7046 = vmatpush1.msra.mxu0 %v7045
      %7047 = vmatprep.subr.mxu0 0.0
      %v7048 = vand.u32 %v6861, 4294901760
      %v7049 = vsub.f32 %v6861, %v7048
      %v7050 = vand.u32 %v7049, 4294901760
      %v7051 = vsub.f32 %v7049, %v7050
      %v7052 = vand.u32 %v7051, 4294901760
      %7053 = vmatpush1.msra.mxu0 %v7052
      %7054 = vmatprep.subr.mxu0 0.0
      %v7055 = vand.u32 %v6863, 4294901760
      %v7056 = vsub.f32 %v6863, %v7055
      %v7057 = vand.u32 %v7056, 4294901760
      %v7058 = vsub.f32 %v7056, %v7057
      %v7059 = vand.u32 %v7058, 4294901760
      %7060 = vmatpush1.msra.mxu0 %v7059
      %7061 = vmatprep.subr.mxu0 0.0
      %v7062 = vand.u32 %v6865, 4294901760
      %v7063 = vsub.f32 %v6865, %v7062
      %v7064 = vand.u32 %v7063, 4294901760
      %v7065 = vsub.f32 %v7063, %v7064
      %v7066 = vand.u32 %v7065, 4294901760
      %7067 = vmatpush1.msra.mxu0 %v7066
      %7068 = vmatprep.subr.mxu0 0.0
      %v7069 = vand.u32 %v6867, 4294901760
      %v7070 = vsub.f32 %v6867, %v7069
      %v7071 = vand.u32 %v7070, 4294901760
      %v7072 = vsub.f32 %v7070, %v7071
      %v7073 = vand.u32 %v7072, 4294901760
      %7074 = vmatpush1.msra.mxu0 %v7073
      %7075 = vmatprep.subr.mxu0 0.0
      %v7076 = vand.u32 %v6850, 4294901760
      %v7077 = vsub.f32 %v6850, %v7076
      %v7078 = vand.u32 %v7077, 4294901760
      %v7079 = vsub.f32 %v7077, %v7078
      %v7080 = vand.u32 %v7079, 4294901760
      %7081 = vmatpush1.msra.mxu0 %v7080
      %7082 = vmatprep.subr.mxu0 0.0
      %v7083 = vand.u32 %v6851, 4294901760
      %v7084 = vsub.f32 %v6851, %v7083
      %v7085 = vand.u32 %v7084, 4294901760
      %v7086 = vsub.f32 %v7084, %v7085
      %v7087 = vand.u32 %v7086, 4294901760
      %7088 = vmatpush1.msra.mxu0 %v7087
      %7089 = vmatprep.subr.mxu0 0.0
      %v7090 = vand.u32 %v6869, 4294901760
      %v7091 = vsub.f32 %v6869, %v7090
      %v7092 = vand.u32 %v7091, 4294901760
      %v7093 = vsub.f32 %v7091, %v7092
      %v7094 = vand.u32 %v7093, 4294901760
      %7095 = vmatpush1.msra.mxu0 %v7094
      %7096 = vmatprep.subr.mxu0 0.0
      %v7097 = vand.u32 %v6871, 4294901760
      %v7098 = vsub.f32 %v6871, %v7097
      %v7099 = vand.u32 %v7098, 4294901760
      %v7100 = vsub.f32 %v7098, %v7099
      %v7101 = vand.u32 %v7100, 4294901760
      %7102 = vmatpush1.msra.mxu0 %v7101
      %7103 = vmatprep.subr.mxu0 0.0
      %v7104 = vand.u32 %v6873, 4294901760
      %v7105 = vsub.f32 %v6873, %v7104
      %v7106 = vand.u32 %v7105, 4294901760
      %v7107 = vsub.f32 %v7105, %v7106
      %v7108 = vand.u32 %v7107, 4294901760
      %7109 = vmatpush1.msra.mxu0 %v7108
      %7110 = vmatprep.subr.mxu0 0.0
      %v7111 = vand.u32 %v6875, 4294901760
      %v7112 = vsub.f32 %v6875, %v7111
      %v7113 = vand.u32 %v7112, 4294901760
      %v7114 = vsub.f32 %v7112, %v7113
      %v7115 = vand.u32 %v7114, 4294901760
      %7116 = vmatpush1.msra.mxu0 %v7115
      %7117 = vmatprep.subr.mxu0 0.0
      %v7118 = vand.u32 %v6877, 4294901760
      %v7119 = vsub.f32 %v6877, %v7118
      %v7120 = vand.u32 %v7119, 4294901760
      %v7121 = vsub.f32 %v7119, %v7120
      %v7122 = vand.u32 %v7121, 4294901760
      %7123 = vmatpush1.msra.mxu0 %v7122
      %7124 = vmatprep.subr.mxu0 0.0
      %v7125 = vand.u32 %v6879, 4294901760
      %v7126 = vsub.f32 %v6879, %v7125
      %v7127 = vand.u32 %v7126, 4294901760
      %v7128 = vsub.f32 %v7126, %v7127
      %v7129 = vand.u32 %v7128, 4294901760
      %7130 = vmatpush1.msra.mxu0 %v7129
      %7131 = vmatprep.subr.mxu0 0.0
      %v7132 = vand.u32 %v6881, 4294901760
      %v7133 = vsub.f32 %v6881, %v7132
      %v7134 = vand.u32 %v7133, 4294901760
      %v7135 = vsub.f32 %v7133, %v7134
      %v7136 = vand.u32 %v7135, 4294901760
      %7137 = vmatpush1.msra.mxu0 %v7136
      %7138 = vmatprep.subr.mxu0 0.0
      %v7139 = vand.u32 %v6883, 4294901760
      %v7140 = vsub.f32 %v6883, %v7139
      %v7141 = vand.u32 %v7140, 4294901760
      %v7142 = vsub.f32 %v7140, %v7141
      %v7143 = vand.u32 %v7142, 4294901760
      %7144 = vmatpush1.msra.mxu0 %v7143
      %7145 = vmatprep.subr.mxu0 0.0
      %7146 = vmatpush1.msra.mxu0 0.0
      %7147 = vmatprep.subr.mxu0 0.0
      %7148 = vmatpush1.msra.mxu0 0.0
      %7149 = vmatprep.subr.mxu0 0.0
      %7150 = vmatpush1.msra.mxu0 0.0
      %7151 = vmatprep.subr.mxu0 0.0
      %7152 = vmatpush1.msra.mxu0 0.0
      %7153 = vmatprep.subr.mxu0 0.0
      %7154 = vmatpush1.msra.mxu0 0.0
      %7155 = vmatprep.subr.mxu0 0.0
      %7156 = vmatpush1.msra.mxu0 0.0
      %7157 = vmatprep.subr.mxu0 0.0
      %7158 = vmatpush1.msra.mxu0 0.0
      %7159 = vmatprep.subr.mxu0 0.0
      %7160 = vmatpush1.msra.mxu0 0.0
      %7161 = vmatprep.subr.mxu0 0.0
      %7162 = vmatpush1.msra.mxu0 0.0
      %7163 = vmatprep.subr.mxu0 0.0
      %7164 = vmatpush1.msra.mxu0 0.0
      %7165 = vmatprep.subr.mxu0 0.0
      %7166 = vmatpush1.msra.mxu0 0.0
      %7167 = vmatprep.subr.mxu0 0.0
      %7168 = vmatpush1.msra.mxu0 0.0
      %7169 = vmatprep.subr.mxu0 0.0
      %7170 = vmatpush1.msra.mxu0 0.0
      %7171 = vmatprep.subr.mxu0 0.0
      %7172 = vmatpush1.msra.mxu0 0.0
      %v7173 = vand.u32 %v6901, 4294901760
      %7174 = vmatprep.mubr.f32.mxu0 %v7173
      %v7175 = vand.u32 %v6884, 4294901760
      %7176 = vmatmul.mubr.f32.gmra.mrb[0].mxu0 %v7175
      %v7177 = vpop.f32.mrb[0].mxu0
      %v7178 = vadd.f32 %v7001, %v7177
      %v7179 = vpop.f32.mrb[0].mxu0
      %v7180 = vand.u32 %v6904, 4294901760
      %7181 = vmatprep.mubr.f32.mxu0 %v7180
      %v7182 = vand.u32 %v6886, 4294901760
      %7183 = vmatmul.mubr.f32.gmra.mrb[0].mxu0 %v7182
      %v7184 = vpop.f32.mrb[0].mxu0
      %v7185 = vadd.f32 %v7016, %v7184
      %v7186 = vpop.f32.mrb[0].mxu0
      %7187 = vdwg.mxu0
      %7188 = vmatprep.subr.mxu0 0.0
      %v7189 = vand.u32 %v6853, 4294901760
      %v7190 = vsub.f32 %v6853, %v7189
      %7191 = vmatpush1.msra.mxu0 %v7190
      %7192 = vmatprep.subr.mxu0 0.0
      %v7193 = vand.u32 %v6855, 4294901760
      %v7194 = vsub.f32 %v6855, %v7193
      %7195 = vmatpush1.msra.mxu0 %v7194
      %7196 = vmatprep.subr.mxu0 0.0
      %v7197 = vand.u32 %v6857, 4294901760
      %v7198 = vsub.f32 %v6857, %v7197
      %7199 = vmatpush1.msra.mxu0 %v7198
      %7200 = vmatprep.subr.mxu0 0.0
      %v7201 = vand.u32 %v6859, 4294901760
      %v7202 = vsub.f32 %v6859, %v7201
      %7203 = vmatpush1.msra.mxu0 %v7202
      %7204 = vmatprep.subr.mxu0 0.0
      %v7205 = vand.u32 %v6861, 4294901760
      %v7206 = vsub.f32 %v6861, %v7205
      %7207 = vmatpush1.msra.mxu0 %v7206
      %7208 = vmatprep.subr.mxu0 0.0
      %v7209 = vand.u32 %v6863, 4294901760
      %v7210 = vsub.f32 %v6863, %v7209
      %7211 = vmatpush1.msra.mxu0 %v7210
      %7212 = vmatprep.subr.mxu0 0.0
      %v7213 = vand.u32 %v6865, 4294901760
      %v7214 = vsub.f32 %v6865, %v7213
      %7215 = vmatpush1.msra.mxu0 %v7214
      %7216 = vmatprep.subr.mxu0 0.0
      %v7217 = vand.u32 %v6867, 4294901760
      %v7218 = vsub.f32 %v6867, %v7217
      %7219 = vmatpush1.msra.mxu0 %v7218
      %7220 = vmatprep.subr.mxu0 0.0
      %v7221 = vand.u32 %v6850, 4294901760
      %v7222 = vsub.f32 %v6850, %v7221
      %7223 = vmatpush1.msra.mxu0 %v7222
      %7224 = vmatprep.subr.mxu0 0.0
      %v7225 = vand.u32 %v6851, 4294901760
      %v7226 = vsub.f32 %v6851, %v7225
      %7227 = vmatpush1.msra.mxu0 %v7226
      %7228 = vmatprep.subr.mxu0 0.0
      %v7229 = vand.u32 %v6869, 4294901760
      %v7230 = vsub.f32 %v6869, %v7229
      %7231 = vmatpush1.msra.mxu0 %v7230
      %7232 = vmatprep.subr.mxu0 0.0
      %v7233 = vand.u32 %v6871, 4294901760
      %v7234 = vsub.f32 %v6871, %v7233
      %7235 = vmatpush1.msra.mxu0 %v7234
      %7236 = vmatprep.subr.mxu0 0.0
      %v7237 = vand.u32 %v6873, 4294901760
      %v7238 = vsub.f32 %v6873, %v7237
      %7239 = vmatpush1.msra.mxu0 %v7238
      %7240 = vmatprep.subr.mxu0 0.0
      %v7241 = vand.u32 %v6875, 4294901760
      %v7242 = vsub.f32 %v6875, %v7241
      %7243 = vmatpush1.msra.mxu0 %v7242
      %7244 = vmatprep.subr.mxu0 0.0
      %v7245 = vand.u32 %v6877, 4294901760
      %v7246 = vsub.f32 %v6877, %v7245
      %7247 = vmatpush1.msra.mxu0 %v7246
      %7248 = vmatprep.subr.mxu0 0.0
      %v7249 = vand.u32 %v6879, 4294901760
      %v7250 = vsub.f32 %v6879, %v7249
      %7251 = vmatpush1.msra.mxu0 %v7250
      %7252 = vmatprep.subr.mxu0 0.0
      %v7253 = vand.u32 %v6881, 4294901760
      %v7254 = vsub.f32 %v6881, %v7253
      %7255 = vmatpush1.msra.mxu0 %v7254
      %7256 = vmatprep.subr.mxu0 0.0
      %v7257 = vand.u32 %v6883, 4294901760
      %v7258 = vsub.f32 %v6883, %v7257
      %7259 = vmatpush1.msra.mxu0 %v7258
      %7260 = vmatprep.subr.mxu0 0.0
      %7261 = vmatpush1.msra.mxu0 0.0
      %7262 = vmatprep.subr.mxu0 0.0
      %7263 = vmatpush1.msra.mxu0 0.0
      %7264 = vmatprep.subr.mxu0 0.0
      %7265 = vmatpush1.msra.mxu0 0.0
      %7266 = vmatprep.subr.mxu0 0.0
      %7267 = vmatpush1.msra.mxu0 0.0
      %7268 = vmatprep.subr.mxu0 0.0
      %7269 = vmatpush1.msra.mxu0 0.0
      %7270 = vmatprep.subr.mxu0 0.0
      %7271 = vmatpush1.msra.mxu0 0.0
      %7272 = vmatprep.subr.mxu0 0.0
      %7273 = vmatpush1.msra.mxu0 0.0
      %7274 = vmatprep.subr.mxu0 0.0
      %7275 = vmatpush1.msra.mxu0 0.0
      %7276 = vmatprep.subr.mxu0 0.0
      %7277 = vmatpush1.msra.mxu0 0.0
      %7278 = vmatprep.subr.mxu0 0.0
      %7279 = vmatpush1.msra.mxu0 0.0
      %7280 = vmatprep.subr.mxu0 0.0
      %7281 = vmatpush1.msra.mxu0 0.0
      %7282 = vmatprep.subr.mxu0 0.0
      %7283 = vmatpush1.msra.mxu0 0.0
      %7284 = vmatprep.subr.mxu0 0.0
      %7285 = vmatpush1.msra.mxu0 0.0
      %7286 = vmatprep.subr.mxu0 0.0
      %7287 = vmatpush1.msra.mxu0 0.0
      %v7288 = vand.u32 %v6901, 4294901760
      %v7289 = vsub.f32 %v6901, %v7288
      %7290 = vmatprep.mubr.f32.mxu0 %v7289
      %v7291 = vand.u32 %v6884, 4294901760
      %v7292 = vsub.f32 %v6884, %v7291
      %7293 = vmatmul.mubr.f32.gmra.mrb[0].mxu0 %v7292
      %v7294 = vpop.f32.mrb[0].mxu0
      %v7295 = vadd.f32 %v7178, %v7294
      %v7296 = vpop.f32.mrb[0].mxu0
      %v7297 = vand.u32 %v6904, 4294901760
      %v7298 = vsub.f32 %v6904, %v7297
      %7299 = vmatprep.mubr.f32.mxu0 %v7298
      %v7300 = vand.u32 %v6886, 4294901760
      %v7301 = vsub.f32 %v6886, %v7300
      %7302 = vmatmul.mubr.f32.gmra.mrb[0].mxu0 %v7301
      %v7303 = vpop.f32.mrb[0].mxu0
      %v7304 = vadd.f32 %v7185, %v7303
      %v7305 = vpop.f32.mrb[0].mxu0
      %7306 = vdwg.mxu0
      %7307 = vmatprep.subr.mxu0 0.0
      %v7308 = vand.u32 %v6853, 4294901760
      %7309 = vmatpush1.msra.mxu0 %v7308
      %7310 = vmatprep.subr.mxu0 0.0
      %v7311 = vand.u32 %v6855, 4294901760
      %7312 = vmatpush1.msra.mxu0 %v7311
      %7313 = vmatprep.subr.mxu0 0.0
      %v7314 = vand.u32 %v6857, 4294901760
      %7315 = vmatpush1.msra.mxu0 %v7314
      %7316 = vmatprep.subr.mxu0 0.0
      %v7317 = vand.u32 %v6859, 4294901760
      %7318 = vmatpush1.msra.mxu0 %v7317
      %7319 = vmatprep.subr.mxu0 0.0
      %v7320 = vand.u32 %v6861, 4294901760
      %7321 = vmatpush1.msra.mxu0 %v7320
      %7322 = vmatprep.subr.mxu0 0.0
      %v7323 = vand.u32 %v6863, 4294901760
      %7324 = vmatpush1.msra.mxu0 %v7323
      %7325 = vmatprep.subr.mxu0 0.0
      %v7326 = vand.u32 %v6865, 4294901760
      %7327 = vmatpush1.msra.mxu0 %v7326
      %7328 = vmatprep.subr.mxu0 0.0
      %v7329 = vand.u32 %v6867, 4294901760
      %7330 = vmatpush1.msra.mxu0 %v7329
      %7331 = vmatprep.subr.mxu0 0.0
      %v7332 = vand.u32 %v6850, 4294901760
      %7333 = vmatpush1.msra.mxu0 %v7332
      %7334 = vmatprep.subr.mxu0 0.0
      %v7335 = vand.u32 %v6851, 4294901760
      %7336 = vmatpush1.msra.mxu0 %v7335
      %7337 = vmatprep.subr.mxu0 0.0
      %v7338 = vand.u32 %v6869, 4294901760
      %7339 = vmatpush1.msra.mxu0 %v7338
      %7340 = vmatprep.subr.mxu0 0.0
      %v7341 = vand.u32 %v6871, 4294901760
      %7342 = vmatpush1.msra.mxu0 %v7341
      %7343 = vmatprep.subr.mxu0 0.0
      %v7344 = vand.u32 %v6873, 4294901760
      %7345 = vmatpush1.msra.mxu0 %v7344
      %7346 = vmatprep.subr.mxu0 0.0
      %v7347 = vand.u32 %v6875, 4294901760
      %7348 = vmatpush1.msra.mxu0 %v7347
      %7349 = vmatprep.subr.mxu0 0.0
      %v7350 = vand.u32 %v6877, 4294901760
      %7351 = vmatpush1.msra.mxu0 %v7350
      %7352 = vmatprep.subr.mxu0 0.0
      %v7353 = vand.u32 %v6879, 4294901760
      %7354 = vmatpush1.msra.mxu0 %v7353
      %7355 = vmatprep.subr.mxu0 0.0
      %v7356 = vand.u32 %v6881, 4294901760
      %7357 = vmatpush1.msra.mxu0 %v7356
      %7358 = vmatprep.subr.mxu0 0.0
      %v7359 = vand.u32 %v6883, 4294901760
      %7360 = vmatpush1.msra.mxu0 %v7359
      %7361 = vmatprep.subr.mxu0 0.0
      %7362 = vmatpush1.msra.mxu0 0.0
      %7363 = vmatprep.subr.mxu0 0.0
      %7364 = vmatpush1.msra.mxu0 0.0
      %7365 = vmatprep.subr.mxu0 0.0
      %7366 = vmatpush1.msra.mxu0 0.0
      %7367 = vmatprep.subr.mxu0 0.0
      %7368 = vmatpush1.msra.mxu0 0.0
      %7369 = vmatprep.subr.mxu0 0.0
      %7370 = vmatpush1.msra.mxu0 0.0
      %7371 = vmatprep.subr.mxu0 0.0
      %7372 = vmatpush1.msra.mxu0 0.0
      %7373 = vmatprep.subr.mxu0 0.0
      %7374 = vmatpush1.msra.mxu0 0.0
      %7375 = vmatprep.subr.mxu0 0.0
      %7376 = vmatpush1.msra.mxu0 0.0
      %7377 = vmatprep.subr.mxu0 0.0
      %7378 = vmatpush1.msra.mxu0 0.0
      %7379 = vmatprep.subr.mxu0 0.0
      %7380 = vmatpush1.msra.mxu0 0.0
      %7381 = vmatprep.subr.mxu0 0.0
      %7382 = vmatpush1.msra.mxu0 0.0
      %7383 = vmatprep.subr.mxu0 0.0
      %7384 = vmatpush1.msra.mxu0 0.0
      %7385 = vmatprep.subr.mxu0 0.0
      %7386 = vmatpush1.msra.mxu0 0.0
      %7387 = vmatprep.subr.mxu0 0.0
      %7388 = vmatpush1.msra.mxu0 0.0
      %v7389 = vand.u32 %v6901, 4294901760
      %v7390 = vsub.f32 %v6901, %v7389
      %v7391 = vand.u32 %v7390, 4294901760
      %7392 = vmatprep.mubr.f32.mxu0 %v7391
      %v7393 = vand.u32 %v6884, 4294901760
      %v7394 = vsub.f32 %v6884, %v7393
      %v7395 = vand.u32 %v7394, 4294901760
      %7396 = vmatmul.mubr.f32.gmra.mrb[0].mxu0 %v7395
      %v7397 = vpop.f32.mrb[0].mxu0
      %v7398 = vadd.f32 %v7295, %v7397
      %v7399 = vpop.f32.mrb[0].mxu0
      %v7400 = vand.u32 %v6904, 4294901760
      %v7401 = vsub.f32 %v6904, %v7400
      %v7402 = vand.u32 %v7401, 4294901760
      %7403 = vmatprep.mubr.f32.mxu0 %v7402
      %v7404 = vand.u32 %v6886, 4294901760
      %v7405 = vsub.f32 %v6886, %v7404
      %v7406 = vand.u32 %v7405, 4294901760
      %7407 = vmatmul.mubr.f32.gmra.mrb[0].mxu0 %v7406
      %v7408 = vpop.f32.mrb[0].mxu0
      %v7409 = vadd.f32 %v7304, %v7408
      %v7410 = vpop.f32.mrb[0].mxu0
      %7411 = vdwg.mxu0
      %7412 = vmatprep.subr.mxu0 0.0
      %v7413 = vand.u32 %v6853, 4294901760
      %v7414 = vsub.f32 %v6853, %v7413
      %v7415 = vand.u32 %v7414, 4294901760
      %7416 = vmatpush1.msra.mxu0 %v7415
      %7417 = vmatprep.subr.mxu0 0.0
      %v7418 = vand.u32 %v6855, 4294901760
      %v7419 = vsub.f32 %v6855, %v7418
      %v7420 = vand.u32 %v7419, 4294901760
      %7421 = vmatpush1.msra.mxu0 %v7420
      %7422 = vmatprep.subr.mxu0 0.0
      %v7423 = vand.u32 %v6857, 4294901760
      %v7424 = vsub.f32 %v6857, %v7423
      %v7425 = vand.u32 %v7424, 4294901760
      %7426 = vmatpush1.msra.mxu0 %v7425
      %7427 = vmatprep.subr.mxu0 0.0
      %v7428 = vand.u32 %v6859, 4294901760
      %v7429 = vsub.f32 %v6859, %v7428
      %v7430 = vand.u32 %v7429, 4294901760
      %7431 = vmatpush1.msra.mxu0 %v7430
      %7432 = vmatprep.subr.mxu0 0.0
      %v7433 = vand.u32 %v6861, 4294901760
      %v7434 = vsub.f32 %v6861, %v7433
      %v7435 = vand.u32 %v7434, 4294901760
      %7436 = vmatpush1.msra.mxu0 %v7435
      %7437 = vmatprep.subr.mxu0 0.0
      %v7438 = vand.u32 %v6863, 4294901760
      %v7439 = vsub.f32 %v6863, %v7438
      %v7440 = vand.u32 %v7439, 4294901760
      %7441 = vmatpush1.msra.mxu0 %v7440
      %7442 = vmatprep.subr.mxu0 0.0
      %v7443 = vand.u32 %v6865, 4294901760
      %v7444 = vsub.f32 %v6865, %v7443
      %v7445 = vand.u32 %v7444, 4294901760
      %7446 = vmatpush1.msra.mxu0 %v7445
      %7447 = vmatprep.subr.mxu0 0.0
      %v7448 = vand.u32 %v6867, 4294901760
      %v7449 = vsub.f32 %v6867, %v7448
      %v7450 = vand.u32 %v7449, 4294901760
      %7451 = vmatpush1.msra.mxu0 %v7450
      %7452 = vmatprep.subr.mxu0 0.0
      %v7453 = vand.u32 %v6850, 4294901760
      %v7454 = vsub.f32 %v6850, %v7453
      %v7455 = vand.u32 %v7454, 4294901760
      %7456 = vmatpush1.msra.mxu0 %v7455
      %7457 = vmatprep.subr.mxu0 0.0
      %v7458 = vand.u32 %v6851, 4294901760
      %v7459 = vsub.f32 %v6851, %v7458
      %v7460 = vand.u32 %v7459, 4294901760
      %7461 = vmatpush1.msra.mxu0 %v7460
      %7462 = vmatprep.subr.mxu0 0.0
      %v7463 = vand.u32 %v6869, 4294901760
      %v7464 = vsub.f32 %v6869, %v7463
      %v7465 = vand.u32 %v7464, 4294901760
      %7466 = vmatpush1.msra.mxu0 %v7465
      %7467 = vmatprep.subr.mxu0 0.0
      %v7468 = vand.u32 %v6871, 4294901760
      %v7469 = vsub.f32 %v6871, %v7468
      %v7470 = vand.u32 %v7469, 4294901760
      %7471 = vmatpush1.msra.mxu0 %v7470
      %7472 = vmatprep.subr.mxu0 0.0
      %v7473 = vand.u32 %v6873, 4294901760
      %v7474 = vsub.f32 %v6873, %v7473
      %v7475 = vand.u32 %v7474, 4294901760
      %7476 = vmatpush1.msra.mxu0 %v7475
      %7477 = vmatprep.subr.mxu0 0.0
      %v7478 = vand.u32 %v6875, 4294901760
      %v7479 = vsub.f32 %v6875, %v7478
      %v7480 = vand.u32 %v7479, 4294901760
      %7481 = vmatpush1.msra.mxu0 %v7480
      %7482 = vmatprep.subr.mxu0 0.0
      %v7483 = vand.u32 %v6877, 4294901760
      %v7484 = vsub.f32 %v6877, %v7483
      %v7485 = vand.u32 %v7484, 4294901760
      %7486 = vmatpush1.msra.mxu0 %v7485
      %7487 = vmatprep.subr.mxu0 0.0
      %v7488 = vand.u32 %v6879, 4294901760
      %v7489 = vsub.f32 %v6879, %v7488
      %v7490 = vand.u32 %v7489, 4294901760
      %7491 = vmatpush1.msra.mxu0 %v7490
      %7492 = vmatprep.subr.mxu0 0.0
      %v7493 = vand.u32 %v6881, 4294901760
      %v7494 = vsub.f32 %v6881, %v7493
      %v7495 = vand.u32 %v7494, 4294901760
      %7496 = vmatpush1.msra.mxu0 %v7495
      %7497 = vmatprep.subr.mxu0 0.0
      %v7498 = vand.u32 %v6883, 4294901760
      %v7499 = vsub.f32 %v6883, %v7498
      %v7500 = vand.u32 %v7499, 4294901760
      %7501 = vmatpush1.msra.mxu0 %v7500
      %7502 = vmatprep.subr.mxu0 0.0
      %7503 = vmatpush1.msra.mxu0 0.0
      %7504 = vmatprep.subr.mxu0 0.0
      %7505 = vmatpush1.msra.mxu0 0.0
      %7506 = vmatprep.subr.mxu0 0.0
      %7507 = vmatpush1.msra.mxu0 0.0
      %7508 = vmatprep.subr.mxu0 0.0
      %7509 = vmatpush1.msra.mxu0 0.0
      %7510 = vmatprep.subr.mxu0 0.0
      %7511 = vmatpush1.msra.mxu0 0.0
      %7512 = vmatprep.subr.mxu0 0.0
      %7513 = vmatpush1.msra.mxu0 0.0
      %7514 = vmatprep.subr.mxu0 0.0
      %7515 = vmatpush1.msra.mxu0 0.0
      %7516 = vmatprep.subr.mxu0 0.0
      %7517 = vmatpush1.msra.mxu0 0.0
      %7518 = vmatprep.subr.mxu0 0.0
      %7519 = vmatpush1.msra.mxu0 0.0
      %7520 = vmatprep.subr.mxu0 0.0
      %7521 = vmatpush1.msra.mxu0 0.0
      %7522 = vmatprep.subr.mxu0 0.0
      %7523 = vmatpush1.msra.mxu0 0.0
      %7524 = vmatprep.subr.mxu0 0.0
      %7525 = vmatpush1.msra.mxu0 0.0
      %7526 = vmatprep.subr.mxu0 0.0
      %7527 = vmatpush1.msra.mxu0 0.0
      %7528 = vmatprep.subr.mxu0 0.0
      %7529 = vmatpush1.msra.mxu0 0.0
      %v7530 = vand.u32 %v6901, 4294901760
      %7531 = vmatprep.mubr.f32.mxu0 %v7530
      %v7532 = vand.u32 %v6884, 4294901760
      %7533 = vmatmul.mubr.f32.gmra.mrb[0].mxu0 %v7532
      %v7534 = vpop.f32.mrb[0].mxu0
      %v7535 = vadd.f32 %v7398, %v7534
      %v7536 = vpop.f32.mrb[0].mxu0
      %v7537 = vand.u32 %v6904, 4294901760
      %7538 = vmatprep.mubr.f32.mxu0 %v7537
      %v7539 = vand.u32 %v6886, 4294901760
      %7540 = vmatmul.mubr.f32.gmra.mrb[0].mxu0 %v7539
      %v7541 = vpop.f32.mrb[0].mxu0
      %v7542 = vadd.f32 %v7409, %v7541
      %v7543 = vpop.f32.mrb[0].mxu0
      %7544 = vdwg.mxu0
      %7545 = vmatprep.subr.mxu0 0.0
      %v7546 = vand.u32 %v6853, 4294901760
      %7547 = vmatpush1.msra.mxu0 %v7546
      %7548 = vmatprep.subr.mxu0 0.0
      %v7549 = vand.u32 %v6855, 4294901760
      %7550 = vmatpush1.msra.mxu0 %v7549
      %7551 = vmatprep.subr.mxu0 0.0
      %v7552 = vand.u32 %v6857, 4294901760
      %7553 = vmatpush1.msra.mxu0 %v7552
      %7554 = vmatprep.subr.mxu0 0.0
      %v7555 = vand.u32 %v6859, 4294901760
      %7556 = vmatpush1.msra.mxu0 %v7555
      %7557 = vmatprep.subr.mxu0 0.0
      %v7558 = vand.u32 %v6861, 4294901760
      %7559 = vmatpush1.msra.mxu0 %v7558
      %7560 = vmatprep.subr.mxu0 0.0
      %v7561 = vand.u32 %v6863, 4294901760
      %7562 = vmatpush1.msra.mxu0 %v7561
      %7563 = vmatprep.subr.mxu0 0.0
      %v7564 = vand.u32 %v6865, 4294901760
      %7565 = vmatpush1.msra.mxu0 %v7564
      %7566 = vmatprep.subr.mxu0 0.0
      %v7567 = vand.u32 %v6867, 4294901760
      %7568 = vmatpush1.msra.mxu0 %v7567
      %7569 = vmatprep.subr.mxu0 0.0
      %v7570 = vand.u32 %v6850, 4294901760
      %7571 = vmatpush1.msra.mxu0 %v7570
      %7572 = vmatprep.subr.mxu0 0.0
      %v7573 = vand.u32 %v6851, 4294901760
      %7574 = vmatpush1.msra.mxu0 %v7573
      %7575 = vmatprep.subr.mxu0 0.0
      %v7576 = vand.u32 %v6869, 4294901760
      %7577 = vmatpush1.msra.mxu0 %v7576
      %7578 = vmatprep.subr.mxu0 0.0
      %v7579 = vand.u32 %v6871, 4294901760
      %7580 = vmatpush1.msra.mxu0 %v7579
      %7581 = vmatprep.subr.mxu0 0.0
      %v7582 = vand.u32 %v6873, 4294901760
      %7583 = vmatpush1.msra.mxu0 %v7582
      %7584 = vmatprep.subr.mxu0 0.0
      %v7585 = vand.u32 %v6875, 4294901760
      %7586 = vmatpush1.msra.mxu0 %v7585
      %7587 = vmatprep.subr.mxu0 0.0
      %v7588 = vand.u32 %v6877, 4294901760
      %7589 = vmatpush1.msra.mxu0 %v7588
      %7590 = vmatprep.subr.mxu0 0.0
      %v7591 = vand.u32 %v6879, 4294901760
      %7592 = vmatpush1.msra.mxu0 %v7591
      %7593 = vmatprep.subr.mxu0 0.0
      %v7594 = vand.u32 %v6881, 4294901760
      %7595 = vmatpush1.msra.mxu0 %v7594
      %7596 = vmatprep.subr.mxu0 0.0
      %v7597 = vand.u32 %v6883, 4294901760
      %7598 = vmatpush1.msra.mxu0 %v7597
      %7599 = vmatprep.subr.mxu0 0.0
      %7600 = vmatpush1.msra.mxu0 0.0
      %7601 = vmatprep.subr.mxu0 0.0
      %7602 = vmatpush1.msra.mxu0 0.0
      %7603 = vmatprep.subr.mxu0 0.0
      %7604 = vmatpush1.msra.mxu0 0.0
      %7605 = vmatprep.subr.mxu0 0.0
      %7606 = vmatpush1.msra.mxu0 0.0
      %7607 = vmatprep.subr.mxu0 0.0
      %7608 = vmatpush1.msra.mxu0 0.0
      %7609 = vmatprep.subr.mxu0 0.0
      %7610 = vmatpush1.msra.mxu0 0.0
      %7611 = vmatprep.subr.mxu0 0.0
      %7612 = vmatpush1.msra.mxu0 0.0
      %7613 = vmatprep.subr.mxu0 0.0
      %7614 = vmatpush1.msra.mxu0 0.0
      %7615 = vmatprep.subr.mxu0 0.0
      %7616 = vmatpush1.msra.mxu0 0.0
      %7617 = vmatprep.subr.mxu0 0.0
      %7618 = vmatpush1.msra.mxu0 0.0
      %7619 = vmatprep.subr.mxu0 0.0
      %7620 = vmatpush1.msra.mxu0 0.0
      %7621 = vmatprep.subr.mxu0 0.0
      %7622 = vmatpush1.msra.mxu0 0.0
      %7623 = vmatprep.subr.mxu0 0.0
      %7624 = vmatpush1.msra.mxu0 0.0
      %7625 = vmatprep.subr.mxu0 0.0
      %7626 = vmatpush1.msra.mxu0 0.0
      %v7627 = vand.u32 %v6901, 4294901760
      %7628 = vmatprep.mubr.f32.mxu0 %v7627
      %v7629 = vand.u32 %v6884, 4294901760
      %7630 = vmatmul.mubr.f32.gmra.mrb[0].mxu0 %v7629
      %v7631 = vpop.f32.mrb[0].mxu0
      %v7632 = vadd.f32 %v7535, %v7631
      %v7633 = vpop.f32.mrb[0].mxu0
      %v7634 = vand.u32 %v6904, 4294901760
      %7635 = vmatprep.mubr.f32.mxu0 %v7634
      %v7636 = vand.u32 %v6886, 4294901760
      %7637 = vmatmul.mubr.f32.gmra.mrb[0].mxu0 %v7636
      %v7638 = vpop.f32.mrb[0].mxu0
      %v7639 = vadd.f32 %v7542, %v7638
      %v7640 = vpop.f32.mrb[0].mxu0
      %7641 = vdwg.mxu0
      %v7642 = vmax.f32 %v7632, 0.0
      %v7643 = vmax.f32 %v7639, 0.0
      %v7644 = vmul.f32 %v7642, %v5260
      %v7645 = vmul.f32 %v7643, %v5260
      %7646 = vrot.lane.b32.xlu0 %v7644, 10
      %v7647 = vpop.permute.xlu0 %7646
      %7648 = vrot.lane.b32.xlu0 %v7645, 10
      %v7649 = vpop.permute.xlu0 %7648
      %7650 = vrot.lane.b32.xlu0 %v7644, 9
      %v7651 = vpop.permute.xlu0 %7650
      %7652 = vrot.lane.b32.xlu0 %v7645, 9
      %v7653 = vpop.permute.xlu0 %7652
      %7654 = vrot.lane.b32.xlu0 %v7644, 8
      %v7655 = vpop.permute.xlu0 %7654
      %7656 = vrot.lane.b32.xlu0 %v7645, 8
      %v7657 = vpop.permute.xlu0 %7656
      %7658 = vrot.lane.b32.xlu0 %v7644, 1
      %v7659 = vpop.permute.xlu0 %7658
      %7660 = vrot.lane.b32.xlu0 %v7645, 1
      %v7661 = vpop.permute.xlu0 %7660
      %7662 = vrot.lane.b32.xlu0 %v7644, 127
      %v7663 = vpop.permute.xlu0 %7662
      %7664 = vrot.lane.b32.xlu0 %v7645, 127
      %v7665 = vpop.permute.xlu0 %7664
      %7666 = vrot.lane.b32.xlu0 %v7644, 120
      %v7667 = vpop.permute.xlu0 %7666
      %7668 = vrot.lane.b32.xlu0 %v7645, 120
      %v7669 = vpop.permute.xlu0 %7668
      %7670 = vrot.lane.b32.xlu0 %v7644, 119
      %v7671 = vpop.permute.xlu0 %7670
      %7672 = vrot.lane.b32.xlu0 %v7645, 119
      %v7673 = vpop.permute.xlu0 %7672
      %7674 = vrot.lane.b32.xlu0 %v7644, 118
      %v7675 = vpop.permute.xlu0 %7674
      %7676 = vrot.lane.b32.xlu0 %v7645, 118
      %v7677 = vpop.permute.xlu0 %7676
      %v7678 = vld [vmem:[%s9 + $0x60] sm:$0xff]
      %v7679 = vld [vmem:[%s9 + $0x68] sm:$0xff]
      %v7680 = vld [vmem:[%s9 + $0x70] sm:$0xff]
      %v7681 = vld [vmem:[%s9 + $0x78] sm:$0xff]
      %v7682 = vld [vmem:[%s10 + $0x30] sm:$0xff]
      %v7683 = vld [vmem:[%s10 + $0x38] sm:$0xff]
      %7685 = vset.pattern.permute.xlu0 0
      %7686 = vperm.xlu0 %7685, %v7682
      %v7687 = vpop.permute.xlu0 %7686
      %7690 = vset.pattern.permute.xlu0 0
      %7691 = vperm.xlu0 %7690, %v7683
      %v7692 = vpop.permute.xlu0 %7691
      %v7695 = vsel %vm5311, %v7679, 0
      %v7698 = vsel %vm5311, %v7681, 0
      %7700 = vmatprep.subr.mxu0 0.0
      %v7701 = vand.u32 %v7647, 4294901760
      %7702 = vmatpush1.msra.mxu0 %v7701
      %7703 = vmatprep.subr.mxu0 0.0
      %v7704 = vand.u32 %v7649, 4294901760
      %7705 = vmatpush1.msra.mxu0 %v7704
      %7706 = vmatprep.subr.mxu0 0.0
      %v7707 = vand.u32 %v7651, 4294901760
      %7708 = vmatpush1.msra.mxu0 %v7707
      %7709 = vmatprep.subr.mxu0 0.0
      %v7710 = vand.u32 %v7653, 4294901760
      %7711 = vmatpush1.msra.mxu0 %v7710
      %7712 = vmatprep.subr.mxu0 0.0
      %v7713 = vand.u32 %v7655, 4294901760
      %7714 = vmatpush1.msra.mxu0 %v7713
      %7715 = vmatprep.subr.mxu0 0.0
      %v7716 = vand.u32 %v7657, 4294901760
      %7717 = vmatpush1.msra.mxu0 %v7716
      %7718 = vmatprep.subr.mxu0 0.0
      %v7719 = vand.u32 %v7659, 4294901760
      %7720 = vmatpush1.msra.mxu0 %v7719
      %7721 = vmatprep.subr.mxu0 0.0
      %v7722 = vand.u32 %v7661, 4294901760
      %7723 = vmatpush1.msra.mxu0 %v7722
      %7724 = vmatprep.subr.mxu0 0.0
      %v7725 = vand.u32 %v7644, 4294901760
      %7726 = vmatpush1.msra.mxu0 %v7725
      %7727 = vmatprep.subr.mxu0 0.0
      %v7728 = vand.u32 %v7645, 4294901760
      %7729 = vmatpush1.msra.mxu0 %v7728
      %7730 = vmatprep.subr.mxu0 0.0
      %v7731 = vand.u32 %v7663, 4294901760
      %7732 = vmatpush1.msra.mxu0 %v7731
      %7733 = vmatprep.subr.mxu0 0.0
      %v7734 = vand.u32 %v7665, 4294901760
      %7735 = vmatpush1.msra.mxu0 %v7734
      %7736 = vmatprep.subr.mxu0 0.0
      %v7737 = vand.u32 %v7667, 4294901760
      %7738 = vmatpush1.msra.mxu0 %v7737
      %7739 = vmatprep.subr.mxu0 0.0
      %v7740 = vand.u32 %v7669, 4294901760
      %7741 = vmatpush1.msra.mxu0 %v7740
      %7742 = vmatprep.subr.mxu0 0.0
      %v7743 = vand.u32 %v7671, 4294901760
      %7744 = vmatpush1.msra.mxu0 %v7743
      %7745 = vmatprep.subr.mxu0 0.0
      %v7746 = vand.u32 %v7673, 4294901760
      %7747 = vmatpush1.msra.mxu0 %v7746
      %7748 = vmatprep.subr.mxu0 0.0
      %v7749 = vand.u32 %v7675, 4294901760
      %7750 = vmatpush1.msra.mxu0 %v7749
      %7751 = vmatprep.subr.mxu0 0.0
      %v7752 = vand.u32 %v7677, 4294901760
      %7753 = vmatpush1.msra.mxu0 %v7752
      %7754 = vmatprep.subr.mxu0 0.0
      %7755 = vmatpush1.msra.mxu0 0.0
      %7756 = vmatprep.subr.mxu0 0.0
      %7757 = vmatpush1.msra.mxu0 0.0
      %7758 = vmatprep.subr.mxu0 0.0
      %7759 = vmatpush1.msra.mxu0 0.0
      %7760 = vmatprep.subr.mxu0 0.0
      %7761 = vmatpush1.msra.mxu0 0.0
      %7762 = vmatprep.subr.mxu0 0.0
      %7763 = vmatpush1.msra.mxu0 0.0
      %7764 = vmatprep.subr.mxu0 0.0
      %7765 = vmatpush1.msra.mxu0 0.0
      %7766 = vmatprep.subr.mxu0 0.0
      %7767 = vmatpush1.msra.mxu0 0.0
      %7768 = vmatprep.subr.mxu0 0.0
      %7769 = vmatpush1.msra.mxu0 0.0
      %7770 = vmatprep.subr.mxu0 0.0
      %7771 = vmatpush1.msra.mxu0 0.0
      %7772 = vmatprep.subr.mxu0 0.0
      %7773 = vmatpush1.msra.mxu0 0.0
      %7774 = vmatprep.subr.mxu0 0.0
      %7775 = vmatpush1.msra.mxu0 0.0
      %7776 = vmatprep.subr.mxu0 0.0
      %7777 = vmatpush1.msra.mxu0 0.0
      %7778 = vmatprep.subr.mxu0 0.0
      %7779 = vmatpush1.msra.mxu0 0.0
      %7780 = vmatprep.subr.mxu0 0.0
      %7781 = vmatpush1.msra.mxu0 0.0
      %v7782 = vand.u32 %v7695, 4294901760
      %v7783 = vsub.f32 %v7695, %v7782
      %v7784 = vand.u32 %v7783, 4294901760
      %v7785 = vsub.f32 %v7783, %v7784
      %v7786 = vand.u32 %v7785, 4294901760
      %7787 = vmatprep.mubr.f32.mxu0 %v7786
      %v7788 = vand.u32 %v7678, 4294901760
      %v7789 = vsub.f32 %v7678, %v7788
      %v7790 = vand.u32 %v7789, 4294901760
      %v7791 = vsub.f32 %v7789, %v7790
      %v7792 = vand.u32 %v7791, 4294901760
      %7793 = vmatmul.mubr.f32.gmra.mrb[0].mxu0 %v7792
      %v7794 = vpop.f32.mrb[0].mxu0
      %v7795 = vadd.f32 %v7687, %v7794
      %v7796 = vpop.f32.mrb[0].mxu0
      %v7797 = vand.u32 %v7698, 4294901760
      %v7798 = vsub.f32 %v7698, %v7797
      %v7799 = vand.u32 %v7798, 4294901760
      %v7800 = vsub.f32 %v7798, %v7799
      %v7801 = vand.u32 %v7800, 4294901760
      %7802 = vmatprep.mubr.f32.mxu0 %v7801
      %v7803 = vand.u32 %v7680, 4294901760
      %v7804 = vsub.f32 %v7680, %v7803
      %v7805 = vand.u32 %v7804, 4294901760
      %v7806 = vsub.f32 %v7804, %v7805
      %v7807 = vand.u32 %v7806, 4294901760
      %7808 = vmatmul.mubr.f32.gmra.mrb[0].mxu0 %v7807
      %v7809 = vpop.f32.mrb[0].mxu0
      %v7810 = vadd.f32 %v7692, %v7809
      %v7811 = vpop.f32.mrb[0].mxu0
      %7812 = vdwg.mxu0
      %7813 = vmatprep.subr.mxu0 0.0
      %v7814 = vand.u32 %v7647, 4294901760
      %v7815 = vsub.f32 %v7647, %v7814
      %v7816 = vand.u32 %v7815, 4294901760
      %v7817 = vsub.f32 %v7815, %v7816
      %v7818 = vand.u32 %v7817, 4294901760
      %7819 = vmatpush1.msra.mxu0 %v7818
      %7820 = vmatprep.subr.mxu0 0.0
      %v7821 = vand.u32 %v7649, 4294901760
      %v7822 = vsub.f32 %v7649, %v7821
      %v7823 = vand.u32 %v7822, 4294901760
      %v7824 = vsub.f32 %v7822, %v7823
      %v7825 = vand.u32 %v7824, 4294901760
      %7826 = vmatpush1.msra.mxu0 %v7825
      %7827 = vmatprep.subr.mxu0 0.0
      %v7828 = vand.u32 %v7651, 4294901760
      %v7829 = vsub.f32 %v7651, %v7828
      %v7830 = vand.u32 %v7829, 4294901760
      %v7831 = vsub.f32 %v7829, %v7830
      %v7832 = vand.u32 %v7831, 4294901760
      %7833 = vmatpush1.msra.mxu0 %v7832
      %7834 = vmatprep.subr.mxu0 0.0
      %v7835 = vand.u32 %v7653, 4294901760
      %v7836 = vsub.f32 %v7653, %v7835
      %v7837 = vand.u32 %v7836, 4294901760
      %v7838 = vsub.f32 %v7836, %v7837
      %v7839 = vand.u32 %v7838, 4294901760
      %7840 = vmatpush1.msra.mxu0 %v7839
      %7841 = vmatprep.subr.mxu0 0.0
      %v7842 = vand.u32 %v7655, 4294901760
      %v7843 = vsub.f32 %v7655, %v7842
      %v7844 = vand.u32 %v7843, 4294901760
      %v7845 = vsub.f32 %v7843, %v7844
      %v7846 = vand.u32 %v7845, 4294901760
      %7847 = vmatpush1.msra.mxu0 %v7846
      %7848 = vmatprep.subr.mxu0 0.0
      %v7849 = vand.u32 %v7657, 4294901760
      %v7850 = vsub.f32 %v7657, %v7849
      %v7851 = vand.u32 %v7850, 4294901760
      %v7852 = vsub.f32 %v7850, %v7851
      %v7853 = vand.u32 %v7852, 4294901760
      %7854 = vmatpush1.msra.mxu0 %v7853
      %7855 = vmatprep.subr.mxu0 0.0
      %v7856 = vand.u32 %v7659, 4294901760
      %v7857 = vsub.f32 %v7659, %v7856
      %v7858 = vand.u32 %v7857, 4294901760
      %v7859 = vsub.f32 %v7857, %v7858
      %v7860 = vand.u32 %v7859, 4294901760
      %7861 = vmatpush1.msra.mxu0 %v7860
      %7862 = vmatprep.subr.mxu0 0.0
      %v7863 = vand.u32 %v7661, 4294901760
      %v7864 = vsub.f32 %v7661, %v7863
      %v7865 = vand.u32 %v7864, 4294901760
      %v7866 = vsub.f32 %v7864, %v7865
      %v7867 = vand.u32 %v7866, 4294901760
      %7868 = vmatpush1.msra.mxu0 %v7867
      %7869 = vmatprep.subr.mxu0 0.0
      %v7870 = vand.u32 %v7644, 4294901760
      %v7871 = vsub.f32 %v7644, %v7870
      %v7872 = vand.u32 %v7871, 4294901760
      %v7873 = vsub.f32 %v7871, %v7872
      %v7874 = vand.u32 %v7873, 4294901760
      %7875 = vmatpush1.msra.mxu0 %v7874
      %7876 = vmatprep.subr.mxu0 0.0
      %v7877 = vand.u32 %v7645, 4294901760
      %v7878 = vsub.f32 %v7645, %v7877
      %v7879 = vand.u32 %v7878, 4294901760
      %v7880 = vsub.f32 %v7878, %v7879
      %v7881 = vand.u32 %v7880, 4294901760
      %7882 = vmatpush1.msra.mxu0 %v7881
      %7883 = vmatprep.subr.mxu0 0.0
      %v7884 = vand.u32 %v7663, 4294901760
      %v7885 = vsub.f32 %v7663, %v7884
      %v7886 = vand.u32 %v7885, 4294901760
      %v7887 = vsub.f32 %v7885, %v7886
      %v7888 = vand.u32 %v7887, 4294901760
      %7889 = vmatpush1.msra.mxu0 %v7888
      %7890 = vmatprep.subr.mxu0 0.0
      %v7891 = vand.u32 %v7665, 4294901760
      %v7892 = vsub.f32 %v7665, %v7891
      %v7893 = vand.u32 %v7892, 4294901760
      %v7894 = vsub.f32 %v7892, %v7893
      %v7895 = vand.u32 %v7894, 4294901760
      %7896 = vmatpush1.msra.mxu0 %v7895
      %7897 = vmatprep.subr.mxu0 0.0
      %v7898 = vand.u32 %v7667, 4294901760
      %v7899 = vsub.f32 %v7667, %v7898
      %v7900 = vand.u32 %v7899, 4294901760
      %v7901 = vsub.f32 %v7899, %v7900
      %v7902 = vand.u32 %v7901, 4294901760
      %7903 = vmatpush1.msra.mxu0 %v7902
      %7904 = vmatprep.subr.mxu0 0.0
      %v7905 = vand.u32 %v7669, 4294901760
      %v7906 = vsub.f32 %v7669, %v7905
      %v7907 = vand.u32 %v7906, 4294901760
      %v7908 = vsub.f32 %v7906, %v7907
      %v7909 = vand.u32 %v7908, 4294901760
      %7910 = vmatpush1.msra.mxu0 %v7909
      %7911 = vmatprep.subr.mxu0 0.0
      %v7912 = vand.u32 %v7671, 4294901760
      %v7913 = vsub.f32 %v7671, %v7912
      %v7914 = vand.u32 %v7913, 4294901760
      %v7915 = vsub.f32 %v7913, %v7914
      %v7916 = vand.u32 %v7915, 4294901760
      %7917 = vmatpush1.msra.mxu0 %v7916
      %7918 = vmatprep.subr.mxu0 0.0
      %v7919 = vand.u32 %v7673, 4294901760
      %v7920 = vsub.f32 %v7673, %v7919
      %v7921 = vand.u32 %v7920, 4294901760
      %v7922 = vsub.f32 %v7920, %v7921
      %v7923 = vand.u32 %v7922, 4294901760
      %7924 = vmatpush1.msra.mxu0 %v7923
      %7925 = vmatprep.subr.mxu0 0.0
      %v7926 = vand.u32 %v7675, 4294901760
      %v7927 = vsub.f32 %v7675, %v7926
      %v7928 = vand.u32 %v7927, 4294901760
      %v7929 = vsub.f32 %v7927, %v7928
      %v7930 = vand.u32 %v7929, 4294901760
      %7931 = vmatpush1.msra.mxu0 %v7930
      %7932 = vmatprep.subr.mxu0 0.0
      %v7933 = vand.u32 %v7677, 4294901760
      %v7934 = vsub.f32 %v7677, %v7933
      %v7935 = vand.u32 %v7934, 4294901760
      %v7936 = vsub.f32 %v7934, %v7935
      %v7937 = vand.u32 %v7936, 4294901760
      %7938 = vmatpush1.msra.mxu0 %v7937
      %7939 = vmatprep.subr.mxu0 0.0
      %7940 = vmatpush1.msra.mxu0 0.0
      %7941 = vmatprep.subr.mxu0 0.0
      %7942 = vmatpush1.msra.mxu0 0.0
      %7943 = vmatprep.subr.mxu0 0.0
      %7944 = vmatpush1.msra.mxu0 0.0
      %7945 = vmatprep.subr.mxu0 0.0
      %7946 = vmatpush1.msra.mxu0 0.0
      %7947 = vmatprep.subr.mxu0 0.0
      %7948 = vmatpush1.msra.mxu0 0.0
      %7949 = vmatprep.subr.mxu0 0.0
      %7950 = vmatpush1.msra.mxu0 0.0
      %7951 = vmatprep.subr.mxu0 0.0
      %7952 = vmatpush1.msra.mxu0 0.0
      %7953 = vmatprep.subr.mxu0 0.0
      %7954 = vmatpush1.msra.mxu0 0.0
      %7955 = vmatprep.subr.mxu0 0.0
      %7956 = vmatpush1.msra.mxu0 0.0
      %7957 = vmatprep.subr.mxu0 0.0
      %7958 = vmatpush1.msra.mxu0 0.0
      %7959 = vmatprep.subr.mxu0 0.0
      %7960 = vmatpush1.msra.mxu0 0.0
      %7961 = vmatprep.subr.mxu0 0.0
      %7962 = vmatpush1.msra.mxu0 0.0
      %7963 = vmatprep.subr.mxu0 0.0
      %7964 = vmatpush1.msra.mxu0 0.0
      %7965 = vmatprep.subr.mxu0 0.0
      %7966 = vmatpush1.msra.mxu0 0.0
      %v7967 = vand.u32 %v7695, 4294901760
      %7968 = vmatprep.mubr.f32.mxu0 %v7967
      %v7969 = vand.u32 %v7678, 4294901760
      %7970 = vmatmul.mubr.f32.gmra.mrb[0].mxu0 %v7969
      %v7971 = vpop.f32.mrb[0].mxu0
      %v7972 = vadd.f32 %v7795, %v7971
      %v7973 = vpop.f32.mrb[0].mxu0
      %v7974 = vand.u32 %v7698, 4294901760
      %7975 = vmatprep.mubr.f32.mxu0 %v7974
      %v7976 = vand.u32 %v7680, 4294901760
      %7977 = vmatmul.mubr.f32.gmra.mrb[0].mxu0 %v7976
      %v7978 = vpop.f32.mrb[0].mxu0
      %v7979 = vadd.f32 %v7810, %v7978
      %v7980 = vpop.f32.mrb[0].mxu0
      %7981 = vdwg.mxu0
      %7982 = vmatprep.subr.mxu0 0.0
      %v7983 = vand.u32 %v7647, 4294901760
      %v7984 = vsub.f32 %v7647, %v7983
      %7985 = vmatpush1.msra.mxu0 %v7984
      %7986 = vmatprep.subr.mxu0 0.0
      %v7987 = vand.u32 %v7649, 4294901760
      %v7988 = vsub.f32 %v7649, %v7987
      %7989 = vmatpush1.msra.mxu0 %v7988
      %7990 = vmatprep.subr.mxu0 0.0
      %v7991 = vand.u32 %v7651, 4294901760
      %v7992 = vsub.f32 %v7651, %v7991
      %7993 = vmatpush1.msra.mxu0 %v7992
      %7994 = vmatprep.subr.mxu0 0.0
      %v7995 = vand.u32 %v7653, 4294901760
      %v7996 = vsub.f32 %v7653, %v7995
      %7997 = vmatpush1.msra.mxu0 %v7996
      %7998 = vmatprep.subr.mxu0 0.0
      %v7999 = vand.u32 %v7655, 4294901760
      %v8000 = vsub.f32 %v7655, %v7999
      %8001 = vmatpush1.msra.mxu0 %v8000
      %8002 = vmatprep.subr.mxu0 0.0
      %v8003 = vand.u32 %v7657, 4294901760
      %v8004 = vsub.f32 %v7657, %v8003
      %8005 = vmatpush1.msra.mxu0 %v8004
      %8006 = vmatprep.subr.mxu0 0.0
      %v8007 = vand.u32 %v7659, 4294901760
      %v8008 = vsub.f32 %v7659, %v8007
      %8009 = vmatpush1.msra.mxu0 %v8008
      %8010 = vmatprep.subr.mxu0 0.0
      %v8011 = vand.u32 %v7661, 4294901760
      %v8012 = vsub.f32 %v7661, %v8011
      %8013 = vmatpush1.msra.mxu0 %v8012
      %8014 = vmatprep.subr.mxu0 0.0
      %v8015 = vand.u32 %v7644, 4294901760
      %v8016 = vsub.f32 %v7644, %v8015
      %8017 = vmatpush1.msra.mxu0 %v8016
      %8018 = vmatprep.subr.mxu0 0.0
      %v8019 = vand.u32 %v7645, 4294901760
      %v8020 = vsub.f32 %v7645, %v8019
      %8021 = vmatpush1.msra.mxu0 %v8020
      %8022 = vmatprep.subr.mxu0 0.0
      %v8023 = vand.u32 %v7663, 4294901760
      %v8024 = vsub.f32 %v7663, %v8023
      %8025 = vmatpush1.msra.mxu0 %v8024
      %8026 = vmatprep.subr.mxu0 0.0
      %v8027 = vand.u32 %v7665, 4294901760
      %v8028 = vsub.f32 %v7665, %v8027
      %8029 = vmatpush1.msra.mxu0 %v8028
      %8030 = vmatprep.subr.mxu0 0.0
      %v8031 = vand.u32 %v7667, 4294901760
      %v8032 = vsub.f32 %v7667, %v8031
      %8033 = vmatpush1.msra.mxu0 %v8032
      %8034 = vmatprep.subr.mxu0 0.0
      %v8035 = vand.u32 %v7669, 4294901760
      %v8036 = vsub.f32 %v7669, %v8035
      %8037 = vmatpush1.msra.mxu0 %v8036
      %8038 = vmatprep.subr.mxu0 0.0
      %v8039 = vand.u32 %v7671, 4294901760
      %v8040 = vsub.f32 %v7671, %v8039
      %8041 = vmatpush1.msra.mxu0 %v8040
      %8042 = vmatprep.subr.mxu0 0.0
      %v8043 = vand.u32 %v7673, 4294901760
      %v8044 = vsub.f32 %v7673, %v8043
      %8045 = vmatpush1.msra.mxu0 %v8044
      %8046 = vmatprep.subr.mxu0 0.0
      %v8047 = vand.u32 %v7675, 4294901760
      %v8048 = vsub.f32 %v7675, %v8047
      %8049 = vmatpush1.msra.mxu0 %v8048
      %8050 = vmatprep.subr.mxu0 0.0
      %v8051 = vand.u32 %v7677, 4294901760
      %v8052 = vsub.f32 %v7677, %v8051
      %8053 = vmatpush1.msra.mxu0 %v8052
      %8054 = vmatprep.subr.mxu0 0.0
      %8055 = vmatpush1.msra.mxu0 0.0
      %8056 = vmatprep.subr.mxu0 0.0
      %8057 = vmatpush1.msra.mxu0 0.0
      %8058 = vmatprep.subr.mxu0 0.0
      %8059 = vmatpush1.msra.mxu0 0.0
      %8060 = vmatprep.subr.mxu0 0.0
      %8061 = vmatpush1.msra.mxu0 0.0
      %8062 = vmatprep.subr.mxu0 0.0
      %8063 = vmatpush1.msra.mxu0 0.0
      %8064 = vmatprep.subr.mxu0 0.0
      %8065 = vmatpush1.msra.mxu0 0.0
      %8066 = vmatprep.subr.mxu0 0.0
      %8067 = vmatpush1.msra.mxu0 0.0
      %8068 = vmatprep.subr.mxu0 0.0
      %8069 = vmatpush1.msra.mxu0 0.0
      %8070 = vmatprep.subr.mxu0 0.0
      %8071 = vmatpush1.msra.mxu0 0.0
      %8072 = vmatprep.subr.mxu0 0.0
      %8073 = vmatpush1.msra.mxu0 0.0
      %8074 = vmatprep.subr.mxu0 0.0
      %8075 = vmatpush1.msra.mxu0 0.0
      %8076 = vmatprep.subr.mxu0 0.0
      %8077 = vmatpush1.msra.mxu0 0.0
      %8078 = vmatprep.subr.mxu0 0.0
      %8079 = vmatpush1.msra.mxu0 0.0
      %8080 = vmatprep.subr.mxu0 0.0
      %8081 = vmatpush1.msra.mxu0 0.0
      %v8082 = vand.u32 %v7695, 4294901760
      %v8083 = vsub.f32 %v7695, %v8082
      %8084 = vmatprep.mubr.f32.mxu0 %v8083
      %v8085 = vand.u32 %v7678, 4294901760
      %v8086 = vsub.f32 %v7678, %v8085
      %8087 = vmatmul.mubr.f32.gmra.mrb[0].mxu0 %v8086
      %v8088 = vpop.f32.mrb[0].mxu0
      %v8089 = vadd.f32 %v7972, %v8088
      %v8090 = vpop.f32.mrb[0].mxu0
      %v8091 = vand.u32 %v7698, 4294901760
      %v8092 = vsub.f32 %v7698, %v8091
      %8093 = vmatprep.mubr.f32.mxu0 %v8092
      %v8094 = vand.u32 %v7680, 4294901760
      %v8095 = vsub.f32 %v7680, %v8094
      %8096 = vmatmul.mubr.f32.gmra.mrb[0].mxu0 %v8095
      %v8097 = vpop.f32.mrb[0].mxu0
      %v8098 = vadd.f32 %v7979, %v8097
      %v8099 = vpop.f32.mrb[0].mxu0
      %8100 = vdwg.mxu0
      %8101 = vmatprep.subr.mxu0 0.0
      %v8102 = vand.u32 %v7647, 4294901760
      %8103 = vmatpush1.msra.mxu0 %v8102
      %8104 = vmatprep.subr.mxu0 0.0
      %v8105 = vand.u32 %v7649, 4294901760
      %8106 = vmatpush1.msra.mxu0 %v8105
      %8107 = vmatprep.subr.mxu0 0.0
      %v8108 = vand.u32 %v7651, 4294901760
      %8109 = vmatpush1.msra.mxu0 %v8108
      %8110 = vmatprep.subr.mxu0 0.0
      %v8111 = vand.u32 %v7653, 4294901760
      %8112 = vmatpush1.msra.mxu0 %v8111
      %8113 = vmatprep.subr.mxu0 0.0
      %v8114 = vand.u32 %v7655, 4294901760
      %8115 = vmatpush1.msra.mxu0 %v8114
      %8116 = vmatprep.subr.mxu0 0.0
      %v8117 = vand.u32 %v7657, 4294901760
      %8118 = vmatpush1.msra.mxu0 %v8117
      %8119 = vmatprep.subr.mxu0 0.0
      %v8120 = vand.u32 %v7659, 4294901760
      %8121 = vmatpush1.msra.mxu0 %v8120
      %8122 = vmatprep.subr.mxu0 0.0
      %v8123 = vand.u32 %v7661, 4294901760
      %8124 = vmatpush1.msra.mxu0 %v8123
      %8125 = vmatprep.subr.mxu0 0.0
      %v8126 = vand.u32 %v7644, 4294901760
      %8127 = vmatpush1.msra.mxu0 %v8126
      %8128 = vmatprep.subr.mxu0 0.0
      %v8129 = vand.u32 %v7645, 4294901760
      %8130 = vmatpush1.msra.mxu0 %v8129
      %8131 = vmatprep.subr.mxu0 0.0
      %v8132 = vand.u32 %v7663, 4294901760
      %8133 = vmatpush1.msra.mxu0 %v8132
      %8134 = vmatprep.subr.mxu0 0.0
      %v8135 = vand.u32 %v7665, 4294901760
      %8136 = vmatpush1.msra.mxu0 %v8135
      %8137 = vmatprep.subr.mxu0 0.0
      %v8138 = vand.u32 %v7667, 4294901760
      %8139 = vmatpush1.msra.mxu0 %v8138
      %8140 = vmatprep.subr.mxu0 0.0
      %v8141 = vand.u32 %v7669, 4294901760
      %8142 = vmatpush1.msra.mxu0 %v8141
      %8143 = vmatprep.subr.mxu0 0.0
      %v8144 = vand.u32 %v7671, 4294901760
      %8145 = vmatpush1.msra.mxu0 %v8144
      %8146 = vmatprep.subr.mxu0 0.0
      %v8147 = vand.u32 %v7673, 4294901760
      %8148 = vmatpush1.msra.mxu0 %v8147
      %8149 = vmatprep.subr.mxu0 0.0
      %v8150 = vand.u32 %v7675, 4294901760
      %8151 = vmatpush1.msra.mxu0 %v8150
      %8152 = vmatprep.subr.mxu0 0.0
      %v8153 = vand.u32 %v7677, 4294901760
      %8154 = vmatpush1.msra.mxu0 %v8153
      %8155 = vmatprep.subr.mxu0 0.0
      %8156 = vmatpush1.msra.mxu0 0.0
      %8157 = vmatprep.subr.mxu0 0.0
      %8158 = vmatpush1.msra.mxu0 0.0
      %8159 = vmatprep.subr.mxu0 0.0
      %8160 = vmatpush1.msra.mxu0 0.0
      %8161 = vmatprep.subr.mxu0 0.0
      %8162 = vmatpush1.msra.mxu0 0.0
      %8163 = vmatprep.subr.mxu0 0.0
      %8164 = vmatpush1.msra.mxu0 0.0
      %8165 = vmatprep.subr.mxu0 0.0
      %8166 = vmatpush1.msra.mxu0 0.0
      %8167 = vmatprep.subr.mxu0 0.0
      %8168 = vmatpush1.msra.mxu0 0.0
      %8169 = vmatprep.subr.mxu0 0.0
      %8170 = vmatpush1.msra.mxu0 0.0
      %8171 = vmatprep.subr.mxu0 0.0
      %8172 = vmatpush1.msra.mxu0 0.0
      %8173 = vmatprep.subr.mxu0 0.0
      %8174 = vmatpush1.msra.mxu0 0.0
      %8175 = vmatprep.subr.mxu0 0.0
      %8176 = vmatpush1.msra.mxu0 0.0
      %8177 = vmatprep.subr.mxu0 0.0
      %8178 = vmatpush1.msra.mxu0 0.0
      %8179 = vmatprep.subr.mxu0 0.0
      %8180 = vmatpush1.msra.mxu0 0.0
      %8181 = vmatprep.subr.mxu0 0.0
      %8182 = vmatpush1.msra.mxu0 0.0
      %v8183 = vand.u32 %v7695, 4294901760
      %v8184 = vsub.f32 %v7695, %v8183
      %v8185 = vand.u32 %v8184, 4294901760
      %8186 = vmatprep.mubr.f32.mxu0 %v8185
      %v8187 = vand.u32 %v7678, 4294901760
      %v8188 = vsub.f32 %v7678, %v8187
      %v8189 = vand.u32 %v8188, 4294901760
      %8190 = vmatmul.mubr.f32.gmra.mrb[0].mxu0 %v8189
      %v8191 = vpop.f32.mrb[0].mxu0
      %v8192 = vadd.f32 %v8089, %v8191
      %v8193 = vpop.f32.mrb[0].mxu0
      %v8194 = vand.u32 %v7698, 4294901760
      %v8195 = vsub.f32 %v7698, %v8194
      %v8196 = vand.u32 %v8195, 4294901760
      %8197 = vmatprep.mubr.f32.mxu0 %v8196
      %v8198 = vand.u32 %v7680, 4294901760
      %v8199 = vsub.f32 %v7680, %v8198
      %v8200 = vand.u32 %v8199, 4294901760
      %8201 = vmatmul.mubr.f32.gmra.mrb[0].mxu0 %v8200
      %v8202 = vpop.f32.mrb[0].mxu0
      %v8203 = vadd.f32 %v8098, %v8202
      %v8204 = vpop.f32.mrb[0].mxu0
      %8205 = vdwg.mxu0
      %8206 = vmatprep.subr.mxu0 0.0
      %v8207 = vand.u32 %v7647, 4294901760
      %v8208 = vsub.f32 %v7647, %v8207
      %v8209 = vand.u32 %v8208, 4294901760
      %8210 = vmatpush1.msra.mxu0 %v8209
      %8211 = vmatprep.subr.mxu0 0.0
      %v8212 = vand.u32 %v7649, 4294901760
      %v8213 = vsub.f32 %v7649, %v8212
      %v8214 = vand.u32 %v8213, 4294901760
      %8215 = vmatpush1.msra.mxu0 %v8214
      %8216 = vmatprep.subr.mxu0 0.0
      %v8217 = vand.u32 %v7651, 4294901760
      %v8218 = vsub.f32 %v7651, %v8217
      %v8219 = vand.u32 %v8218, 4294901760
      %8220 = vmatpush1.msra.mxu0 %v8219
      %8221 = vmatprep.subr.mxu0 0.0
      %v8222 = vand.u32 %v7653, 4294901760
      %v8223 = vsub.f32 %v7653, %v8222
      %v8224 = vand.u32 %v8223, 4294901760
      %8225 = vmatpush1.msra.mxu0 %v8224
      %8226 = vmatprep.subr.mxu0 0.0
      %v8227 = vand.u32 %v7655, 4294901760
      %v8228 = vsub.f32 %v7655, %v8227
      %v8229 = vand.u32 %v8228, 4294901760
      %8230 = vmatpush1.msra.mxu0 %v8229
      %8231 = vmatprep.subr.mxu0 0.0
      %v8232 = vand.u32 %v7657, 4294901760
      %v8233 = vsub.f32 %v7657, %v8232
      %v8234 = vand.u32 %v8233, 4294901760
      %8235 = vmatpush1.msra.mxu0 %v8234
      %8236 = vmatprep.subr.mxu0 0.0
      %v8237 = vand.u32 %v7659, 4294901760
      %v8238 = vsub.f32 %v7659, %v8237
      %v8239 = vand.u32 %v8238, 4294901760
      %8240 = vmatpush1.msra.mxu0 %v8239
      %8241 = vmatprep.subr.mxu0 0.0
      %v8242 = vand.u32 %v7661, 4294901760
      %v8243 = vsub.f32 %v7661, %v8242
      %v8244 = vand.u32 %v8243, 4294901760
      %8245 = vmatpush1.msra.mxu0 %v8244
      %8246 = vmatprep.subr.mxu0 0.0
      %v8247 = vand.u32 %v7644, 4294901760
      %v8248 = vsub.f32 %v7644, %v8247
      %v8249 = vand.u32 %v8248, 4294901760
      %8250 = vmatpush1.msra.mxu0 %v8249
      %8251 = vmatprep.subr.mxu0 0.0
      %v8252 = vand.u32 %v7645, 4294901760
      %v8253 = vsub.f32 %v7645, %v8252
      %v8254 = vand.u32 %v8253, 4294901760
      %8255 = vmatpush1.msra.mxu0 %v8254
      %8256 = vmatprep.subr.mxu0 0.0
      %v8257 = vand.u32 %v7663, 4294901760
      %v8258 = vsub.f32 %v7663, %v8257
      %v8259 = vand.u32 %v8258, 4294901760
      %8260 = vmatpush1.msra.mxu0 %v8259
      %8261 = vmatprep.subr.mxu0 0.0
      %v8262 = vand.u32 %v7665, 4294901760
      %v8263 = vsub.f32 %v7665, %v8262
      %v8264 = vand.u32 %v8263, 4294901760
      %8265 = vmatpush1.msra.mxu0 %v8264
      %8266 = vmatprep.subr.mxu0 0.0
      %v8267 = vand.u32 %v7667, 4294901760
      %v8268 = vsub.f32 %v7667, %v8267
      %v8269 = vand.u32 %v8268, 4294901760
      %8270 = vmatpush1.msra.mxu0 %v8269
      %8271 = vmatprep.subr.mxu0 0.0
      %v8272 = vand.u32 %v7669, 4294901760
      %v8273 = vsub.f32 %v7669, %v8272
      %v8274 = vand.u32 %v8273, 4294901760
      %8275 = vmatpush1.msra.mxu0 %v8274
      %8276 = vmatprep.subr.mxu0 0.0
      %v8277 = vand.u32 %v7671, 4294901760
      %v8278 = vsub.f32 %v7671, %v8277
      %v8279 = vand.u32 %v8278, 4294901760
      %8280 = vmatpush1.msra.mxu0 %v8279
      %8281 = vmatprep.subr.mxu0 0.0
      %v8282 = vand.u32 %v7673, 4294901760
      %v8283 = vsub.f32 %v7673, %v8282
      %v8284 = vand.u32 %v8283, 4294901760
      %8285 = vmatpush1.msra.mxu0 %v8284
      %8286 = vmatprep.subr.mxu0 0.0
      %v8287 = vand.u32 %v7675, 4294901760
      %v8288 = vsub.f32 %v7675, %v8287
      %v8289 = vand.u32 %v8288, 4294901760
      %8290 = vmatpush1.msra.mxu0 %v8289
      %8291 = vmatprep.subr.mxu0 0.0
      %v8292 = vand.u32 %v7677, 4294901760
      %v8293 = vsub.f32 %v7677, %v8292
      %v8294 = vand.u32 %v8293, 4294901760
      %8295 = vmatpush1.msra.mxu0 %v8294
      %8296 = vmatprep.subr.mxu0 0.0
      %8297 = vmatpush1.msra.mxu0 0.0
      %8298 = vmatprep.subr.mxu0 0.0
      %8299 = vmatpush1.msra.mxu0 0.0
      %8300 = vmatprep.subr.mxu0 0.0
      %8301 = vmatpush1.msra.mxu0 0.0
      %8302 = vmatprep.subr.mxu0 0.0
      %8303 = vmatpush1.msra.mxu0 0.0
      %8304 = vmatprep.subr.mxu0 0.0
      %8305 = vmatpush1.msra.mxu0 0.0
      %8306 = vmatprep.subr.mxu0 0.0
      %8307 = vmatpush1.msra.mxu0 0.0
      %8308 = vmatprep.subr.mxu0 0.0
      %8309 = vmatpush1.msra.mxu0 0.0
      %8310 = vmatprep.subr.mxu0 0.0
      %8311 = vmatpush1.msra.mxu0 0.0
      %8312 = vmatprep.subr.mxu0 0.0
      %8313 = vmatpush1.msra.mxu0 0.0
      %8314 = vmatprep.subr.mxu0 0.0
      %8315 = vmatpush1.msra.mxu0 0.0
      %8316 = vmatprep.subr.mxu0 0.0
      %8317 = vmatpush1.msra.mxu0 0.0
      %8318 = vmatprep.subr.mxu0 0.0
      %8319 = vmatpush1.msra.mxu0 0.0
      %8320 = vmatprep.subr.mxu0 0.0
      %8321 = vmatpush1.msra.mxu0 0.0
      %8322 = vmatprep.subr.mxu0 0.0
      %8323 = vmatpush1.msra.mxu0 0.0
      %v8324 = vand.u32 %v7695, 4294901760
      %8325 = vmatprep.mubr.f32.mxu0 %v8324
      %v8326 = vand.u32 %v7678, 4294901760
      %8327 = vmatmul.mubr.f32.gmra.mrb[0].mxu0 %v8326
      %v8328 = vpop.f32.mrb[0].mxu0
      %v8329 = vadd.f32 %v8192, %v8328
      %v8330 = vpop.f32.mrb[0].mxu0
      %v8331 = vand.u32 %v7698, 4294901760
      %8332 = vmatprep.mubr.f32.mxu0 %v8331
      %v8333 = vand.u32 %v7680, 4294901760
      %8334 = vmatmul.mubr.f32.gmra.mrb[0].mxu0 %v8333
      %v8335 = vpop.f32.mrb[0].mxu0
      %v8336 = vadd.f32 %v8203, %v8335
      %v8337 = vpop.f32.mrb[0].mxu0
      %8338 = vdwg.mxu0
      %8339 = vmatprep.subr.mxu0 0.0
      %v8340 = vand.u32 %v7647, 4294901760
      %8341 = vmatpush1.msra.mxu0 %v8340
      %8342 = vmatprep.subr.mxu0 0.0
      %v8343 = vand.u32 %v7649, 4294901760
      %8344 = vmatpush1.msra.mxu0 %v8343
      %8345 = vmatprep.subr.mxu0 0.0
      %v8346 = vand.u32 %v7651, 4294901760
      %8347 = vmatpush1.msra.mxu0 %v8346
      %8348 = vmatprep.subr.mxu0 0.0
      %v8349 = vand.u32 %v7653, 4294901760
      %8350 = vmatpush1.msra.mxu0 %v8349
      %8351 = vmatprep.subr.mxu0 0.0
      %v8352 = vand.u32 %v7655, 4294901760
      %8353 = vmatpush1.msra.mxu0 %v8352
      %8354 = vmatprep.subr.mxu0 0.0
      %v8355 = vand.u32 %v7657, 4294901760
      %8356 = vmatpush1.msra.mxu0 %v8355
      %8357 = vmatprep.subr.mxu0 0.0
      %v8358 = vand.u32 %v7659, 4294901760
      %8359 = vmatpush1.msra.mxu0 %v8358
      %8360 = vmatprep.subr.mxu0 0.0
      %v8361 = vand.u32 %v7661, 4294901760
      %8362 = vmatpush1.msra.mxu0 %v8361
      %8363 = vmatprep.subr.mxu0 0.0
      %v8364 = vand.u32 %v7644, 4294901760
      %8365 = vmatpush1.msra.mxu0 %v8364
      %8366 = vmatprep.subr.mxu0 0.0
      %v8367 = vand.u32 %v7645, 4294901760
      %8368 = vmatpush1.msra.mxu0 %v8367
      %8369 = vmatprep.subr.mxu0 0.0
      %v8370 = vand.u32 %v7663, 4294901760
      %8371 = vmatpush1.msra.mxu0 %v8370
      %8372 = vmatprep.subr.mxu0 0.0
      %v8373 = vand.u32 %v7665, 4294901760
      %8374 = vmatpush1.msra.mxu0 %v8373
      %8375 = vmatprep.subr.mxu0 0.0
      %v8376 = vand.u32 %v7667, 4294901760
      %8377 = vmatpush1.msra.mxu0 %v8376
      %8378 = vmatprep.subr.mxu0 0.0
      %v8379 = vand.u32 %v7669, 4294901760
      %8380 = vmatpush1.msra.mxu0 %v8379
      %8381 = vmatprep.subr.mxu0 0.0
      %v8382 = vand.u32 %v7671, 4294901760
      %8383 = vmatpush1.msra.mxu0 %v8382
      %8384 = vmatprep.subr.mxu0 0.0
      %v8385 = vand.u32 %v7673, 4294901760
      %8386 = vmatpush1.msra.mxu0 %v8385
      %8387 = vmatprep.subr.mxu0 0.0
      %v8388 = vand.u32 %v7675, 4294901760
      %8389 = vmatpush1.msra.mxu0 %v8388
      %8390 = vmatprep.subr.mxu0 0.0
      %v8391 = vand.u32 %v7677, 4294901760
      %8392 = vmatpush1.msra.mxu0 %v8391
      %8393 = vmatprep.subr.mxu0 0.0
      %8394 = vmatpush1.msra.mxu0 0.0
      %8395 = vmatprep.subr.mxu0 0.0
      %8396 = vmatpush1.msra.mxu0 0.0
      %8397 = vmatprep.subr.mxu0 0.0
      %8398 = vmatpush1.msra.mxu0 0.0
      %8399 = vmatprep.subr.mxu0 0.0
      %8400 = vmatpush1.msra.mxu0 0.0
      %8401 = vmatprep.subr.mxu0 0.0
      %8402 = vmatpush1.msra.mxu0 0.0
      %8403 = vmatprep.subr.mxu0 0.0
      %8404 = vmatpush1.msra.mxu0 0.0
      %8405 = vmatprep.subr.mxu0 0.0
      %8406 = vmatpush1.msra.mxu0 0.0
      %8407 = vmatprep.subr.mxu0 0.0
      %8408 = vmatpush1.msra.mxu0 0.0
      %8409 = vmatprep.subr.mxu0 0.0
      %8410 = vmatpush1.msra.mxu0 0.0
      %8411 = vmatprep.subr.mxu0 0.0
      %8412 = vmatpush1.msra.mxu0 0.0
      %8413 = vmatprep.subr.mxu0 0.0
      %8414 = vmatpush1.msra.mxu0 0.0
      %8415 = vmatprep.subr.mxu0 0.0
      %8416 = vmatpush1.msra.mxu0 0.0
      %8417 = vmatprep.subr.mxu0 0.0
      %8418 = vmatpush1.msra.mxu0 0.0
      %8419 = vmatprep.subr.mxu0 0.0
      %8420 = vmatpush1.msra.mxu0 0.0
      %v8421 = vand.u32 %v7695, 4294901760
      %8422 = vmatprep.mubr.f32.mxu0 %v8421
      %v8423 = vand.u32 %v7678, 4294901760
      %8424 = vmatmul.mubr.f32.gmra.mrb[0].mxu0 %v8423
      %v8425 = vpop.f32.mrb[0].mxu0
      %v8426 = vadd.f32 %v8329, %v8425
      %v8427 = vpop.f32.mrb[0].mxu0
      %v8428 = vand.u32 %v7698, 4294901760
      %8429 = vmatprep.mubr.f32.mxu0 %v8428
      %v8430 = vand.u32 %v7680, 4294901760
      %8431 = vmatmul.mubr.f32.gmra.mrb[0].mxu0 %v8430
      %v8432 = vpop.f32.mrb[0].mxu0
      %v8433 = vadd.f32 %v8336, %v8432
      %v8434 = vpop.f32.mrb[0].mxu0
      %8435 = vdwg.mxu0
      %v8436 = vmax.f32 %v8426, 0.0
      %v8437 = vmax.f32 %v8433, 0.0
      %v8438 = vmul.f32 %v8436, %v5260
      %v8439 = vmul.f32 %v8437, %v5260
      %8440 = vrot.lane.b32.xlu0 %v8438, 10
      %v8441 = vpop.permute.xlu0 %8440
      %8442 = vrot.lane.b32.xlu0 %v8439, 10
      %v8443 = vpop.permute.xlu0 %8442
      %8444 = vrot.lane.b32.xlu0 %v8438, 9
      %v8445 = vpop.permute.xlu0 %8444
      %8446 = vrot.lane.b32.xlu0 %v8439, 9
      %v8447 = vpop.permute.xlu0 %8446
      %8448 = vrot.lane.b32.xlu0 %v8438, 8
      %v8449 = vpop.permute.xlu0 %8448
      %8450 = vrot.lane.b32.xlu0 %v8439, 8
      %v8451 = vpop.permute.xlu0 %8450
      %8452 = vrot.lane.b32.xlu0 %v8438, 1
      %v8453 = vpop.permute.xlu0 %8452
      %8454 = vrot.lane.b32.xlu0 %v8439, 1
      %v8455 = vpop.permute.xlu0 %8454
      %8456 = vrot.lane.b32.xlu0 %v8438, 127
      %v8457 = vpop.permute.xlu0 %8456
      %8458 = vrot.lane.b32.xlu0 %v8439, 127
      %v8459 = vpop.permute.xlu0 %8458
      %8460 = vrot.lane.b32.xlu0 %v8438, 120
      %v8461 = vpop.permute.xlu0 %8460
      %8462 = vrot.lane.b32.xlu0 %v8439, 120
      %v8463 = vpop.permute.xlu0 %8462
      %8464 = vrot.lane.b32.xlu0 %v8438, 119
      %v8465 = vpop.permute.xlu0 %8464
      %8466 = vrot.lane.b32.xlu0 %v8439, 119
      %v8467 = vpop.permute.xlu0 %8466
      %8468 = vrot.lane.b32.xlu0 %v8438, 118
      %v8469 = vpop.permute.xlu0 %8468
      %8470 = vrot.lane.b32.xlu0 %v8439, 118
      %v8471 = vpop.permute.xlu0 %8470
      %v8472 = vld [vmem:[%s9 + $0x80] sm:$0xff]
      %v8473 = vld [vmem:[%s9 + $0x88] sm:$0xff]
      %v8474 = vld [vmem:[%s9 + $0x90] sm:$0xff]
      %v8475 = vld [vmem:[%s9 + $0x98] sm:$0xff]
      %v8476 = vld [vmem:[%s10 + $0x40] sm:$0xff]
      %v8477 = vld [vmem:[%s10 + $0x48] sm:$0xff]
      %8479 = vset.pattern.permute.xlu0 0
      %8480 = vperm.xlu0 %8479, %v8476
      %v8481 = vpop.permute.xlu0 %8480
      %8484 = vset.pattern.permute.xlu0 0
      %8485 = vperm.xlu0 %8484, %v8477
      %v8486 = vpop.permute.xlu0 %8485
      %v8489 = vsel %vm5311, %v8473, 0
      %v8492 = vsel %vm5311, %v8475, 0
      %8494 = vmatprep.subr.mxu0 0.0
      %v8495 = vand.u32 %v8441, 4294901760
      %8496 = vmatpush1.msra.mxu0 %v8495
      %8497 = vmatprep.subr.mxu0 0.0
      %v8498 = vand.u32 %v8443, 4294901760
      %8499 = vmatpush1.msra.mxu0 %v8498
      %8500 = vmatprep.subr.mxu0 0.0
      %v8501 = vand.u32 %v8445, 4294901760
      %8502 = vmatpush1.msra.mxu0 %v8501
      %8503 = vmatprep.subr.mxu0 0.0
      %v8504 = vand.u32 %v8447, 4294901760
      %8505 = vmatpush1.msra.mxu0 %v8504
      %8506 = vmatprep.subr.mxu0 0.0
      %v8507 = vand.u32 %v8449, 4294901760
      %8508 = vmatpush1.msra.mxu0 %v8507
      %8509 = vmatprep.subr.mxu0 0.0
      %v8510 = vand.u32 %v8451, 4294901760
      %8511 = vmatpush1.msra.mxu0 %v8510
      %8512 = vmatprep.subr.mxu0 0.0
      %v8513 = vand.u32 %v8453, 4294901760
      %8514 = vmatpush1.msra.mxu0 %v8513
      %8515 = vmatprep.subr.mxu0 0.0
      %v8516 = vand.u32 %v8455, 4294901760
      %8517 = vmatpush1.msra.mxu0 %v8516
      %8518 = vmatprep.subr.mxu0 0.0
      %v8519 = vand.u32 %v8438, 4294901760
      %8520 = vmatpush1.msra.mxu0 %v8519
      %8521 = vmatprep.subr.mxu0 0.0
      %v8522 = vand.u32 %v8439, 4294901760
      %8523 = vmatpush1.msra.mxu0 %v8522
      %8524 = vmatprep.subr.mxu0 0.0
      %v8525 = vand.u32 %v8457, 4294901760
      %8526 = vmatpush1.msra.mxu0 %v8525
      %8527 = vmatprep.subr.mxu0 0.0
      %v8528 = vand.u32 %v8459, 4294901760
      %8529 = vmatpush1.msra.mxu0 %v8528
      %8530 = vmatprep.subr.mxu0 0.0
      %v8531 = vand.u32 %v8461, 4294901760
      %8532 = vmatpush1.msra.mxu0 %v8531
      %8533 = vmatprep.subr.mxu0 0.0
      %v8534 = vand.u32 %v8463, 4294901760
      %8535 = vmatpush1.msra.mxu0 %v8534
      %8536 = vmatprep.subr.mxu0 0.0
      %v8537 = vand.u32 %v8465, 4294901760
      %8538 = vmatpush1.msra.mxu0 %v8537
      %8539 = vmatprep.subr.mxu0 0.0
      %v8540 = vand.u32 %v8467, 4294901760
      %8541 = vmatpush1.msra.mxu0 %v8540
      %8542 = vmatprep.subr.mxu0 0.0
      %v8543 = vand.u32 %v8469, 4294901760
      %8544 = vmatpush1.msra.mxu0 %v8543
      %8545 = vmatprep.subr.mxu0 0.0
      %v8546 = vand.u32 %v8471, 4294901760
      %8547 = vmatpush1.msra.mxu0 %v8546
      %8548 = vmatprep.subr.mxu0 0.0
      %8549 = vmatpush1.msra.mxu0 0.0
      %8550 = vmatprep.subr.mxu0 0.0
      %8551 = vmatpush1.msra.mxu0 0.0
      %8552 = vmatprep.subr.mxu0 0.0
      %8553 = vmatpush1.msra.mxu0 0.0
      %8554 = vmatprep.subr.mxu0 0.0
      %8555 = vmatpush1.msra.mxu0 0.0
      %8556 = vmatprep.subr.mxu0 0.0
      %8557 = vmatpush1.msra.mxu0 0.0
      %8558 = vmatprep.subr.mxu0 0.0
      %8559 = vmatpush1.msra.mxu0 0.0
      %8560 = vmatprep.subr.mxu0 0.0
      %8561 = vmatpush1.msra.mxu0 0.0
      %8562 = vmatprep.subr.mxu0 0.0
      %8563 = vmatpush1.msra.mxu0 0.0
      %8564 = vmatprep.subr.mxu0 0.0
      %8565 = vmatpush1.msra.mxu0 0.0
      %8566 = vmatprep.subr.mxu0 0.0
      %8567 = vmatpush1.msra.mxu0 0.0
      %8568 = vmatprep.subr.mxu0 0.0
      %8569 = vmatpush1.msra.mxu0 0.0
      %8570 = vmatprep.subr.mxu0 0.0
      %8571 = vmatpush1.msra.mxu0 0.0
      %8572 = vmatprep.subr.mxu0 0.0
      %8573 = vmatpush1.msra.mxu0 0.0
      %8574 = vmatprep.subr.mxu0 0.0
      %8575 = vmatpush1.msra.mxu0 0.0
      %v8576 = vand.u32 %v8489, 4294901760
      %v8577 = vsub.f32 %v8489, %v8576
      %v8578 = vand.u32 %v8577, 4294901760
      %v8579 = vsub.f32 %v8577, %v8578
      %v8580 = vand.u32 %v8579, 4294901760
      %8581 = vmatprep.mubr.f32.mxu0 %v8580
      %v8582 = vand.u32 %v8472, 4294901760
      %v8583 = vsub.f32 %v8472, %v8582
      %v8584 = vand.u32 %v8583, 4294901760
      %v8585 = vsub.f32 %v8583, %v8584
      %v8586 = vand.u32 %v8585, 4294901760
      %8587 = vmatmul.mubr.f32.gmra.mrb[0].mxu0 %v8586
      %v8588 = vpop.f32.mrb[0].mxu0
      %v8589 = vadd.f32 %v8481, %v8588
      %v8590 = vpop.f32.mrb[0].mxu0
      %v8591 = vand.u32 %v8492, 4294901760
      %v8592 = vsub.f32 %v8492, %v8591
      %v8593 = vand.u32 %v8592, 4294901760
      %v8594 = vsub.f32 %v8592, %v8593
      %v8595 = vand.u32 %v8594, 4294901760
      %8596 = vmatprep.mubr.f32.mxu0 %v8595
      %v8597 = vand.u32 %v8474, 4294901760
      %v8598 = vsub.f32 %v8474, %v8597
      %v8599 = vand.u32 %v8598, 4294901760
      %v8600 = vsub.f32 %v8598, %v8599
      %v8601 = vand.u32 %v8600, 4294901760
      %8602 = vmatmul.mubr.f32.gmra.mrb[0].mxu0 %v8601
      %v8603 = vpop.f32.mrb[0].mxu0
      %v8604 = vadd.f32 %v8486, %v8603
      %v8605 = vpop.f32.mrb[0].mxu0
      %8606 = vdwg.mxu0
      %8607 = vmatprep.subr.mxu0 0.0
      %v8608 = vand.u32 %v8441, 4294901760
      %v8609 = vsub.f32 %v8441, %v8608
      %v8610 = vand.u32 %v8609, 4294901760
      %v8611 = vsub.f32 %v8609, %v8610
      %v8612 = vand.u32 %v8611, 4294901760
      %8613 = vmatpush1.msra.mxu0 %v8612
      %8614 = vmatprep.subr.mxu0 0.0
      %v8615 = vand.u32 %v8443, 4294901760
      %v8616 = vsub.f32 %v8443, %v8615
      %v8617 = vand.u32 %v8616, 4294901760
      %v8618 = vsub.f32 %v8616, %v8617
      %v8619 = vand.u32 %v8618, 4294901760
      %8620 = vmatpush1.msra.mxu0 %v8619
      %8621 = vmatprep.subr.mxu0 0.0
      %v8622 = vand.u32 %v8445, 4294901760
      %v8623 = vsub.f32 %v8445, %v8622
      %v8624 = vand.u32 %v8623, 4294901760
      %v8625 = vsub.f32 %v8623, %v8624
      %v8626 = vand.u32 %v8625, 4294901760
      %8627 = vmatpush1.msra.mxu0 %v8626
      %8628 = vmatprep.subr.mxu0 0.0
      %v8629 = vand.u32 %v8447, 4294901760
      %v8630 = vsub.f32 %v8447, %v8629
      %v8631 = vand.u32 %v8630, 4294901760
      %v8632 = vsub.f32 %v8630, %v8631
      %v8633 = vand.u32 %v8632, 4294901760
      %8634 = vmatpush1.msra.mxu0 %v8633
      %8635 = vmatprep.subr.mxu0 0.0
      %v8636 = vand.u32 %v8449, 4294901760
      %v8637 = vsub.f32 %v8449, %v8636
      %v8638 = vand.u32 %v8637, 4294901760
      %v8639 = vsub.f32 %v8637, %v8638
      %v8640 = vand.u32 %v8639, 4294901760
      %8641 = vmatpush1.msra.mxu0 %v8640
      %8642 = vmatprep.subr.mxu0 0.0
      %v8643 = vand.u32 %v8451, 4294901760
      %v8644 = vsub.f32 %v8451, %v8643
      %v8645 = vand.u32 %v8644, 4294901760
      %v8646 = vsub.f32 %v8644, %v8645
      %v8647 = vand.u32 %v8646, 4294901760
      %8648 = vmatpush1.msra.mxu0 %v8647
      %8649 = vmatprep.subr.mxu0 0.0
      %v8650 = vand.u32 %v8453, 4294901760
      %v8651 = vsub.f32 %v8453, %v8650
      %v8652 = vand.u32 %v8651, 4294901760
      %v8653 = vsub.f32 %v8651, %v8652
      %v8654 = vand.u32 %v8653, 4294901760
      %8655 = vmatpush1.msra.mxu0 %v8654
      %8656 = vmatprep.subr.mxu0 0.0
      %v8657 = vand.u32 %v8455, 4294901760
      %v8658 = vsub.f32 %v8455, %v8657
      %v8659 = vand.u32 %v8658, 4294901760
      %v8660 = vsub.f32 %v8658, %v8659
      %v8661 = vand.u32 %v8660, 4294901760
      %8662 = vmatpush1.msra.mxu0 %v8661
      %8663 = vmatprep.subr.mxu0 0.0
      %v8664 = vand.u32 %v8438, 4294901760
      %v8665 = vsub.f32 %v8438, %v8664
      %v8666 = vand.u32 %v8665, 4294901760
      %v8667 = vsub.f32 %v8665, %v8666
      %v8668 = vand.u32 %v8667, 4294901760
      %8669 = vmatpush1.msra.mxu0 %v8668
      %8670 = vmatprep.subr.mxu0 0.0
      %v8671 = vand.u32 %v8439, 4294901760
      %v8672 = vsub.f32 %v8439, %v8671
      %v8673 = vand.u32 %v8672, 4294901760
      %v8674 = vsub.f32 %v8672, %v8673
      %v8675 = vand.u32 %v8674, 4294901760
      %8676 = vmatpush1.msra.mxu0 %v8675
      %8677 = vmatprep.subr.mxu0 0.0
      %v8678 = vand.u32 %v8457, 4294901760
      %v8679 = vsub.f32 %v8457, %v8678
      %v8680 = vand.u32 %v8679, 4294901760
      %v8681 = vsub.f32 %v8679, %v8680
      %v8682 = vand.u32 %v8681, 4294901760
      %8683 = vmatpush1.msra.mxu0 %v8682
      %8684 = vmatprep.subr.mxu0 0.0
      %v8685 = vand.u32 %v8459, 4294901760
      %v8686 = vsub.f32 %v8459, %v8685
      %v8687 = vand.u32 %v8686, 4294901760
      %v8688 = vsub.f32 %v8686, %v8687
      %v8689 = vand.u32 %v8688, 4294901760
      %8690 = vmatpush1.msra.mxu0 %v8689
      %8691 = vmatprep.subr.mxu0 0.0
      %v8692 = vand.u32 %v8461, 4294901760
      %v8693 = vsub.f32 %v8461, %v8692
      %v8694 = vand.u32 %v8693, 4294901760
      %v8695 = vsub.f32 %v8693, %v8694
      %v8696 = vand.u32 %v8695, 4294901760
      %8697 = vmatpush1.msra.mxu0 %v8696
      %8698 = vmatprep.subr.mxu0 0.0
      %v8699 = vand.u32 %v8463, 4294901760
      %v8700 = vsub.f32 %v8463, %v8699
      %v8701 = vand.u32 %v8700, 4294901760
      %v8702 = vsub.f32 %v8700, %v8701
      %v8703 = vand.u32 %v8702, 4294901760
      %8704 = vmatpush1.msra.mxu0 %v8703
      %8705 = vmatprep.subr.mxu0 0.0
      %v8706 = vand.u32 %v8465, 4294901760
      %v8707 = vsub.f32 %v8465, %v8706
      %v8708 = vand.u32 %v8707, 4294901760
      %v8709 = vsub.f32 %v8707, %v8708
      %v8710 = vand.u32 %v8709, 4294901760
      %8711 = vmatpush1.msra.mxu0 %v8710
      %8712 = vmatprep.subr.mxu0 0.0
      %v8713 = vand.u32 %v8467, 4294901760
      %v8714 = vsub.f32 %v8467, %v8713
      %v8715 = vand.u32 %v8714, 4294901760
      %v8716 = vsub.f32 %v8714, %v8715
      %v8717 = vand.u32 %v8716, 4294901760
      %8718 = vmatpush1.msra.mxu0 %v8717
      %8719 = vmatprep.subr.mxu0 0.0
      %v8720 = vand.u32 %v8469, 4294901760
      %v8721 = vsub.f32 %v8469, %v8720
      %v8722 = vand.u32 %v8721, 4294901760
      %v8723 = vsub.f32 %v8721, %v8722
      %v8724 = vand.u32 %v8723, 4294901760
      %8725 = vmatpush1.msra.mxu0 %v8724
      %8726 = vmatprep.subr.mxu0 0.0
      %v8727 = vand.u32 %v8471, 4294901760
      %v8728 = vsub.f32 %v8471, %v8727
      %v8729 = vand.u32 %v8728, 4294901760
      %v8730 = vsub.f32 %v8728, %v8729
      %v8731 = vand.u32 %v8730, 4294901760
      %8732 = vmatpush1.msra.mxu0 %v8731
      %8733 = vmatprep.subr.mxu0 0.0
      %8734 = vmatpush1.msra.mxu0 0.0
      %8735 = vmatprep.subr.mxu0 0.0
      %8736 = vmatpush1.msra.mxu0 0.0
      %8737 = vmatprep.subr.mxu0 0.0
      %8738 = vmatpush1.msra.mxu0 0.0
      %8739 = vmatprep.subr.mxu0 0.0
      %8740 = vmatpush1.msra.mxu0 0.0
      %8741 = vmatprep.subr.mxu0 0.0
      %8742 = vmatpush1.msra.mxu0 0.0
      %8743 = vmatprep.subr.mxu0 0.0
      %8744 = vmatpush1.msra.mxu0 0.0
      %8745 = vmatprep.subr.mxu0 0.0
      %8746 = vmatpush1.msra.mxu0 0.0
      %8747 = vmatprep.subr.mxu0 0.0
      %8748 = vmatpush1.msra.mxu0 0.0
      %8749 = vmatprep.subr.mxu0 0.0
      %8750 = vmatpush1.msra.mxu0 0.0
      %8751 = vmatprep.subr.mxu0 0.0
      %8752 = vmatpush1.msra.mxu0 0.0
      %8753 = vmatprep.subr.mxu0 0.0
      %8754 = vmatpush1.msra.mxu0 0.0
      %8755 = vmatprep.subr.mxu0 0.0
      %8756 = vmatpush1.msra.mxu0 0.0
      %8757 = vmatprep.subr.mxu0 0.0
      %8758 = vmatpush1.msra.mxu0 0.0
      %8759 = vmatprep.subr.mxu0 0.0
      %8760 = vmatpush1.msra.mxu0 0.0
      %v8761 = vand.u32 %v8489, 4294901760
      %8762 = vmatprep.mubr.f32.mxu0 %v8761
      %v8763 = vand.u32 %v8472, 4294901760
      %8764 = vmatmul.mubr.f32.gmra.mrb[0].mxu0 %v8763
      %v8765 = vpop.f32.mrb[0].mxu0
      %v8766 = vadd.f32 %v8589, %v8765
      %v8767 = vpop.f32.mrb[0].mxu0
      %v8768 = vand.u32 %v8492, 4294901760
      %8769 = vmatprep.mubr.f32.mxu0 %v8768
      %v8770 = vand.u32 %v8474, 4294901760
      %8771 = vmatmul.mubr.f32.gmra.mrb[0].mxu0 %v8770
      %v8772 = vpop.f32.mrb[0].mxu0
      %v8773 = vadd.f32 %v8604, %v8772
      %v8774 = vpop.f32.mrb[0].mxu0
      %8775 = vdwg.mxu0
      %8776 = vmatprep.subr.mxu0 0.0
      %v8777 = vand.u32 %v8441, 4294901760
      %v8778 = vsub.f32 %v8441, %v8777
      %8779 = vmatpush1.msra.mxu0 %v8778
      %8780 = vmatprep.subr.mxu0 0.0
      %v8781 = vand.u32 %v8443, 4294901760
      %v8782 = vsub.f32 %v8443, %v8781
      %8783 = vmatpush1.msra.mxu0 %v8782
      %8784 = vmatprep.subr.mxu0 0.0
      %v8785 = vand.u32 %v8445, 4294901760
      %v8786 = vsub.f32 %v8445, %v8785
      %8787 = vmatpush1.msra.mxu0 %v8786
      %8788 = vmatprep.subr.mxu0 0.0
      %v8789 = vand.u32 %v8447, 4294901760
      %v8790 = vsub.f32 %v8447, %v8789
      %8791 = vmatpush1.msra.mxu0 %v8790
      %8792 = vmatprep.subr.mxu0 0.0
      %v8793 = vand.u32 %v8449, 4294901760
      %v8794 = vsub.f32 %v8449, %v8793
      %8795 = vmatpush1.msra.mxu0 %v8794
      %8796 = vmatprep.subr.mxu0 0.0
      %v8797 = vand.u32 %v8451, 4294901760
      %v8798 = vsub.f32 %v8451, %v8797
      %8799 = vmatpush1.msra.mxu0 %v8798
      %8800 = vmatprep.subr.mxu0 0.0
      %v8801 = vand.u32 %v8453, 4294901760
      %v8802 = vsub.f32 %v8453, %v8801
      %8803 = vmatpush1.msra.mxu0 %v8802
      %8804 = vmatprep.subr.mxu0 0.0
      %v8805 = vand.u32 %v8455, 4294901760
      %v8806 = vsub.f32 %v8455, %v8805
      %8807 = vmatpush1.msra.mxu0 %v8806
      %8808 = vmatprep.subr.mxu0 0.0
      %v8809 = vand.u32 %v8438, 4294901760
      %v8810 = vsub.f32 %v8438, %v8809
      %8811 = vmatpush1.msra.mxu0 %v8810
      %8812 = vmatprep.subr.mxu0 0.0
      %v8813 = vand.u32 %v8439, 4294901760
      %v8814 = vsub.f32 %v8439, %v8813
      %8815 = vmatpush1.msra.mxu0 %v8814
      %8816 = vmatprep.subr.mxu0 0.0
      %v8817 = vand.u32 %v8457, 4294901760
      %v8818 = vsub.f32 %v8457, %v8817
      %8819 = vmatpush1.msra.mxu0 %v8818
      %8820 = vmatprep.subr.mxu0 0.0
      %v8821 = vand.u32 %v8459, 4294901760
      %v8822 = vsub.f32 %v8459, %v8821
      %8823 = vmatpush1.msra.mxu0 %v8822
      %8824 = vmatprep.subr.mxu0 0.0
      %v8825 = vand.u32 %v8461, 4294901760
      %v8826 = vsub.f32 %v8461, %v8825
      %8827 = vmatpush1.msra.mxu0 %v8826
      %8828 = vmatprep.subr.mxu0 0.0
      %v8829 = vand.u32 %v8463, 4294901760
      %v8830 = vsub.f32 %v8463, %v8829
      %8831 = vmatpush1.msra.mxu0 %v8830
      %8832 = vmatprep.subr.mxu0 0.0
      %v8833 = vand.u32 %v8465, 4294901760
      %v8834 = vsub.f32 %v8465, %v8833
      %8835 = vmatpush1.msra.mxu0 %v8834
      %8836 = vmatprep.subr.mxu0 0.0
      %v8837 = vand.u32 %v8467, 4294901760
      %v8838 = vsub.f32 %v8467, %v8837
      %8839 = vmatpush1.msra.mxu0 %v8838
      %8840 = vmatprep.subr.mxu0 0.0
      %v8841 = vand.u32 %v8469, 4294901760
      %v8842 = vsub.f32 %v8469, %v8841
      %8843 = vmatpush1.msra.mxu0 %v8842
      %8844 = vmatprep.subr.mxu0 0.0
      %v8845 = vand.u32 %v8471, 4294901760
      %v8846 = vsub.f32 %v8471, %v8845
      %8847 = vmatpush1.msra.mxu0 %v8846
      %8848 = vmatprep.subr.mxu0 0.0
      %8849 = vmatpush1.msra.mxu0 0.0
      %8850 = vmatprep.subr.mxu0 0.0
      %8851 = vmatpush1.msra.mxu0 0.0
      %8852 = vmatprep.subr.mxu0 0.0
      %8853 = vmatpush1.msra.mxu0 0.0
      %8854 = vmatprep.subr.mxu0 0.0
      %8855 = vmatpush1.msra.mxu0 0.0
      %8856 = vmatprep.subr.mxu0 0.0
      %8857 = vmatpush1.msra.mxu0 0.0
      %8858 = vmatprep.subr.mxu0 0.0
      %8859 = vmatpush1.msra.mxu0 0.0
      %8860 = vmatprep.subr.mxu0 0.0
      %8861 = vmatpush1.msra.mxu0 0.0
      %8862 = vmatprep.subr.mxu0 0.0
      %8863 = vmatpush1.msra.mxu0 0.0
      %8864 = vmatprep.subr.mxu0 0.0
      %8865 = vmatpush1.msra.mxu0 0.0
      %8866 = vmatprep.subr.mxu0 0.0
      %8867 = vmatpush1.msra.mxu0 0.0
      %8868 = vmatprep.subr.mxu0 0.0
      %8869 = vmatpush1.msra.mxu0 0.0
      %8870 = vmatprep.subr.mxu0 0.0
      %8871 = vmatpush1.msra.mxu0 0.0
      %8872 = vmatprep.subr.mxu0 0.0
      %8873 = vmatpush1.msra.mxu0 0.0
      %8874 = vmatprep.subr.mxu0 0.0
      %8875 = vmatpush1.msra.mxu0 0.0
      %v8876 = vand.u32 %v8489, 4294901760
      %v8877 = vsub.f32 %v8489, %v8876
      %8878 = vmatprep.mubr.f32.mxu0 %v8877
      %v8879 = vand.u32 %v8472, 4294901760
      %v8880 = vsub.f32 %v8472, %v8879
      %8881 = vmatmul.mubr.f32.gmra.mrb[0].mxu0 %v8880
      %v8882 = vpop.f32.mrb[0].mxu0
      %v8883 = vadd.f32 %v8766, %v8882
      %v8884 = vpop.f32.mrb[0].mxu0
      %v8885 = vand.u32 %v8492, 4294901760
      %v8886 = vsub.f32 %v8492, %v8885
      %8887 = vmatprep.mubr.f32.mxu0 %v8886
      %v8888 = vand.u32 %v8474, 4294901760
      %v8889 = vsub.f32 %v8474, %v8888
      %8890 = vmatmul.mubr.f32.gmra.mrb[0].mxu0 %v8889
      %v8891 = vpop.f32.mrb[0].mxu0
      %v8892 = vadd.f32 %v8773, %v8891
      %v8893 = vpop.f32.mrb[0].mxu0
      %8894 = vdwg.mxu0
      %8895 = vmatprep.subr.mxu0 0.0
      %v8896 = vand.u32 %v8441, 4294901760
      %8897 = vmatpush1.msra.mxu0 %v8896
      %8898 = vmatprep.subr.mxu0 0.0
      %v8899 = vand.u32 %v8443, 4294901760
      %8900 = vmatpush1.msra.mxu0 %v8899
      %8901 = vmatprep.subr.mxu0 0.0
      %v8902 = vand.u32 %v8445, 4294901760
      %8903 = vmatpush1.msra.mxu0 %v8902
      %8904 = vmatprep.subr.mxu0 0.0
      %v8905 = vand.u32 %v8447, 4294901760
      %8906 = vmatpush1.msra.mxu0 %v8905
      %8907 = vmatprep.subr.mxu0 0.0
      %v8908 = vand.u32 %v8449, 4294901760
      %8909 = vmatpush1.msra.mxu0 %v8908
      %8910 = vmatprep.subr.mxu0 0.0
      %v8911 = vand.u32 %v8451, 4294901760
      %8912 = vmatpush1.msra.mxu0 %v8911
      %8913 = vmatprep.subr.mxu0 0.0
      %v8914 = vand.u32 %v8453, 4294901760
      %8915 = vmatpush1.msra.mxu0 %v8914
      %8916 = vmatprep.subr.mxu0 0.0
      %v8917 = vand.u32 %v8455, 4294901760
      %8918 = vmatpush1.msra.mxu0 %v8917
      %8919 = vmatprep.subr.mxu0 0.0
      %v8920 = vand.u32 %v8438, 4294901760
      %8921 = vmatpush1.msra.mxu0 %v8920
      %8922 = vmatprep.subr.mxu0 0.0
      %v8923 = vand.u32 %v8439, 4294901760
      %8924 = vmatpush1.msra.mxu0 %v8923
      %8925 = vmatprep.subr.mxu0 0.0
      %v8926 = vand.u32 %v8457, 4294901760
      %8927 = vmatpush1.msra.mxu0 %v8926
      %8928 = vmatprep.subr.mxu0 0.0
      %v8929 = vand.u32 %v8459, 4294901760
      %8930 = vmatpush1.msra.mxu0 %v8929
      %8931 = vmatprep.subr.mxu0 0.0
      %v8932 = vand.u32 %v8461, 4294901760
      %8933 = vmatpush1.msra.mxu0 %v8932
      %8934 = vmatprep.subr.mxu0 0.0
      %v8935 = vand.u32 %v8463, 4294901760
      %8936 = vmatpush1.msra.mxu0 %v8935
      %8937 = vmatprep.subr.mxu0 0.0
      %v8938 = vand.u32 %v8465, 4294901760
      %8939 = vmatpush1.msra.mxu0 %v8938
      %8940 = vmatprep.subr.mxu0 0.0
      %v8941 = vand.u32 %v8467, 4294901760
      %8942 = vmatpush1.msra.mxu0 %v8941
      %8943 = vmatprep.subr.mxu0 0.0
      %v8944 = vand.u32 %v8469, 4294901760
      %8945 = vmatpush1.msra.mxu0 %v8944
      %8946 = vmatprep.subr.mxu0 0.0
      %v8947 = vand.u32 %v8471, 4294901760
      %8948 = vmatpush1.msra.mxu0 %v8947
      %8949 = vmatprep.subr.mxu0 0.0
      %8950 = vmatpush1.msra.mxu0 0.0
      %8951 = vmatprep.subr.mxu0 0.0
      %8952 = vmatpush1.msra.mxu0 0.0
      %8953 = vmatprep.subr.mxu0 0.0
      %8954 = vmatpush1.msra.mxu0 0.0
      %8955 = vmatprep.subr.mxu0 0.0
      %8956 = vmatpush1.msra.mxu0 0.0
      %8957 = vmatprep.subr.mxu0 0.0
      %8958 = vmatpush1.msra.mxu0 0.0
      %8959 = vmatprep.subr.mxu0 0.0
      %8960 = vmatpush1.msra.mxu0 0.0
      %8961 = vmatprep.subr.mxu0 0.0
      %8962 = vmatpush1.msra.mxu0 0.0
      %8963 = vmatprep.subr.mxu0 0.0
      %8964 = vmatpush1.msra.mxu0 0.0
      %8965 = vmatprep.subr.mxu0 0.0
      %8966 = vmatpush1.msra.mxu0 0.0
      %8967 = vmatprep.subr.mxu0 0.0
      %8968 = vmatpush1.msra.mxu0 0.0
      %8969 = vmatprep.subr.mxu0 0.0
      %8970 = vmatpush1.msra.mxu0 0.0
      %8971 = vmatprep.subr.mxu0 0.0
      %8972 = vmatpush1.msra.mxu0 0.0
      %8973 = vmatprep.subr.mxu0 0.0
      %8974 = vmatpush1.msra.mxu0 0.0
      %8975 = vmatprep.subr.mxu0 0.0
      %8976 = vmatpush1.msra.mxu0 0.0
      %v8977 = vand.u32 %v8489, 4294901760
      %v8978 = vsub.f32 %v8489, %v8977
      %v8979 = vand.u32 %v8978, 4294901760
      %8980 = vmatprep.mubr.f32.mxu0 %v8979
      %v8981 = vand.u32 %v8472, 4294901760
      %v8982 = vsub.f32 %v8472, %v8981
      %v8983 = vand.u32 %v8982, 4294901760
      %8984 = vmatmul.mubr.f32.gmra.mrb[0].mxu0 %v8983
      %v8985 = vpop.f32.mrb[0].mxu0
      %v8986 = vadd.f32 %v8883, %v8985
      %v8987 = vpop.f32.mrb[0].mxu0
      %v8988 = vand.u32 %v8492, 4294901760
      %v8989 = vsub.f32 %v8492, %v8988
      %v8990 = vand.u32 %v8989, 4294901760
      %8991 = vmatprep.mubr.f32.mxu0 %v8990
      %v8992 = vand.u32 %v8474, 4294901760
      %v8993 = vsub.f32 %v8474, %v8992
      %v8994 = vand.u32 %v8993, 4294901760
      %8995 = vmatmul.mubr.f32.gmra.mrb[0].mxu0 %v8994
      %v8996 = vpop.f32.mrb[0].mxu0
      %v8997 = vadd.f32 %v8892, %v8996
      %v8998 = vpop.f32.mrb[0].mxu0
      %8999 = vdwg.mxu0
      %9000 = vmatprep.subr.mxu0 0.0
      %v9001 = vand.u32 %v8441, 4294901760
      %v9002 = vsub.f32 %v8441, %v9001
      %v9003 = vand.u32 %v9002, 4294901760
      %9004 = vmatpush1.msra.mxu0 %v9003
      %9005 = vmatprep.subr.mxu0 0.0
      %v9006 = vand.u32 %v8443, 4294901760
      %v9007 = vsub.f32 %v8443, %v9006
      %v9008 = vand.u32 %v9007, 4294901760
      %9009 = vmatpush1.msra.mxu0 %v9008
      %9010 = vmatprep.subr.mxu0 0.0
      %v9011 = vand.u32 %v8445, 4294901760
      %v9012 = vsub.f32 %v8445, %v9011
      %v9013 = vand.u32 %v9012, 4294901760
      %9014 = vmatpush1.msra.mxu0 %v9013
      %9015 = vmatprep.subr.mxu0 0.0
      %v9016 = vand.u32 %v8447, 4294901760
      %v9017 = vsub.f32 %v8447, %v9016
      %v9018 = vand.u32 %v9017, 4294901760
      %9019 = vmatpush1.msra.mxu0 %v9018
      %9020 = vmatprep.subr.mxu0 0.0
      %v9021 = vand.u32 %v8449, 4294901760
      %v9022 = vsub.f32 %v8449, %v9021
      %v9023 = vand.u32 %v9022, 4294901760
      %9024 = vmatpush1.msra.mxu0 %v9023
      %9025 = vmatprep.subr.mxu0 0.0
      %v9026 = vand.u32 %v8451, 4294901760
      %v9027 = vsub.f32 %v8451, %v9026
      %v9028 = vand.u32 %v9027, 4294901760
      %9029 = vmatpush1.msra.mxu0 %v9028
      %9030 = vmatprep.subr.mxu0 0.0
      %v9031 = vand.u32 %v8453, 4294901760
      %v9032 = vsub.f32 %v8453, %v9031
      %v9033 = vand.u32 %v9032, 4294901760
      %9034 = vmatpush1.msra.mxu0 %v9033
      %9035 = vmatprep.subr.mxu0 0.0
      %v9036 = vand.u32 %v8455, 4294901760
      %v9037 = vsub.f32 %v8455, %v9036
      %v9038 = vand.u32 %v9037, 4294901760
      %9039 = vmatpush1.msra.mxu0 %v9038
      %9040 = vmatprep.subr.mxu0 0.0
      %v9041 = vand.u32 %v8438, 4294901760
      %v9042 = vsub.f32 %v8438, %v9041
      %v9043 = vand.u32 %v9042, 4294901760
      %9044 = vmatpush1.msra.mxu0 %v9043
      %9045 = vmatprep.subr.mxu0 0.0
      %v9046 = vand.u32 %v8439, 4294901760
      %v9047 = vsub.f32 %v8439, %v9046
      %v9048 = vand.u32 %v9047, 4294901760
      %9049 = vmatpush1.msra.mxu0 %v9048
      %9050 = vmatprep.subr.mxu0 0.0
      %v9051 = vand.u32 %v8457, 4294901760
      %v9052 = vsub.f32 %v8457, %v9051
      %v9053 = vand.u32 %v9052, 4294901760
      %9054 = vmatpush1.msra.mxu0 %v9053
      %9055 = vmatprep.subr.mxu0 0.0
      %v9056 = vand.u32 %v8459, 4294901760
      %v9057 = vsub.f32 %v8459, %v9056
      %v9058 = vand.u32 %v9057, 4294901760
      %9059 = vmatpush1.msra.mxu0 %v9058
      %9060 = vmatprep.subr.mxu0 0.0
      %v9061 = vand.u32 %v8461, 4294901760
      %v9062 = vsub.f32 %v8461, %v9061
      %v9063 = vand.u32 %v9062, 4294901760
      %9064 = vmatpush1.msra.mxu0 %v9063
      %9065 = vmatprep.subr.mxu0 0.0
      %v9066 = vand.u32 %v8463, 4294901760
      %v9067 = vsub.f32 %v8463, %v9066
      %v9068 = vand.u32 %v9067, 4294901760
      %9069 = vmatpush1.msra.mxu0 %v9068
      %9070 = vmatprep.subr.mxu0 0.0
      %v9071 = vand.u32 %v8465, 4294901760
      %v9072 = vsub.f32 %v8465, %v9071
      %v9073 = vand.u32 %v9072, 4294901760
      %9074 = vmatpush1.msra.mxu0 %v9073
      %9075 = vmatprep.subr.mxu0 0.0
      %v9076 = vand.u32 %v8467, 4294901760
      %v9077 = vsub.f32 %v8467, %v9076
      %v9078 = vand.u32 %v9077, 4294901760
      %9079 = vmatpush1.msra.mxu0 %v9078
      %9080 = vmatprep.subr.mxu0 0.0
      %v9081 = vand.u32 %v8469, 4294901760
      %v9082 = vsub.f32 %v8469, %v9081
      %v9083 = vand.u32 %v9082, 4294901760
      %9084 = vmatpush1.msra.mxu0 %v9083
      %9085 = vmatprep.subr.mxu0 0.0
      %v9086 = vand.u32 %v8471, 4294901760
      %v9087 = vsub.f32 %v8471, %v9086
      %v9088 = vand.u32 %v9087, 4294901760
      %9089 = vmatpush1.msra.mxu0 %v9088
      %9090 = vmatprep.subr.mxu0 0.0
      %9091 = vmatpush1.msra.mxu0 0.0
      %9092 = vmatprep.subr.mxu0 0.0
      %9093 = vmatpush1.msra.mxu0 0.0
      %9094 = vmatprep.subr.mxu0 0.0
      %9095 = vmatpush1.msra.mxu0 0.0
      %9096 = vmatprep.subr.mxu0 0.0
      %9097 = vmatpush1.msra.mxu0 0.0
      %9098 = vmatprep.subr.mxu0 0.0
      %9099 = vmatpush1.msra.mxu0 0.0
      %9100 = vmatprep.subr.mxu0 0.0
      %9101 = vmatpush1.msra.mxu0 0.0
      %9102 = vmatprep.subr.mxu0 0.0
      %9103 = vmatpush1.msra.mxu0 0.0
      %9104 = vmatprep.subr.mxu0 0.0
      %9105 = vmatpush1.msra.mxu0 0.0
      %9106 = vmatprep.subr.mxu0 0.0
      %9107 = vmatpush1.msra.mxu0 0.0
      %9108 = vmatprep.subr.mxu0 0.0
      %9109 = vmatpush1.msra.mxu0 0.0
      %9110 = vmatprep.subr.mxu0 0.0
      %9111 = vmatpush1.msra.mxu0 0.0
      %9112 = vmatprep.subr.mxu0 0.0
      %9113 = vmatpush1.msra.mxu0 0.0
      %9114 = vmatprep.subr.mxu0 0.0
      %9115 = vmatpush1.msra.mxu0 0.0
      %9116 = vmatprep.subr.mxu0 0.0
      %9117 = vmatpush1.msra.mxu0 0.0
      %v9118 = vand.u32 %v8489, 4294901760
      %9119 = vmatprep.mubr.f32.mxu0 %v9118
      %v9120 = vand.u32 %v8472, 4294901760
      %9121 = vmatmul.mubr.f32.gmra.mrb[0].mxu0 %v9120
      %v9122 = vpop.f32.mrb[0].mxu0
      %v9123 = vadd.f32 %v8986, %v9122
      %v9124 = vpop.f32.mrb[0].mxu0
      %v9125 = vand.u32 %v8492, 4294901760
      %9126 = vmatprep.mubr.f32.mxu0 %v9125
      %v9127 = vand.u32 %v8474, 4294901760
      %9128 = vmatmul.mubr.f32.gmra.mrb[0].mxu0 %v9127
      %v9129 = vpop.f32.mrb[0].mxu0
      %v9130 = vadd.f32 %v8997, %v9129
      %v9131 = vpop.f32.mrb[0].mxu0
      %9132 = vdwg.mxu0
      %9133 = vmatprep.subr.mxu0 0.0
      %v9134 = vand.u32 %v8441, 4294901760
      %9135 = vmatpush1.msra.mxu0 %v9134
      %9136 = vmatprep.subr.mxu0 0.0
      %v9137 = vand.u32 %v8443, 4294901760
      %9138 = vmatpush1.msra.mxu0 %v9137
      %9139 = vmatprep.subr.mxu0 0.0
      %v9140 = vand.u32 %v8445, 4294901760
      %9141 = vmatpush1.msra.mxu0 %v9140
      %9142 = vmatprep.subr.mxu0 0.0
      %v9143 = vand.u32 %v8447, 4294901760
      %9144 = vmatpush1.msra.mxu0 %v9143
      %9145 = vmatprep.subr.mxu0 0.0
      %v9146 = vand.u32 %v8449, 4294901760
      %9147 = vmatpush1.msra.mxu0 %v9146
      %9148 = vmatprep.subr.mxu0 0.0
      %v9149 = vand.u32 %v8451, 4294901760
      %9150 = vmatpush1.msra.mxu0 %v9149
      %9151 = vmatprep.subr.mxu0 0.0
      %v9152 = vand.u32 %v8453, 4294901760
      %9153 = vmatpush1.msra.mxu0 %v9152
      %9154 = vmatprep.subr.mxu0 0.0
      %v9155 = vand.u32 %v8455, 4294901760
      %9156 = vmatpush1.msra.mxu0 %v9155
      %9157 = vmatprep.subr.mxu0 0.0
      %v9158 = vand.u32 %v8438, 4294901760
      %9159 = vmatpush1.msra.mxu0 %v9158
      %9160 = vmatprep.subr.mxu0 0.0
      %v9161 = vand.u32 %v8439, 4294901760
      %9162 = vmatpush1.msra.mxu0 %v9161
      %9163 = vmatprep.subr.mxu0 0.0
      %v9164 = vand.u32 %v8457, 4294901760
      %9165 = vmatpush1.msra.mxu0 %v9164
      %9166 = vmatprep.subr.mxu0 0.0
      %v9167 = vand.u32 %v8459, 4294901760
      %9168 = vmatpush1.msra.mxu0 %v9167
      %9169 = vmatprep.subr.mxu0 0.0
      %v9170 = vand.u32 %v8461, 4294901760
      %9171 = vmatpush1.msra.mxu0 %v9170
      %9172 = vmatprep.subr.mxu0 0.0
      %v9173 = vand.u32 %v8463, 4294901760
      %9174 = vmatpush1.msra.mxu0 %v9173
      %9175 = vmatprep.subr.mxu0 0.0
      %v9176 = vand.u32 %v8465, 4294901760
      %9177 = vmatpush1.msra.mxu0 %v9176
      %9178 = vmatprep.subr.mxu0 0.0
      %v9179 = vand.u32 %v8467, 4294901760
      %9180 = vmatpush1.msra.mxu0 %v9179
      %9181 = vmatprep.subr.mxu0 0.0
      %v9182 = vand.u32 %v8469, 4294901760
      %9183 = vmatpush1.msra.mxu0 %v9182
      %9184 = vmatprep.subr.mxu0 0.0
      %v9185 = vand.u32 %v8471, 4294901760
      %9186 = vmatpush1.msra.mxu0 %v9185
      %9187 = vmatprep.subr.mxu0 0.0
      %9188 = vmatpush1.msra.mxu0 0.0
      %9189 = vmatprep.subr.mxu0 0.0
      %9190 = vmatpush1.msra.mxu0 0.0
      %9191 = vmatprep.subr.mxu0 0.0
      %9192 = vmatpush1.msra.mxu0 0.0
      %9193 = vmatprep.subr.mxu0 0.0
      %9194 = vmatpush1.msra.mxu0 0.0
      %9195 = vmatprep.subr.mxu0 0.0
      %9196 = vmatpush1.msra.mxu0 0.0
      %9197 = vmatprep.subr.mxu0 0.0
      %9198 = vmatpush1.msra.mxu0 0.0
      %9199 = vmatprep.subr.mxu0 0.0
      %9200 = vmatpush1.msra.mxu0 0.0
      %9201 = vmatprep.subr.mxu0 0.0
      %9202 = vmatpush1.msra.mxu0 0.0
      %9203 = vmatprep.subr.mxu0 0.0
      %9204 = vmatpush1.msra.mxu0 0.0
      %9205 = vmatprep.subr.mxu0 0.0
      %9206 = vmatpush1.msra.mxu0 0.0
      %9207 = vmatprep.subr.mxu0 0.0
      %9208 = vmatpush1.msra.mxu0 0.0
      %9209 = vmatprep.subr.mxu0 0.0
      %9210 = vmatpush1.msra.mxu0 0.0
      %9211 = vmatprep.subr.mxu0 0.0
      %9212 = vmatpush1.msra.mxu0 0.0
      %9213 = vmatprep.subr.mxu0 0.0
      %9214 = vmatpush1.msra.mxu0 0.0
      %v9215 = vand.u32 %v8489, 4294901760
      %9216 = vmatprep.mubr.f32.mxu0 %v9215
      %v9217 = vand.u32 %v8472, 4294901760
      %9218 = vmatmul.mubr.f32.gmra.mrb[0].mxu0 %v9217
      %v9219 = vpop.f32.mrb[0].mxu0
      %v9220 = vadd.f32 %v9123, %v9219
      %v9221 = vpop.f32.mrb[0].mxu0
      %v9222 = vand.u32 %v8492, 4294901760
      %9223 = vmatprep.mubr.f32.mxu0 %v9222
      %v9224 = vand.u32 %v8474, 4294901760
      %9225 = vmatmul.mubr.f32.gmra.mrb[0].mxu0 %v9224
      %v9226 = vpop.f32.mrb[0].mxu0
      %v9227 = vadd.f32 %v9130, %v9226
      %v9228 = vpop.f32.mrb[0].mxu0
      %9229 = vdwg.mxu0
      %v9230 = vmax.f32 %v9220, 0.0
      %v9231 = vmax.f32 %v9227, 0.0
      %v9232 = vmul.f32 %v9230, %v5260
      %v9233 = vmul.f32 %v9231, %v5260
      %9234 = vrot.lane.b32.xlu0 %v9232, 10
      %v9235 = vpop.permute.xlu0 %9234
      %9236 = vrot.lane.b32.xlu0 %v9233, 10
      %v9237 = vpop.permute.xlu0 %9236
      %9238 = vrot.lane.b32.xlu0 %v9232, 9
      %v9239 = vpop.permute.xlu0 %9238
      %9240 = vrot.lane.b32.xlu0 %v9233, 9
      %v9241 = vpop.permute.xlu0 %9240
      %9242 = vrot.lane.b32.xlu0 %v9232, 8
      %v9243 = vpop.permute.xlu0 %9242
      %9244 = vrot.lane.b32.xlu0 %v9233, 8
      %v9245 = vpop.permute.xlu0 %9244
      %9246 = vrot.lane.b32.xlu0 %v9232, 1
      %v9247 = vpop.permute.xlu0 %9246
      %9248 = vrot.lane.b32.xlu0 %v9233, 1
      %v9249 = vpop.permute.xlu0 %9248
      %9250 = vrot.lane.b32.xlu0 %v9232, 127
      %v9251 = vpop.permute.xlu0 %9250
      %9252 = vrot.lane.b32.xlu0 %v9233, 127
      %v9253 = vpop.permute.xlu0 %9252
      %9254 = vrot.lane.b32.xlu0 %v9232, 120
      %v9255 = vpop.permute.xlu0 %9254
      %9256 = vrot.lane.b32.xlu0 %v9233, 120
      %v9257 = vpop.permute.xlu0 %9256
      %9258 = vrot.lane.b32.xlu0 %v9232, 119
      %v9259 = vpop.permute.xlu0 %9258
      %9260 = vrot.lane.b32.xlu0 %v9233, 119
      %v9261 = vpop.permute.xlu0 %9260
      %9262 = vrot.lane.b32.xlu0 %v9232, 118
      %v9263 = vpop.permute.xlu0 %9262
      %9264 = vrot.lane.b32.xlu0 %v9233, 118
      %v9265 = vpop.permute.xlu0 %9264
      %v9266 = vld [vmem:[%s11] sm:$0xff]
      %v9267 = vld [vmem:[%s11 + $0x8] sm:$0xff]
      %v9268 = vld [vmem:[%s12] sm:$0xff]
      %9270 = vset.pattern.permute.xlu0 0
      %9271 = vperm.xlu0 %9270, %v9268
      %v9272 = vpop.permute.xlu0 %9271
      %v9275 = vsel %vm5311, %v9267, 0
      %9277 = vmatprep.subr.mxu0 0.0
      %v9278 = vand.u32 %v9235, 4294901760
      %9279 = vmatpush1.msra.mxu0 %v9278
      %9280 = vmatprep.subr.mxu0 0.0
      %v9281 = vand.u32 %v9237, 4294901760
      %9282 = vmatpush1.msra.mxu0 %v9281
      %9283 = vmatprep.subr.mxu0 0.0
      %v9284 = vand.u32 %v9239, 4294901760
      %9285 = vmatpush1.msra.mxu0 %v9284
      %9286 = vmatprep.subr.mxu0 0.0
      %v9287 = vand.u32 %v9241, 4294901760
      %9288 = vmatpush1.msra.mxu0 %v9287
      %9289 = vmatprep.subr.mxu0 0.0
      %v9290 = vand.u32 %v9243, 4294901760
      %9291 = vmatpush1.msra.mxu0 %v9290
      %9292 = vmatprep.subr.mxu0 0.0
      %v9293 = vand.u32 %v9245, 4294901760
      %9294 = vmatpush1.msra.mxu0 %v9293
      %9295 = vmatprep.subr.mxu0 0.0
      %v9296 = vand.u32 %v9247, 4294901760
      %9297 = vmatpush1.msra.mxu0 %v9296
      %9298 = vmatprep.subr.mxu0 0.0
      %v9299 = vand.u32 %v9249, 4294901760
      %9300 = vmatpush1.msra.mxu0 %v9299
      %9301 = vmatprep.subr.mxu0 0.0
      %v9302 = vand.u32 %v9232, 4294901760
      %9303 = vmatpush1.msra.mxu0 %v9302
      %9304 = vmatprep.subr.mxu0 0.0
      %v9305 = vand.u32 %v9233, 4294901760
      %9306 = vmatpush1.msra.mxu0 %v9305
      %9307 = vmatprep.subr.mxu0 0.0
      %v9308 = vand.u32 %v9251, 4294901760
      %9309 = vmatpush1.msra.mxu0 %v9308
      %9310 = vmatprep.subr.mxu0 0.0
      %v9311 = vand.u32 %v9253, 4294901760
      %9312 = vmatpush1.msra.mxu0 %v9311
      %9313 = vmatprep.subr.mxu0 0.0
      %v9314 = vand.u32 %v9255, 4294901760
      %9315 = vmatpush1.msra.mxu0 %v9314
      %9316 = vmatprep.subr.mxu0 0.0
      %v9317 = vand.u32 %v9257, 4294901760
      %9318 = vmatpush1.msra.mxu0 %v9317
      %9319 = vmatprep.subr.mxu0 0.0
      %v9320 = vand.u32 %v9259, 4294901760
      %9321 = vmatpush1.msra.mxu0 %v9320
      %9322 = vmatprep.subr.mxu0 0.0
      %v9323 = vand.u32 %v9261, 4294901760
      %9324 = vmatpush1.msra.mxu0 %v9323
      %9325 = vmatprep.subr.mxu0 0.0
      %v9326 = vand.u32 %v9263, 4294901760
      %9327 = vmatpush1.msra.mxu0 %v9326
      %9328 = vmatprep.subr.mxu0 0.0
      %v9329 = vand.u32 %v9265, 4294901760
      %9330 = vmatpush1.msra.mxu0 %v9329
      %9331 = vmatprep.subr.mxu0 0.0
      %9332 = vmatpush1.msra.mxu0 0.0
      %9333 = vmatprep.subr.mxu0 0.0
      %9334 = vmatpush1.msra.mxu0 0.0
      %9335 = vmatprep.subr.mxu0 0.0
      %9336 = vmatpush1.msra.mxu0 0.0
      %9337 = vmatprep.subr.mxu0 0.0
      %9338 = vmatpush1.msra.mxu0 0.0
      %9339 = vmatprep.subr.mxu0 0.0
      %9340 = vmatpush1.msra.mxu0 0.0
      %9341 = vmatprep.subr.mxu0 0.0
      %9342 = vmatpush1.msra.mxu0 0.0
      %9343 = vmatprep.subr.mxu0 0.0
      %9344 = vmatpush1.msra.mxu0 0.0
      %9345 = vmatprep.subr.mxu0 0.0
      %9346 = vmatpush1.msra.mxu0 0.0
      %9347 = vmatprep.subr.mxu0 0.0
      %9348 = vmatpush1.msra.mxu0 0.0
      %9349 = vmatprep.subr.mxu0 0.0
      %9350 = vmatpush1.msra.mxu0 0.0
      %9351 = vmatprep.subr.mxu0 0.0
      %9352 = vmatpush1.msra.mxu0 0.0
      %9353 = vmatprep.subr.mxu0 0.0
      %9354 = vmatpush1.msra.mxu0 0.0
      %9355 = vmatprep.subr.mxu0 0.0
      %9356 = vmatpush1.msra.mxu0 0.0
      %9357 = vmatprep.subr.mxu0 0.0
      %9358 = vmatpush1.msra.mxu0 0.0
      %v9359 = vand.u32 %v9275, 4294901760
      %v9360 = vsub.f32 %v9275, %v9359
      %v9361 = vand.u32 %v9360, 4294901760
      %v9362 = vsub.f32 %v9360, %v9361
      %v9363 = vand.u32 %v9362, 4294901760
      %9364 = vmatprep.mubr.f32.mxu0 %v9363
      %v9365 = vand.u32 %v9266, 4294901760
      %v9366 = vsub.f32 %v9266, %v9365
      %v9367 = vand.u32 %v9366, 4294901760
      %v9368 = vsub.f32 %v9366, %v9367
      %v9369 = vand.u32 %v9368, 4294901760
      %9370 = vmatmul.mubr.f32.gmra.mrb[0].mxu0 %v9369
      %v9371 = vpop.f32.mrb[0].mxu0
      %v9372 = vadd.f32 %v9272, %v9371
      %v9373 = vpop.f32.mrb[0].mxu0
      %9374 = vdwg.mxu0
      %9375 = vmatprep.subr.mxu0 0.0
      %v9376 = vand.u32 %v9235, 4294901760
      %v9377 = vsub.f32 %v9235, %v9376
      %v9378 = vand.u32 %v9377, 4294901760
      %v9379 = vsub.f32 %v9377, %v9378
      %v9380 = vand.u32 %v9379, 4294901760
      %9381 = vmatpush1.msra.mxu0 %v9380
      %9382 = vmatprep.subr.mxu0 0.0
      %v9383 = vand.u32 %v9237, 4294901760
      %v9384 = vsub.f32 %v9237, %v9383
      %v9385 = vand.u32 %v9384, 4294901760
      %v9386 = vsub.f32 %v9384, %v9385
      %v9387 = vand.u32 %v9386, 4294901760
      %9388 = vmatpush1.msra.mxu0 %v9387
      %9389 = vmatprep.subr.mxu0 0.0
      %v9390 = vand.u32 %v9239, 4294901760
      %v9391 = vsub.f32 %v9239, %v9390
      %v9392 = vand.u32 %v9391, 4294901760
      %v9393 = vsub.f32 %v9391, %v9392
      %v9394 = vand.u32 %v9393, 4294901760
      %9395 = vmatpush1.msra.mxu0 %v9394
      %9396 = vmatprep.subr.mxu0 0.0
      %v9397 = vand.u32 %v9241, 4294901760
      %v9398 = vsub.f32 %v9241, %v9397
      %v9399 = vand.u32 %v9398, 4294901760
      %v9400 = vsub.f32 %v9398, %v9399
      %v9401 = vand.u32 %v9400, 4294901760
      %9402 = vmatpush1.msra.mxu0 %v9401
      %9403 = vmatprep.subr.mxu0 0.0
      %v9404 = vand.u32 %v9243, 4294901760
      %v9405 = vsub.f32 %v9243, %v9404
      %v9406 = vand.u32 %v9405, 4294901760
      %v9407 = vsub.f32 %v9405, %v9406
      %v9408 = vand.u32 %v9407, 4294901760
      %9409 = vmatpush1.msra.mxu0 %v9408
      %9410 = vmatprep.subr.mxu0 0.0
      %v9411 = vand.u32 %v9245, 4294901760
      %v9412 = vsub.f32 %v9245, %v9411
      %v9413 = vand.u32 %v9412, 4294901760
      %v9414 = vsub.f32 %v9412, %v9413
      %v9415 = vand.u32 %v9414, 4294901760
      %9416 = vmatpush1.msra.mxu0 %v9415
      %9417 = vmatprep.subr.mxu0 0.0
      %v9418 = vand.u32 %v9247, 4294901760
      %v9419 = vsub.f32 %v9247, %v9418
      %v9420 = vand.u32 %v9419, 4294901760
      %v9421 = vsub.f32 %v9419, %v9420
      %v9422 = vand.u32 %v9421, 4294901760
      %9423 = vmatpush1.msra.mxu0 %v9422
      %9424 = vmatprep.subr.mxu0 0.0
      %v9425 = vand.u32 %v9249, 4294901760
      %v9426 = vsub.f32 %v9249, %v9425
      %v9427 = vand.u32 %v9426, 4294901760
      %v9428 = vsub.f32 %v9426, %v9427
      %v9429 = vand.u32 %v9428, 4294901760
      %9430 = vmatpush1.msra.mxu0 %v9429
      %9431 = vmatprep.subr.mxu0 0.0
      %v9432 = vand.u32 %v9232, 4294901760
      %v9433 = vsub.f32 %v9232, %v9432
      %v9434 = vand.u32 %v9433, 4294901760
      %v9435 = vsub.f32 %v9433, %v9434
      %v9436 = vand.u32 %v9435, 4294901760
      %9437 = vmatpush1.msra.mxu0 %v9436
      %9438 = vmatprep.subr.mxu0 0.0
      %v9439 = vand.u32 %v9233, 4294901760
      %v9440 = vsub.f32 %v9233, %v9439
      %v9441 = vand.u32 %v9440, 4294901760
      %v9442 = vsub.f32 %v9440, %v9441
      %v9443 = vand.u32 %v9442, 4294901760
      %9444 = vmatpush1.msra.mxu0 %v9443
      %9445 = vmatprep.subr.mxu0 0.0
      %v9446 = vand.u32 %v9251, 4294901760
      %v9447 = vsub.f32 %v9251, %v9446
      %v9448 = vand.u32 %v9447, 4294901760
      %v9449 = vsub.f32 %v9447, %v9448
      %v9450 = vand.u32 %v9449, 4294901760
      %9451 = vmatpush1.msra.mxu0 %v9450
      %9452 = vmatprep.subr.mxu0 0.0
      %v9453 = vand.u32 %v9253, 4294901760
      %v9454 = vsub.f32 %v9253, %v9453
      %v9455 = vand.u32 %v9454, 4294901760
      %v9456 = vsub.f32 %v9454, %v9455
      %v9457 = vand.u32 %v9456, 4294901760
      %9458 = vmatpush1.msra.mxu0 %v9457
      %9459 = vmatprep.subr.mxu0 0.0
      %v9460 = vand.u32 %v9255, 4294901760
      %v9461 = vsub.f32 %v9255, %v9460
      %v9462 = vand.u32 %v9461, 4294901760
      %v9463 = vsub.f32 %v9461, %v9462
      %v9464 = vand.u32 %v9463, 4294901760
      %9465 = vmatpush1.msra.mxu0 %v9464
      %9466 = vmatprep.subr.mxu0 0.0
      %v9467 = vand.u32 %v9257, 4294901760
      %v9468 = vsub.f32 %v9257, %v9467
      %v9469 = vand.u32 %v9468, 4294901760
      %v9470 = vsub.f32 %v9468, %v9469
      %v9471 = vand.u32 %v9470, 4294901760
      %9472 = vmatpush1.msra.mxu0 %v9471
      %9473 = vmatprep.subr.mxu0 0.0
      %v9474 = vand.u32 %v9259, 4294901760
      %v9475 = vsub.f32 %v9259, %v9474
      %v9476 = vand.u32 %v9475, 4294901760
      %v9477 = vsub.f32 %v9475, %v9476
      %v9478 = vand.u32 %v9477, 4294901760
      %9479 = vmatpush1.msra.mxu0 %v9478
      %9480 = vmatprep.subr.mxu0 0.0
      %v9481 = vand.u32 %v9261, 4294901760
      %v9482 = vsub.f32 %v9261, %v9481
      %v9483 = vand.u32 %v9482, 4294901760
      %v9484 = vsub.f32 %v9482, %v9483
      %v9485 = vand.u32 %v9484, 4294901760
      %9486 = vmatpush1.msra.mxu0 %v9485
      %9487 = vmatprep.subr.mxu0 0.0
      %v9488 = vand.u32 %v9263, 4294901760
      %v9489 = vsub.f32 %v9263, %v9488
      %v9490 = vand.u32 %v9489, 4294901760
      %v9491 = vsub.f32 %v9489, %v9490
      %v9492 = vand.u32 %v9491, 4294901760
      %9493 = vmatpush1.msra.mxu0 %v9492
      %9494 = vmatprep.subr.mxu0 0.0
      %v9495 = vand.u32 %v9265, 4294901760
      %v9496 = vsub.f32 %v9265, %v9495
      %v9497 = vand.u32 %v9496, 4294901760
      %v9498 = vsub.f32 %v9496, %v9497
      %v9499 = vand.u32 %v9498, 4294901760
      %9500 = vmatpush1.msra.mxu0 %v9499
      %9501 = vmatprep.subr.mxu0 0.0
      %9502 = vmatpush1.msra.mxu0 0.0
      %9503 = vmatprep.subr.mxu0 0.0
      %9504 = vmatpush1.msra.mxu0 0.0
      %9505 = vmatprep.subr.mxu0 0.0
      %9506 = vmatpush1.msra.mxu0 0.0
      %9507 = vmatprep.subr.mxu0 0.0
      %9508 = vmatpush1.msra.mxu0 0.0
      %9509 = vmatprep.subr.mxu0 0.0
      %9510 = vmatpush1.msra.mxu0 0.0
      %9511 = vmatprep.subr.mxu0 0.0
      %9512 = vmatpush1.msra.mxu0 0.0
      %9513 = vmatprep.subr.mxu0 0.0
      %9514 = vmatpush1.msra.mxu0 0.0
      %9515 = vmatprep.subr.mxu0 0.0
      %9516 = vmatpush1.msra.mxu0 0.0
      %9517 = vmatprep.subr.mxu0 0.0
      %9518 = vmatpush1.msra.mxu0 0.0
      %9519 = vmatprep.subr.mxu0 0.0
      %9520 = vmatpush1.msra.mxu0 0.0
      %9521 = vmatprep.subr.mxu0 0.0
      %9522 = vmatpush1.msra.mxu0 0.0
      %9523 = vmatprep.subr.mxu0 0.0
      %9524 = vmatpush1.msra.mxu0 0.0
      %9525 = vmatprep.subr.mxu0 0.0
      %9526 = vmatpush1.msra.mxu0 0.0
      %9527 = vmatprep.subr.mxu0 0.0
      %9528 = vmatpush1.msra.mxu0 0.0
      %v9529 = vand.u32 %v9275, 4294901760
      %9530 = vmatprep.mubr.f32.mxu0 %v9529
      %v9531 = vand.u32 %v9266, 4294901760
      %9532 = vmatmul.mubr.f32.gmra.mrb[0].mxu0 %v9531
      %v9533 = vpop.f32.mrb[0].mxu0
      %v9534 = vadd.f32 %v9372, %v9533
      %v9535 = vpop.f32.mrb[0].mxu0
      %9536 = vdwg.mxu0
      %9537 = vmatprep.subr.mxu0 0.0
      %v9538 = vand.u32 %v9235, 4294901760
      %v9539 = vsub.f32 %v9235, %v9538
      %9540 = vmatpush1.msra.mxu0 %v9539
      %9541 = vmatprep.subr.mxu0 0.0
      %v9542 = vand.u32 %v9237, 4294901760
      %v9543 = vsub.f32 %v9237, %v9542
      %9544 = vmatpush1.msra.mxu0 %v9543
      %9545 = vmatprep.subr.mxu0 0.0
      %v9546 = vand.u32 %v9239, 4294901760
      %v9547 = vsub.f32 %v9239, %v9546
      %9548 = vmatpush1.msra.mxu0 %v9547
      %9549 = vmatprep.subr.mxu0 0.0
      %v9550 = vand.u32 %v9241, 4294901760
      %v9551 = vsub.f32 %v9241, %v9550
      %9552 = vmatpush1.msra.mxu0 %v9551
      %9553 = vmatprep.subr.mxu0 0.0
      %v9554 = vand.u32 %v9243, 4294901760
      %v9555 = vsub.f32 %v9243, %v9554
      %9556 = vmatpush1.msra.mxu0 %v9555
      %9557 = vmatprep.subr.mxu0 0.0
      %v9558 = vand.u32 %v9245, 4294901760
      %v9559 = vsub.f32 %v9245, %v9558
      %9560 = vmatpush1.msra.mxu0 %v9559
      %9561 = vmatprep.subr.mxu0 0.0
      %v9562 = vand.u32 %v9247, 4294901760
      %v9563 = vsub.f32 %v9247, %v9562
      %9564 = vmatpush1.msra.mxu0 %v9563
      %9565 = vmatprep.subr.mxu0 0.0
      %v9566 = vand.u32 %v9249, 4294901760
      %v9567 = vsub.f32 %v9249, %v9566
      %9568 = vmatpush1.msra.mxu0 %v9567
      %9569 = vmatprep.subr.mxu0 0.0
      %v9570 = vand.u32 %v9232, 4294901760
      %v9571 = vsub.f32 %v9232, %v9570
      %9572 = vmatpush1.msra.mxu0 %v9571
      %9573 = vmatprep.subr.mxu0 0.0
      %v9574 = vand.u32 %v9233, 4294901760
      %v9575 = vsub.f32 %v9233, %v9574
      %9576 = vmatpush1.msra.mxu0 %v9575
      %9577 = vmatprep.subr.mxu0 0.0
      %v9578 = vand.u32 %v9251, 4294901760
      %v9579 = vsub.f32 %v9251, %v9578
      %9580 = vmatpush1.msra.mxu0 %v9579
      %9581 = vmatprep.subr.mxu0 0.0
      %v9582 = vand.u32 %v9253, 4294901760
      %v9583 = vsub.f32 %v9253, %v9582
      %9584 = vmatpush1.msra.mxu0 %v9583
      %9585 = vmatprep.subr.mxu0 0.0
      %v9586 = vand.u32 %v9255, 4294901760
      %v9587 = vsub.f32 %v9255, %v9586
      %9588 = vmatpush1.msra.mxu0 %v9587
      %9589 = vmatprep.subr.mxu0 0.0
      %v9590 = vand.u32 %v9257, 4294901760
      %v9591 = vsub.f32 %v9257, %v9590
      %9592 = vmatpush1.msra.mxu0 %v9591
      %9593 = vmatprep.subr.mxu0 0.0
      %v9594 = vand.u32 %v9259, 4294901760
      %v9595 = vsub.f32 %v9259, %v9594
      %9596 = vmatpush1.msra.mxu0 %v9595
      %9597 = vmatprep.subr.mxu0 0.0
      %v9598 = vand.u32 %v9261, 4294901760
      %v9599 = vsub.f32 %v9261, %v9598
      %9600 = vmatpush1.msra.mxu0 %v9599
      %9601 = vmatprep.subr.mxu0 0.0
      %v9602 = vand.u32 %v9263, 4294901760
      %v9603 = vsub.f32 %v9263, %v9602
      %9604 = vmatpush1.msra.mxu0 %v9603
      %9605 = vmatprep.subr.mxu0 0.0
      %v9606 = vand.u32 %v9265, 4294901760
      %v9607 = vsub.f32 %v9265, %v9606
      %9608 = vmatpush1.msra.mxu0 %v9607
      %9609 = vmatprep.subr.mxu0 0.0
      %9610 = vmatpush1.msra.mxu0 0.0
      %9611 = vmatprep.subr.mxu0 0.0
      %9612 = vmatpush1.msra.mxu0 0.0
      %9613 = vmatprep.subr.mxu0 0.0
      %9614 = vmatpush1.msra.mxu0 0.0
      %9615 = vmatprep.subr.mxu0 0.0
      %9616 = vmatpush1.msra.mxu0 0.0
      %9617 = vmatprep.subr.mxu0 0.0
      %9618 = vmatpush1.msra.mxu0 0.0
      %9619 = vmatprep.subr.mxu0 0.0
      %9620 = vmatpush1.msra.mxu0 0.0
      %9621 = vmatprep.subr.mxu0 0.0
      %9622 = vmatpush1.msra.mxu0 0.0
      %9623 = vmatprep.subr.mxu0 0.0
      %9624 = vmatpush1.msra.mxu0 0.0
      %9625 = vmatprep.subr.mxu0 0.0
      %9626 = vmatpush1.msra.mxu0 0.0
      %9627 = vmatprep.subr.mxu0 0.0
      %9628 = vmatpush1.msra.mxu0 0.0
      %9629 = vmatprep.subr.mxu0 0.0
      %9630 = vmatpush1.msra.mxu0 0.0
      %9631 = vmatprep.subr.mxu0 0.0
      %9632 = vmatpush1.msra.mxu0 0.0
      %9633 = vmatprep.subr.mxu0 0.0
      %9634 = vmatpush1.msra.mxu0 0.0
      %9635 = vmatprep.subr.mxu0 0.0
      %9636 = vmatpush1.msra.mxu0 0.0
      %v9637 = vand.u32 %v9275, 4294901760
      %v9638 = vsub.f32 %v9275, %v9637
      %9639 = vmatprep.mubr.f32.mxu0 %v9638
      %v9640 = vand.u32 %v9266, 4294901760
      %v9641 = vsub.f32 %v9266, %v9640
      %9642 = vmatmul.mubr.f32.gmra.mrb[0].mxu0 %v9641
      %v9643 = vpop.f32.mrb[0].mxu0
      %v9644 = vadd.f32 %v9534, %v9643
      %v9645 = vpop.f32.mrb[0].mxu0
      %9646 = vdwg.mxu0
      %9647 = vmatprep.subr.mxu0 0.0
      %v9648 = vand.u32 %v9235, 4294901760
      %9649 = vmatpush1.msra.mxu0 %v9648
      %9650 = vmatprep.subr.mxu0 0.0
      %v9651 = vand.u32 %v9237, 4294901760
      %9652 = vmatpush1.msra.mxu0 %v9651
      %9653 = vmatprep.subr.mxu0 0.0
      %v9654 = vand.u32 %v9239, 4294901760
      %9655 = vmatpush1.msra.mxu0 %v9654
      %9656 = vmatprep.subr.mxu0 0.0
      %v9657 = vand.u32 %v9241, 4294901760
      %9658 = vmatpush1.msra.mxu0 %v9657
      %9659 = vmatprep.subr.mxu0 0.0
      %v9660 = vand.u32 %v9243, 4294901760
      %9661 = vmatpush1.msra.mxu0 %v9660
      %9662 = vmatprep.subr.mxu0 0.0
      %v9663 = vand.u32 %v9245, 4294901760
      %9664 = vmatpush1.msra.mxu0 %v9663
      %9665 = vmatprep.subr.mxu0 0.0
      %v9666 = vand.u32 %v9247, 4294901760
      %9667 = vmatpush1.msra.mxu0 %v9666
      %9668 = vmatprep.subr.mxu0 0.0
      %v9669 = vand.u32 %v9249, 4294901760
      %9670 = vmatpush1.msra.mxu0 %v9669
      %9671 = vmatprep.subr.mxu0 0.0
      %v9672 = vand.u32 %v9232, 4294901760
      %9673 = vmatpush1.msra.mxu0 %v9672
      %9674 = vmatprep.subr.mxu0 0.0
      %v9675 = vand.u32 %v9233, 4294901760
      %9676 = vmatpush1.msra.mxu0 %v9675
      %9677 = vmatprep.subr.mxu0 0.0
      %v9678 = vand.u32 %v9251, 4294901760
      %9679 = vmatpush1.msra.mxu0 %v9678
      %9680 = vmatprep.subr.mxu0 0.0
      %v9681 = vand.u32 %v9253, 4294901760
      %9682 = vmatpush1.msra.mxu0 %v9681
      %9683 = vmatprep.subr.mxu0 0.0
      %v9684 = vand.u32 %v9255, 4294901760
      %9685 = vmatpush1.msra.mxu0 %v9684
      %9686 = vmatprep.subr.mxu0 0.0
      %v9687 = vand.u32 %v9257, 4294901760
      %9688 = vmatpush1.msra.mxu0 %v9687
      %9689 = vmatprep.subr.mxu0 0.0
      %v9690 = vand.u32 %v9259, 4294901760
      %9691 = vmatpush1.msra.mxu0 %v9690
      %9692 = vmatprep.subr.mxu0 0.0
      %v9693 = vand.u32 %v9261, 4294901760
      %9694 = vmatpush1.msra.mxu0 %v9693
      %9695 = vmatprep.subr.mxu0 0.0
      %v9696 = vand.u32 %v9263, 4294901760
      %9697 = vmatpush1.msra.mxu0 %v9696
      %9698 = vmatprep.subr.mxu0 0.0
      %v9699 = vand.u32 %v9265, 4294901760
      %9700 = vmatpush1.msra.mxu0 %v9699
      %9701 = vmatprep.subr.mxu0 0.0
      %9702 = vmatpush1.msra.mxu0 0.0
      %9703 = vmatprep.subr.mxu0 0.0
      %9704 = vmatpush1.msra.mxu0 0.0
      %9705 = vmatprep.subr.mxu0 0.0
      %9706 = vmatpush1.msra.mxu0 0.0
      %9707 = vmatprep.subr.mxu0 0.0
      %9708 = vmatpush1.msra.mxu0 0.0
      %9709 = vmatprep.subr.mxu0 0.0
      %9710 = vmatpush1.msra.mxu0 0.0
      %9711 = vmatprep.subr.mxu0 0.0
      %9712 = vmatpush1.msra.mxu0 0.0
      %9713 = vmatprep.subr.mxu0 0.0
      %9714 = vmatpush1.msra.mxu0 0.0
      %9715 = vmatprep.subr.mxu0 0.0
      %9716 = vmatpush1.msra.mxu0 0.0
      %9717 = vmatprep.subr.mxu0 0.0
      %9718 = vmatpush1.msra.mxu0 0.0
      %9719 = vmatprep.subr.mxu0 0.0
      %9720 = vmatpush1.msra.mxu0 0.0
      %9721 = vmatprep.subr.mxu0 0.0
      %9722 = vmatpush1.msra.mxu0 0.0
      %9723 = vmatprep.subr.mxu0 0.0
      %9724 = vmatpush1.msra.mxu0 0.0
      %9725 = vmatprep.subr.mxu0 0.0
      %9726 = vmatpush1.msra.mxu0 0.0
      %9727 = vmatprep.subr.mxu0 0.0
      %9728 = vmatpush1.msra.mxu0 0.0
      %v9729 = vand.u32 %v9275, 4294901760
      %v9730 = vsub.f32 %v9275, %v9729
      %v9731 = vand.u32 %v9730, 4294901760
      %9732 = vmatprep.mubr.f32.mxu0 %v9731
      %v9733 = vand.u32 %v9266, 4294901760
      %v9734 = vsub.f32 %v9266, %v9733
      %v9735 = vand.u32 %v9734, 4294901760
      %9736 = vmatmul.mubr.f32.gmra.mrb[0].mxu0 %v9735
      %v9737 = vpop.f32.mrb[0].mxu0
      %v9738 = vadd.f32 %v9644, %v9737
      %v9739 = vpop.f32.mrb[0].mxu0
      %9740 = vdwg.mxu0
      %9741 = vmatprep.subr.mxu0 0.0
      %v9742 = vand.u32 %v9235, 4294901760
      %v9743 = vsub.f32 %v9235, %v9742
      %v9744 = vand.u32 %v9743, 4294901760
      %9745 = vmatpush1.msra.mxu0 %v9744
      %9746 = vmatprep.subr.mxu0 0.0
      %v9747 = vand.u32 %v9237, 4294901760
      %v9748 = vsub.f32 %v9237, %v9747
      %v9749 = vand.u32 %v9748, 4294901760
      %9750 = vmatpush1.msra.mxu0 %v9749
      %9751 = vmatprep.subr.mxu0 0.0
      %v9752 = vand.u32 %v9239, 4294901760
      %v9753 = vsub.f32 %v9239, %v9752
      %v9754 = vand.u32 %v9753, 4294901760
      %9755 = vmatpush1.msra.mxu0 %v9754
      %9756 = vmatprep.subr.mxu0 0.0
      %v9757 = vand.u32 %v9241, 4294901760
      %v9758 = vsub.f32 %v9241, %v9757
      %v9759 = vand.u32 %v9758, 4294901760
      %9760 = vmatpush1.msra.mxu0 %v9759
      %9761 = vmatprep.subr.mxu0 0.0
      %v9762 = vand.u32 %v9243, 4294901760
      %v9763 = vsub.f32 %v9243, %v9762
      %v9764 = vand.u32 %v9763, 4294901760
      %9765 = vmatpush1.msra.mxu0 %v9764
      %9766 = vmatprep.subr.mxu0 0.0
      %v9767 = vand.u32 %v9245, 4294901760
      %v9768 = vsub.f32 %v9245, %v9767
      %v9769 = vand.u32 %v9768, 4294901760
      %9770 = vmatpush1.msra.mxu0 %v9769
      %9771 = vmatprep.subr.mxu0 0.0
      %v9772 = vand.u32 %v9247, 4294901760
      %v9773 = vsub.f32 %v9247, %v9772
      %v9774 = vand.u32 %v9773, 4294901760
      %9775 = vmatpush1.msra.mxu0 %v9774
      %9776 = vmatprep.subr.mxu0 0.0
      %v9777 = vand.u32 %v9249, 4294901760
      %v9778 = vsub.f32 %v9249, %v9777
      %v9779 = vand.u32 %v9778, 4294901760
      %9780 = vmatpush1.msra.mxu0 %v9779
      %9781 = vmatprep.subr.mxu0 0.0
      %v9782 = vand.u32 %v9232, 4294901760
      %v9783 = vsub.f32 %v9232, %v9782
      %v9784 = vand.u32 %v9783, 4294901760
      %9785 = vmatpush1.msra.mxu0 %v9784
      %9786 = vmatprep.subr.mxu0 0.0
      %v9787 = vand.u32 %v9233, 4294901760
      %v9788 = vsub.f32 %v9233, %v9787
      %v9789 = vand.u32 %v9788, 4294901760
      %9790 = vmatpush1.msra.mxu0 %v9789
      %9791 = vmatprep.subr.mxu0 0.0
      %v9792 = vand.u32 %v9251, 4294901760
      %v9793 = vsub.f32 %v9251, %v9792
      %v9794 = vand.u32 %v9793, 4294901760
      %9795 = vmatpush1.msra.mxu0 %v9794
      %9796 = vmatprep.subr.mxu0 0.0
      %v9797 = vand.u32 %v9253, 4294901760
      %v9798 = vsub.f32 %v9253, %v9797
      %v9799 = vand.u32 %v9798, 4294901760
      %9800 = vmatpush1.msra.mxu0 %v9799
      %9801 = vmatprep.subr.mxu0 0.0
      %v9802 = vand.u32 %v9255, 4294901760
      %v9803 = vsub.f32 %v9255, %v9802
      %v9804 = vand.u32 %v9803, 4294901760
      %9805 = vmatpush1.msra.mxu0 %v9804
      %9806 = vmatprep.subr.mxu0 0.0
      %v9807 = vand.u32 %v9257, 4294901760
      %v9808 = vsub.f32 %v9257, %v9807
      %v9809 = vand.u32 %v9808, 4294901760
      %9810 = vmatpush1.msra.mxu0 %v9809
      %9811 = vmatprep.subr.mxu0 0.0
      %v9812 = vand.u32 %v9259, 4294901760
      %v9813 = vsub.f32 %v9259, %v9812
      %v9814 = vand.u32 %v9813, 4294901760
      %9815 = vmatpush1.msra.mxu0 %v9814
      %9816 = vmatprep.subr.mxu0 0.0
      %v9817 = vand.u32 %v9261, 4294901760
      %v9818 = vsub.f32 %v9261, %v9817
      %v9819 = vand.u32 %v9818, 4294901760
      %9820 = vmatpush1.msra.mxu0 %v9819
      %9821 = vmatprep.subr.mxu0 0.0
      %v9822 = vand.u32 %v9263, 4294901760
      %v9823 = vsub.f32 %v9263, %v9822
      %v9824 = vand.u32 %v9823, 4294901760
      %9825 = vmatpush1.msra.mxu0 %v9824
      %9826 = vmatprep.subr.mxu0 0.0
      %v9827 = vand.u32 %v9265, 4294901760
      %v9828 = vsub.f32 %v9265, %v9827
      %v9829 = vand.u32 %v9828, 4294901760
      %9830 = vmatpush1.msra.mxu0 %v9829
      %9831 = vmatprep.subr.mxu0 0.0
      %9832 = vmatpush1.msra.mxu0 0.0
      %9833 = vmatprep.subr.mxu0 0.0
      %9834 = vmatpush1.msra.mxu0 0.0
      %9835 = vmatprep.subr.mxu0 0.0
      %9836 = vmatpush1.msra.mxu0 0.0
      %9837 = vmatprep.subr.mxu0 0.0
      %9838 = vmatpush1.msra.mxu0 0.0
      %9839 = vmatprep.subr.mxu0 0.0
      %9840 = vmatpush1.msra.mxu0 0.0
      %9841 = vmatprep.subr.mxu0 0.0
      %9842 = vmatpush1.msra.mxu0 0.0
      %9843 = vmatprep.subr.mxu0 0.0
      %9844 = vmatpush1.msra.mxu0 0.0
      %9845 = vmatprep.subr.mxu0 0.0
      %9846 = vmatpush1.msra.mxu0 0.0
      %9847 = vmatprep.subr.mxu0 0.0
      %9848 = vmatpush1.msra.mxu0 0.0
      %9849 = vmatprep.subr.mxu0 0.0
      %9850 = vmatpush1.msra.mxu0 0.0
      %9851 = vmatprep.subr.mxu0 0.0
      %9852 = vmatpush1.msra.mxu0 0.0
      %9853 = vmatprep.subr.mxu0 0.0
      %9854 = vmatpush1.msra.mxu0 0.0
      %9855 = vmatprep.subr.mxu0 0.0
      %9856 = vmatpush1.msra.mxu0 0.0
      %9857 = vmatprep.subr.mxu0 0.0
      %9858 = vmatpush1.msra.mxu0 0.0
      %v9859 = vand.u32 %v9275, 4294901760
      %9860 = vmatprep.mubr.f32.mxu0 %v9859
      %v9861 = vand.u32 %v9266, 4294901760
      %9862 = vmatmul.mubr.f32.gmra.mrb[0].mxu0 %v9861
      %v9863 = vpop.f32.mrb[0].mxu0
      %v9864 = vadd.f32 %v9738, %v9863
      %v9865 = vpop.f32.mrb[0].mxu0
      %9866 = vdwg.mxu0
      %9867 = vmatprep.subr.mxu0 0.0
      %v9868 = vand.u32 %v9235, 4294901760
      %9869 = vmatpush1.msra.mxu0 %v9868
      %9870 = vmatprep.subr.mxu0 0.0
      %v9871 = vand.u32 %v9237, 4294901760
      %9872 = vmatpush1.msra.mxu0 %v9871
      %9873 = vmatprep.subr.mxu0 0.0
      %v9874 = vand.u32 %v9239, 4294901760
      %9875 = vmatpush1.msra.mxu0 %v9874
      %9876 = vmatprep.subr.mxu0 0.0
      %v9877 = vand.u32 %v9241, 4294901760
      %9878 = vmatpush1.msra.mxu0 %v9877
      %9879 = vmatprep.subr.mxu0 0.0
      %v9880 = vand.u32 %v9243, 4294901760
      %9881 = vmatpush1.msra.mxu0 %v9880
      %9882 = vmatprep.subr.mxu0 0.0
      %v9883 = vand.u32 %v9245, 4294901760
      %9884 = vmatpush1.msra.mxu0 %v9883
      %9885 = vmatprep.subr.mxu0 0.0
      %v9886 = vand.u32 %v9247, 4294901760
      %9887 = vmatpush1.msra.mxu0 %v9886
      %9888 = vmatprep.subr.mxu0 0.0
      %v9889 = vand.u32 %v9249, 4294901760
      %9890 = vmatpush1.msra.mxu0 %v9889
      %9891 = vmatprep.subr.mxu0 0.0
      %v9892 = vand.u32 %v9232, 4294901760
      %9893 = vmatpush1.msra.mxu0 %v9892
      %9894 = vmatprep.subr.mxu0 0.0
      %v9895 = vand.u32 %v9233, 4294901760
      %9896 = vmatpush1.msra.mxu0 %v9895
      %9897 = vmatprep.subr.mxu0 0.0
      %v9898 = vand.u32 %v9251, 4294901760
      %9899 = vmatpush1.msra.mxu0 %v9898
      %9900 = vmatprep.subr.mxu0 0.0
      %v9901 = vand.u32 %v9253, 4294901760
      %9902 = vmatpush1.msra.mxu0 %v9901
      %9903 = vmatprep.subr.mxu0 0.0
      %v9904 = vand.u32 %v9255, 4294901760
      %9905 = vmatpush1.msra.mxu0 %v9904
      %9906 = vmatprep.subr.mxu0 0.0
      %v9907 = vand.u32 %v9257, 4294901760
      %9908 = vmatpush1.msra.mxu0 %v9907
      %9909 = vmatprep.subr.mxu0 0.0
      %v9910 = vand.u32 %v9259, 4294901760
      %9911 = vmatpush1.msra.mxu0 %v9910
      %9912 = vmatprep.subr.mxu0 0.0
      %v9913 = vand.u32 %v9261, 4294901760
      %9914 = vmatpush1.msra.mxu0 %v9913
      %9915 = vmatprep.subr.mxu0 0.0
      %v9916 = vand.u32 %v9263, 4294901760
      %9917 = vmatpush1.msra.mxu0 %v9916
      %9918 = vmatprep.subr.mxu0 0.0
      %v9919 = vand.u32 %v9265, 4294901760
      %9920 = vmatpush1.msra.mxu0 %v9919
      %9921 = vmatprep.subr.mxu0 0.0
      %9922 = vmatpush1.msra.mxu0 0.0
      %9923 = vmatprep.subr.mxu0 0.0
      %9924 = vmatpush1.msra.mxu0 0.0
      %9925 = vmatprep.subr.mxu0 0.0
      %9926 = vmatpush1.msra.mxu0 0.0
      %9927 = vmatprep.subr.mxu0 0.0
      %9928 = vmatpush1.msra.mxu0 0.0
      %9929 = vmatprep.subr.mxu0 0.0
      %9930 = vmatpush1.msra.mxu0 0.0
      %9931 = vmatprep.subr.mxu0 0.0
      %9932 = vmatpush1.msra.mxu0 0.0
      %9933 = vmatprep.subr.mxu0 0.0
      %9934 = vmatpush1.msra.mxu0 0.0
      %9935 = vmatprep.subr.mxu0 0.0
      %9936 = vmatpush1.msra.mxu0 0.0
      %9937 = vmatprep.subr.mxu0 0.0
      %9938 = vmatpush1.msra.mxu0 0.0
      %9939 = vmatprep.subr.mxu0 0.0
      %9940 = vmatpush1.msra.mxu0 0.0
      %9941 = vmatprep.subr.mxu0 0.0
      %9942 = vmatpush1.msra.mxu0 0.0
      %9943 = vmatprep.subr.mxu0 0.0
      %9944 = vmatpush1.msra.mxu0 0.0
      %9945 = vmatprep.subr.mxu0 0.0
      %9946 = vmatpush1.msra.mxu0 0.0
      %9947 = vmatprep.subr.mxu0 0.0
      %9948 = vmatpush1.msra.mxu0 0.0
      %v9949 = vand.u32 %v9275, 4294901760
      %9950 = vmatprep.mubr.f32.mxu0 %v9949
      %v9951 = vand.u32 %v9266, 4294901760
      %9952 = vmatmul.mubr.f32.gmra.mrb[0].mxu0 %v9951
      %v9953 = vpop.f32.mrb[0].mxu0
      %v9954 = vadd.f32 %v9864, %v9953
      %v9955 = vpop.f32.mrb[0].mxu0
      %9956 = vdwg.mxu0
      %9957 = vst [vmem:[%s452] sm:$0xff] %v9954
      %p9958 = scmp.lt.s32.totalorder %s24, 1
      %s9959 = scalar_select %p9958, %s24, 1
      %s9960 = smul.addr %s9959, 8
      %s9961 = scalar_lea.vmem %s13, %s9960
      // Predicated region
      $region73: #{forward.1} parent=71 // pred_check
        %p9962 = pneg %p325
      $region74: #{forward.1} parent=71 // pred_check_branch
        %9964 = sbr.rel (%p9962) target = $region76
      $region75: #{forward.1} parent=71 // pred_region
        _
      $region76: #{forward.1} parent=71 // pred_fallthru
        _
    $region72: #{forward.1} parent=5 // pred_fallthru
      _
    %p9965 = scmp.le.s32.totalorder 2, %s19
    // Predicated region
    $region77: #{forward.1} parent=5 // pred_check
      %p9966 = pneg %p9965
    $region78: #{forward.1} parent=5 // pred_check_branch
      %9968 = sbr.rel (%p9966) target = $region80
    $region79: #{forward.1} parent=5 // pred_region
      %s9969 = ssub.s32 %s19, 2
      // Predicated region
      $region81: #{forward.1} parent=79 // pred_check
        %p9970 = pneg %p331
      $region82: #{forward.1} parent=79 // pred_check_branch
        %9972 = sbr.rel (%p9970) target = $region84
      $region83: #{forward.1} parent=79 // pred_region
        %p9973 = scmp.lt.s32.totalorder %s25, 1
        %s9974 = scalar_select %p9973, %s25, 1
        %s9975 = smul.addr %s9974, 8
        %s9976 = scalar_lea.vmem %s13, %s9975
      $region84: #{forward.1} parent=79 // pred_fallthru
        _
    $region80: #{forward.1} parent=5 // pred_fallthru
      _
  $region6: #{forward.1} parent=0 // loop_footer
    %s23 = sadd.s32 1, %s19
  $region7: #{forward.1} parent=0 // loop_footer_branch
    %18 = sbr.rel target = $region3
  $region8: #{forward.1} parent=0 // loop_exit
    _

</llo_original>
